<compile_context>
chip_gen: v6e
topology: v6e:2x2x1
jax: 0.10.0
libtpu: 0.0.40
codegen_flags: <defaults>
</compile_context>

<pallas_src>
import math

import jax
import jax.numpy as jnp
from jax.experimental import pallas as pl
from jax.experimental.pallas import tpu as pltpu

OBS_SIZE, OBS_WIDTH = 21, 2
INPUT_SIZE = OBS_SIZE * OBS_WIDTH * 2        # 84
HIDDEN = 256
HEAD_OUTS = (3, 3, 3, 3, 3, 2, 2, 2)         # throttle, steer, pitch, yaw, roll, jump, boost, drift
NUM_HEADS = len(HEAD_OUTS)
MAX_OUT = 4                                  # unpadded output slab last dim (>= max head width)
OUT_PAD = 128                                # lane-padded N for the final head matmul
NEG = -1e30                                  # bias of padded logit lanes -> exp() == 0 exactly
MAX_BATCH_TILE = 256                         # batch rows per grid step for large batches


def _num_head_steps():
    """1 fat step on single-TC chips (v5e/v6e); 2 steps on v7x (one per TensorCore)."""
    try:
        kind = jax.devices()[0].device_kind.lower()
    except Exception:
        return 2
    return 2 if "7" in kind else 1


# ---------------- kernel ----------------

def fused_kernel(x_ref, w1_ref, b1_ref, wh_ref, bh_ref, wo_ref, bo_ref, out_ref):
    hps = wh_ref.shape[0]            # heads handled in this grid step
    nout = out_ref.shape[-1]

    # Trunk: pred = relu(x @ W1 + b1). w1/b1 have constant index_maps -> VMEM resident.
    xb = x_ref[...].astype(jnp.bfloat16)
    pred = jnp.dot(xb, w1_ref[...], preferred_element_type=jnp.float32) + b1_ref[...]
    pred = jnp.maximum(pred, 0.0)

    # Independent head chains (statically unrolled) -> the VLIW scheduler interleaves them.
    for j in range(hps):
        h = pred
        for l in range(3):
            h = jnp.dot(h.astype(jnp.bfloat16), wh_ref[j, l],
                        preferred_element_type=jnp.float32) + bh_ref[j, l]
            h = jnp.maximum(h, 0.0)
        logits = jnp.dot(h.astype(jnp.bfloat16), wo_ref[j],
                         preferred_element_type=jnp.float32) + bo_ref[j, 0]
        # log_softmax in f32 over the lane axis; padded lanes carry bias -1e30 so their exp
        # underflows to exactly 0 and the max comes from valid lanes.
        m = jnp.max(logits, axis=-1, keepdims=True)
        s = logits - m
        lse = jnp.log(jnp.sum(jnp.exp(s), axis=-1, keepdims=True))
        out_ref[j] = (s - lse)[:, :nout]


# ---------------- wrapper ----------------

def _forward(x, w1, b1, wh, bh, wo, bo):
    B = x.shape[0]
    num_steps = _num_head_steps()
    assert NUM_HEADS % num_steps == 0
    hps = NUM_HEADS // num_steps
    tb = B if B <= MAX_BATCH_TILE else MAX_BATCH_TILE
    nb = pl.cdiv(B, tb)

    def nbytes(a):
        return a.size * jnp.dtype(a.dtype).itemsize

    weight_bytes = sum(nbytes(a) for a in (w1, b1, wh, bh, wo, bo))
    cost = pl.CostEstimate(
        flops=2 * B * (INPUT_SIZE * HIDDEN
                       + NUM_HEADS * (3 * HIDDEN * HIDDEN + HIDDEN * OUT_PAD)),
        transcendentals=B * NUM_HEADS * (OUT_PAD + 1),
        bytes_accessed=int(weight_bytes + nbytes(x) + NUM_HEADS * B * MAX_OUT * 4),
    )

    return pl.pallas_call(
        fused_kernel,
        out_shape=jax.ShapeDtypeStruct((NUM_HEADS, B, MAX_OUT), jnp.float32),
        grid=(num_steps, nb),                                   # batch axis innermost:
        in_specs=[                                              # weights DMA'd once per step
            pl.BlockSpec((tb, INPUT_SIZE), lambda s, b: (b, 0)),
            pl.BlockSpec((INPUT_SIZE, HIDDEN), lambda s, b: (0, 0)),
            pl.BlockSpec((1, HIDDEN), lambda s, b: (0, 0)),
            pl.BlockSpec((hps, 3, HIDDEN, HIDDEN), lambda s, b: (s, 0, 0, 0)),
            pl.BlockSpec((hps, 3, HIDDEN), lambda s, b: (s, 0, 0)),
            pl.BlockSpec((hps, HIDDEN, OUT_PAD), lambda s, b: (s, 0, 0)),
            pl.BlockSpec((hps, 1, OUT_PAD), lambda s, b: (s, 0, 0)),
        ],
        out_specs=pl.BlockSpec((hps, tb, MAX_OUT), lambda s, b: (s, b, 0)),
        compiler_params=pltpu.CompilerParams(
            dimension_semantics=("parallel", "parallel")),
        cost_estimate=cost,
    )(x, w1, b1, wh, bh, wo, bo)


@jax.jit
def fully_connected2_forward(seq, params):
    w1, b1, wh, bh, wo, bo = params
    x = seq.reshape(-1, INPUT_SIZE).astype(jnp.float32)         # seq.view(-1, input_size)
    out = _forward(x, w1, b1, wh, bh, wo, bo)                   # (NUM_HEADS, B, MAX_OUT)
    return tuple(out[h, :, :HEAD_OUTS[h]] for h in range(NUM_HEADS))


# ---------------- deterministic param init (PyTorch-Linear-style uniform) ----------------

def _linear_init(key, fan_in, fan_out):
    kw, kb = jax.random.split(key)
    bound = 1.0 / math.sqrt(fan_in)
    w = jax.random.uniform(kw, (fan_in, fan_out), jnp.float32, -bound, bound)
    b = jax.random.uniform(kb, (fan_out,), jnp.float32, -bound, bound)
    return w, b


def init_params(key):
    keys = jax.random.split(key, 1 + NUM_HEADS * 4)
    w1f, b1f = _linear_init(keys[0], INPUT_SIZE, HIDDEN)

    w1 = w1f.astype(jnp.bfloat16)                               # (84, 256)
    b1 = b1f.reshape(1, HIDDEN)                                 # (1, 256) f32

    wh = jnp.zeros((NUM_HEADS, 3, HIDDEN, HIDDEN), jnp.bfloat16)
    bh = jnp.zeros((NUM_HEADS, 3, HIDDEN), jnp.float32)
    wo = jnp.zeros((NUM_HEADS, HIDDEN, OUT_PAD), jnp.bfloat16)
    bo = jnp.full((NUM_HEADS, 1, OUT_PAD), NEG, jnp.float32)

    kidx = 1
    for h in range(NUM_HEADS):
        for l in range(3):
            w, b = _linear_init(keys[kidx], HIDDEN, HIDDEN); kidx += 1
            wh = wh.at[h, l].set(w.astype(jnp.bfloat16))
            bh = bh.at[h, l].set(b)
        n = HEAD_OUTS[h]
        w, b = _linear_init(keys[kidx], HIDDEN, n); kidx += 1
        wo = wo.at[h, :, :n].set(w.astype(jnp.bfloat16))
        bo = bo.at[h, 0, :n].set(b)

    return (w1, b1, wh, bh, wo, bo)


def reference_forward(seq, params):
    # Pure-JAX reference using the same bf16 weights / f32 accumulation as the kernel.
    w1, b1, wh, bh, wo, bo = params
    x = seq.reshape(-1, INPUT_SIZE).astype(jnp.float32)
    pred = jnp.dot(x.astype(jnp.bfloat16), w1, preferred_element_type=jnp.float32) + b1
    pred = jnp.maximum(pred, 0.0)
    outs = []
    for h in range(NUM_HEADS):
        a = pred
        for l in range(3):
            a = jnp.dot(a.astype(jnp.bfloat16), wh[h, l],
                        preferred_element_type=jnp.float32) + bh[h, l]
            a = jnp.maximum(a, 0.0)
        n = HEAD_OUTS[h]
        logits = jnp.dot(a.astype(jnp.bfloat16), wo[h, :, :n],
                         preferred_element_type=jnp.float32) + bo[h, 0, :n]
        outs.append(jax.nn.log_softmax(logits, axis=1))
    return tuple(outs)


if __name__ == "__main__":
    key = jax.random.PRNGKey(0)
    kx, kp = jax.random.split(key)

    # input mirrors (batch, obs_size, obs_width, 2); forward flattens to (batch, 84)
    B = 8
    seq = jax.random.normal(kx, (B, OBS_SIZE, OBS_WIDTH, 2), jnp.float32)

    params = init_params(kp)

    outs = fully_connected2_forward(seq, params)
    outs = jax.block_until_ready(outs)

    refs = reference_forward(seq, params)
    for h, (o, r) in enumerate(zip(outs, refs)):
        assert o.shape == (B, HEAD_OUTS[h]), (o.shape, HEAD_OUTS[h])
        assert o.shape == r.shape, (o.shape, r.shape)
        assert jnp.max(jnp.abs(o - r)) < 1e-3, (h, float(jnp.max(jnp.abs(o - r))))

    print("KERNEL_OK")
</pallas_src>

<mosaic_0001>
module attributes {stable_mosaic.version = 11 : i64} {
  func.func @fused_kernel(%arg0: i32, %arg1: i32, %arg2: memref<8x84xf32, #tpu.memory_space<vmem>>, %arg3: memref<84x256xbf16, #tpu.memory_space<vmem>>, %arg4: memref<1x256xf32, #tpu.memory_space<vmem>>, %arg5: memref<8x3x256x256xbf16, #tpu.memory_space<vmem>>, %arg6: memref<8x3x256xf32, #tpu.memory_space<vmem>>, %arg7: memref<8x256x128xbf16, #tpu.memory_space<vmem>>, %arg8: memref<8x1x128xf32, #tpu.memory_space<vmem>>, %arg9: memref<8x8x4xf32, #tpu.memory_space<vmem>>) attributes {dimension_semantics = [#tpu.dimension_semantics<parallel>, #tpu.dimension_semantics<parallel>], iteration_bounds = array<i64: 1, 1>, scalar_prefetch = 0 : i64, scratch_operands = 0 : i64, tpu.core_type = #tpu.core_type<tc>, window_params = [{transform_indices = @transform_0, window_bounds = array<i64: 8, 84>}, {pipeline_mode = #tpu.pipeline_mode<synchronous>, transform_indices = @transform_1, window_bounds = array<i64: 84, 256>}, {pipeline_mode = #tpu.pipeline_mode<synchronous>, transform_indices = @transform_2, window_bounds = array<i64: 1, 256>}, {transform_indices = @transform_3, window_bounds = array<i64: 8, 3, 256, 256>}, {transform_indices = @transform_4, window_bounds = array<i64: 8, 3, 256>}, {transform_indices = @transform_5, window_bounds = array<i64: 8, 256, 128>}, {transform_indices = @transform_6, window_bounds = array<i64: 8, 1, 128>}, {transform_indices = @transform_7, window_bounds = array<i64: 8, 8, 4>}]} {
    %c0 = arith.constant 0 : index
    %c0_0 = arith.constant 0 : index
    %0 = vector.load %arg2[%c0, %c0_0] : memref<8x84xf32, #tpu.memory_space<vmem>>, vector<8x84xf32>
    %1 = arith.truncf %0 : vector<8x84xf32> to vector<8x84xbf16>
    %c0_1 = arith.constant 0 : index
    %c0_2 = arith.constant 0 : index
    %2 = vector.load %arg3[%c0_1, %c0_2] : memref<84x256xbf16, #tpu.memory_space<vmem>>, vector<84x256xbf16>
    %cst = arith.constant dense<0.000000e+00> : vector<8x256xf32>
    %3 = tpu.matmul %1, %2, %cst {dimension_numbers = #tpu.dot_dimension_numbers<[1], [0], [0], [1], [0, 0, 1, 1], [], []>} : vector<8x84xbf16>, vector<84x256xbf16>, vector<8x256xf32> -> vector<8x256xf32>
    %c0_3 = arith.constant 0 : index
    %c0_4 = arith.constant 0 : index
    %4 = vector.load %arg4[%c0_3, %c0_4] : memref<1x256xf32, #tpu.memory_space<vmem>>, vector<1x256xf32>
    %5 = vector.broadcast %4 : vector<1x256xf32> to vector<8x256xf32>
    %6 = arith.addf %3, %5 : vector<8x256xf32>
    %cst_5 = arith.constant 0.000000e+00 : f32
    %7 = vector.broadcast %cst_5 : f32 to vector<8x256xf32>
    %8 = arith.maximumf %6, %7 : vector<8x256xf32>
    %9 = arith.truncf %8 : vector<8x256xf32> to vector<8x256xbf16>
    %c0_6 = arith.constant 0 : index
    %c0_7 = arith.constant 0 : index
    %c0_8 = arith.constant 0 : index
    %c0_9 = arith.constant 0 : index
    %10 = vector.load %arg5[%c0_6, %c0_7, %c0_8, %c0_9] : memref<8x3x256x256xbf16, #tpu.memory_space<vmem>>, vector<1x1x256x256xbf16>
    %11 = vector.shape_cast %10 : vector<1x1x256x256xbf16> to vector<256x256xbf16>
    %cst_10 = arith.constant dense<0.000000e+00> : vector<8x256xf32>
    %12 = tpu.matmul %9, %11, %cst_10 {dimension_numbers = #tpu.dot_dimension_numbers<[1], [0], [0], [1], [0, 0, 1, 1], [], []>} : vector<8x256xbf16>, vector<256x256xbf16>, vector<8x256xf32> -> vector<8x256xf32>
    %c0_11 = arith.constant 0 : index
    %c0_12 = arith.constant 0 : index
    %c0_13 = arith.constant 0 : index
    %13 = vector.load %arg6[%c0_11, %c0_12, %c0_13] : memref<8x3x256xf32, #tpu.memory_space<vmem>>, vector<1x1x256xf32>
    %14 = vector.shape_cast %13 : vector<1x1x256xf32> to vector<256xf32>
    %15 = vector.shape_cast %14 : vector<256xf32> to vector<1x256xf32>
    %16 = vector.broadcast %15 : vector<1x256xf32> to vector<8x256xf32>
    %17 = arith.addf %12, %16 : vector<8x256xf32>
    %cst_14 = arith.constant 0.000000e+00 : f32
    %18 = vector.broadcast %cst_14 : f32 to vector<8x256xf32>
    %19 = arith.maximumf %17, %18 : vector<8x256xf32>
    %20 = arith.truncf %19 : vector<8x256xf32> to vector<8x256xbf16>
    %c0_15 = arith.constant 0 : index
    %c1 = arith.constant 1 : index
    %c0_16 = arith.constant 0 : index
    %c0_17 = arith.constant 0 : index
    %21 = vector.load %arg5[%c0_15, %c1, %c0_16, %c0_17] : memref<8x3x256x256xbf16, #tpu.memory_space<vmem>>, vector<1x1x256x256xbf16>
    %22 = vector.shape_cast %21 : vector<1x1x256x256xbf16> to vector<256x256xbf16>
    %cst_18 = arith.constant dense<0.000000e+00> : vector<8x256xf32>
    %23 = tpu.matmul %20, %22, %cst_18 {dimension_numbers = #tpu.dot_dimension_numbers<[1], [0], [0], [1], [0, 0, 1, 1], [], []>} : vector<8x256xbf16>, vector<256x256xbf16>, vector<8x256xf32> -> vector<8x256xf32>
    %c0_19 = arith.constant 0 : index
    %c1_20 = arith.constant 1 : index
    %c0_21 = arith.constant 0 : index
    %24 = vector.load %arg6[%c0_19, %c1_20, %c0_21] : memref<8x3x256xf32, #tpu.memory_space<vmem>>, vector<1x1x256xf32>
    %25 = vector.shape_cast %24 : vector<1x1x256xf32> to vector<256xf32>
    %26 = vector.shape_cast %25 : vector<256xf32> to vector<1x256xf32>
    %27 = vector.broadcast %26 : vector<1x256xf32> to vector<8x256xf32>
    %28 = arith.addf %23, %27 : vector<8x256xf32>
    %cst_22 = arith.constant 0.000000e+00 : f32
    %29 = vector.broadcast %cst_22 : f32 to vector<8x256xf32>
    %30 = arith.maximumf %28, %29 : vector<8x256xf32>
    %31 = arith.truncf %30 : vector<8x256xf32> to vector<8x256xbf16>
    %c0_23 = arith.constant 0 : index
    %c2 = arith.constant 2 : index
    %c0_24 = arith.constant 0 : index
    %c0_25 = arith.constant 0 : index
    %32 = vector.load %arg5[%c0_23, %c2, %c0_24, %c0_25] : memref<8x3x256x256xbf16, #tpu.memory_space<vmem>>, vector<1x1x256x256xbf16>
    %33 = vector.shape_cast %32 : vector<1x1x256x256xbf16> to vector<256x256xbf16>
    %cst_26 = arith.constant dense<0.000000e+00> : vector<8x256xf32>
    %34 = tpu.matmul %31, %33, %cst_26 {dimension_numbers = #tpu.dot_dimension_numbers<[1], [0], [0], [1], [0, 0, 1, 1], [], []>} : vector<8x256xbf16>, vector<256x256xbf16>, vector<8x256xf32> -> vector<8x256xf32>
    %c0_27 = arith.constant 0 : index
    %c2_28 = arith.constant 2 : index
    %c0_29 = arith.constant 0 : index
    %35 = vector.load %arg6[%c0_27, %c2_28, %c0_29] : memref<8x3x256xf32, #tpu.memory_space<vmem>>, vector<1x1x256xf32>
    %36 = vector.shape_cast %35 : vector<1x1x256xf32> to vector<256xf32>
    %37 = vector.shape_cast %36 : vector<256xf32> to vector<1x256xf32>
    %38 = vector.broadcast %37 : vector<1x256xf32> to vector<8x256xf32>
    %39 = arith.addf %34, %38 : vector<8x256xf32>
    %cst_30 = arith.constant 0.000000e+00 : f32
    %40 = vector.broadcast %cst_30 : f32 to vector<8x256xf32>
    %41 = arith.maximumf %39, %40 : vector<8x256xf32>
    %42 = arith.truncf %41 : vector<8x256xf32> to vector<8x256xbf16>
    %c0_31 = arith.constant 0 : index
    %c0_32 = arith.constant 0 : index
    %c0_33 = arith.constant 0 : index
    %43 = vector.load %arg7[%c0_31, %c0_32, %c0_33] : memref<8x256x128xbf16, #tpu.memory_space<vmem>>, vector<1x256x128xbf16>
    %44 = vector.shape_cast %43 : vector<1x256x128xbf16> to vector<256x128xbf16>
    %cst_34 = arith.constant dense<0.000000e+00> : vector<8x128xf32>
    %45 = tpu.matmul %42, %44, %cst_34 {dimension_numbers = #tpu.dot_dimension_numbers<[1], [0], [0], [1], [0, 0, 1, 1], [], []>} : vector<8x256xbf16>, vector<256x128xbf16>, vector<8x128xf32> -> vector<8x128xf32>
    %c0_35 = arith.constant 0 : index
    %c0_36 = arith.constant 0 : index
    %c0_37 = arith.constant 0 : index
    %46 = vector.load %arg8[%c0_35, %c0_36, %c0_37] : memref<8x1x128xf32, #tpu.memory_space<vmem>>, vector<1x1x128xf32>
    %47 = vector.shape_cast %46 : vector<1x1x128xf32> to vector<128xf32>
    %48 = vector.shape_cast %47 : vector<128xf32> to vector<1x128xf32>
    %49 = vector.broadcast %48 : vector<1x128xf32> to vector<8x128xf32>
    %50 = arith.addf %45, %49 : vector<8x128xf32>
    %cst_38 = arith.constant dense<0xFF800000> : vector<8xf32>
    %51 = vector.multi_reduction <maximumf>, %50, %cst_38 [1] : vector<8x128xf32> to vector<8xf32>
    %52 = vector.shape_cast %51 : vector<8xf32> to vector<8x1xf32>
    %53 = vector.broadcast %52 : vector<8x1xf32> to vector<8x128xf32>
    %54 = arith.subf %50, %53 : vector<8x128xf32>
    %55 = math.exp %54 : vector<8x128xf32>
    %cst_39 = arith.constant dense<0.000000e+00> : vector<8xf32>
    %56 = vector.multi_reduction <add>, %55, %cst_39 [1] : vector<8x128xf32> to vector<8xf32>
    %57 = vector.shape_cast %56 : vector<8xf32> to vector<8x1xf32>
    %58 = math.log %57 : vector<8x1xf32>
    %59 = vector.broadcast %58 : vector<8x1xf32> to vector<8x128xf32>
    %60 = arith.subf %54, %59 : vector<8x128xf32>
    %61 = vector.extract_strided_slice %60 {offsets = [0, 0], sizes = [8, 4], strides = [1, 1]} : vector<8x128xf32> to vector<8x4xf32>
    %c0_40 = arith.constant 0 : index
    %c0_41 = arith.constant 0 : index
    %c0_42 = arith.constant 0 : index
    %62 = vector.load %arg9[%c0_40, %c0_41, %c0_42] : memref<8x8x4xf32, #tpu.memory_space<vmem>>, vector<1x8x4xf32>
    %63 = vector.shape_cast %62 : vector<1x8x4xf32> to vector<8x4xf32>
    %64 = vector.shape_cast %61 : vector<8x4xf32> to vector<1x8x4xf32>
    tpu.vector_store %arg9[%c0_40, %c0_41, %c0_42], %64 {strides = array<i32>} : memref<8x8x4xf32, #tpu.memory_space<vmem>>, vector<1x8x4xf32>,
    %65 = arith.truncf %8 : vector<8x256xf32> to vector<8x256xbf16>
    %c1_43 = arith.constant 1 : index
    %c0_44 = arith.constant 0 : index
    %c0_45 = arith.constant 0 : index
    %c0_46 = arith.constant 0 : index
    %66 = vector.load %arg5[%c1_43, %c0_44, %c0_45, %c0_46] : memref<8x3x256x256xbf16, #tpu.memory_space<vmem>>, vector<1x1x256x256xbf16>
    %67 = vector.shape_cast %66 : vector<1x1x256x256xbf16> to vector<256x256xbf16>
    %cst_47 = arith.constant dense<0.000000e+00> : vector<8x256xf32>
    %68 = tpu.matmul %65, %67, %cst_47 {dimension_numbers = #tpu.dot_dimension_numbers<[1], [0], [0], [1], [0, 0, 1, 1], [], []>} : vector<8x256xbf16>, vector<256x256xbf16>, vector<8x256xf32> -> vector<8x256xf32>
    %c1_48 = arith.constant 1 : index
    %c0_49 = arith.constant 0 : index
    %c0_50 = arith.constant 0 : index
    %69 = vector.load %arg6[%c1_48, %c0_49, %c0_50] : memref<8x3x256xf32, #tpu.memory_space<vmem>>, vector<1x1x256xf32>
    %70 = vector.shape_cast %69 : vector<1x1x256xf32> to vector<256xf32>
    %71 = vector.shape_cast %70 : vector<256xf32> to vector<1x256xf32>
    %72 = vector.broadcast %71 : vector<1x256xf32> to vector<8x256xf32>
    %73 = arith.addf %68, %72 : vector<8x256xf32>
    %cst_51 = arith.constant 0.000000e+00 : f32
    %74 = vector.broadcast %cst_51 : f32 to vector<8x256xf32>
    %75 = arith.maximumf %73, %74 : vector<8x256xf32>
    %76 = arith.truncf %75 : vector<8x256xf32> to vector<8x256xbf16>
    %c1_52 = arith.constant 1 : index
    %c1_53 = arith.constant 1 : index
    %c0_54 = arith.constant 0 : index
    %c0_55 = arith.constant 0 : index
    %77 = vector.load %arg5[%c1_52, %c1_53, %c0_54, %c0_55] : memref<8x3x256x256xbf16, #tpu.memory_space<vmem>>, vector<1x1x256x256xbf16>
    %78 = vector.shape_cast %77 : vector<1x1x256x256xbf16> to vector<256x256xbf16>
    %cst_56 = arith.constant dense<0.000000e+00> : vector<8x256xf32>
    %79 = tpu.matmul %76, %78, %cst_56 {dimension_numbers = #tpu.dot_dimension_numbers<[1], [0], [0], [1], [0, 0, 1, 1], [], []>} : vector<8x256xbf16>, vector<256x256xbf16>, vector<8x256xf32> -> vector<8x256xf32>
    %c1_57 = arith.constant 1 : index
    %c1_58 = arith.constant 1 : index
    %c0_59 = arith.constant 0 : index
    %80 = vector.load %arg6[%c1_57, %c1_58, %c0_59] : memref<8x3x256xf32, #tpu.memory_space<vmem>>, vector<1x1x256xf32>
    %81 = vector.shape_cast %80 : vector<1x1x256xf32> to vector<256xf32>
    %82 = vector.shape_cast %81 : vector<256xf32> to vector<1x256xf32>
    %83 = vector.broadcast %82 : vector<1x256xf32> to vector<8x256xf32>
    %84 = arith.addf %79, %83 : vector<8x256xf32>
    %cst_60 = arith.constant 0.000000e+00 : f32
    %85 = vector.broadcast %cst_60 : f32 to vector<8x256xf32>
    %86 = arith.maximumf %84, %85 : vector<8x256xf32>
    %87 = arith.truncf %86 : vector<8x256xf32> to vector<8x256xbf16>
    %c1_61 = arith.constant 1 : index
    %c2_62 = arith.constant 2 : index
    %c0_63 = arith.constant 0 : index
    %c0_64 = arith.constant 0 : index
    %88 = vector.load %arg5[%c1_61, %c2_62, %c0_63, %c0_64] : memref<8x3x256x256xbf16, #tpu.memory_space<vmem>>, vector<1x1x256x256xbf16>
    %89 = vector.shape_cast %88 : vector<1x1x256x256xbf16> to vector<256x256xbf16>
    %cst_65 = arith.constant dense<0.000000e+00> : vector<8x256xf32>
    %90 = tpu.matmul %87, %89, %cst_65 {dimension_numbers = #tpu.dot_dimension_numbers<[1], [0], [0], [1], [0, 0, 1, 1], [], []>} : vector<8x256xbf16>, vector<256x256xbf16>, vector<8x256xf32> -> vector<8x256xf32>
    %c1_66 = arith.constant 1 : index
    %c2_67 = arith.constant 2 : index
    %c0_68 = arith.constant 0 : index
    %91 = vector.load %arg6[%c1_66, %c2_67, %c0_68] : memref<8x3x256xf32, #tpu.memory_space<vmem>>, vector<1x1x256xf32>
    %92 = vector.shape_cast %91 : vector<1x1x256xf32> to vector<256xf32>
    %93 = vector.shape_cast %92 : vector<256xf32> to vector<1x256xf32>
    %94 = vector.broadcast %93 : vector<1x256xf32> to vector<8x256xf32>
    %95 = arith.addf %90, %94 : vector<8x256xf32>
    %cst_69 = arith.constant 0.000000e+00 : f32
    %96 = vector.broadcast %cst_69 : f32 to vector<8x256xf32>
    %97 = arith.maximumf %95, %96 : vector<8x256xf32>
    %98 = arith.truncf %97 : vector<8x256xf32> to vector<8x256xbf16>
    %c1_70 = arith.constant 1 : index
    %c0_71 = arith.constant 0 : index
    %c0_72 = arith.constant 0 : index
    %99 = vector.load %arg7[%c1_70, %c0_71, %c0_72] : memref<8x256x128xbf16, #tpu.memory_space<vmem>>, vector<1x256x128xbf16>
    %100 = vector.shape_cast %99 : vector<1x256x128xbf16> to vector<256x128xbf16>
    %cst_73 = arith.constant dense<0.000000e+00> : vector<8x128xf32>
    %101 = tpu.matmul %98, %100, %cst_73 {dimension_numbers = #tpu.dot_dimension_numbers<[1], [0], [0], [1], [0, 0, 1, 1], [], []>} : vector<8x256xbf16>, vector<256x128xbf16>, vector<8x128xf32> -> vector<8x128xf32>
    %c1_74 = arith.constant 1 : index
    %c0_75 = arith.constant 0 : index
    %c0_76 = arith.constant 0 : index
    %102 = vector.load %arg8[%c1_74, %c0_75, %c0_76] : memref<8x1x128xf32, #tpu.memory_space<vmem>>, vector<1x1x128xf32>
    %103 = vector.shape_cast %102 : vector<1x1x128xf32> to vector<128xf32>
    %104 = vector.shape_cast %103 : vector<128xf32> to vector<1x128xf32>
    %105 = vector.broadcast %104 : vector<1x128xf32> to vector<8x128xf32>
    %106 = arith.addf %101, %105 : vector<8x128xf32>
    %cst_77 = arith.constant dense<0xFF800000> : vector<8xf32>
    %107 = vector.multi_reduction <maximumf>, %106, %cst_77 [1] : vector<8x128xf32> to vector<8xf32>
    %108 = vector.shape_cast %107 : vector<8xf32> to vector<8x1xf32>
    %109 = vector.broadcast %108 : vector<8x1xf32> to vector<8x128xf32>
    %110 = arith.subf %106, %109 : vector<8x128xf32>
    %111 = math.exp %110 : vector<8x128xf32>
    %cst_78 = arith.constant dense<0.000000e+00> : vector<8xf32>
    %112 = vector.multi_reduction <add>, %111, %cst_78 [1] : vector<8x128xf32> to vector<8xf32>
    %113 = vector.shape_cast %112 : vector<8xf32> to vector<8x1xf32>
    %114 = math.log %113 : vector<8x1xf32>
    %115 = vector.broadcast %114 : vector<8x1xf32> to vector<8x128xf32>
    %116 = arith.subf %110, %115 : vector<8x128xf32>
    %117 = vector.extract_strided_slice %116 {offsets = [0, 0], sizes = [8, 4], strides = [1, 1]} : vector<8x128xf32> to vector<8x4xf32>
    %c1_79 = arith.constant 1 : index
    %c0_80 = arith.constant 0 : index
    %c0_81 = arith.constant 0 : index
    %118 = vector.load %arg9[%c1_79, %c0_80, %c0_81] : memref<8x8x4xf32, #tpu.memory_space<vmem>>, vector<1x8x4xf32>
    %119 = vector.shape_cast %118 : vector<1x8x4xf32> to vector<8x4xf32>
    %120 = vector.shape_cast %117 : vector<8x4xf32> to vector<1x8x4xf32>
    tpu.vector_store %arg9[%c1_79, %c0_80, %c0_81], %120 {strides = array<i32>} : memref<8x8x4xf32, #tpu.memory_space<vmem>>, vector<1x8x4xf32>,
    %121 = arith.truncf %8 : vector<8x256xf32> to vector<8x256xbf16>
    %c2_82 = arith.constant 2 : index
    %c0_83 = arith.constant 0 : index
    %c0_84 = arith.constant 0 : index
    %c0_85 = arith.constant 0 : index
    %122 = vector.load %arg5[%c2_82, %c0_83, %c0_84, %c0_85] : memref<8x3x256x256xbf16, #tpu.memory_space<vmem>>, vector<1x1x256x256xbf16>
    %123 = vector.shape_cast %122 : vector<1x1x256x256xbf16> to vector<256x256xbf16>
    %cst_86 = arith.constant dense<0.000000e+00> : vector<8x256xf32>
    %124 = tpu.matmul %121, %123, %cst_86 {dimension_numbers = #tpu.dot_dimension_numbers<[1], [0], [0], [1], [0, 0, 1, 1], [], []>} : vector<8x256xbf16>, vector<256x256xbf16>, vector<8x256xf32> -> vector<8x256xf32>
    %c2_87 = arith.constant 2 : index
    %c0_88 = arith.constant 0 : index
    %c0_89 = arith.constant 0 : index
    %125 = vector.load %arg6[%c2_87, %c0_88, %c0_89] : memref<8x3x256xf32, #tpu.memory_space<vmem>>, vector<1x1x256xf32>
    %126 = vector.shape_cast %125 : vector<1x1x256xf32> to vector<256xf32>
    %127 = vector.shape_cast %126 : vector<256xf32> to vector<1x256xf32>
    %128 = vector.broadcast %127 : vector<1x256xf32> to vector<8x256xf32>
    %129 = arith.addf %124, %128 : vector<8x256xf32>
    %cst_90 = arith.constant 0.000000e+00 : f32
    %130 = vector.broadcast %cst_90 : f32 to vector<8x256xf32>
    %131 = arith.maximumf %129, %130 : vector<8x256xf32>
    %132 = arith.truncf %131 : vector<8x256xf32> to vector<8x256xbf16>
    %c2_91 = arith.constant 2 : index
    %c1_92 = arith.constant 1 : index
    %c0_93 = arith.constant 0 : index
    %c0_94 = arith.constant 0 : index
    %133 = vector.load %arg5[%c2_91, %c1_92, %c0_93, %c0_94] : memref<8x3x256x256xbf16, #tpu.memory_space<vmem>>, vector<1x1x256x256xbf16>
    %134 = vector.shape_cast %133 : vector<1x1x256x256xbf16> to vector<256x256xbf16>
    %cst_95 = arith.constant dense<0.000000e+00> : vector<8x256xf32>
    %135 = tpu.matmul %132, %134, %cst_95 {dimension_numbers = #tpu.dot_dimension_numbers<[1], [0], [0], [1], [0, 0, 1, 1], [], []>} : vector<8x256xbf16>, vector<256x256xbf16>, vector<8x256xf32> -> vector<8x256xf32>
    %c2_96 = arith.constant 2 : index
    %c1_97 = arith.constant 1 : index
    %c0_98 = arith.constant 0 : index
    %136 = vector.load %arg6[%c2_96, %c1_97, %c0_98] : memref<8x3x256xf32, #tpu.memory_space<vmem>>, vector<1x1x256xf32>
    %137 = vector.shape_cast %136 : vector<1x1x256xf32> to vector<256xf32>
    %138 = vector.shape_cast %137 : vector<256xf32> to vector<1x256xf32>
    %139 = vector.broadcast %138 : vector<1x256xf32> to vector<8x256xf32>
    %140 = arith.addf %135, %139 : vector<8x256xf32>
    %cst_99 = arith.constant 0.000000e+00 : f32
    %141 = vector.broadcast %cst_99 : f32 to vector<8x256xf32>
    %142 = arith.maximumf %140, %141 : vector<8x256xf32>
    %143 = arith.truncf %142 : vector<8x256xf32> to vector<8x256xbf16>
    %c2_100 = arith.constant 2 : index
    %c2_101 = arith.constant 2 : index
    %c0_102 = arith.constant 0 : index
    %c0_103 = arith.constant 0 : index
    %144 = vector.load %arg5[%c2_100, %c2_101, %c0_102, %c0_103] : memref<8x3x256x256xbf16, #tpu.memory_space<vmem>>, vector<1x1x256x256xbf16>
    %145 = vector.shape_cast %144 : vector<1x1x256x256xbf16> to vector<256x256xbf16>
    %cst_104 = arith.constant dense<0.000000e+00> : vector<8x256xf32>
    %146 = tpu.matmul %143, %145, %cst_104 {dimension_numbers = #tpu.dot_dimension_numbers<[1], [0], [0], [1], [0, 0, 1, 1], [], []>} : vector<8x256xbf16>, vector<256x256xbf16>, vector<8x256xf32> -> vector<8x256xf32>
    %c2_105 = arith.constant 2 : index
    %c2_106 = arith.constant 2 : index
    %c0_107 = arith.constant 0 : index
    %147 = vector.load %arg6[%c2_105, %c2_106, %c0_107] : memref<8x3x256xf32, #tpu.memory_space<vmem>>, vector<1x1x256xf32>
    %148 = vector.shape_cast %147 : vector<1x1x256xf32> to vector<256xf32>
    %149 = vector.shape_cast %148 : vector<256xf32> to vector<1x256xf32>
    %150 = vector.broadcast %149 : vector<1x256xf32> to vector<8x256xf32>
    %151 = arith.addf %146, %150 : vector<8x256xf32>
    %cst_108 = arith.constant 0.000000e+00 : f32
    %152 = vector.broadcast %cst_108 : f32 to vector<8x256xf32>
    %153 = arith.maximumf %151, %152 : vector<8x256xf32>
    %154 = arith.truncf %153 : vector<8x256xf32> to vector<8x256xbf16>
    %c2_109 = arith.constant 2 : index
    %c0_110 = arith.constant 0 : index
    %c0_111 = arith.constant 0 : index
    %155 = vector.load %arg7[%c2_109, %c0_110, %c0_111] : memref<8x256x128xbf16, #tpu.memory_space<vmem>>, vector<1x256x128xbf16>
    %156 = vector.shape_cast %155 : vector<1x256x128xbf16> to vector<256x128xbf16>
    %cst_112 = arith.constant dense<0.000000e+00> : vector<8x128xf32>
    %157 = tpu.matmul %154, %156, %cst_112 {dimension_numbers = #tpu.dot_dimension_numbers<[1], [0], [0], [1], [0, 0, 1, 1], [], []>} : vector<8x256xbf16>, vector<256x128xbf16>, vector<8x128xf32> -> vector<8x128xf32>
    %c2_113 = arith.constant 2 : index
    %c0_114 = arith.constant 0 : index
    %c0_115 = arith.constant 0 : index
    %158 = vector.load %arg8[%c2_113, %c0_114, %c0_115] : memref<8x1x128xf32, #tpu.memory_space<vmem>>, vector<1x1x128xf32>
    %159 = vector.shape_cast %158 : vector<1x1x128xf32> to vector<128xf32>
    %160 = vector.shape_cast %159 : vector<128xf32> to vector<1x128xf32>
    %161 = vector.broadcast %160 : vector<1x128xf32> to vector<8x128xf32>
    %162 = arith.addf %157, %161 : vector<8x128xf32>
    %cst_116 = arith.constant dense<0xFF800000> : vector<8xf32>
    %163 = vector.multi_reduction <maximumf>, %162, %cst_116 [1] : vector<8x128xf32> to vector<8xf32>
    %164 = vector.shape_cast %163 : vector<8xf32> to vector<8x1xf32>
    %165 = vector.broadcast %164 : vector<8x1xf32> to vector<8x128xf32>
    %166 = arith.subf %162, %165 : vector<8x128xf32>
    %167 = math.exp %166 : vector<8x128xf32>
    %cst_117 = arith.constant dense<0.000000e+00> : vector<8xf32>
    %168 = vector.multi_reduction <add>, %167, %cst_117 [1] : vector<8x128xf32> to vector<8xf32>
    %169 = vector.shape_cast %168 : vector<8xf32> to vector<8x1xf32>
    %170 = math.log %169 : vector<8x1xf32>
    %171 = vector.broadcast %170 : vector<8x1xf32> to vector<8x128xf32>
    %172 = arith.subf %166, %171 : vector<8x128xf32>
    %173 = vector.extract_strided_slice %172 {offsets = [0, 0], sizes = [8, 4], strides = [1, 1]} : vector<8x128xf32> to vector<8x4xf32>
    %c2_118 = arith.constant 2 : index
    %c0_119 = arith.constant 0 : index
    %c0_120 = arith.constant 0 : index
    %174 = vector.load %arg9[%c2_118, %c0_119, %c0_120] : memref<8x8x4xf32, #tpu.memory_space<vmem>>, vector<1x8x4xf32>
    %175 = vector.shape_cast %174 : vector<1x8x4xf32> to vector<8x4xf32>
    %176 = vector.shape_cast %173 : vector<8x4xf32> to vector<1x8x4xf32>
    tpu.vector_store %arg9[%c2_118, %c0_119, %c0_120], %176 {strides = array<i32>} : memref<8x8x4xf32, #tpu.memory_space<vmem>>, vector<1x8x4xf32>,
    %177 = arith.truncf %8 : vector<8x256xf32> to vector<8x256xbf16>
    %c3 = arith.constant 3 : index
    %c0_121 = arith.constant 0 : index
    %c0_122 = arith.constant 0 : index
    %c0_123 = arith.constant 0 : index
    %178 = vector.load %arg5[%c3, %c0_121, %c0_122, %c0_123] : memref<8x3x256x256xbf16, #tpu.memory_space<vmem>>, vector<1x1x256x256xbf16>
    %179 = vector.shape_cast %178 : vector<1x1x256x256xbf16> to vector<256x256xbf16>
    %cst_124 = arith.constant dense<0.000000e+00> : vector<8x256xf32>
    %180 = tpu.matmul %177, %179, %cst_124 {dimension_numbers = #tpu.dot_dimension_numbers<[1], [0], [0], [1], [0, 0, 1, 1], [], []>} : vector<8x256xbf16>, vector<256x256xbf16>, vector<8x256xf32> -> vector<8x256xf32>
    %c3_125 = arith.constant 3 : index
    %c0_126 = arith.constant 0 : index
    %c0_127 = arith.constant 0 : index
    %181 = vector.load %arg6[%c3_125, %c0_126, %c0_127] : memref<8x3x256xf32, #tpu.memory_space<vmem>>, vector<1x1x256xf32>
    %182 = vector.shape_cast %181 : vector<1x1x256xf32> to vector<256xf32>
    %183 = vector.shape_cast %182 : vector<256xf32> to vector<1x256xf32>
    %184 = vector.broadcast %183 : vector<1x256xf32> to vector<8x256xf32>
    %185 = arith.addf %180, %184 : vector<8x256xf32>
    %cst_128 = arith.constant 0.000000e+00 : f32
    %186 = vector.broadcast %cst_128 : f32 to vector<8x256xf32>
    %187 = arith.maximumf %185, %186 : vector<8x256xf32>
    %188 = arith.truncf %187 : vector<8x256xf32> to vector<8x256xbf16>
    %c3_129 = arith.constant 3 : index
    %c1_130 = arith.constant 1 : index
    %c0_131 = arith.constant 0 : index
    %c0_132 = arith.constant 0 : index
    %189 = vector.load %arg5[%c3_129, %c1_130, %c0_131, %c0_132] : memref<8x3x256x256xbf16, #tpu.memory_space<vmem>>, vector<1x1x256x256xbf16>
    %190 = vector.shape_cast %189 : vector<1x1x256x256xbf16> to vector<256x256xbf16>
    %cst_133 = arith.constant dense<0.000000e+00> : vector<8x256xf32>
    %191 = tpu.matmul %188, %190, %cst_133 {dimension_numbers = #tpu.dot_dimension_numbers<[1], [0], [0], [1], [0, 0, 1, 1], [], []>} : vector<8x256xbf16>, vector<256x256xbf16>, vector<8x256xf32> -> vector<8x256xf32>
    %c3_134 = arith.constant 3 : index
    %c1_135 = arith.constant 1 : index
    %c0_136 = arith.constant 0 : index
    %192 = vector.load %arg6[%c3_134, %c1_135, %c0_136] : memref<8x3x256xf32, #tpu.memory_space<vmem>>, vector<1x1x256xf32>
    %193 = vector.shape_cast %192 : vector<1x1x256xf32> to vector<256xf32>
    %194 = vector.shape_cast %193 : vector<256xf32> to vector<1x256xf32>
    %195 = vector.broadcast %194 : vector<1x256xf32> to vector<8x256xf32>
    %196 = arith.addf %191, %195 : vector<8x256xf32>
    %cst_137 = arith.constant 0.000000e+00 : f32
    %197 = vector.broadcast %cst_137 : f32 to vector<8x256xf32>
    %198 = arith.maximumf %196, %197 : vector<8x256xf32>
    %199 = arith.truncf %198 : vector<8x256xf32> to vector<8x256xbf16>
    %c3_138 = arith.constant 3 : index
    %c2_139 = arith.constant 2 : index
    %c0_140 = arith.constant 0 : index
    %c0_141 = arith.constant 0 : index
    %200 = vector.load %arg5[%c3_138, %c2_139, %c0_140, %c0_141] : memref<8x3x256x256xbf16, #tpu.memory_space<vmem>>, vector<1x1x256x256xbf16>
    %201 = vector.shape_cast %200 : vector<1x1x256x256xbf16> to vector<256x256xbf16>
    %cst_142 = arith.constant dense<0.000000e+00> : vector<8x256xf32>
    %202 = tpu.matmul %199, %201, %cst_142 {dimension_numbers = #tpu.dot_dimension_numbers<[1], [0], [0], [1], [0, 0, 1, 1], [], []>} : vector<8x256xbf16>, vector<256x256xbf16>, vector<8x256xf32> -> vector<8x256xf32>
    %c3_143 = arith.constant 3 : index
    %c2_144 = arith.constant 2 : index
    %c0_145 = arith.constant 0 : index
    %203 = vector.load %arg6[%c3_143, %c2_144, %c0_145] : memref<8x3x256xf32, #tpu.memory_space<vmem>>, vector<1x1x256xf32>
    %204 = vector.shape_cast %203 : vector<1x1x256xf32> to vector<256xf32>
    %205 = vector.shape_cast %204 : vector<256xf32> to vector<1x256xf32>
    %206 = vector.broadcast %205 : vector<1x256xf32> to vector<8x256xf32>
    %207 = arith.addf %202, %206 : vector<8x256xf32>
    %cst_146 = arith.constant 0.000000e+00 : f32
    %208 = vector.broadcast %cst_146 : f32 to vector<8x256xf32>
    %209 = arith.maximumf %207, %208 : vector<8x256xf32>
    %210 = arith.truncf %209 : vector<8x256xf32> to vector<8x256xbf16>
    %c3_147 = arith.constant 3 : index
    %c0_148 = arith.constant 0 : index
    %c0_149 = arith.constant 0 : index
    %211 = vector.load %arg7[%c3_147, %c0_148, %c0_149] : memref<8x256x128xbf16, #tpu.memory_space<vmem>>, vector<1x256x128xbf16>
    %212 = vector.shape_cast %211 : vector<1x256x128xbf16> to vector<256x128xbf16>
    %cst_150 = arith.constant dense<0.000000e+00> : vector<8x128xf32>
    %213 = tpu.matmul %210, %212, %cst_150 {dimension_numbers = #tpu.dot_dimension_numbers<[1], [0], [0], [1], [0, 0, 1, 1], [], []>} : vector<8x256xbf16>, vector<256x128xbf16>, vector<8x128xf32> -> vector<8x128xf32>
    %c3_151 = arith.constant 3 : index
    %c0_152 = arith.constant 0 : index
    %c0_153 = arith.constant 0 : index
    %214 = vector.load %arg8[%c3_151, %c0_152, %c0_153] : memref<8x1x128xf32, #tpu.memory_space<vmem>>, vector<1x1x128xf32>
    %215 = vector.shape_cast %214 : vector<1x1x128xf32> to vector<128xf32>
    %216 = vector.shape_cast %215 : vector<128xf32> to vector<1x128xf32>
    %217 = vector.broadcast %216 : vector<1x128xf32> to vector<8x128xf32>
    %218 = arith.addf %213, %217 : vector<8x128xf32>
    %cst_154 = arith.constant dense<0xFF800000> : vector<8xf32>
    %219 = vector.multi_reduction <maximumf>, %218, %cst_154 [1] : vector<8x128xf32> to vector<8xf32>
    %220 = vector.shape_cast %219 : vector<8xf32> to vector<8x1xf32>
    %221 = vector.broadcast %220 : vector<8x1xf32> to vector<8x128xf32>
    %222 = arith.subf %218, %221 : vector<8x128xf32>
    %223 = math.exp %222 : vector<8x128xf32>
    %cst_155 = arith.constant dense<0.000000e+00> : vector<8xf32>
    %224 = vector.multi_reduction <add>, %223, %cst_155 [1] : vector<8x128xf32> to vector<8xf32>
    %225 = vector.shape_cast %224 : vector<8xf32> to vector<8x1xf32>
    %226 = math.log %225 : vector<8x1xf32>
    %227 = vector.broadcast %226 : vector<8x1xf32> to vector<8x128xf32>
    %228 = arith.subf %222, %227 : vector<8x128xf32>
    %229 = vector.extract_strided_slice %228 {offsets = [0, 0], sizes = [8, 4], strides = [1, 1]} : vector<8x128xf32> to vector<8x4xf32>
    %c3_156 = arith.constant 3 : index
    %c0_157 = arith.constant 0 : index
    %c0_158 = arith.constant 0 : index
    %230 = vector.load %arg9[%c3_156, %c0_157, %c0_158] : memref<8x8x4xf32, #tpu.memory_space<vmem>>, vector<1x8x4xf32>
    %231 = vector.shape_cast %230 : vector<1x8x4xf32> to vector<8x4xf32>
    %232 = vector.shape_cast %229 : vector<8x4xf32> to vector<1x8x4xf32>
    tpu.vector_store %arg9[%c3_156, %c0_157, %c0_158], %232 {strides = array<i32>} : memref<8x8x4xf32, #tpu.memory_space<vmem>>, vector<1x8x4xf32>,
    %233 = arith.truncf %8 : vector<8x256xf32> to vector<8x256xbf16>
    %c4 = arith.constant 4 : index
    %c0_159 = arith.constant 0 : index
    %c0_160 = arith.constant 0 : index
    %c0_161 = arith.constant 0 : index
    %234 = vector.load %arg5[%c4, %c0_159, %c0_160, %c0_161] : memref<8x3x256x256xbf16, #tpu.memory_space<vmem>>, vector<1x1x256x256xbf16>
    %235 = vector.shape_cast %234 : vector<1x1x256x256xbf16> to vector<256x256xbf16>
    %cst_162 = arith.constant dense<0.000000e+00> : vector<8x256xf32>
    %236 = tpu.matmul %233, %235, %cst_162 {dimension_numbers = #tpu.dot_dimension_numbers<[1], [0], [0], [1], [0, 0, 1, 1], [], []>} : vector<8x256xbf16>, vector<256x256xbf16>, vector<8x256xf32> -> vector<8x256xf32>
    %c4_163 = arith.constant 4 : index
    %c0_164 = arith.constant 0 : index
    %c0_165 = arith.constant 0 : index
    %237 = vector.load %arg6[%c4_163, %c0_164, %c0_165] : memref<8x3x256xf32, #tpu.memory_space<vmem>>, vector<1x1x256xf32>
    %238 = vector.shape_cast %237 : vector<1x1x256xf32> to vector<256xf32>
    %239 = vector.shape_cast %238 : vector<256xf32> to vector<1x256xf32>
    %240 = vector.broadcast %239 : vector<1x256xf32> to vector<8x256xf32>
    %241 = arith.addf %236, %240 : vector<8x256xf32>
    %cst_166 = arith.constant 0.000000e+00 : f32
    %242 = vector.broadcast %cst_166 : f32 to vector<8x256xf32>
    %243 = arith.maximumf %241, %242 : vector<8x256xf32>
    %244 = arith.truncf %243 : vector<8x256xf32> to vector<8x256xbf16>
    %c4_167 = arith.constant 4 : index
    %c1_168 = arith.constant 1 : index
    %c0_169 = arith.constant 0 : index
    %c0_170 = arith.constant 0 : index
    %245 = vector.load %arg5[%c4_167, %c1_168, %c0_169, %c0_170] : memref<8x3x256x256xbf16, #tpu.memory_space<vmem>>, vector<1x1x256x256xbf16>
    %246 = vector.shape_cast %245 : vector<1x1x256x256xbf16> to vector<256x256xbf16>
    %cst_171 = arith.constant dense<0.000000e+00> : vector<8x256xf32>
    %247 = tpu.matmul %244, %246, %cst_171 {dimension_numbers = #tpu.dot_dimension_numbers<[1], [0], [0], [1], [0, 0, 1, 1], [], []>} : vector<8x256xbf16>, vector<256x256xbf16>, vector<8x256xf32> -> vector<8x256xf32>
    %c4_172 = arith.constant 4 : index
    %c1_173 = arith.constant 1 : index
    %c0_174 = arith.constant 0 : index
    %248 = vector.load %arg6[%c4_172, %c1_173, %c0_174] : memref<8x3x256xf32, #tpu.memory_space<vmem>>, vector<1x1x256xf32>
    %249 = vector.shape_cast %248 : vector<1x1x256xf32> to vector<256xf32>
    %250 = vector.shape_cast %249 : vector<256xf32> to vector<1x256xf32>
    %251 = vector.broadcast %250 : vector<1x256xf32> to vector<8x256xf32>
    %252 = arith.addf %247, %251 : vector<8x256xf32>
    %cst_175 = arith.constant 0.000000e+00 : f32
    %253 = vector.broadcast %cst_175 : f32 to vector<8x256xf32>
    %254 = arith.maximumf %252, %253 : vector<8x256xf32>
    %255 = arith.truncf %254 : vector<8x256xf32> to vector<8x256xbf16>
    %c4_176 = arith.constant 4 : index
    %c2_177 = arith.constant 2 : index
    %c0_178 = arith.constant 0 : index
    %c0_179 = arith.constant 0 : index
    %256 = vector.load %arg5[%c4_176, %c2_177, %c0_178, %c0_179] : memref<8x3x256x256xbf16, #tpu.memory_space<vmem>>, vector<1x1x256x256xbf16>
    %257 = vector.shape_cast %256 : vector<1x1x256x256xbf16> to vector<256x256xbf16>
    %cst_180 = arith.constant dense<0.000000e+00> : vector<8x256xf32>
    %258 = tpu.matmul %255, %257, %cst_180 {dimension_numbers = #tpu.dot_dimension_numbers<[1], [0], [0], [1], [0, 0, 1, 1], [], []>} : vector<8x256xbf16>, vector<256x256xbf16>, vector<8x256xf32> -> vector<8x256xf32>
    %c4_181 = arith.constant 4 : index
    %c2_182 = arith.constant 2 : index
    %c0_183 = arith.constant 0 : index
    %259 = vector.load %arg6[%c4_181, %c2_182, %c0_183] : memref<8x3x256xf32, #tpu.memory_space<vmem>>, vector<1x1x256xf32>
    %260 = vector.shape_cast %259 : vector<1x1x256xf32> to vector<256xf32>
    %261 = vector.shape_cast %260 : vector<256xf32> to vector<1x256xf32>
    %262 = vector.broadcast %261 : vector<1x256xf32> to vector<8x256xf32>
    %263 = arith.addf %258, %262 : vector<8x256xf32>
    %cst_184 = arith.constant 0.000000e+00 : f32
    %264 = vector.broadcast %cst_184 : f32 to vector<8x256xf32>
    %265 = arith.maximumf %263, %264 : vector<8x256xf32>
    %266 = arith.truncf %265 : vector<8x256xf32> to vector<8x256xbf16>
    %c4_185 = arith.constant 4 : index
    %c0_186 = arith.constant 0 : index
    %c0_187 = arith.constant 0 : index
    %267 = vector.load %arg7[%c4_185, %c0_186, %c0_187] : memref<8x256x128xbf16, #tpu.memory_space<vmem>>, vector<1x256x128xbf16>
    %268 = vector.shape_cast %267 : vector<1x256x128xbf16> to vector<256x128xbf16>
    %cst_188 = arith.constant dense<0.000000e+00> : vector<8x128xf32>
    %269 = tpu.matmul %266, %268, %cst_188 {dimension_numbers = #tpu.dot_dimension_numbers<[1], [0], [0], [1], [0, 0, 1, 1], [], []>} : vector<8x256xbf16>, vector<256x128xbf16>, vector<8x128xf32> -> vector<8x128xf32>
    %c4_189 = arith.constant 4 : index
    %c0_190 = arith.constant 0 : index
    %c0_191 = arith.constant 0 : index
    %270 = vector.load %arg8[%c4_189, %c0_190, %c0_191] : memref<8x1x128xf32, #tpu.memory_space<vmem>>, vector<1x1x128xf32>
    %271 = vector.shape_cast %270 : vector<1x1x128xf32> to vector<128xf32>
    %272 = vector.shape_cast %271 : vector<128xf32> to vector<1x128xf32>
    %273 = vector.broadcast %272 : vector<1x128xf32> to vector<8x128xf32>
    %274 = arith.addf %269, %273 : vector<8x128xf32>
    %cst_192 = arith.constant dense<0xFF800000> : vector<8xf32>
    %275 = vector.multi_reduction <maximumf>, %274, %cst_192 [1] : vector<8x128xf32> to vector<8xf32>
    %276 = vector.shape_cast %275 : vector<8xf32> to vector<8x1xf32>
    %277 = vector.broadcast %276 : vector<8x1xf32> to vector<8x128xf32>
    %278 = arith.subf %274, %277 : vector<8x128xf32>
    %279 = math.exp %278 : vector<8x128xf32>
    %cst_193 = arith.constant dense<0.000000e+00> : vector<8xf32>
    %280 = vector.multi_reduction <add>, %279, %cst_193 [1] : vector<8x128xf32> to vector<8xf32>
    %281 = vector.shape_cast %280 : vector<8xf32> to vector<8x1xf32>
    %282 = math.log %281 : vector<8x1xf32>
    %283 = vector.broadcast %282 : vector<8x1xf32> to vector<8x128xf32>
    %284 = arith.subf %278, %283 : vector<8x128xf32>
    %285 = vector.extract_strided_slice %284 {offsets = [0, 0], sizes = [8, 4], strides = [1, 1]} : vector<8x128xf32> to vector<8x4xf32>
    %c4_194 = arith.constant 4 : index
    %c0_195 = arith.constant 0 : index
    %c0_196 = arith.constant 0 : index
    %286 = vector.load %arg9[%c4_194, %c0_195, %c0_196] : memref<8x8x4xf32, #tpu.memory_space<vmem>>, vector<1x8x4xf32>
    %287 = vector.shape_cast %286 : vector<1x8x4xf32> to vector<8x4xf32>
    %288 = vector.shape_cast %285 : vector<8x4xf32> to vector<1x8x4xf32>
    tpu.vector_store %arg9[%c4_194, %c0_195, %c0_196], %288 {strides = array<i32>} : memref<8x8x4xf32, #tpu.memory_space<vmem>>, vector<1x8x4xf32>,
    %289 = arith.truncf %8 : vector<8x256xf32> to vector<8x256xbf16>
    %c5 = arith.constant 5 : index
    %c0_197 = arith.constant 0 : index
    %c0_198 = arith.constant 0 : index
    %c0_199 = arith.constant 0 : index
    %290 = vector.load %arg5[%c5, %c0_197, %c0_198, %c0_199] : memref<8x3x256x256xbf16, #tpu.memory_space<vmem>>, vector<1x1x256x256xbf16>
    %291 = vector.shape_cast %290 : vector<1x1x256x256xbf16> to vector<256x256xbf16>
    %cst_200 = arith.constant dense<0.000000e+00> : vector<8x256xf32>
    %292 = tpu.matmul %289, %291, %cst_200 {dimension_numbers = #tpu.dot_dimension_numbers<[1], [0], [0], [1], [0, 0, 1, 1], [], []>} : vector<8x256xbf16>, vector<256x256xbf16>, vector<8x256xf32> -> vector<8x256xf32>
    %c5_201 = arith.constant 5 : index
    %c0_202 = arith.constant 0 : index
    %c0_203 = arith.constant 0 : index
    %293 = vector.load %arg6[%c5_201, %c0_202, %c0_203] : memref<8x3x256xf32, #tpu.memory_space<vmem>>, vector<1x1x256xf32>
    %294 = vector.shape_cast %293 : vector<1x1x256xf32> to vector<256xf32>
    %295 = vector.shape_cast %294 : vector<256xf32> to vector<1x256xf32>
    %296 = vector.broadcast %295 : vector<1x256xf32> to vector<8x256xf32>
    %297 = arith.addf %292, %296 : vector<8x256xf32>
    %cst_204 = arith.constant 0.000000e+00 : f32
    %298 = vector.broadcast %cst_204 : f32 to vector<8x256xf32>
    %299 = arith.maximumf %297, %298 : vector<8x256xf32>
    %300 = arith.truncf %299 : vector<8x256xf32> to vector<8x256xbf16>
    %c5_205 = arith.constant 5 : index
    %c1_206 = arith.constant 1 : index
    %c0_207 = arith.constant 0 : index
    %c0_208 = arith.constant 0 : index
    %301 = vector.load %arg5[%c5_205, %c1_206, %c0_207, %c0_208] : memref<8x3x256x256xbf16, #tpu.memory_space<vmem>>, vector<1x1x256x256xbf16>
    %302 = vector.shape_cast %301 : vector<1x1x256x256xbf16> to vector<256x256xbf16>
    %cst_209 = arith.constant dense<0.000000e+00> : vector<8x256xf32>
    %303 = tpu.matmul %300, %302, %cst_209 {dimension_numbers = #tpu.dot_dimension_numbers<[1], [0], [0], [1], [0, 0, 1, 1], [], []>} : vector<8x256xbf16>, vector<256x256xbf16>, vector<8x256xf32> -> vector<8x256xf32>
    %c5_210 = arith.constant 5 : index
    %c1_211 = arith.constant 1 : index
    %c0_212 = arith.constant 0 : index
    %304 = vector.load %arg6[%c5_210, %c1_211, %c0_212] : memref<8x3x256xf32, #tpu.memory_space<vmem>>, vector<1x1x256xf32>
    %305 = vector.shape_cast %304 : vector<1x1x256xf32> to vector<256xf32>
    %306 = vector.shape_cast %305 : vector<256xf32> to vector<1x256xf32>
    %307 = vector.broadcast %306 : vector<1x256xf32> to vector<8x256xf32>
    %308 = arith.addf %303, %307 : vector<8x256xf32>
    %cst_213 = arith.constant 0.000000e+00 : f32
    %309 = vector.broadcast %cst_213 : f32 to vector<8x256xf32>
    %310 = arith.maximumf %308, %309 : vector<8x256xf32>
    %311 = arith.truncf %310 : vector<8x256xf32> to vector<8x256xbf16>
    %c5_214 = arith.constant 5 : index
    %c2_215 = arith.constant 2 : index
    %c0_216 = arith.constant 0 : index
    %c0_217 = arith.constant 0 : index
    %312 = vector.load %arg5[%c5_214, %c2_215, %c0_216, %c0_217] : memref<8x3x256x256xbf16, #tpu.memory_space<vmem>>, vector<1x1x256x256xbf16>
    %313 = vector.shape_cast %312 : vector<1x1x256x256xbf16> to vector<256x256xbf16>
    %cst_218 = arith.constant dense<0.000000e+00> : vector<8x256xf32>
    %314 = tpu.matmul %311, %313, %cst_218 {dimension_numbers = #tpu.dot_dimension_numbers<[1], [0], [0], [1], [0, 0, 1, 1], [], []>} : vector<8x256xbf16>, vector<256x256xbf16>, vector<8x256xf32> -> vector<8x256xf32>
    %c5_219 = arith.constant 5 : index
    %c2_220 = arith.constant 2 : index
    %c0_221 = arith.constant 0 : index
    %315 = vector.load %arg6[%c5_219, %c2_220, %c0_221] : memref<8x3x256xf32, #tpu.memory_space<vmem>>, vector<1x1x256xf32>
    %316 = vector.shape_cast %315 : vector<1x1x256xf32> to vector<256xf32>
    %317 = vector.shape_cast %316 : vector<256xf32> to vector<1x256xf32>
    %318 = vector.broadcast %317 : vector<1x256xf32> to vector<8x256xf32>
    %319 = arith.addf %314, %318 : vector<8x256xf32>
    %cst_222 = arith.constant 0.000000e+00 : f32
    %320 = vector.broadcast %cst_222 : f32 to vector<8x256xf32>
    %321 = arith.maximumf %319, %320 : vector<8x256xf32>
    %322 = arith.truncf %321 : vector<8x256xf32> to vector<8x256xbf16>
    %c5_223 = arith.constant 5 : index
    %c0_224 = arith.constant 0 : index
    %c0_225 = arith.constant 0 : index
    %323 = vector.load %arg7[%c5_223, %c0_224, %c0_225] : memref<8x256x128xbf16, #tpu.memory_space<vmem>>, vector<1x256x128xbf16>
    %324 = vector.shape_cast %323 : vector<1x256x128xbf16> to vector<256x128xbf16>
    %cst_226 = arith.constant dense<0.000000e+00> : vector<8x128xf32>
    %325 = tpu.matmul %322, %324, %cst_226 {dimension_numbers = #tpu.dot_dimension_numbers<[1], [0], [0], [1], [0, 0, 1, 1], [], []>} : vector<8x256xbf16>, vector<256x128xbf16>, vector<8x128xf32> -> vector<8x128xf32>
    %c5_227 = arith.constant 5 : index
    %c0_228 = arith.constant 0 : index
    %c0_229 = arith.constant 0 : index
    %326 = vector.load %arg8[%c5_227, %c0_228, %c0_229] : memref<8x1x128xf32, #tpu.memory_space<vmem>>, vector<1x1x128xf32>
    %327 = vector.shape_cast %326 : vector<1x1x128xf32> to vector<128xf32>
    %328 = vector.shape_cast %327 : vector<128xf32> to vector<1x128xf32>
    %329 = vector.broadcast %328 : vector<1x128xf32> to vector<8x128xf32>
    %330 = arith.addf %325, %329 : vector<8x128xf32>
    %cst_230 = arith.constant dense<0xFF800000> : vector<8xf32>
    %331 = vector.multi_reduction <maximumf>, %330, %cst_230 [1] : vector<8x128xf32> to vector<8xf32>
    %332 = vector.shape_cast %331 : vector<8xf32> to vector<8x1xf32>
    %333 = vector.broadcast %332 : vector<8x1xf32> to vector<8x128xf32>
    %334 = arith.subf %330, %333 : vector<8x128xf32>
    %335 = math.exp %334 : vector<8x128xf32>
    %cst_231 = arith.constant dense<0.000000e+00> : vector<8xf32>
    %336 = vector.multi_reduction <add>, %335, %cst_231 [1] : vector<8x128xf32> to vector<8xf32>
    %337 = vector.shape_cast %336 : vector<8xf32> to vector<8x1xf32>
    %338 = math.log %337 : vector<8x1xf32>
    %339 = vector.broadcast %338 : vector<8x1xf32> to vector<8x128xf32>
    %340 = arith.subf %334, %339 : vector<8x128xf32>
    %341 = vector.extract_strided_slice %340 {offsets = [0, 0], sizes = [8, 4], strides = [1, 1]} : vector<8x128xf32> to vector<8x4xf32>
    %c5_232 = arith.constant 5 : index
    %c0_233 = arith.constant 0 : index
    %c0_234 = arith.constant 0 : index
    %342 = vector.load %arg9[%c5_232, %c0_233, %c0_234] : memref<8x8x4xf32, #tpu.memory_space<vmem>>, vector<1x8x4xf32>
    %343 = vector.shape_cast %342 : vector<1x8x4xf32> to vector<8x4xf32>
    %344 = vector.shape_cast %341 : vector<8x4xf32> to vector<1x8x4xf32>
    tpu.vector_store %arg9[%c5_232, %c0_233, %c0_234], %344 {strides = array<i32>} : memref<8x8x4xf32, #tpu.memory_space<vmem>>, vector<1x8x4xf32>,
    %345 = arith.truncf %8 : vector<8x256xf32> to vector<8x256xbf16>
    %c6 = arith.constant 6 : index
    %c0_235 = arith.constant 0 : index
    %c0_236 = arith.constant 0 : index
    %c0_237 = arith.constant 0 : index
    %346 = vector.load %arg5[%c6, %c0_235, %c0_236, %c0_237] : memref<8x3x256x256xbf16, #tpu.memory_space<vmem>>, vector<1x1x256x256xbf16>
    %347 = vector.shape_cast %346 : vector<1x1x256x256xbf16> to vector<256x256xbf16>
    %cst_238 = arith.constant dense<0.000000e+00> : vector<8x256xf32>
    %348 = tpu.matmul %345, %347, %cst_238 {dimension_numbers = #tpu.dot_dimension_numbers<[1], [0], [0], [1], [0, 0, 1, 1], [], []>} : vector<8x256xbf16>, vector<256x256xbf16>, vector<8x256xf32> -> vector<8x256xf32>
    %c6_239 = arith.constant 6 : index
    %c0_240 = arith.constant 0 : index
    %c0_241 = arith.constant 0 : index
    %349 = vector.load %arg6[%c6_239, %c0_240, %c0_241] : memref<8x3x256xf32, #tpu.memory_space<vmem>>, vector<1x1x256xf32>
    %350 = vector.shape_cast %349 : vector<1x1x256xf32> to vector<256xf32>
    %351 = vector.shape_cast %350 : vector<256xf32> to vector<1x256xf32>
    %352 = vector.broadcast %351 : vector<1x256xf32> to vector<8x256xf32>
    %353 = arith.addf %348, %352 : vector<8x256xf32>
    %cst_242 = arith.constant 0.000000e+00 : f32
    %354 = vector.broadcast %cst_242 : f32 to vector<8x256xf32>
    %355 = arith.maximumf %353, %354 : vector<8x256xf32>
    %356 = arith.truncf %355 : vector<8x256xf32> to vector<8x256xbf16>
    %c6_243 = arith.constant 6 : index
    %c1_244 = arith.constant 1 : index
    %c0_245 = arith.constant 0 : index
    %c0_246 = arith.constant 0 : index
    %357 = vector.load %arg5[%c6_243, %c1_244, %c0_245, %c0_246] : memref<8x3x256x256xbf16, #tpu.memory_space<vmem>>, vector<1x1x256x256xbf16>
    %358 = vector.shape_cast %357 : vector<1x1x256x256xbf16> to vector<256x256xbf16>
    %cst_247 = arith.constant dense<0.000000e+00> : vector<8x256xf32>
    %359 = tpu.matmul %356, %358, %cst_247 {dimension_numbers = #tpu.dot_dimension_numbers<[1], [0], [0], [1], [0, 0, 1, 1], [], []>} : vector<8x256xbf16>, vector<256x256xbf16>, vector<8x256xf32> -> vector<8x256xf32>
    %c6_248 = arith.constant 6 : index
    %c1_249 = arith.constant 1 : index
    %c0_250 = arith.constant 0 : index
    %360 = vector.load %arg6[%c6_248, %c1_249, %c0_250] : memref<8x3x256xf32, #tpu.memory_space<vmem>>, vector<1x1x256xf32>
    %361 = vector.shape_cast %360 : vector<1x1x256xf32> to vector<256xf32>
    %362 = vector.shape_cast %361 : vector<256xf32> to vector<1x256xf32>
    %363 = vector.broadcast %362 : vector<1x256xf32> to vector<8x256xf32>
    %364 = arith.addf %359, %363 : vector<8x256xf32>
    %cst_251 = arith.constant 0.000000e+00 : f32
    %365 = vector.broadcast %cst_251 : f32 to vector<8x256xf32>
    %366 = arith.maximumf %364, %365 : vector<8x256xf32>
    %367 = arith.truncf %366 : vector<8x256xf32> to vector<8x256xbf16>
    %c6_252 = arith.constant 6 : index
    %c2_253 = arith.constant 2 : index
    %c0_254 = arith.constant 0 : index
    %c0_255 = arith.constant 0 : index
    %368 = vector.load %arg5[%c6_252, %c2_253, %c0_254, %c0_255] : memref<8x3x256x256xbf16, #tpu.memory_space<vmem>>, vector<1x1x256x256xbf16>
    %369 = vector.shape_cast %368 : vector<1x1x256x256xbf16> to vector<256x256xbf16>
    %cst_256 = arith.constant dense<0.000000e+00> : vector<8x256xf32>
    %370 = tpu.matmul %367, %369, %cst_256 {dimension_numbers = #tpu.dot_dimension_numbers<[1], [0], [0], [1], [0, 0, 1, 1], [], []>} : vector<8x256xbf16>, vector<256x256xbf16>, vector<8x256xf32> -> vector<8x256xf32>
    %c6_257 = arith.constant 6 : index
    %c2_258 = arith.constant 2 : index
    %c0_259 = arith.constant 0 : index
    %371 = vector.load %arg6[%c6_257, %c2_258, %c0_259] : memref<8x3x256xf32, #tpu.memory_space<vmem>>, vector<1x1x256xf32>
    %372 = vector.shape_cast %371 : vector<1x1x256xf32> to vector<256xf32>
    %373 = vector.shape_cast %372 : vector<256xf32> to vector<1x256xf32>
    %374 = vector.broadcast %373 : vector<1x256xf32> to vector<8x256xf32>
    %375 = arith.addf %370, %374 : vector<8x256xf32>
    %cst_260 = arith.constant 0.000000e+00 : f32
    %376 = vector.broadcast %cst_260 : f32 to vector<8x256xf32>
    %377 = arith.maximumf %375, %376 : vector<8x256xf32>
    %378 = arith.truncf %377 : vector<8x256xf32> to vector<8x256xbf16>
    %c6_261 = arith.constant 6 : index
    %c0_262 = arith.constant 0 : index
    %c0_263 = arith.constant 0 : index
    %379 = vector.load %arg7[%c6_261, %c0_262, %c0_263] : memref<8x256x128xbf16, #tpu.memory_space<vmem>>, vector<1x256x128xbf16>
    %380 = vector.shape_cast %379 : vector<1x256x128xbf16> to vector<256x128xbf16>
    %cst_264 = arith.constant dense<0.000000e+00> : vector<8x128xf32>
    %381 = tpu.matmul %378, %380, %cst_264 {dimension_numbers = #tpu.dot_dimension_numbers<[1], [0], [0], [1], [0, 0, 1, 1], [], []>} : vector<8x256xbf16>, vector<256x128xbf16>, vector<8x128xf32> -> vector<8x128xf32>
    %c6_265 = arith.constant 6 : index
    %c0_266 = arith.constant 0 : index
    %c0_267 = arith.constant 0 : index
    %382 = vector.load %arg8[%c6_265, %c0_266, %c0_267] : memref<8x1x128xf32, #tpu.memory_space<vmem>>, vector<1x1x128xf32>
    %383 = vector.shape_cast %382 : vector<1x1x128xf32> to vector<128xf32>
    %384 = vector.shape_cast %383 : vector<128xf32> to vector<1x128xf32>
    %385 = vector.broadcast %384 : vector<1x128xf32> to vector<8x128xf32>
    %386 = arith.addf %381, %385 : vector<8x128xf32>
    %cst_268 = arith.constant dense<0xFF800000> : vector<8xf32>
    %387 = vector.multi_reduction <maximumf>, %386, %cst_268 [1] : vector<8x128xf32> to vector<8xf32>
    %388 = vector.shape_cast %387 : vector<8xf32> to vector<8x1xf32>
    %389 = vector.broadcast %388 : vector<8x1xf32> to vector<8x128xf32>
    %390 = arith.subf %386, %389 : vector<8x128xf32>
    %391 = math.exp %390 : vector<8x128xf32>
    %cst_269 = arith.constant dense<0.000000e+00> : vector<8xf32>
    %392 = vector.multi_reduction <add>, %391, %cst_269 [1] : vector<8x128xf32> to vector<8xf32>
    %393 = vector.shape_cast %392 : vector<8xf32> to vector<8x1xf32>
    %394 = math.log %393 : vector<8x1xf32>
    %395 = vector.broadcast %394 : vector<8x1xf32> to vector<8x128xf32>
    %396 = arith.subf %390, %395 : vector<8x128xf32>
    %397 = vector.extract_strided_slice %396 {offsets = [0, 0], sizes = [8, 4], strides = [1, 1]} : vector<8x128xf32> to vector<8x4xf32>
    %c6_270 = arith.constant 6 : index
    %c0_271 = arith.constant 0 : index
    %c0_272 = arith.constant 0 : index
    %398 = vector.load %arg9[%c6_270, %c0_271, %c0_272] : memref<8x8x4xf32, #tpu.memory_space<vmem>>, vector<1x8x4xf32>
    %399 = vector.shape_cast %398 : vector<1x8x4xf32> to vector<8x4xf32>
    %400 = vector.shape_cast %397 : vector<8x4xf32> to vector<1x8x4xf32>
    tpu.vector_store %arg9[%c6_270, %c0_271, %c0_272], %400 {strides = array<i32>} : memref<8x8x4xf32, #tpu.memory_space<vmem>>, vector<1x8x4xf32>,
    %401 = arith.truncf %8 : vector<8x256xf32> to vector<8x256xbf16>
    %c7 = arith.constant 7 : index
    %c0_273 = arith.constant 0 : index
    %c0_274 = arith.constant 0 : index
    %c0_275 = arith.constant 0 : index
    %402 = vector.load %arg5[%c7, %c0_273, %c0_274, %c0_275] : memref<8x3x256x256xbf16, #tpu.memory_space<vmem>>, vector<1x1x256x256xbf16>
    %403 = vector.shape_cast %402 : vector<1x1x256x256xbf16> to vector<256x256xbf16>
    %cst_276 = arith.constant dense<0.000000e+00> : vector<8x256xf32>
    %404 = tpu.matmul %401, %403, %cst_276 {dimension_numbers = #tpu.dot_dimension_numbers<[1], [0], [0], [1], [0, 0, 1, 1], [], []>} : vector<8x256xbf16>, vector<256x256xbf16>, vector<8x256xf32> -> vector<8x256xf32>
    %c7_277 = arith.constant 7 : index
    %c0_278 = arith.constant 0 : index
    %c0_279 = arith.constant 0 : index
    %405 = vector.load %arg6[%c7_277, %c0_278, %c0_279] : memref<8x3x256xf32, #tpu.memory_space<vmem>>, vector<1x1x256xf32>
    %406 = vector.shape_cast %405 : vector<1x1x256xf32> to vector<256xf32>
    %407 = vector.shape_cast %406 : vector<256xf32> to vector<1x256xf32>
    %408 = vector.broadcast %407 : vector<1x256xf32> to vector<8x256xf32>
    %409 = arith.addf %404, %408 : vector<8x256xf32>
    %cst_280 = arith.constant 0.000000e+00 : f32
    %410 = vector.broadcast %cst_280 : f32 to vector<8x256xf32>
    %411 = arith.maximumf %409, %410 : vector<8x256xf32>
    %412 = arith.truncf %411 : vector<8x256xf32> to vector<8x256xbf16>
    %c7_281 = arith.constant 7 : index
    %c1_282 = arith.constant 1 : index
    %c0_283 = arith.constant 0 : index
    %c0_284 = arith.constant 0 : index
    %413 = vector.load %arg5[%c7_281, %c1_282, %c0_283, %c0_284] : memref<8x3x256x256xbf16, #tpu.memory_space<vmem>>, vector<1x1x256x256xbf16>
    %414 = vector.shape_cast %413 : vector<1x1x256x256xbf16> to vector<256x256xbf16>
    %cst_285 = arith.constant dense<0.000000e+00> : vector<8x256xf32>
    %415 = tpu.matmul %412, %414, %cst_285 {dimension_numbers = #tpu.dot_dimension_numbers<[1], [0], [0], [1], [0, 0, 1, 1], [], []>} : vector<8x256xbf16>, vector<256x256xbf16>, vector<8x256xf32> -> vector<8x256xf32>
    %c7_286 = arith.constant 7 : index
    %c1_287 = arith.constant 1 : index
    %c0_288 = arith.constant 0 : index
    %416 = vector.load %arg6[%c7_286, %c1_287, %c0_288] : memref<8x3x256xf32, #tpu.memory_space<vmem>>, vector<1x1x256xf32>
    %417 = vector.shape_cast %416 : vector<1x1x256xf32> to vector<256xf32>
    %418 = vector.shape_cast %417 : vector<256xf32> to vector<1x256xf32>
    %419 = vector.broadcast %418 : vector<1x256xf32> to vector<8x256xf32>
    %420 = arith.addf %415, %419 : vector<8x256xf32>
    %cst_289 = arith.constant 0.000000e+00 : f32
    %421 = vector.broadcast %cst_289 : f32 to vector<8x256xf32>
    %422 = arith.maximumf %420, %421 : vector<8x256xf32>
    %423 = arith.truncf %422 : vector<8x256xf32> to vector<8x256xbf16>
    %c7_290 = arith.constant 7 : index
    %c2_291 = arith.constant 2 : index
    %c0_292 = arith.constant 0 : index
    %c0_293 = arith.constant 0 : index
    %424 = vector.load %arg5[%c7_290, %c2_291, %c0_292, %c0_293] : memref<8x3x256x256xbf16, #tpu.memory_space<vmem>>, vector<1x1x256x256xbf16>
    %425 = vector.shape_cast %424 : vector<1x1x256x256xbf16> to vector<256x256xbf16>
    %cst_294 = arith.constant dense<0.000000e+00> : vector<8x256xf32>
    %426 = tpu.matmul %423, %425, %cst_294 {dimension_numbers = #tpu.dot_dimension_numbers<[1], [0], [0], [1], [0, 0, 1, 1], [], []>} : vector<8x256xbf16>, vector<256x256xbf16>, vector<8x256xf32> -> vector<8x256xf32>
    %c7_295 = arith.constant 7 : index
    %c2_296 = arith.constant 2 : index
    %c0_297 = arith.constant 0 : index
    %427 = vector.load %arg6[%c7_295, %c2_296, %c0_297] : memref<8x3x256xf32, #tpu.memory_space<vmem>>, vector<1x1x256xf32>
    %428 = vector.shape_cast %427 : vector<1x1x256xf32> to vector<256xf32>
    %429 = vector.shape_cast %428 : vector<256xf32> to vector<1x256xf32>
    %430 = vector.broadcast %429 : vector<1x256xf32> to vector<8x256xf32>
    %431 = arith.addf %426, %430 : vector<8x256xf32>
    %cst_298 = arith.constant 0.000000e+00 : f32
    %432 = vector.broadcast %cst_298 : f32 to vector<8x256xf32>
    %433 = arith.maximumf %431, %432 : vector<8x256xf32>
    %434 = arith.truncf %433 : vector<8x256xf32> to vector<8x256xbf16>
    %c7_299 = arith.constant 7 : index
    %c0_300 = arith.constant 0 : index
    %c0_301 = arith.constant 0 : index
    %435 = vector.load %arg7[%c7_299, %c0_300, %c0_301] : memref<8x256x128xbf16, #tpu.memory_space<vmem>>, vector<1x256x128xbf16>
    %436 = vector.shape_cast %435 : vector<1x256x128xbf16> to vector<256x128xbf16>
    %cst_302 = arith.constant dense<0.000000e+00> : vector<8x128xf32>
    %437 = tpu.matmul %434, %436, %cst_302 {dimension_numbers = #tpu.dot_dimension_numbers<[1], [0], [0], [1], [0, 0, 1, 1], [], []>} : vector<8x256xbf16>, vector<256x128xbf16>, vector<8x128xf32> -> vector<8x128xf32>
    %c7_303 = arith.constant 7 : index
    %c0_304 = arith.constant 0 : index
    %c0_305 = arith.constant 0 : index
    %438 = vector.load %arg8[%c7_303, %c0_304, %c0_305] : memref<8x1x128xf32, #tpu.memory_space<vmem>>, vector<1x1x128xf32>
    %439 = vector.shape_cast %438 : vector<1x1x128xf32> to vector<128xf32>
    %440 = vector.shape_cast %439 : vector<128xf32> to vector<1x128xf32>
    %441 = vector.broadcast %440 : vector<1x128xf32> to vector<8x128xf32>
    %442 = arith.addf %437, %441 : vector<8x128xf32>
    %cst_306 = arith.constant dense<0xFF800000> : vector<8xf32>
    %443 = vector.multi_reduction <maximumf>, %442, %cst_306 [1] : vector<8x128xf32> to vector<8xf32>
    %444 = vector.shape_cast %443 : vector<8xf32> to vector<8x1xf32>
    %445 = vector.broadcast %444 : vector<8x1xf32> to vector<8x128xf32>
    %446 = arith.subf %442, %445 : vector<8x128xf32>
    %447 = math.exp %446 : vector<8x128xf32>
    %cst_307 = arith.constant dense<0.000000e+00> : vector<8xf32>
    %448 = vector.multi_reduction <add>, %447, %cst_307 [1] : vector<8x128xf32> to vector<8xf32>
    %449 = vector.shape_cast %448 : vector<8xf32> to vector<8x1xf32>
    %450 = math.log %449 : vector<8x1xf32>
    %451 = vector.broadcast %450 : vector<8x1xf32> to vector<8x128xf32>
    %452 = arith.subf %446, %451 : vector<8x128xf32>
    %453 = vector.extract_strided_slice %452 {offsets = [0, 0], sizes = [8, 4], strides = [1, 1]} : vector<8x128xf32> to vector<8x4xf32>
    %c7_308 = arith.constant 7 : index
    %c0_309 = arith.constant 0 : index
    %c0_310 = arith.constant 0 : index
    %454 = vector.load %arg9[%c7_308, %c0_309, %c0_310] : memref<8x8x4xf32, #tpu.memory_space<vmem>>, vector<1x8x4xf32>
    %455 = vector.shape_cast %454 : vector<1x8x4xf32> to vector<8x4xf32>
    %456 = vector.shape_cast %453 : vector<8x4xf32> to vector<1x8x4xf32>
    tpu.vector_store %arg9[%c7_308, %c0_309, %c0_310], %456 {strides = array<i32>} : memref<8x8x4xf32, #tpu.memory_space<vmem>>, vector<1x8x4xf32>,
    return
  }
  func.func @transform_0(%arg0: i32, %arg1: i32) -> (i32, i32) {
    %c0_i32 = arith.constant 0 : i32
    %c0_i32_0 = arith.constant 0 : i32
    return %arg1, %c0_i32 : i32, i32
  }
  func.func @transform_1(%arg0: i32, %arg1: i32) -> (i32, i32) {
    %c0_i32 = arith.constant 0 : i32
    %c0_i32_0 = arith.constant 0 : i32
    %c0_i32_1 = arith.constant 0 : i32
    return %c0_i32, %c0_i32_0 : i32, i32
  }
  func.func @transform_2(%arg0: i32, %arg1: i32) -> (i32, i32) {
    %c0_i32 = arith.constant 0 : i32
    %c0_i32_0 = arith.constant 0 : i32
    %c0_i32_1 = arith.constant 0 : i32
    return %c0_i32, %c0_i32_0 : i32, i32
  }
  func.func @transform_3(%arg0: i32, %arg1: i32) -> (i32, i32, i32, i32) {
    %c0_i32 = arith.constant 0 : i32
    %c0_i32_0 = arith.constant 0 : i32
    %c0_i32_1 = arith.constant 0 : i32
    %c0_i32_2 = arith.constant 0 : i32
    return %arg0, %c0_i32, %c0_i32_0, %c0_i32_1 : i32, i32, i32, i32
  }
  func.func @transform_4(%arg0: i32, %arg1: i32) -> (i32, i32, i32) {
    %c0_i32 = arith.constant 0 : i32
    %c0_i32_0 = arith.constant 0 : i32
    %c0_i32_1 = arith.constant 0 : i32
    return %arg0, %c0_i32, %c0_i32_0 : i32, i32, i32
  }
  func.func @transform_5(%arg0: i32, %arg1: i32) -> (i32, i32, i32) {
    %c0_i32 = arith.constant 0 : i32
    %c0_i32_0 = arith.constant 0 : i32
    %c0_i32_1 = arith.constant 0 : i32
    return %arg0, %c0_i32, %c0_i32_0 : i32, i32, i32
  }
  func.func @transform_6(%arg0: i32, %arg1: i32) -> (i32, i32, i32) {
    %c0_i32 = arith.constant 0 : i32
    %c0_i32_0 = arith.constant 0 : i32
    %c0_i32_1 = arith.constant 0 : i32
    return %arg0, %c0_i32, %c0_i32_0 : i32, i32, i32
  }
  func.func @transform_7(%arg0: i32, %arg1: i32) -> (i32, i32, i32) {
    %c0_i32 = arith.constant 0 : i32
    %c0_i32_0 = arith.constant 0 : i32
    return %arg0, %arg1, %c0_i32 : i32, i32, i32
  }
}

</mosaic_0001>

<llo_original>
// kernel: fully_connected2_forward.1
$region0: #{fully_connected2_forward.1}
  #allocation0 [shape = 'u32[]', space=smem, size = 0x4, offset = 0x4, fixed_abs, tag = 'smem constant byte address 0x4 - core index']
  #allocation1 [shape = 'u32[144,128]{1,0:T(1,128)}', space=vmem, size = 0x12000, scoped, tag = 'internal scratch']
  %s0 = inlined_call_operand.vmem [shape: f32[8,84], index: 0, kind: input, shape index: {}]
  %s1 = inlined_call_operand.hbm [shape: bf16[84,256], index: 1, kind: input, shape index: {}]
  %s2 = inlined_call_operand.hbm [shape: f32[1,256], index: 2, kind: input, shape index: {}]
  %s3 = inlined_call_operand.hbm [shape: bf16[8,3,256,256], index: 3, kind: input, shape index: {}]
  %s4 = inlined_call_operand.vmem [shape: f32[8,3,256], index: 4, kind: input, shape index: {}]
  %s5 = inlined_call_operand.hbm [shape: bf16[8,256,128], index: 5, kind: input, shape index: {}]
  %s6 = inlined_call_operand.hbm [shape: f32[8,1,128], index: 6, kind: input, shape index: {}]
  %s7 = inlined_call_operand.vmem [shape: f32[8,8,4], index: 7, kind: output, shape index: {}]
  %s8 = sld [smem:[#allocation0]]
  $region58: #{fully_connected2_forward.1} parent=0
    _
  %s10 = ssub.s32 1, %s8
  %s11 = scalar_select 0, %s10, %s8
  $region1: #{fully_connected2_forward.1} parent=0
    #allocation2 [shape = 'u8[45056]{0}', space=vmem, size = 0xb000, scoped, tag = 'input window, operand 1, single buffered']
    #allocation3 [shape = 's32[1]{0}', space=sflag, size = 0x4, scoped, tag = 'scoped memory for fully_connected2_forward.1']
    #allocation4 [shape = 'u8[1024]{0}', space=vmem, size = 0x400, scoped, tag = 'input window, operand 2, single buffered']
    #allocation5 [shape = 's32[1]{0}', space=sflag, size = 0x4, scoped, tag = 'scoped memory for fully_connected2_forward.1']
    #allocation6 [shape = 'u8[3145728]{0}', space=vmem, size = 0x300000, scoped, tag = 'input window, operand 3, single buffered']
    #allocation7 [shape = 'u8[524288]{0}', space=vmem, size = 0x80000, scoped, tag = 'input window, operand 5, single buffered']
    #allocation8 [shape = 's32[1]{0}', space=sflag, size = 0x4, scoped, tag = 'scoped memory for fully_connected2_forward.1']
    #allocation9 [shape = 'u8[4096]{0}', space=vmem, size = 0x1000, scoped, tag = 'input window, operand 6, single buffered']
    %12 = vsyncpa [#allocation3], 0
    %13 = vsyncpa [#allocation5], 0
    %14 = vsyncpa [#allocation8], 0
    // Predicated region
    $region2: #{fully_connected2_forward.1} parent=1 // pred_check
      _
    $region3: #{fully_connected2_forward.1} parent=1 // pred_check_branch
      %16 = sbr.rel (0) target = $region5
    $region4: #{fully_connected2_forward.1} parent=1 // pred_region
      _
    $region5: #{fully_connected2_forward.1} parent=1 // pred_fallthru
      _
    // Predicated region
    $region6: #{fully_connected2_forward.1} parent=1 // pred_check
      _
    $region7: #{fully_connected2_forward.1} parent=1 // pred_check_branch
      %18 = sbr.rel (0) target = $region9
    $region8: #{fully_connected2_forward.1} parent=1 // pred_region
      %s20 = ssub.s32 1408, 1408
      %21 = vsyncadd [#allocation3], %s20
      %s22 = sshll.u32 [#allocation2], 4
      %s23 = int_to_ptr.vmem [resolvable:$true] %s22
      %28 = dma.hbm_to_vmem [thread:$0]  %s1, 1408, %s23, [#allocation3], 128, 128, 8
    $region9: #{fully_connected2_forward.1} parent=1 // pred_fallthru
      _
    // Predicated region
    $region10: #{fully_connected2_forward.1} parent=1 // pred_check
      _
    $region11: #{fully_connected2_forward.1} parent=1 // pred_check_branch
      %30 = sbr.rel (0) target = $region13
    $region12: #{fully_connected2_forward.1} parent=1 // pred_region
      %s32 = ssub.s32 32, 32
      %33 = vsyncadd [#allocation5], %s32
      %s35 = sshll.u32 [#allocation4], 4
      %s36 = int_to_ptr.vmem [resolvable:$true] %s35
      %38 = dma.hbm_to_vmem [thread:$0]  %s2, 32, %s36, [#allocation5]
    $region13: #{fully_connected2_forward.1} parent=1 // pred_fallthru
      _
    // Predicated region
    $region14: #{fully_connected2_forward.1} parent=1 // pred_check
      _
    $region15: #{fully_connected2_forward.1} parent=1 // pred_check_branch
      %40 = sbr.rel (0) target = $region17
    $region16: #{fully_connected2_forward.1} parent=1 // pred_region
      %s42 = ssub.s32 98304, 98304
      %43 = vsyncadd [#allocation5], %s42
      %s44 = sshll.u32 [#allocation6], 4
      %s45 = int_to_ptr.vmem [resolvable:$true] %s44
      %50 = dma.hbm_to_vmem [thread:$0]  %s3, 98304, %s45, [#allocation5], 128, 128, 8
    $region17: #{fully_connected2_forward.1} parent=1 // pred_fallthru
      _
    // Predicated region
    $region18: #{fully_connected2_forward.1} parent=1 // pred_check
      _
    $region19: #{fully_connected2_forward.1} parent=1 // pred_check_branch
      %52 = sbr.rel (0) target = $region21
    $region20: #{fully_connected2_forward.1} parent=1 // pred_region
      _
    $region21: #{fully_connected2_forward.1} parent=1 // pred_fallthru
      _
    // Predicated region
    $region22: #{fully_connected2_forward.1} parent=1 // pred_check
      _
    $region23: #{fully_connected2_forward.1} parent=1 // pred_check_branch
      %54 = sbr.rel (0) target = $region25
    $region24: #{fully_connected2_forward.1} parent=1 // pred_region
      %s56 = ssub.s32 16384, 16384
      %57 = vsyncadd [#allocation8], %s56
      %s58 = sshll.u32 [#allocation7], 4
      %s59 = int_to_ptr.vmem [resolvable:$true] %s58
      %64 = dma.hbm_to_vmem [thread:$0]  %s5, 16384, %s59, [#allocation8], 64, 64, 4
    $region25: #{fully_connected2_forward.1} parent=1 // pred_fallthru
      _
    // Predicated region
    $region26: #{fully_connected2_forward.1} parent=1 // pred_check
      _
    $region27: #{fully_connected2_forward.1} parent=1 // pred_check_branch
      %66 = sbr.rel (0) target = $region29
    $region28: #{fully_connected2_forward.1} parent=1 // pred_region
      %s68 = ssub.s32 128, 128
      %69 = vsyncadd [#allocation8], %s68
      %s70 = sshll.u32 [#allocation9], 4
      %s71 = int_to_ptr.vmem [resolvable:$true] %s70
      %76 = dma.hbm_to_vmem [thread:$0]  %s6, 128, %s71, [#allocation8], 16, 16, 1
    $region29: #{fully_connected2_forward.1} parent=1 // pred_fallthru
      _
    // Predicated region
    $region30: #{fully_connected2_forward.1} parent=1 // pred_check
      _
    $region31: #{fully_connected2_forward.1} parent=1 // pred_check_branch
      %78 = sbr.rel (0) target = $region33
    $region32: #{fully_connected2_forward.1} parent=1 // pred_region
      %79 = dma.done [#allocation3], 1408
    $region33: #{fully_connected2_forward.1} parent=1 // pred_fallthru
      _
    // Predicated region
    $region34: #{fully_connected2_forward.1} parent=1 // pred_check
      _
    $region35: #{fully_connected2_forward.1} parent=1 // pred_check_branch
      %81 = sbr.rel (0) target = $region37
    $region36: #{fully_connected2_forward.1} parent=1 // pred_region
      %82 = dma.done [#allocation5], 32
    $region37: #{fully_connected2_forward.1} parent=1 // pred_fallthru
      _
    // Predicated region
    $region38: #{fully_connected2_forward.1} parent=1 // pred_check
      _
    $region39: #{fully_connected2_forward.1} parent=1 // pred_check_branch
      %84 = sbr.rel (0) target = $region41
    $region40: #{fully_connected2_forward.1} parent=1 // pred_region
      %85 = dma.done [#allocation5], 98304
    $region41: #{fully_connected2_forward.1} parent=1 // pred_fallthru
      _
    // Predicated region
    $region42: #{fully_connected2_forward.1} parent=1 // pred_check
      _
    $region43: #{fully_connected2_forward.1} parent=1 // pred_check_branch
      %87 = sbr.rel (0) target = $region45
    $region44: #{fully_connected2_forward.1} parent=1 // pred_region
      %88 = dma.done [#allocation8], 16384
    $region45: #{fully_connected2_forward.1} parent=1 // pred_fallthru
      _
    // Predicated region
    $region46: #{fully_connected2_forward.1} parent=1 // pred_check
      _
    $region47: #{fully_connected2_forward.1} parent=1 // pred_check_branch
      %90 = sbr.rel (0) target = $region49
    $region48: #{fully_connected2_forward.1} parent=1 // pred_region
      %91 = dma.done [#allocation8], 128
    $region49: #{fully_connected2_forward.1} parent=1 // pred_fallthru
      _
    %v93 = vld [vmem:[%s0] sm:$0xff]
    %v94 = vpack.c.bf16 %v93, %v93
    %v95 = vld [vmem:[#allocation2] sm:$0xff]
    %v96 = vld [vmem:[#allocation2 + $0x8] sm:$0xff]
    %v97 = vld [vmem:[#allocation2 + $0x10] sm:$0xff]
    %v98 = vld [vmem:[#allocation2 + $0x18] sm:$0xff]
    %v99 = vld [vmem:[#allocation2 + $0x20] sm:$0xff]
    %v100 = vld [vmem:[#allocation2 + $0x28] sm:$0xff]
    %v101 = vld [vmem:[#allocation2 + $0x30] sm:$0xff]
    %v102 = vld [vmem:[#allocation2 + $0x38] sm:$0xff]
    %v103 = vld [vmem:[#allocation2 + $0x40] sm:$0xff]
    %v104 = vld [vmem:[#allocation2 + $0x48] sm:$0xff]
    %v105 = vld [vmem:[#allocation2 + $0x50] sm:$0x33]
    %v106 = vld [vmem:[#allocation4] sm:$0x3]
    %v108 = vlaneseq
    %v109 = vshrl.u32 %v108, 7
    %v110 = vsub.s32 0, %v109
    %v111 = vrot.slane %v106, %v110
    %v112 = vlaneseq
    %v113 = vshrl.u32 %v112, 7
    %v114 = vsub.s32 1, %v113
    %v115 = vrot.slane %v106, %v114
    %v129 = vunpack.c.l.b16 %v95
    %v130 = vunpack.c.h.b16 %v95
    %v131 = vunpack.c.l.b16 %v96
    %v132 = vunpack.c.h.b16 %v96
    %v133 = vunpack.c.l.b16 %v97
    %v134 = vunpack.c.h.b16 %v97
    %v135 = vunpack.c.l.b16 %v98
    %v136 = vunpack.c.h.b16 %v98
    %v137 = vunpack.c.l.b16 %v99
    %v138 = vunpack.c.h.b16 %v99
    %v139 = vunpack.c.l.b16 %v100
    %v140 = vunpack.c.h.b16 %v100
    %v141 = vunpack.c.l.b16 %v101
    %v142 = vunpack.c.h.b16 %v101
    %v143 = vunpack.c.l.b16 %v102
    %v144 = vunpack.c.h.b16 %v102
    %v145 = vunpack.c.l.b16 %v103
    %v146 = vunpack.c.h.b16 %v103
    %v147 = vunpack.c.l.b16 %v104
    %v148 = vunpack.c.h.b16 %v104
    %v149 = vunpack.c.l.b16 %v105
    %v150 = vunpack.c.h.b16 %v105
    %v151 = vpack.c.b16 %v131, %v129
    %v152 = vpack.c.b16 %v132, %v130
    %v153 = vpack.c.b16 %v135, %v133
    %v154 = vpack.c.b16 %v136, %v134
    %v155 = vpack.c.b16 %v139, %v137
    %v156 = vpack.c.b16 %v140, %v138
    %v157 = vpack.c.b16 %v143, %v141
    %v158 = vpack.c.b16 %v144, %v142
    %v159 = vpack.c.b16 %v147, %v145
    %v160 = vpack.c.b16 %v148, %v146
    %v161 = vpack.c.b16 %v149, %v149
    %v162 = vpack.c.b16 %v150, %v150
    %vm173 = vcmask 687104
    %v175 = vsel %vm173, %v94, 0
    %vm177 = vcmask 1041408
    %v179 = vsel %vm177, %v161, 0
    %v182 = vsel %vm177, %v162, 0
    %184 = vmatprep.subr.bf16.mxu0 0
    %185 = vmatpush1.bf16.msra.mxu0 0
    %186 = vmatprep.subr.bf16.mxu0 0
    %187 = vmatpush1.bf16.msra.mxu0 0
    %188 = vmatprep.subr.bf16.mxu0 %v182
    %189 = vmatpush1.bf16.msra.mxu0 %v179
    %190 = vmatprep.subr.bf16.mxu0 %v160
    %191 = vmatpush1.bf16.msra.mxu0 %v159
    %192 = vmatprep.subr.bf16.mxu0 %v158
    %193 = vmatpush1.bf16.msra.mxu0 %v157
    %194 = vmatprep.subr.bf16.mxu0 %v156
    %195 = vmatpush1.bf16.msra.mxu0 %v155
    %196 = vmatprep.subr.bf16.mxu0 %v154
    %197 = vmatpush1.bf16.msra.mxu0 %v153
    %198 = vmatprep.subr.bf16.mxu0 %v152
    %199 = vmatpush1.bf16.msra.mxu0 %v151
    %200 = vmatprep.subr.bf16.mxu0 0
    %201 = vmatpush2.bf16.msra.mxu0 0
    %202 = vmatprep.subr.bf16.mxu0 0
    %203 = vmatpush2.bf16.msra.mxu0 0
    %204 = vmatprep.subr.bf16.mxu0 0
    %205 = vmatpush2.bf16.msra.mxu0 0
    %206 = vmatprep.subr.bf16.mxu0 0
    %207 = vmatpush2.bf16.msra.mxu0 0
    %208 = vmatprep.subr.bf16.mxu0 0
    %209 = vmatpush2.bf16.msra.mxu0 0
    %210 = vmatprep.subr.bf16.mxu0 0
    %211 = vmatpush2.bf16.msra.mxu0 0
    %212 = vmatprep.subr.bf16.mxu0 0
    %213 = vmatpush2.bf16.msra.mxu0 0
    %214 = vmatprep.subr.bf16.mxu0 0
    %215 = vmatpush2.bf16.msra.mxu0 0
    %216 = vmatprep.mubr.bf16.mxu0 0
    %217 = vmatmul.mubr.bf16.gmra.mxu0 %v175
    %v218 = vpop.f32.mrf.mxu0
    %v219 = vadd.f32 %v111, %v218
    %v220 = vpop.f32.mrf.mxu0
    %v221 = vadd.f32 %v115, %v220
    %v222 = vpop.f32.mrf.mxu0
    %v223 = vpop.f32.mrf.mxu0
    %224 = vdwg.mxu0
    %v225 = vmax.f32 %v219, 0.0
    %v226 = vmax.f32 %v221, 0.0
    %v227 = vpack.c.bf16 %v225, %v225
    %v228 = vpack.c.bf16 %v226, %v226
    %v229 = vld [vmem:[#allocation6] sm:$0xff]
    %v230 = vld [vmem:[#allocation6 + $0x8] sm:$0xff]
    %v231 = vld [vmem:[#allocation6 + $0x10] sm:$0xff]
    %v232 = vld [vmem:[#allocation6 + $0x18] sm:$0xff]
    %v233 = vld [vmem:[#allocation6 + $0x20] sm:$0xff]
    %v234 = vld [vmem:[#allocation6 + $0x28] sm:$0xff]
    %v235 = vld [vmem:[#allocation6 + $0x30] sm:$0xff]
    %v236 = vld [vmem:[#allocation6 + $0x38] sm:$0xff]
    %v237 = vld [vmem:[#allocation6 + $0x40] sm:$0xff]
    %v238 = vld [vmem:[#allocation6 + $0x48] sm:$0xff]
    %v239 = vld [vmem:[#allocation6 + $0x50] sm:$0xff]
    %v240 = vld [vmem:[#allocation6 + $0x58] sm:$0xff]
    %v241 = vld [vmem:[#allocation6 + $0x60] sm:$0xff]
    %v242 = vld [vmem:[#allocation6 + $0x68] sm:$0xff]
    %v243 = vld [vmem:[#allocation6 + $0x70] sm:$0xff]
    %v244 = vld [vmem:[#allocation6 + $0x78] sm:$0xff]
    %v245 = vld [vmem:[#allocation6 + $0x80] sm:$0xff]
    %v246 = vld [vmem:[#allocation6 + $0x88] sm:$0xff]
    %v247 = vld [vmem:[#allocation6 + $0x90] sm:$0xff]
    %v248 = vld [vmem:[#allocation6 + $0x98] sm:$0xff]
    %v249 = vld [vmem:[#allocation6 + $0xa0] sm:$0xff]
    %v250 = vld [vmem:[#allocation6 + $0xa8] sm:$0xff]
    %v251 = vld [vmem:[#allocation6 + $0xb0] sm:$0xff]
    %v252 = vld [vmem:[#allocation6 + $0xb8] sm:$0xff]
    %v253 = vld [vmem:[#allocation6 + $0xc0] sm:$0xff]
    %v254 = vld [vmem:[#allocation6 + $0xc8] sm:$0xff]
    %v255 = vld [vmem:[#allocation6 + $0xd0] sm:$0xff]
    %v256 = vld [vmem:[#allocation6 + $0xd8] sm:$0xff]
    %v257 = vld [vmem:[#allocation6 + $0xe0] sm:$0xff]
    %v258 = vld [vmem:[#allocation6 + $0xe8] sm:$0xff]
    %v259 = vld [vmem:[#allocation6 + $0xf0] sm:$0xff]
    %v260 = vld [vmem:[#allocation6 + $0xf8] sm:$0xff]
    %v261 = vld [vmem:[%s4] ss:$4 sm:$0x3]
    %v263 = vlaneseq
    %v264 = vshrl.u32 %v263, 7
    %v265 = vsub.s32 0, %v264
    %v266 = vrot.slane %v261, %v265
    %v267 = vlaneseq
    %v268 = vshrl.u32 %v267, 7
    %v269 = vsub.s32 1, %v268
    %v270 = vrot.slane %v261, %v269
    %v305 = vunpack.c.l.b16 %v229
    %v306 = vunpack.c.h.b16 %v229
    %v307 = vunpack.c.l.b16 %v230
    %v308 = vunpack.c.h.b16 %v230
    %v309 = vunpack.c.l.b16 %v231
    %v310 = vunpack.c.h.b16 %v231
    %v311 = vunpack.c.l.b16 %v232
    %v312 = vunpack.c.h.b16 %v232
    %v313 = vunpack.c.l.b16 %v233
    %v314 = vunpack.c.h.b16 %v233
    %v315 = vunpack.c.l.b16 %v234
    %v316 = vunpack.c.h.b16 %v234
    %v317 = vunpack.c.l.b16 %v235
    %v318 = vunpack.c.h.b16 %v235
    %v319 = vunpack.c.l.b16 %v236
    %v320 = vunpack.c.h.b16 %v236
    %v321 = vunpack.c.l.b16 %v237
    %v322 = vunpack.c.h.b16 %v237
    %v323 = vunpack.c.l.b16 %v238
    %v324 = vunpack.c.h.b16 %v238
    %v325 = vunpack.c.l.b16 %v239
    %v326 = vunpack.c.h.b16 %v239
    %v327 = vunpack.c.l.b16 %v240
    %v328 = vunpack.c.h.b16 %v240
    %v329 = vunpack.c.l.b16 %v241
    %v330 = vunpack.c.h.b16 %v241
    %v331 = vunpack.c.l.b16 %v242
    %v332 = vunpack.c.h.b16 %v242
    %v333 = vunpack.c.l.b16 %v243
    %v334 = vunpack.c.h.b16 %v243
    %v335 = vunpack.c.l.b16 %v244
    %v336 = vunpack.c.h.b16 %v244
    %v337 = vunpack.c.l.b16 %v245
    %v338 = vunpack.c.h.b16 %v245
    %v339 = vunpack.c.l.b16 %v246
    %v340 = vunpack.c.h.b16 %v246
    %v341 = vunpack.c.l.b16 %v247
    %v342 = vunpack.c.h.b16 %v247
    %v343 = vunpack.c.l.b16 %v248
    %v344 = vunpack.c.h.b16 %v248
    %v345 = vunpack.c.l.b16 %v249
    %v346 = vunpack.c.h.b16 %v249
    %v347 = vunpack.c.l.b16 %v250
    %v348 = vunpack.c.h.b16 %v250
    %v349 = vunpack.c.l.b16 %v251
    %v350 = vunpack.c.h.b16 %v251
    %v351 = vunpack.c.l.b16 %v252
    %v352 = vunpack.c.h.b16 %v252
    %v353 = vunpack.c.l.b16 %v253
    %v354 = vunpack.c.h.b16 %v253
    %v355 = vunpack.c.l.b16 %v254
    %v356 = vunpack.c.h.b16 %v254
    %v357 = vunpack.c.l.b16 %v255
    %v358 = vunpack.c.h.b16 %v255
    %v359 = vunpack.c.l.b16 %v256
    %v360 = vunpack.c.h.b16 %v256
    %v361 = vunpack.c.l.b16 %v257
    %v362 = vunpack.c.h.b16 %v257
    %v363 = vunpack.c.l.b16 %v258
    %v364 = vunpack.c.h.b16 %v258
    %v365 = vunpack.c.l.b16 %v259
    %v366 = vunpack.c.h.b16 %v259
    %v367 = vunpack.c.l.b16 %v260
    %v368 = vunpack.c.h.b16 %v260
    %v369 = vpack.c.b16 %v307, %v305
    %v370 = vpack.c.b16 %v308, %v306
    %v371 = vpack.c.b16 %v311, %v309
    %v372 = vpack.c.b16 %v312, %v310
    %v373 = vpack.c.b16 %v315, %v313
    %v374 = vpack.c.b16 %v316, %v314
    %v375 = vpack.c.b16 %v319, %v317
    %v376 = vpack.c.b16 %v320, %v318
    %v377 = vpack.c.b16 %v323, %v321
    %v378 = vpack.c.b16 %v324, %v322
    %v379 = vpack.c.b16 %v327, %v325
    %v380 = vpack.c.b16 %v328, %v326
    %v381 = vpack.c.b16 %v331, %v329
    %v382 = vpack.c.b16 %v332, %v330
    %v383 = vpack.c.b16 %v335, %v333
    %v384 = vpack.c.b16 %v336, %v334
    %v385 = vpack.c.b16 %v339, %v337
    %v386 = vpack.c.b16 %v340, %v338
    %v387 = vpack.c.b16 %v343, %v341
    %v388 = vpack.c.b16 %v344, %v342
    %v389 = vpack.c.b16 %v347, %v345
    %v390 = vpack.c.b16 %v348, %v346
    %v391 = vpack.c.b16 %v351, %v349
    %v392 = vpack.c.b16 %v352, %v350
    %v393 = vpack.c.b16 %v355, %v353
    %v394 = vpack.c.b16 %v356, %v354
    %v395 = vpack.c.b16 %v359, %v357
    %v396 = vpack.c.b16 %v360, %v358
    %v397 = vpack.c.b16 %v363, %v361
    %v398 = vpack.c.b16 %v364, %v362
    %v399 = vpack.c.b16 %v367, %v365
    %v400 = vpack.c.b16 %v368, %v366
    %433 = vmatprep.subr.bf16.mxu0 %v384
    %434 = vmatpush1.bf16.msra.mxu0 %v383
    %435 = vmatprep.subr.bf16.mxu0 %v382
    %436 = vmatpush1.bf16.msra.mxu0 %v381
    %437 = vmatprep.subr.bf16.mxu0 %v380
    %438 = vmatpush1.bf16.msra.mxu0 %v379
    %439 = vmatprep.subr.bf16.mxu0 %v378
    %440 = vmatpush1.bf16.msra.mxu0 %v377
    %441 = vmatprep.subr.bf16.mxu0 %v376
    %442 = vmatpush1.bf16.msra.mxu0 %v375
    %443 = vmatprep.subr.bf16.mxu0 %v374
    %444 = vmatpush1.bf16.msra.mxu0 %v373
    %445 = vmatprep.subr.bf16.mxu0 %v372
    %446 = vmatpush1.bf16.msra.mxu0 %v371
    %447 = vmatprep.subr.bf16.mxu0 %v370
    %448 = vmatpush1.bf16.msra.mxu0 %v369
    %449 = vmatprep.subr.bf16.mxu0 %v400
    %450 = vmatpush2.bf16.msra.mxu0 %v399
    %451 = vmatprep.subr.bf16.mxu0 %v398
    %452 = vmatpush2.bf16.msra.mxu0 %v397
    %453 = vmatprep.subr.bf16.mxu0 %v396
    %454 = vmatpush2.bf16.msra.mxu0 %v395
    %455 = vmatprep.subr.bf16.mxu0 %v394
    %456 = vmatpush2.bf16.msra.mxu0 %v393
    %457 = vmatprep.subr.bf16.mxu0 %v392
    %458 = vmatpush2.bf16.msra.mxu0 %v391
    %459 = vmatprep.subr.bf16.mxu0 %v390
    %460 = vmatpush2.bf16.msra.mxu0 %v389
    %461 = vmatprep.subr.bf16.mxu0 %v388
    %462 = vmatpush2.bf16.msra.mxu0 %v387
    %463 = vmatprep.subr.bf16.mxu0 %v386
    %464 = vmatpush2.bf16.msra.mxu0 %v385
    %465 = vmatprep.mubr.bf16.mxu0 %v228
    %466 = vmatmul.mubr.bf16.gmra.mxu0 %v227
    %v467 = vpop.f32.mrf.mxu0
    %v468 = vadd.f32 %v266, %v467
    %v469 = vpop.f32.mrf.mxu0
    %v470 = vadd.f32 %v270, %v469
    %v471 = vpop.f32.mrf.mxu0
    %v472 = vpop.f32.mrf.mxu0
    %473 = vdwg.mxu0
    %v474 = vmax.f32 %v468, 0.0
    %v475 = vmax.f32 %v470, 0.0
    %v476 = vpack.c.bf16 %v474, %v474
    %v477 = vpack.c.bf16 %v475, %v475
    %s478 = scalar_lea.vmem [#allocation6], 256
    %v479 = vld [vmem:[%s478] sm:$0xff]
    %v480 = vld [vmem:[%s478 + $0x8] sm:$0xff]
    %v481 = vld [vmem:[%s478 + $0x10] sm:$0xff]
    %v482 = vld [vmem:[%s478 + $0x18] sm:$0xff]
    %v483 = vld [vmem:[%s478 + $0x20] sm:$0xff]
    %v484 = vld [vmem:[%s478 + $0x28] sm:$0xff]
    %v485 = vld [vmem:[%s478 + $0x30] sm:$0xff]
    %v486 = vld [vmem:[%s478 + $0x38] sm:$0xff]
    %v487 = vld [vmem:[%s478 + $0x40] sm:$0xff]
    %v488 = vld [vmem:[%s478 + $0x48] sm:$0xff]
    %v489 = vld [vmem:[%s478 + $0x50] sm:$0xff]
    %v490 = vld [vmem:[%s478 + $0x58] sm:$0xff]
    %v491 = vld [vmem:[%s478 + $0x60] sm:$0xff]
    %v492 = vld [vmem:[%s478 + $0x68] sm:$0xff]
    %v493 = vld [vmem:[%s478 + $0x70] sm:$0xff]
    %v494 = vld [vmem:[%s478 + $0x78] sm:$0xff]
    %v495 = vld [vmem:[%s478 + $0x80] sm:$0xff]
    %v496 = vld [vmem:[%s478 + $0x88] sm:$0xff]
    %v497 = vld [vmem:[%s478 + $0x90] sm:$0xff]
    %v498 = vld [vmem:[%s478 + $0x98] sm:$0xff]
    %v499 = vld [vmem:[%s478 + $0xa0] sm:$0xff]
    %v500 = vld [vmem:[%s478 + $0xa8] sm:$0xff]
    %v501 = vld [vmem:[%s478 + $0xb0] sm:$0xff]
    %v502 = vld [vmem:[%s478 + $0xb8] sm:$0xff]
    %v503 = vld [vmem:[%s478 + $0xc0] sm:$0xff]
    %v504 = vld [vmem:[%s478 + $0xc8] sm:$0xff]
    %v505 = vld [vmem:[%s478 + $0xd0] sm:$0xff]
    %v506 = vld [vmem:[%s478 + $0xd8] sm:$0xff]
    %v507 = vld [vmem:[%s478 + $0xe0] sm:$0xff]
    %v508 = vld [vmem:[%s478 + $0xe8] sm:$0xff]
    %v509 = vld [vmem:[%s478 + $0xf0] sm:$0xff]
    %v510 = vld [vmem:[%s478 + $0xf8] sm:$0xff]
    %s511 = scalar_lea.vmem %s4, 1
    %v512 = vld [vmem:[%s511] ss:$4 sm:$0x3]
    %v514 = vlaneseq
    %v515 = vshrl.u32 %v514, 7
    %v516 = vsub.s32 0, %v515
    %v517 = vrot.slane %v512, %v516
    %v518 = vlaneseq
    %v519 = vshrl.u32 %v518, 7
    %v520 = vsub.s32 1, %v519
    %v521 = vrot.slane %v512, %v520
    %v556 = vunpack.c.l.b16 %v479
    %v557 = vunpack.c.h.b16 %v479
    %v558 = vunpack.c.l.b16 %v480
    %v559 = vunpack.c.h.b16 %v480
    %v560 = vunpack.c.l.b16 %v481
    %v561 = vunpack.c.h.b16 %v481
    %v562 = vunpack.c.l.b16 %v482
    %v563 = vunpack.c.h.b16 %v482
    %v564 = vunpack.c.l.b16 %v483
    %v565 = vunpack.c.h.b16 %v483
    %v566 = vunpack.c.l.b16 %v484
    %v567 = vunpack.c.h.b16 %v484
    %v568 = vunpack.c.l.b16 %v485
    %v569 = vunpack.c.h.b16 %v485
    %v570 = vunpack.c.l.b16 %v486
    %v571 = vunpack.c.h.b16 %v486
    %v572 = vunpack.c.l.b16 %v487
    %v573 = vunpack.c.h.b16 %v487
    %v574 = vunpack.c.l.b16 %v488
    %v575 = vunpack.c.h.b16 %v488
    %v576 = vunpack.c.l.b16 %v489
    %v577 = vunpack.c.h.b16 %v489
    %v578 = vunpack.c.l.b16 %v490
    %v579 = vunpack.c.h.b16 %v490
    %v580 = vunpack.c.l.b16 %v491
    %v581 = vunpack.c.h.b16 %v491
    %v582 = vunpack.c.l.b16 %v492
    %v583 = vunpack.c.h.b16 %v492
    %v584 = vunpack.c.l.b16 %v493
    %v585 = vunpack.c.h.b16 %v493
    %v586 = vunpack.c.l.b16 %v494
    %v587 = vunpack.c.h.b16 %v494
    %v588 = vunpack.c.l.b16 %v495
    %v589 = vunpack.c.h.b16 %v495
    %v590 = vunpack.c.l.b16 %v496
    %v591 = vunpack.c.h.b16 %v496
    %v592 = vunpack.c.l.b16 %v497
    %v593 = vunpack.c.h.b16 %v497
    %v594 = vunpack.c.l.b16 %v498
    %v595 = vunpack.c.h.b16 %v498
    %v596 = vunpack.c.l.b16 %v499
    %v597 = vunpack.c.h.b16 %v499
    %v598 = vunpack.c.l.b16 %v500
    %v599 = vunpack.c.h.b16 %v500
    %v600 = vunpack.c.l.b16 %v501
    %v601 = vunpack.c.h.b16 %v501
    %v602 = vunpack.c.l.b16 %v502
    %v603 = vunpack.c.h.b16 %v502
    %v604 = vunpack.c.l.b16 %v503
    %v605 = vunpack.c.h.b16 %v503
    %v606 = vunpack.c.l.b16 %v504
    %v607 = vunpack.c.h.b16 %v504
    %v608 = vunpack.c.l.b16 %v505
    %v609 = vunpack.c.h.b16 %v505
    %v610 = vunpack.c.l.b16 %v506
    %v611 = vunpack.c.h.b16 %v506
    %v612 = vunpack.c.l.b16 %v507
    %v613 = vunpack.c.h.b16 %v507
    %v614 = vunpack.c.l.b16 %v508
    %v615 = vunpack.c.h.b16 %v508
    %v616 = vunpack.c.l.b16 %v509
    %v617 = vunpack.c.h.b16 %v509
    %v618 = vunpack.c.l.b16 %v510
    %v619 = vunpack.c.h.b16 %v510
    %v620 = vpack.c.b16 %v558, %v556
    %v621 = vpack.c.b16 %v559, %v557
    %v622 = vpack.c.b16 %v562, %v560
    %v623 = vpack.c.b16 %v563, %v561
    %v624 = vpack.c.b16 %v566, %v564
    %v625 = vpack.c.b16 %v567, %v565
    %v626 = vpack.c.b16 %v570, %v568
    %v627 = vpack.c.b16 %v571, %v569
    %v628 = vpack.c.b16 %v574, %v572
    %v629 = vpack.c.b16 %v575, %v573
    %v630 = vpack.c.b16 %v578, %v576
    %v631 = vpack.c.b16 %v579, %v577
    %v632 = vpack.c.b16 %v582, %v580
    %v633 = vpack.c.b16 %v583, %v581
    %v634 = vpack.c.b16 %v586, %v584
    %v635 = vpack.c.b16 %v587, %v585
    %v636 = vpack.c.b16 %v590, %v588
    %v637 = vpack.c.b16 %v591, %v589
    %v638 = vpack.c.b16 %v594, %v592
    %v639 = vpack.c.b16 %v595, %v593
    %v640 = vpack.c.b16 %v598, %v596
    %v641 = vpack.c.b16 %v599, %v597
    %v642 = vpack.c.b16 %v602, %v600
    %v643 = vpack.c.b16 %v603, %v601
    %v644 = vpack.c.b16 %v606, %v604
    %v645 = vpack.c.b16 %v607, %v605
    %v646 = vpack.c.b16 %v610, %v608
    %v647 = vpack.c.b16 %v611, %v609
    %v648 = vpack.c.b16 %v614, %v612
    %v649 = vpack.c.b16 %v615, %v613
    %v650 = vpack.c.b16 %v618, %v616
    %v651 = vpack.c.b16 %v619, %v617
    %684 = vmatprep.subr.bf16.mxu0 %v635
    %685 = vmatpush1.bf16.msra.mxu0 %v634
    %686 = vmatprep.subr.bf16.mxu0 %v633
    %687 = vmatpush1.bf16.msra.mxu0 %v632
    %688 = vmatprep.subr.bf16.mxu0 %v631
    %689 = vmatpush1.bf16.msra.mxu0 %v630
    %690 = vmatprep.subr.bf16.mxu0 %v629
    %691 = vmatpush1.bf16.msra.mxu0 %v628
    %692 = vmatprep.subr.bf16.mxu0 %v627
    %693 = vmatpush1.bf16.msra.mxu0 %v626
    %694 = vmatprep.subr.bf16.mxu0 %v625
    %695 = vmatpush1.bf16.msra.mxu0 %v624
    %696 = vmatprep.subr.bf16.mxu0 %v623
    %697 = vmatpush1.bf16.msra.mxu0 %v622
    %698 = vmatprep.subr.bf16.mxu0 %v621
    %699 = vmatpush1.bf16.msra.mxu0 %v620
    %700 = vmatprep.subr.bf16.mxu0 %v651
    %701 = vmatpush2.bf16.msra.mxu0 %v650
    %702 = vmatprep.subr.bf16.mxu0 %v649
    %703 = vmatpush2.bf16.msra.mxu0 %v648
    %704 = vmatprep.subr.bf16.mxu0 %v647
    %705 = vmatpush2.bf16.msra.mxu0 %v646
    %706 = vmatprep.subr.bf16.mxu0 %v645
    %707 = vmatpush2.bf16.msra.mxu0 %v644
    %708 = vmatprep.subr.bf16.mxu0 %v643
    %709 = vmatpush2.bf16.msra.mxu0 %v642
    %710 = vmatprep.subr.bf16.mxu0 %v641
    %711 = vmatpush2.bf16.msra.mxu0 %v640
    %712 = vmatprep.subr.bf16.mxu0 %v639
    %713 = vmatpush2.bf16.msra.mxu0 %v638
    %714 = vmatprep.subr.bf16.mxu0 %v637
    %715 = vmatpush2.bf16.msra.mxu0 %v636
    %716 = vmatprep.mubr.bf16.mxu0 %v477
    %717 = vmatmul.mubr.bf16.gmra.mxu0 %v476
    %v718 = vpop.f32.mrf.mxu0
    %v719 = vadd.f32 %v517, %v718
    %v720 = vpop.f32.mrf.mxu0
    %v721 = vadd.f32 %v521, %v720
    %v722 = vpop.f32.mrf.mxu0
    %v723 = vpop.f32.mrf.mxu0
    %724 = vdwg.mxu0
    %v725 = vmax.f32 %v719, 0.0
    %v726 = vmax.f32 %v721, 0.0
    %v727 = vpack.c.bf16 %v725, %v725
    %v728 = vpack.c.bf16 %v726, %v726
    %s729 = scalar_lea.vmem [#allocation6], 512
    %v730 = vld [vmem:[%s729] sm:$0xff]
    %v731 = vld [vmem:[%s729 + $0x8] sm:$0xff]
    %v732 = vld [vmem:[%s729 + $0x10] sm:$0xff]
    %v733 = vld [vmem:[%s729 + $0x18] sm:$0xff]
    %v734 = vld [vmem:[%s729 + $0x20] sm:$0xff]
    %v735 = vld [vmem:[%s729 + $0x28] sm:$0xff]
    %v736 = vld [vmem:[%s729 + $0x30] sm:$0xff]
    %v737 = vld [vmem:[%s729 + $0x38] sm:$0xff]
    %v738 = vld [vmem:[%s729 + $0x40] sm:$0xff]
    %v739 = vld [vmem:[%s729 + $0x48] sm:$0xff]
    %v740 = vld [vmem:[%s729 + $0x50] sm:$0xff]
    %v741 = vld [vmem:[%s729 + $0x58] sm:$0xff]
    %v742 = vld [vmem:[%s729 + $0x60] sm:$0xff]
    %v743 = vld [vmem:[%s729 + $0x68] sm:$0xff]
    %v744 = vld [vmem:[%s729 + $0x70] sm:$0xff]
    %v745 = vld [vmem:[%s729 + $0x78] sm:$0xff]
    %v746 = vld [vmem:[%s729 + $0x80] sm:$0xff]
    %v747 = vld [vmem:[%s729 + $0x88] sm:$0xff]
    %v748 = vld [vmem:[%s729 + $0x90] sm:$0xff]
    %v749 = vld [vmem:[%s729 + $0x98] sm:$0xff]
    %v750 = vld [vmem:[%s729 + $0xa0] sm:$0xff]
    %v751 = vld [vmem:[%s729 + $0xa8] sm:$0xff]
    %v752 = vld [vmem:[%s729 + $0xb0] sm:$0xff]
    %v753 = vld [vmem:[%s729 + $0xb8] sm:$0xff]
    %v754 = vld [vmem:[%s729 + $0xc0] sm:$0xff]
    %v755 = vld [vmem:[%s729 + $0xc8] sm:$0xff]
    %v756 = vld [vmem:[%s729 + $0xd0] sm:$0xff]
    %v757 = vld [vmem:[%s729 + $0xd8] sm:$0xff]
    %v758 = vld [vmem:[%s729 + $0xe0] sm:$0xff]
    %v759 = vld [vmem:[%s729 + $0xe8] sm:$0xff]
    %v760 = vld [vmem:[%s729 + $0xf0] sm:$0xff]
    %v761 = vld [vmem:[%s729 + $0xf8] sm:$0xff]
    %s762 = scalar_lea.vmem %s4, 2
    %v763 = vld [vmem:[%s762] ss:$4 sm:$0x3]
    %v765 = vlaneseq
    %v766 = vshrl.u32 %v765, 7
    %v767 = vsub.s32 0, %v766
    %v768 = vrot.slane %v763, %v767
    %v769 = vlaneseq
    %v770 = vshrl.u32 %v769, 7
    %v771 = vsub.s32 1, %v770
    %v772 = vrot.slane %v763, %v771
    %v807 = vunpack.c.l.b16 %v730
    %v808 = vunpack.c.h.b16 %v730
    %v809 = vunpack.c.l.b16 %v731
    %v810 = vunpack.c.h.b16 %v731
    %v811 = vunpack.c.l.b16 %v732
    %v812 = vunpack.c.h.b16 %v732
    %v813 = vunpack.c.l.b16 %v733
    %v814 = vunpack.c.h.b16 %v733
    %v815 = vunpack.c.l.b16 %v734
    %v816 = vunpack.c.h.b16 %v734
    %v817 = vunpack.c.l.b16 %v735
    %v818 = vunpack.c.h.b16 %v735
    %v819 = vunpack.c.l.b16 %v736
    %v820 = vunpack.c.h.b16 %v736
    %v821 = vunpack.c.l.b16 %v737
    %v822 = vunpack.c.h.b16 %v737
    %v823 = vunpack.c.l.b16 %v738
    %v824 = vunpack.c.h.b16 %v738
    %v825 = vunpack.c.l.b16 %v739
    %v826 = vunpack.c.h.b16 %v739
    %v827 = vunpack.c.l.b16 %v740
    %v828 = vunpack.c.h.b16 %v740
    %v829 = vunpack.c.l.b16 %v741
    %v830 = vunpack.c.h.b16 %v741
    %v831 = vunpack.c.l.b16 %v742
    %v832 = vunpack.c.h.b16 %v742
    %v833 = vunpack.c.l.b16 %v743
    %v834 = vunpack.c.h.b16 %v743
    %v835 = vunpack.c.l.b16 %v744
    %v836 = vunpack.c.h.b16 %v744
    %v837 = vunpack.c.l.b16 %v745
    %v838 = vunpack.c.h.b16 %v745
    %v839 = vunpack.c.l.b16 %v746
    %v840 = vunpack.c.h.b16 %v746
    %v841 = vunpack.c.l.b16 %v747
    %v842 = vunpack.c.h.b16 %v747
    %v843 = vunpack.c.l.b16 %v748
    %v844 = vunpack.c.h.b16 %v748
    %v845 = vunpack.c.l.b16 %v749
    %v846 = vunpack.c.h.b16 %v749
    %v847 = vunpack.c.l.b16 %v750
    %v848 = vunpack.c.h.b16 %v750
    %v849 = vunpack.c.l.b16 %v751
    %v850 = vunpack.c.h.b16 %v751
    %v851 = vunpack.c.l.b16 %v752
    %v852 = vunpack.c.h.b16 %v752
    %v853 = vunpack.c.l.b16 %v753
    %v854 = vunpack.c.h.b16 %v753
    %v855 = vunpack.c.l.b16 %v754
    %v856 = vunpack.c.h.b16 %v754
    %v857 = vunpack.c.l.b16 %v755
    %v858 = vunpack.c.h.b16 %v755
    %v859 = vunpack.c.l.b16 %v756
    %v860 = vunpack.c.h.b16 %v756
    %v861 = vunpack.c.l.b16 %v757
    %v862 = vunpack.c.h.b16 %v757
    %v863 = vunpack.c.l.b16 %v758
    %v864 = vunpack.c.h.b16 %v758
    %v865 = vunpack.c.l.b16 %v759
    %v866 = vunpack.c.h.b16 %v759
    %v867 = vunpack.c.l.b16 %v760
    %v868 = vunpack.c.h.b16 %v760
    %v869 = vunpack.c.l.b16 %v761
    %v870 = vunpack.c.h.b16 %v761
    %v871 = vpack.c.b16 %v809, %v807
    %v872 = vpack.c.b16 %v810, %v808
    %v873 = vpack.c.b16 %v813, %v811
    %v874 = vpack.c.b16 %v814, %v812
    %v875 = vpack.c.b16 %v817, %v815
    %v876 = vpack.c.b16 %v818, %v816
    %v877 = vpack.c.b16 %v821, %v819
    %v878 = vpack.c.b16 %v822, %v820
    %v879 = vpack.c.b16 %v825, %v823
    %v880 = vpack.c.b16 %v826, %v824
    %v881 = vpack.c.b16 %v829, %v827
    %v882 = vpack.c.b16 %v830, %v828
    %v883 = vpack.c.b16 %v833, %v831
    %v884 = vpack.c.b16 %v834, %v832
    %v885 = vpack.c.b16 %v837, %v835
    %v886 = vpack.c.b16 %v838, %v836
    %v887 = vpack.c.b16 %v841, %v839
    %v888 = vpack.c.b16 %v842, %v840
    %v889 = vpack.c.b16 %v845, %v843
    %v890 = vpack.c.b16 %v846, %v844
    %v891 = vpack.c.b16 %v849, %v847
    %v892 = vpack.c.b16 %v850, %v848
    %v893 = vpack.c.b16 %v853, %v851
    %v894 = vpack.c.b16 %v854, %v852
    %v895 = vpack.c.b16 %v857, %v855
    %v896 = vpack.c.b16 %v858, %v856
    %v897 = vpack.c.b16 %v861, %v859
    %v898 = vpack.c.b16 %v862, %v860
    %v899 = vpack.c.b16 %v865, %v863
    %v900 = vpack.c.b16 %v866, %v864
    %v901 = vpack.c.b16 %v869, %v867
    %v902 = vpack.c.b16 %v870, %v868
    %935 = vmatprep.subr.bf16.mxu0 %v886
    %936 = vmatpush1.bf16.msra.mxu0 %v885
    %937 = vmatprep.subr.bf16.mxu0 %v884
    %938 = vmatpush1.bf16.msra.mxu0 %v883
    %939 = vmatprep.subr.bf16.mxu0 %v882
    %940 = vmatpush1.bf16.msra.mxu0 %v881
    %941 = vmatprep.subr.bf16.mxu0 %v880
    %942 = vmatpush1.bf16.msra.mxu0 %v879
    %943 = vmatprep.subr.bf16.mxu0 %v878
    %944 = vmatpush1.bf16.msra.mxu0 %v877
    %945 = vmatprep.subr.bf16.mxu0 %v876
    %946 = vmatpush1.bf16.msra.mxu0 %v875
    %947 = vmatprep.subr.bf16.mxu0 %v874
    %948 = vmatpush1.bf16.msra.mxu0 %v873
    %949 = vmatprep.subr.bf16.mxu0 %v872
    %950 = vmatpush1.bf16.msra.mxu0 %v871
    %951 = vmatprep.subr.bf16.mxu0 %v902
    %952 = vmatpush2.bf16.msra.mxu0 %v901
    %953 = vmatprep.subr.bf16.mxu0 %v900
    %954 = vmatpush2.bf16.msra.mxu0 %v899
    %955 = vmatprep.subr.bf16.mxu0 %v898
    %956 = vmatpush2.bf16.msra.mxu0 %v897
    %957 = vmatprep.subr.bf16.mxu0 %v896
    %958 = vmatpush2.bf16.msra.mxu0 %v895
    %959 = vmatprep.subr.bf16.mxu0 %v894
    %960 = vmatpush2.bf16.msra.mxu0 %v893
    %961 = vmatprep.subr.bf16.mxu0 %v892
    %962 = vmatpush2.bf16.msra.mxu0 %v891
    %963 = vmatprep.subr.bf16.mxu0 %v890
    %964 = vmatpush2.bf16.msra.mxu0 %v889
    %965 = vmatprep.subr.bf16.mxu0 %v888
    %966 = vmatpush2.bf16.msra.mxu0 %v887
    %967 = vmatprep.mubr.bf16.mxu0 %v728
    %968 = vmatmul.mubr.bf16.gmra.mxu0 %v727
    %v969 = vpop.f32.mrf.mxu0
    %v970 = vadd.f32 %v768, %v969
    %v971 = vpop.f32.mrf.mxu0
    %v972 = vadd.f32 %v772, %v971
    %v973 = vpop.f32.mrf.mxu0
    %v974 = vpop.f32.mrf.mxu0
    %975 = vdwg.mxu0
    %v976 = vmax.f32 %v970, 0.0
    %v977 = vmax.f32 %v972, 0.0
    %v978 = vpack.c.bf16 %v976, %v976
    %v979 = vpack.c.bf16 %v977, %v977
    %v980 = vld [vmem:[#allocation7] sm:$0xf]
    %v981 = vld [vmem:[#allocation7 + $0x4] sm:$0xf]
    %v982 = vld [vmem:[#allocation7 + $0x8] sm:$0xf]
    %v983 = vld [vmem:[#allocation7 + $0xc] sm:$0xf]
    %v984 = vld [vmem:[#allocation7 + $0x10] sm:$0xf]
    %v985 = vld [vmem:[#allocation7 + $0x14] sm:$0xf]
    %v986 = vld [vmem:[#allocation7 + $0x18] sm:$0xf]
    %v987 = vld [vmem:[#allocation7 + $0x1c] sm:$0xf]
    %v988 = vld [vmem:[#allocation7 + $0x20] sm:$0xf]
    %v989 = vld [vmem:[#allocation7 + $0x24] sm:$0xf]
    %v990 = vld [vmem:[#allocation7 + $0x28] sm:$0xf]
    %v991 = vld [vmem:[#allocation7 + $0x2c] sm:$0xf]
    %v992 = vld [vmem:[#allocation7 + $0x30] sm:$0xf]
    %v993 = vld [vmem:[#allocation7 + $0x34] sm:$0xf]
    %v994 = vld [vmem:[#allocation7 + $0x38] sm:$0xf]
    %v995 = vld [vmem:[#allocation7 + $0x3c] sm:$0xf]
    %v996 = vld [vmem:[#allocation7 + $0x40] sm:$0xf]
    %v997 = vld [vmem:[#allocation7 + $0x44] sm:$0xf]
    %v998 = vld [vmem:[#allocation7 + $0x48] sm:$0xf]
    %v999 = vld [vmem:[#allocation7 + $0x4c] sm:$0xf]
    %v1000 = vld [vmem:[#allocation7 + $0x50] sm:$0xf]
    %v1001 = vld [vmem:[#allocation7 + $0x54] sm:$0xf]
    %v1002 = vld [vmem:[#allocation7 + $0x58] sm:$0xf]
    %v1003 = vld [vmem:[#allocation7 + $0x5c] sm:$0xf]
    %v1004 = vld [vmem:[#allocation7 + $0x60] sm:$0xf]
    %v1005 = vld [vmem:[#allocation7 + $0x64] sm:$0xf]
    %v1006 = vld [vmem:[#allocation7 + $0x68] sm:$0xf]
    %v1007 = vld [vmem:[#allocation7 + $0x6c] sm:$0xf]
    %v1008 = vld [vmem:[#allocation7 + $0x70] sm:$0xf]
    %v1009 = vld [vmem:[#allocation7 + $0x74] sm:$0xf]
    %v1010 = vld [vmem:[#allocation7 + $0x78] sm:$0xf]
    %v1011 = vld [vmem:[#allocation7 + $0x7c] sm:$0xf]
    %v1012 = vld [vmem:[#allocation9] sm:$0x1]
    %v1014 = vlaneseq
    %v1015 = vshrl.u32 %v1014, 7
    %v1016 = vsub.s32 0, %v1015
    %v1017 = vrot.slane %v1012, %v1016
    %v1051 = vunpack.c.l.b16 %v980
    %v1052 = vunpack.c.l.b16 %v981
    %v1053 = vunpack.c.l.b16 %v982
    %v1054 = vunpack.c.l.b16 %v983
    %v1055 = vunpack.c.l.b16 %v984
    %v1056 = vunpack.c.l.b16 %v985
    %v1057 = vunpack.c.l.b16 %v986
    %v1058 = vunpack.c.l.b16 %v987
    %v1059 = vunpack.c.l.b16 %v988
    %v1060 = vunpack.c.l.b16 %v989
    %v1061 = vunpack.c.l.b16 %v990
    %v1062 = vunpack.c.l.b16 %v991
    %v1063 = vunpack.c.l.b16 %v992
    %v1064 = vunpack.c.l.b16 %v993
    %v1065 = vunpack.c.l.b16 %v994
    %v1066 = vunpack.c.l.b16 %v995
    %v1067 = vunpack.c.l.b16 %v996
    %v1068 = vunpack.c.l.b16 %v997
    %v1069 = vunpack.c.l.b16 %v998
    %v1070 = vunpack.c.l.b16 %v999
    %v1071 = vunpack.c.l.b16 %v1000
    %v1072 = vunpack.c.l.b16 %v1001
    %v1073 = vunpack.c.l.b16 %v1002
    %v1074 = vunpack.c.l.b16 %v1003
    %v1075 = vunpack.c.l.b16 %v1004
    %v1076 = vunpack.c.l.b16 %v1005
    %v1077 = vunpack.c.l.b16 %v1006
    %v1078 = vunpack.c.l.b16 %v1007
    %v1079 = vunpack.c.l.b16 %v1008
    %v1080 = vunpack.c.l.b16 %v1009
    %v1081 = vunpack.c.l.b16 %v1010
    %v1082 = vunpack.c.l.b16 %v1011
    %v1083 = vpack.c.b16 %v1052, %v1051
    %v1084 = vpack.c.b16 %v1054, %v1053
    %v1085 = vpack.c.b16 %v1056, %v1055
    %v1086 = vpack.c.b16 %v1058, %v1057
    %v1087 = vpack.c.b16 %v1060, %v1059
    %v1088 = vpack.c.b16 %v1062, %v1061
    %v1089 = vpack.c.b16 %v1064, %v1063
    %v1090 = vpack.c.b16 %v1066, %v1065
    %v1091 = vpack.c.b16 %v1068, %v1067
    %v1092 = vpack.c.b16 %v1070, %v1069
    %v1093 = vpack.c.b16 %v1072, %v1071
    %v1094 = vpack.c.b16 %v1074, %v1073
    %v1095 = vpack.c.b16 %v1076, %v1075
    %v1096 = vpack.c.b16 %v1078, %v1077
    %v1097 = vpack.c.b16 %v1080, %v1079
    %v1098 = vpack.c.b16 %v1082, %v1081
    %1115 = vmatprep.subr.bf16.mxu0 0
    %1116 = vmatpush1.bf16.msra.mxu0 %v1090
    %1117 = vmatprep.subr.bf16.mxu0 0
    %1118 = vmatpush1.bf16.msra.mxu0 %v1089
    %1119 = vmatprep.subr.bf16.mxu0 0
    %1120 = vmatpush1.bf16.msra.mxu0 %v1088
    %1121 = vmatprep.subr.bf16.mxu0 0
    %1122 = vmatpush1.bf16.msra.mxu0 %v1087
    %1123 = vmatprep.subr.bf16.mxu0 0
    %1124 = vmatpush1.bf16.msra.mxu0 %v1086
    %1125 = vmatprep.subr.bf16.mxu0 0
    %1126 = vmatpush1.bf16.msra.mxu0 %v1085
    %1127 = vmatprep.subr.bf16.mxu0 0
    %1128 = vmatpush1.bf16.msra.mxu0 %v1084
    %1129 = vmatprep.subr.bf16.mxu0 0
    %1130 = vmatpush1.bf16.msra.mxu0 %v1083
    %1131 = vmatprep.subr.bf16.mxu0 0
    %1132 = vmatpush2.bf16.msra.mxu0 %v1098
    %1133 = vmatprep.subr.bf16.mxu0 0
    %1134 = vmatpush2.bf16.msra.mxu0 %v1097
    %1135 = vmatprep.subr.bf16.mxu0 0
    %1136 = vmatpush2.bf16.msra.mxu0 %v1096
    %1137 = vmatprep.subr.bf16.mxu0 0
    %1138 = vmatpush2.bf16.msra.mxu0 %v1095
    %1139 = vmatprep.subr.bf16.mxu0 0
    %1140 = vmatpush2.bf16.msra.mxu0 %v1094
    %1141 = vmatprep.subr.bf16.mxu0 0
    %1142 = vmatpush2.bf16.msra.mxu0 %v1093
    %1143 = vmatprep.subr.bf16.mxu0 0
    %1144 = vmatpush2.bf16.msra.mxu0 %v1092
    %1145 = vmatprep.subr.bf16.mxu0 0
    %1146 = vmatpush2.bf16.msra.mxu0 %v1091
    %1147 = vmatprep.mubr.bf16.mxu0 %v979
    %1148 = vmatmul.mubr.bf16.gmra.mxu0 %v978
    %v1149 = vpop.f32.mrf.mxu0
    %v1150 = vadd.f32 %v1017, %v1149
    %v1151 = vpop.f32.mrf.mxu0
    %v1152 = vpop.f32.mrf.mxu0
    %v1153 = vpop.f32.mrf.mxu0
    %1154 = vdwg.mxu0
    %1155 = vmax.xlane.f32.xlu0 %v1150
    %v1156 = vpop.xlane.xlu0 %1155
    %v1157 = vsub.f32 %v1150, %v1156
    %v1158 = vmul.f32 %v1157, 1.442695
    %v1159 = vpow.pop %v1158
    %1160 = vadd.xlane.f32.xlu0 %v1159
    %v1161 = vpop.xlane.xlu0 %1160
    %v1162 = vlog2.pop %v1161
    %v1163 = vmul.f32 %v1162, 0.6931472
    %v1164 = vsub.f32 %v1157, %v1163
    %vm1165 = vcmask 31744
    %1166 = vst.msk [vmem:[%s7] sm:$0xff] %vm1165, %v1164
    %s1167 = scalar_lea.vmem [#allocation6], 768
    %v1168 = vld [vmem:[%s1167] sm:$0xff]
    %v1169 = vld [vmem:[%s1167 + $0x8] sm:$0xff]
    %v1170 = vld [vmem:[%s1167 + $0x10] sm:$0xff]
    %v1171 = vld [vmem:[%s1167 + $0x18] sm:$0xff]
    %v1172 = vld [vmem:[%s1167 + $0x20] sm:$0xff]
    %v1173 = vld [vmem:[%s1167 + $0x28] sm:$0xff]
    %v1174 = vld [vmem:[%s1167 + $0x30] sm:$0xff]
    %v1175 = vld [vmem:[%s1167 + $0x38] sm:$0xff]
    %v1176 = vld [vmem:[%s1167 + $0x40] sm:$0xff]
    %v1177 = vld [vmem:[%s1167 + $0x48] sm:$0xff]
    %v1178 = vld [vmem:[%s1167 + $0x50] sm:$0xff]
    %v1179 = vld [vmem:[%s1167 + $0x58] sm:$0xff]
    %v1180 = vld [vmem:[%s1167 + $0x60] sm:$0xff]
    %v1181 = vld [vmem:[%s1167 + $0x68] sm:$0xff]
    %v1182 = vld [vmem:[%s1167 + $0x70] sm:$0xff]
    %v1183 = vld [vmem:[%s1167 + $0x78] sm:$0xff]
    %v1184 = vld [vmem:[%s1167 + $0x80] sm:$0xff]
    %v1185 = vld [vmem:[%s1167 + $0x88] sm:$0xff]
    %v1186 = vld [vmem:[%s1167 + $0x90] sm:$0xff]
    %v1187 = vld [vmem:[%s1167 + $0x98] sm:$0xff]
    %v1188 = vld [vmem:[%s1167 + $0xa0] sm:$0xff]
    %v1189 = vld [vmem:[%s1167 + $0xa8] sm:$0xff]
    %v1190 = vld [vmem:[%s1167 + $0xb0] sm:$0xff]
    %v1191 = vld [vmem:[%s1167 + $0xb8] sm:$0xff]
    %v1192 = vld [vmem:[%s1167 + $0xc0] sm:$0xff]
    %v1193 = vld [vmem:[%s1167 + $0xc8] sm:$0xff]
    %v1194 = vld [vmem:[%s1167 + $0xd0] sm:$0xff]
    %v1195 = vld [vmem:[%s1167 + $0xd8] sm:$0xff]
    %v1196 = vld [vmem:[%s1167 + $0xe0] sm:$0xff]
    %v1197 = vld [vmem:[%s1167 + $0xe8] sm:$0xff]
    %v1198 = vld [vmem:[%s1167 + $0xf0] sm:$0xff]
    %v1199 = vld [vmem:[%s1167 + $0xf8] sm:$0xff]
    %s1200 = scalar_lea.vmem %s4, 8
    %v1201 = vld [vmem:[%s1200] ss:$4 sm:$0x3]
    %v1203 = vlaneseq
    %v1204 = vshrl.u32 %v1203, 7
    %v1205 = vsub.s32 0, %v1204
    %v1206 = vrot.slane %v1201, %v1205
    %v1207 = vlaneseq
    %v1208 = vshrl.u32 %v1207, 7
    %v1209 = vsub.s32 1, %v1208
    %v1210 = vrot.slane %v1201, %v1209
    %v1245 = vunpack.c.l.b16 %v1168
    %v1246 = vunpack.c.h.b16 %v1168
    %v1247 = vunpack.c.l.b16 %v1169
    %v1248 = vunpack.c.h.b16 %v1169
    %v1249 = vunpack.c.l.b16 %v1170
    %v1250 = vunpack.c.h.b16 %v1170
    %v1251 = vunpack.c.l.b16 %v1171
    %v1252 = vunpack.c.h.b16 %v1171
    %v1253 = vunpack.c.l.b16 %v1172
    %v1254 = vunpack.c.h.b16 %v1172
    %v1255 = vunpack.c.l.b16 %v1173
    %v1256 = vunpack.c.h.b16 %v1173
    %v1257 = vunpack.c.l.b16 %v1174
    %v1258 = vunpack.c.h.b16 %v1174
    %v1259 = vunpack.c.l.b16 %v1175
    %v1260 = vunpack.c.h.b16 %v1175
    %v1261 = vunpack.c.l.b16 %v1176
    %v1262 = vunpack.c.h.b16 %v1176
    %v1263 = vunpack.c.l.b16 %v1177
    %v1264 = vunpack.c.h.b16 %v1177
    %v1265 = vunpack.c.l.b16 %v1178
    %v1266 = vunpack.c.h.b16 %v1178
    %v1267 = vunpack.c.l.b16 %v1179
    %v1268 = vunpack.c.h.b16 %v1179
    %v1269 = vunpack.c.l.b16 %v1180
    %v1270 = vunpack.c.h.b16 %v1180
    %v1271 = vunpack.c.l.b16 %v1181
    %v1272 = vunpack.c.h.b16 %v1181
    %v1273 = vunpack.c.l.b16 %v1182
    %v1274 = vunpack.c.h.b16 %v1182
    %v1275 = vunpack.c.l.b16 %v1183
    %v1276 = vunpack.c.h.b16 %v1183
    %v1277 = vunpack.c.l.b16 %v1184
    %v1278 = vunpack.c.h.b16 %v1184
    %v1279 = vunpack.c.l.b16 %v1185
    %v1280 = vunpack.c.h.b16 %v1185
    %v1281 = vunpack.c.l.b16 %v1186
    %v1282 = vunpack.c.h.b16 %v1186
    %v1283 = vunpack.c.l.b16 %v1187
    %v1284 = vunpack.c.h.b16 %v1187
    %v1285 = vunpack.c.l.b16 %v1188
    %v1286 = vunpack.c.h.b16 %v1188
    %v1287 = vunpack.c.l.b16 %v1189
    %v1288 = vunpack.c.h.b16 %v1189
    %v1289 = vunpack.c.l.b16 %v1190
    %v1290 = vunpack.c.h.b16 %v1190
    %v1291 = vunpack.c.l.b16 %v1191
    %v1292 = vunpack.c.h.b16 %v1191
    %v1293 = vunpack.c.l.b16 %v1192
    %v1294 = vunpack.c.h.b16 %v1192
    %v1295 = vunpack.c.l.b16 %v1193
    %v1296 = vunpack.c.h.b16 %v1193
    %v1297 = vunpack.c.l.b16 %v1194
    %v1298 = vunpack.c.h.b16 %v1194
    %v1299 = vunpack.c.l.b16 %v1195
    %v1300 = vunpack.c.h.b16 %v1195
    %v1301 = vunpack.c.l.b16 %v1196
    %v1302 = vunpack.c.h.b16 %v1196
    %v1303 = vunpack.c.l.b16 %v1197
    %v1304 = vunpack.c.h.b16 %v1197
    %v1305 = vunpack.c.l.b16 %v1198
    %v1306 = vunpack.c.h.b16 %v1198
    %v1307 = vunpack.c.l.b16 %v1199
    %v1308 = vunpack.c.h.b16 %v1199
    %v1309 = vpack.c.b16 %v1247, %v1245
    %v1310 = vpack.c.b16 %v1248, %v1246
    %v1311 = vpack.c.b16 %v1251, %v1249
    %v1312 = vpack.c.b16 %v1252, %v1250
    %v1313 = vpack.c.b16 %v1255, %v1253
    %v1314 = vpack.c.b16 %v1256, %v1254
    %v1315 = vpack.c.b16 %v1259, %v1257
    %v1316 = vpack.c.b16 %v1260, %v1258
    %v1317 = vpack.c.b16 %v1263, %v1261
    %v1318 = vpack.c.b16 %v1264, %v1262
    %v1319 = vpack.c.b16 %v1267, %v1265
    %v1320 = vpack.c.b16 %v1268, %v1266
    %v1321 = vpack.c.b16 %v1271, %v1269
    %v1322 = vpack.c.b16 %v1272, %v1270
    %v1323 = vpack.c.b16 %v1275, %v1273
    %v1324 = vpack.c.b16 %v1276, %v1274
    %v1325 = vpack.c.b16 %v1279, %v1277
    %v1326 = vpack.c.b16 %v1280, %v1278
    %v1327 = vpack.c.b16 %v1283, %v1281
    %v1328 = vpack.c.b16 %v1284, %v1282
    %v1329 = vpack.c.b16 %v1287, %v1285
    %v1330 = vpack.c.b16 %v1288, %v1286
    %v1331 = vpack.c.b16 %v1291, %v1289
    %v1332 = vpack.c.b16 %v1292, %v1290
    %v1333 = vpack.c.b16 %v1295, %v1293
    %v1334 = vpack.c.b16 %v1296, %v1294
    %v1335 = vpack.c.b16 %v1299, %v1297
    %v1336 = vpack.c.b16 %v1300, %v1298
    %v1337 = vpack.c.b16 %v1303, %v1301
    %v1338 = vpack.c.b16 %v1304, %v1302
    %v1339 = vpack.c.b16 %v1307, %v1305
    %v1340 = vpack.c.b16 %v1308, %v1306
    %1373 = vmatprep.subr.bf16.mxu0 %v1324
    %1374 = vmatpush1.bf16.msra.mxu0 %v1323
    %1375 = vmatprep.subr.bf16.mxu0 %v1322
    %1376 = vmatpush1.bf16.msra.mxu0 %v1321
    %1377 = vmatprep.subr.bf16.mxu0 %v1320
    %1378 = vmatpush1.bf16.msra.mxu0 %v1319
    %1379 = vmatprep.subr.bf16.mxu0 %v1318
    %1380 = vmatpush1.bf16.msra.mxu0 %v1317
    %1381 = vmatprep.subr.bf16.mxu0 %v1316
    %1382 = vmatpush1.bf16.msra.mxu0 %v1315
    %1383 = vmatprep.subr.bf16.mxu0 %v1314
    %1384 = vmatpush1.bf16.msra.mxu0 %v1313
    %1385 = vmatprep.subr.bf16.mxu0 %v1312
    %1386 = vmatpush1.bf16.msra.mxu0 %v1311
    %1387 = vmatprep.subr.bf16.mxu0 %v1310
    %1388 = vmatpush1.bf16.msra.mxu0 %v1309
    %1389 = vmatprep.subr.bf16.mxu0 %v1340
    %1390 = vmatpush2.bf16.msra.mxu0 %v1339
    %1391 = vmatprep.subr.bf16.mxu0 %v1338
    %1392 = vmatpush2.bf16.msra.mxu0 %v1337
    %1393 = vmatprep.subr.bf16.mxu0 %v1336
    %1394 = vmatpush2.bf16.msra.mxu0 %v1335
    %1395 = vmatprep.subr.bf16.mxu0 %v1334
    %1396 = vmatpush2.bf16.msra.mxu0 %v1333
    %1397 = vmatprep.subr.bf16.mxu0 %v1332
    %1398 = vmatpush2.bf16.msra.mxu0 %v1331
    %1399 = vmatprep.subr.bf16.mxu0 %v1330
    %1400 = vmatpush2.bf16.msra.mxu0 %v1329
    %1401 = vmatprep.subr.bf16.mxu0 %v1328
    %1402 = vmatpush2.bf16.msra.mxu0 %v1327
    %1403 = vmatprep.subr.bf16.mxu0 %v1326
    %1404 = vmatpush2.bf16.msra.mxu0 %v1325
    %1405 = vmatprep.mubr.bf16.mxu0 %v228
    %1406 = vmatmul.mubr.bf16.gmra.mxu0 %v227
    %v1407 = vpop.f32.mrf.mxu0
    %v1408 = vadd.f32 %v1206, %v1407
    %v1409 = vpop.f32.mrf.mxu0
    %v1410 = vadd.f32 %v1210, %v1409
    %v1411 = vpop.f32.mrf.mxu0
    %v1412 = vpop.f32.mrf.mxu0
    %1413 = vdwg.mxu0
    %v1414 = vmax.f32 %v1408, 0.0
    %v1415 = vmax.f32 %v1410, 0.0
    %v1416 = vpack.c.bf16 %v1414, %v1414
    %v1417 = vpack.c.bf16 %v1415, %v1415
    %s1418 = scalar_lea.vmem [#allocation6], 1024
    %v1419 = vld [vmem:[%s1418] sm:$0xff]
    %v1420 = vld [vmem:[%s1418 + $0x8] sm:$0xff]
    %v1421 = vld [vmem:[%s1418 + $0x10] sm:$0xff]
    %v1422 = vld [vmem:[%s1418 + $0x18] sm:$0xff]
    %v1423 = vld [vmem:[%s1418 + $0x20] sm:$0xff]
    %v1424 = vld [vmem:[%s1418 + $0x28] sm:$0xff]
    %v1425 = vld [vmem:[%s1418 + $0x30] sm:$0xff]
    %v1426 = vld [vmem:[%s1418 + $0x38] sm:$0xff]
    %v1427 = vld [vmem:[%s1418 + $0x40] sm:$0xff]
    %v1428 = vld [vmem:[%s1418 + $0x48] sm:$0xff]
    %v1429 = vld [vmem:[%s1418 + $0x50] sm:$0xff]
    %v1430 = vld [vmem:[%s1418 + $0x58] sm:$0xff]
    %v1431 = vld [vmem:[%s1418 + $0x60] sm:$0xff]
    %v1432 = vld [vmem:[%s1418 + $0x68] sm:$0xff]
    %v1433 = vld [vmem:[%s1418 + $0x70] sm:$0xff]
    %v1434 = vld [vmem:[%s1418 + $0x78] sm:$0xff]
    %v1435 = vld [vmem:[%s1418 + $0x80] sm:$0xff]
    %v1436 = vld [vmem:[%s1418 + $0x88] sm:$0xff]
    %v1437 = vld [vmem:[%s1418 + $0x90] sm:$0xff]
    %v1438 = vld [vmem:[%s1418 + $0x98] sm:$0xff]
    %v1439 = vld [vmem:[%s1418 + $0xa0] sm:$0xff]
    %v1440 = vld [vmem:[%s1418 + $0xa8] sm:$0xff]
    %v1441 = vld [vmem:[%s1418 + $0xb0] sm:$0xff]
    %v1442 = vld [vmem:[%s1418 + $0xb8] sm:$0xff]
    %v1443 = vld [vmem:[%s1418 + $0xc0] sm:$0xff]
    %v1444 = vld [vmem:[%s1418 + $0xc8] sm:$0xff]
    %v1445 = vld [vmem:[%s1418 + $0xd0] sm:$0xff]
    %v1446 = vld [vmem:[%s1418 + $0xd8] sm:$0xff]
    %v1447 = vld [vmem:[%s1418 + $0xe0] sm:$0xff]
    %v1448 = vld [vmem:[%s1418 + $0xe8] sm:$0xff]
    %v1449 = vld [vmem:[%s1418 + $0xf0] sm:$0xff]
    %v1450 = vld [vmem:[%s1418 + $0xf8] sm:$0xff]
    %s1451 = scalar_lea.vmem %s1200, 1
    %v1452 = vld [vmem:[%s1451] ss:$4 sm:$0x3]
    %v1454 = vlaneseq
    %v1455 = vshrl.u32 %v1454, 7
    %v1456 = vsub.s32 0, %v1455
    %v1457 = vrot.slane %v1452, %v1456
    %v1458 = vlaneseq
    %v1459 = vshrl.u32 %v1458, 7
    %v1460 = vsub.s32 1, %v1459
    %v1461 = vrot.slane %v1452, %v1460
    %v1496 = vunpack.c.l.b16 %v1419
    %v1497 = vunpack.c.h.b16 %v1419
    %v1498 = vunpack.c.l.b16 %v1420
    %v1499 = vunpack.c.h.b16 %v1420
    %v1500 = vunpack.c.l.b16 %v1421
    %v1501 = vunpack.c.h.b16 %v1421
    %v1502 = vunpack.c.l.b16 %v1422
    %v1503 = vunpack.c.h.b16 %v1422
    %v1504 = vunpack.c.l.b16 %v1423
    %v1505 = vunpack.c.h.b16 %v1423
    %v1506 = vunpack.c.l.b16 %v1424
    %v1507 = vunpack.c.h.b16 %v1424
    %v1508 = vunpack.c.l.b16 %v1425
    %v1509 = vunpack.c.h.b16 %v1425
    %v1510 = vunpack.c.l.b16 %v1426
    %v1511 = vunpack.c.h.b16 %v1426
    %v1512 = vunpack.c.l.b16 %v1427
    %v1513 = vunpack.c.h.b16 %v1427
    %v1514 = vunpack.c.l.b16 %v1428
    %v1515 = vunpack.c.h.b16 %v1428
    %v1516 = vunpack.c.l.b16 %v1429
    %v1517 = vunpack.c.h.b16 %v1429
    %v1518 = vunpack.c.l.b16 %v1430
    %v1519 = vunpack.c.h.b16 %v1430
    %v1520 = vunpack.c.l.b16 %v1431
    %v1521 = vunpack.c.h.b16 %v1431
    %v1522 = vunpack.c.l.b16 %v1432
    %v1523 = vunpack.c.h.b16 %v1432
    %v1524 = vunpack.c.l.b16 %v1433
    %v1525 = vunpack.c.h.b16 %v1433
    %v1526 = vunpack.c.l.b16 %v1434
    %v1527 = vunpack.c.h.b16 %v1434
    %v1528 = vunpack.c.l.b16 %v1435
    %v1529 = vunpack.c.h.b16 %v1435
    %v1530 = vunpack.c.l.b16 %v1436
    %v1531 = vunpack.c.h.b16 %v1436
    %v1532 = vunpack.c.l.b16 %v1437
    %v1533 = vunpack.c.h.b16 %v1437
    %v1534 = vunpack.c.l.b16 %v1438
    %v1535 = vunpack.c.h.b16 %v1438
    %v1536 = vunpack.c.l.b16 %v1439
    %v1537 = vunpack.c.h.b16 %v1439
    %v1538 = vunpack.c.l.b16 %v1440
    %v1539 = vunpack.c.h.b16 %v1440
    %v1540 = vunpack.c.l.b16 %v1441
    %v1541 = vunpack.c.h.b16 %v1441
    %v1542 = vunpack.c.l.b16 %v1442
    %v1543 = vunpack.c.h.b16 %v1442
    %v1544 = vunpack.c.l.b16 %v1443
    %v1545 = vunpack.c.h.b16 %v1443
    %v1546 = vunpack.c.l.b16 %v1444
    %v1547 = vunpack.c.h.b16 %v1444
    %v1548 = vunpack.c.l.b16 %v1445
    %v1549 = vunpack.c.h.b16 %v1445
    %v1550 = vunpack.c.l.b16 %v1446
    %v1551 = vunpack.c.h.b16 %v1446
    %v1552 = vunpack.c.l.b16 %v1447
    %v1553 = vunpack.c.h.b16 %v1447
    %v1554 = vunpack.c.l.b16 %v1448
    %v1555 = vunpack.c.h.b16 %v1448
    %v1556 = vunpack.c.l.b16 %v1449
    %v1557 = vunpack.c.h.b16 %v1449
    %v1558 = vunpack.c.l.b16 %v1450
    %v1559 = vunpack.c.h.b16 %v1450
    %v1560 = vpack.c.b16 %v1498, %v1496
    %v1561 = vpack.c.b16 %v1499, %v1497
    %v1562 = vpack.c.b16 %v1502, %v1500
    %v1563 = vpack.c.b16 %v1503, %v1501
    %v1564 = vpack.c.b16 %v1506, %v1504
    %v1565 = vpack.c.b16 %v1507, %v1505
    %v1566 = vpack.c.b16 %v1510, %v1508
    %v1567 = vpack.c.b16 %v1511, %v1509
    %v1568 = vpack.c.b16 %v1514, %v1512
    %v1569 = vpack.c.b16 %v1515, %v1513
    %v1570 = vpack.c.b16 %v1518, %v1516
    %v1571 = vpack.c.b16 %v1519, %v1517
    %v1572 = vpack.c.b16 %v1522, %v1520
    %v1573 = vpack.c.b16 %v1523, %v1521
    %v1574 = vpack.c.b16 %v1526, %v1524
    %v1575 = vpack.c.b16 %v1527, %v1525
    %v1576 = vpack.c.b16 %v1530, %v1528
    %v1577 = vpack.c.b16 %v1531, %v1529
    %v1578 = vpack.c.b16 %v1534, %v1532
    %v1579 = vpack.c.b16 %v1535, %v1533
    %v1580 = vpack.c.b16 %v1538, %v1536
    %v1581 = vpack.c.b16 %v1539, %v1537
    %v1582 = vpack.c.b16 %v1542, %v1540
    %v1583 = vpack.c.b16 %v1543, %v1541
    %v1584 = vpack.c.b16 %v1546, %v1544
    %v1585 = vpack.c.b16 %v1547, %v1545
    %v1586 = vpack.c.b16 %v1550, %v1548
    %v1587 = vpack.c.b16 %v1551, %v1549
    %v1588 = vpack.c.b16 %v1554, %v1552
    %v1589 = vpack.c.b16 %v1555, %v1553
    %v1590 = vpack.c.b16 %v1558, %v1556
    %v1591 = vpack.c.b16 %v1559, %v1557
    %1624 = vmatprep.subr.bf16.mxu0 %v1575
    %1625 = vmatpush1.bf16.msra.mxu0 %v1574
    %1626 = vmatprep.subr.bf16.mxu0 %v1573
    %1627 = vmatpush1.bf16.msra.mxu0 %v1572
    %1628 = vmatprep.subr.bf16.mxu0 %v1571
    %1629 = vmatpush1.bf16.msra.mxu0 %v1570
    %1630 = vmatprep.subr.bf16.mxu0 %v1569
    %1631 = vmatpush1.bf16.msra.mxu0 %v1568
    %1632 = vmatprep.subr.bf16.mxu0 %v1567
    %1633 = vmatpush1.bf16.msra.mxu0 %v1566
    %1634 = vmatprep.subr.bf16.mxu0 %v1565
    %1635 = vmatpush1.bf16.msra.mxu0 %v1564
    %1636 = vmatprep.subr.bf16.mxu0 %v1563
    %1637 = vmatpush1.bf16.msra.mxu0 %v1562
    %1638 = vmatprep.subr.bf16.mxu0 %v1561
    %1639 = vmatpush1.bf16.msra.mxu0 %v1560
    %1640 = vmatprep.subr.bf16.mxu0 %v1591
    %1641 = vmatpush2.bf16.msra.mxu0 %v1590
    %1642 = vmatprep.subr.bf16.mxu0 %v1589
    %1643 = vmatpush2.bf16.msra.mxu0 %v1588
    %1644 = vmatprep.subr.bf16.mxu0 %v1587
    %1645 = vmatpush2.bf16.msra.mxu0 %v1586
    %1646 = vmatprep.subr.bf16.mxu0 %v1585
    %1647 = vmatpush2.bf16.msra.mxu0 %v1584
    %1648 = vmatprep.subr.bf16.mxu0 %v1583
    %1649 = vmatpush2.bf16.msra.mxu0 %v1582
    %1650 = vmatprep.subr.bf16.mxu0 %v1581
    %1651 = vmatpush2.bf16.msra.mxu0 %v1580
    %1652 = vmatprep.subr.bf16.mxu0 %v1579
    %1653 = vmatpush2.bf16.msra.mxu0 %v1578
    %1654 = vmatprep.subr.bf16.mxu0 %v1577
    %1655 = vmatpush2.bf16.msra.mxu0 %v1576
    %1656 = vmatprep.mubr.bf16.mxu0 %v1417
    %1657 = vmatmul.mubr.bf16.gmra.mxu0 %v1416
    %v1658 = vpop.f32.mrf.mxu0
    %v1659 = vadd.f32 %v1457, %v1658
    %v1660 = vpop.f32.mrf.mxu0
    %v1661 = vadd.f32 %v1461, %v1660
    %v1662 = vpop.f32.mrf.mxu0
    %v1663 = vpop.f32.mrf.mxu0
    %1664 = vdwg.mxu0
    %v1665 = vmax.f32 %v1659, 0.0
    %v1666 = vmax.f32 %v1661, 0.0
    %v1667 = vpack.c.bf16 %v1665, %v1665
    %v1668 = vpack.c.bf16 %v1666, %v1666
    %s1669 = scalar_lea.vmem [#allocation6], 1280
    %v1670 = vld [vmem:[%s1669] sm:$0xff]
    %v1671 = vld [vmem:[%s1669 + $0x8] sm:$0xff]
    %v1672 = vld [vmem:[%s1669 + $0x10] sm:$0xff]
    %v1673 = vld [vmem:[%s1669 + $0x18] sm:$0xff]
    %v1674 = vld [vmem:[%s1669 + $0x20] sm:$0xff]
    %v1675 = vld [vmem:[%s1669 + $0x28] sm:$0xff]
    %v1676 = vld [vmem:[%s1669 + $0x30] sm:$0xff]
    %v1677 = vld [vmem:[%s1669 + $0x38] sm:$0xff]
    %v1678 = vld [vmem:[%s1669 + $0x40] sm:$0xff]
    %v1679 = vld [vmem:[%s1669 + $0x48] sm:$0xff]
    %v1680 = vld [vmem:[%s1669 + $0x50] sm:$0xff]
    %v1681 = vld [vmem:[%s1669 + $0x58] sm:$0xff]
    %v1682 = vld [vmem:[%s1669 + $0x60] sm:$0xff]
    %v1683 = vld [vmem:[%s1669 + $0x68] sm:$0xff]
    %v1684 = vld [vmem:[%s1669 + $0x70] sm:$0xff]
    %v1685 = vld [vmem:[%s1669 + $0x78] sm:$0xff]
    %v1686 = vld [vmem:[%s1669 + $0x80] sm:$0xff]
    %v1687 = vld [vmem:[%s1669 + $0x88] sm:$0xff]
    %v1688 = vld [vmem:[%s1669 + $0x90] sm:$0xff]
    %v1689 = vld [vmem:[%s1669 + $0x98] sm:$0xff]
    %v1690 = vld [vmem:[%s1669 + $0xa0] sm:$0xff]
    %v1691 = vld [vmem:[%s1669 + $0xa8] sm:$0xff]
    %v1692 = vld [vmem:[%s1669 + $0xb0] sm:$0xff]
    %v1693 = vld [vmem:[%s1669 + $0xb8] sm:$0xff]
    %v1694 = vld [vmem:[%s1669 + $0xc0] sm:$0xff]
    %v1695 = vld [vmem:[%s1669 + $0xc8] sm:$0xff]
    %v1696 = vld [vmem:[%s1669 + $0xd0] sm:$0xff]
    %v1697 = vld [vmem:[%s1669 + $0xd8] sm:$0xff]
    %v1698 = vld [vmem:[%s1669 + $0xe0] sm:$0xff]
    %v1699 = vld [vmem:[%s1669 + $0xe8] sm:$0xff]
    %v1700 = vld [vmem:[%s1669 + $0xf0] sm:$0xff]
    %v1701 = vld [vmem:[%s1669 + $0xf8] sm:$0xff]
    %s1702 = scalar_lea.vmem %s1200, 2
    %v1703 = vld [vmem:[%s1702] ss:$4 sm:$0x3]
    %v1705 = vlaneseq
    %v1706 = vshrl.u32 %v1705, 7
    %v1707 = vsub.s32 0, %v1706
    %v1708 = vrot.slane %v1703, %v1707
    %v1709 = vlaneseq
    %v1710 = vshrl.u32 %v1709, 7
    %v1711 = vsub.s32 1, %v1710
    %v1712 = vrot.slane %v1703, %v1711
    %v1747 = vunpack.c.l.b16 %v1670
    %v1748 = vunpack.c.h.b16 %v1670
    %v1749 = vunpack.c.l.b16 %v1671
    %v1750 = vunpack.c.h.b16 %v1671
    %v1751 = vunpack.c.l.b16 %v1672
    %v1752 = vunpack.c.h.b16 %v1672
    %v1753 = vunpack.c.l.b16 %v1673
    %v1754 = vunpack.c.h.b16 %v1673
    %v1755 = vunpack.c.l.b16 %v1674
    %v1756 = vunpack.c.h.b16 %v1674
    %v1757 = vunpack.c.l.b16 %v1675
    %v1758 = vunpack.c.h.b16 %v1675
    %v1759 = vunpack.c.l.b16 %v1676
    %v1760 = vunpack.c.h.b16 %v1676
    %v1761 = vunpack.c.l.b16 %v1677
    %v1762 = vunpack.c.h.b16 %v1677
    %v1763 = vunpack.c.l.b16 %v1678
    %v1764 = vunpack.c.h.b16 %v1678
    %v1765 = vunpack.c.l.b16 %v1679
    %v1766 = vunpack.c.h.b16 %v1679
    %v1767 = vunpack.c.l.b16 %v1680
    %v1768 = vunpack.c.h.b16 %v1680
    %v1769 = vunpack.c.l.b16 %v1681
    %v1770 = vunpack.c.h.b16 %v1681
    %v1771 = vunpack.c.l.b16 %v1682
    %v1772 = vunpack.c.h.b16 %v1682
    %v1773 = vunpack.c.l.b16 %v1683
    %v1774 = vunpack.c.h.b16 %v1683
    %v1775 = vunpack.c.l.b16 %v1684
    %v1776 = vunpack.c.h.b16 %v1684
    %v1777 = vunpack.c.l.b16 %v1685
    %v1778 = vunpack.c.h.b16 %v1685
    %v1779 = vunpack.c.l.b16 %v1686
    %v1780 = vunpack.c.h.b16 %v1686
    %v1781 = vunpack.c.l.b16 %v1687
    %v1782 = vunpack.c.h.b16 %v1687
    %v1783 = vunpack.c.l.b16 %v1688
    %v1784 = vunpack.c.h.b16 %v1688
    %v1785 = vunpack.c.l.b16 %v1689
    %v1786 = vunpack.c.h.b16 %v1689
    %v1787 = vunpack.c.l.b16 %v1690
    %v1788 = vunpack.c.h.b16 %v1690
    %v1789 = vunpack.c.l.b16 %v1691
    %v1790 = vunpack.c.h.b16 %v1691
    %v1791 = vunpack.c.l.b16 %v1692
    %v1792 = vunpack.c.h.b16 %v1692
    %v1793 = vunpack.c.l.b16 %v1693
    %v1794 = vunpack.c.h.b16 %v1693
    %v1795 = vunpack.c.l.b16 %v1694
    %v1796 = vunpack.c.h.b16 %v1694
    %v1797 = vunpack.c.l.b16 %v1695
    %v1798 = vunpack.c.h.b16 %v1695
    %v1799 = vunpack.c.l.b16 %v1696
    %v1800 = vunpack.c.h.b16 %v1696
    %v1801 = vunpack.c.l.b16 %v1697
    %v1802 = vunpack.c.h.b16 %v1697
    %v1803 = vunpack.c.l.b16 %v1698
    %v1804 = vunpack.c.h.b16 %v1698
    %v1805 = vunpack.c.l.b16 %v1699
    %v1806 = vunpack.c.h.b16 %v1699
    %v1807 = vunpack.c.l.b16 %v1700
    %v1808 = vunpack.c.h.b16 %v1700
    %v1809 = vunpack.c.l.b16 %v1701
    %v1810 = vunpack.c.h.b16 %v1701
    %v1811 = vpack.c.b16 %v1749, %v1747
    %v1812 = vpack.c.b16 %v1750, %v1748
    %v1813 = vpack.c.b16 %v1753, %v1751
    %v1814 = vpack.c.b16 %v1754, %v1752
    %v1815 = vpack.c.b16 %v1757, %v1755
    %v1816 = vpack.c.b16 %v1758, %v1756
    %v1817 = vpack.c.b16 %v1761, %v1759
    %v1818 = vpack.c.b16 %v1762, %v1760
    %v1819 = vpack.c.b16 %v1765, %v1763
    %v1820 = vpack.c.b16 %v1766, %v1764
    %v1821 = vpack.c.b16 %v1769, %v1767
    %v1822 = vpack.c.b16 %v1770, %v1768
    %v1823 = vpack.c.b16 %v1773, %v1771
    %v1824 = vpack.c.b16 %v1774, %v1772
    %v1825 = vpack.c.b16 %v1777, %v1775
    %v1826 = vpack.c.b16 %v1778, %v1776
    %v1827 = vpack.c.b16 %v1781, %v1779
    %v1828 = vpack.c.b16 %v1782, %v1780
    %v1829 = vpack.c.b16 %v1785, %v1783
    %v1830 = vpack.c.b16 %v1786, %v1784
    %v1831 = vpack.c.b16 %v1789, %v1787
    %v1832 = vpack.c.b16 %v1790, %v1788
    %v1833 = vpack.c.b16 %v1793, %v1791
    %v1834 = vpack.c.b16 %v1794, %v1792
    %v1835 = vpack.c.b16 %v1797, %v1795
    %v1836 = vpack.c.b16 %v1798, %v1796
    %v1837 = vpack.c.b16 %v1801, %v1799
    %v1838 = vpack.c.b16 %v1802, %v1800
    %v1839 = vpack.c.b16 %v1805, %v1803
    %v1840 = vpack.c.b16 %v1806, %v1804
    %v1841 = vpack.c.b16 %v1809, %v1807
    %v1842 = vpack.c.b16 %v1810, %v1808
    %1875 = vmatprep.subr.bf16.mxu0 %v1826
    %1876 = vmatpush1.bf16.msra.mxu0 %v1825
    %1877 = vmatprep.subr.bf16.mxu0 %v1824
    %1878 = vmatpush1.bf16.msra.mxu0 %v1823
    %1879 = vmatprep.subr.bf16.mxu0 %v1822
    %1880 = vmatpush1.bf16.msra.mxu0 %v1821
    %1881 = vmatprep.subr.bf16.mxu0 %v1820
    %1882 = vmatpush1.bf16.msra.mxu0 %v1819
    %1883 = vmatprep.subr.bf16.mxu0 %v1818
    %1884 = vmatpush1.bf16.msra.mxu0 %v1817
    %1885 = vmatprep.subr.bf16.mxu0 %v1816
    %1886 = vmatpush1.bf16.msra.mxu0 %v1815
    %1887 = vmatprep.subr.bf16.mxu0 %v1814
    %1888 = vmatpush1.bf16.msra.mxu0 %v1813
    %1889 = vmatprep.subr.bf16.mxu0 %v1812
    %1890 = vmatpush1.bf16.msra.mxu0 %v1811
    %1891 = vmatprep.subr.bf16.mxu0 %v1842
    %1892 = vmatpush2.bf16.msra.mxu0 %v1841
    %1893 = vmatprep.subr.bf16.mxu0 %v1840
    %1894 = vmatpush2.bf16.msra.mxu0 %v1839
    %1895 = vmatprep.subr.bf16.mxu0 %v1838
    %1896 = vmatpush2.bf16.msra.mxu0 %v1837
    %1897 = vmatprep.subr.bf16.mxu0 %v1836
    %1898 = vmatpush2.bf16.msra.mxu0 %v1835
    %1899 = vmatprep.subr.bf16.mxu0 %v1834
    %1900 = vmatpush2.bf16.msra.mxu0 %v1833
    %1901 = vmatprep.subr.bf16.mxu0 %v1832
    %1902 = vmatpush2.bf16.msra.mxu0 %v1831
    %1903 = vmatprep.subr.bf16.mxu0 %v1830
    %1904 = vmatpush2.bf16.msra.mxu0 %v1829
    %1905 = vmatprep.subr.bf16.mxu0 %v1828
    %1906 = vmatpush2.bf16.msra.mxu0 %v1827
    %1907 = vmatprep.mubr.bf16.mxu0 %v1668
    %1908 = vmatmul.mubr.bf16.gmra.mxu0 %v1667
    %v1909 = vpop.f32.mrf.mxu0
    %v1910 = vadd.f32 %v1708, %v1909
    %v1911 = vpop.f32.mrf.mxu0
    %v1912 = vadd.f32 %v1712, %v1911
    %v1913 = vpop.f32.mrf.mxu0
    %v1914 = vpop.f32.mrf.mxu0
    %1915 = vdwg.mxu0
    %v1916 = vmax.f32 %v1910, 0.0
    %v1917 = vmax.f32 %v1912, 0.0
    %v1918 = vpack.c.bf16 %v1916, %v1916
    %v1919 = vpack.c.bf16 %v1917, %v1917
    %s1920 = scalar_lea.vmem [#allocation7], 128
    %v1921 = vld [vmem:[%s1920] sm:$0xf]
    %v1922 = vld [vmem:[%s1920 + $0x4] sm:$0xf]
    %v1923 = vld [vmem:[%s1920 + $0x8] sm:$0xf]
    %v1924 = vld [vmem:[%s1920 + $0xc] sm:$0xf]
    %v1925 = vld [vmem:[%s1920 + $0x10] sm:$0xf]
    %v1926 = vld [vmem:[%s1920 + $0x14] sm:$0xf]
    %v1927 = vld [vmem:[%s1920 + $0x18] sm:$0xf]
    %v1928 = vld [vmem:[%s1920 + $0x1c] sm:$0xf]
    %v1929 = vld [vmem:[%s1920 + $0x20] sm:$0xf]
    %v1930 = vld [vmem:[%s1920 + $0x24] sm:$0xf]
    %v1931 = vld [vmem:[%s1920 + $0x28] sm:$0xf]
    %v1932 = vld [vmem:[%s1920 + $0x2c] sm:$0xf]
    %v1933 = vld [vmem:[%s1920 + $0x30] sm:$0xf]
    %v1934 = vld [vmem:[%s1920 + $0x34] sm:$0xf]
    %v1935 = vld [vmem:[%s1920 + $0x38] sm:$0xf]
    %v1936 = vld [vmem:[%s1920 + $0x3c] sm:$0xf]
    %v1937 = vld [vmem:[%s1920 + $0x40] sm:$0xf]
    %v1938 = vld [vmem:[%s1920 + $0x44] sm:$0xf]
    %v1939 = vld [vmem:[%s1920 + $0x48] sm:$0xf]
    %v1940 = vld [vmem:[%s1920 + $0x4c] sm:$0xf]
    %v1941 = vld [vmem:[%s1920 + $0x50] sm:$0xf]
    %v1942 = vld [vmem:[%s1920 + $0x54] sm:$0xf]
    %v1943 = vld [vmem:[%s1920 + $0x58] sm:$0xf]
    %v1944 = vld [vmem:[%s1920 + $0x5c] sm:$0xf]
    %v1945 = vld [vmem:[%s1920 + $0x60] sm:$0xf]
    %v1946 = vld [vmem:[%s1920 + $0x64] sm:$0xf]
    %v1947 = vld [vmem:[%s1920 + $0x68] sm:$0xf]
    %v1948 = vld [vmem:[%s1920 + $0x6c] sm:$0xf]
    %v1949 = vld [vmem:[%s1920 + $0x70] sm:$0xf]
    %v1950 = vld [vmem:[%s1920 + $0x74] sm:$0xf]
    %v1951 = vld [vmem:[%s1920 + $0x78] sm:$0xf]
    %v1952 = vld [vmem:[%s1920 + $0x7c] sm:$0xf]
    %s1953 = scalar_lea.vmem [#allocation9], 1
    %v1954 = vld [vmem:[%s1953] sm:$0x1]
    %v1956 = vlaneseq
    %v1957 = vshrl.u32 %v1956, 7
    %v1958 = vsub.s32 0, %v1957
    %v1959 = vrot.slane %v1954, %v1958
    %v1993 = vunpack.c.l.b16 %v1921
    %v1994 = vunpack.c.l.b16 %v1922
    %v1995 = vunpack.c.l.b16 %v1923
    %v1996 = vunpack.c.l.b16 %v1924
    %v1997 = vunpack.c.l.b16 %v1925
    %v1998 = vunpack.c.l.b16 %v1926
    %v1999 = vunpack.c.l.b16 %v1927
    %v2000 = vunpack.c.l.b16 %v1928
    %v2001 = vunpack.c.l.b16 %v1929
    %v2002 = vunpack.c.l.b16 %v1930
    %v2003 = vunpack.c.l.b16 %v1931
    %v2004 = vunpack.c.l.b16 %v1932
    %v2005 = vunpack.c.l.b16 %v1933
    %v2006 = vunpack.c.l.b16 %v1934
    %v2007 = vunpack.c.l.b16 %v1935
    %v2008 = vunpack.c.l.b16 %v1936
    %v2009 = vunpack.c.l.b16 %v1937
    %v2010 = vunpack.c.l.b16 %v1938
    %v2011 = vunpack.c.l.b16 %v1939
    %v2012 = vunpack.c.l.b16 %v1940
    %v2013 = vunpack.c.l.b16 %v1941
    %v2014 = vunpack.c.l.b16 %v1942
    %v2015 = vunpack.c.l.b16 %v1943
    %v2016 = vunpack.c.l.b16 %v1944
    %v2017 = vunpack.c.l.b16 %v1945
    %v2018 = vunpack.c.l.b16 %v1946
    %v2019 = vunpack.c.l.b16 %v1947
    %v2020 = vunpack.c.l.b16 %v1948
    %v2021 = vunpack.c.l.b16 %v1949
    %v2022 = vunpack.c.l.b16 %v1950
    %v2023 = vunpack.c.l.b16 %v1951
    %v2024 = vunpack.c.l.b16 %v1952
    %v2025 = vpack.c.b16 %v1994, %v1993
    %v2026 = vpack.c.b16 %v1996, %v1995
    %v2027 = vpack.c.b16 %v1998, %v1997
    %v2028 = vpack.c.b16 %v2000, %v1999
    %v2029 = vpack.c.b16 %v2002, %v2001
    %v2030 = vpack.c.b16 %v2004, %v2003
    %v2031 = vpack.c.b16 %v2006, %v2005
    %v2032 = vpack.c.b16 %v2008, %v2007
    %v2033 = vpack.c.b16 %v2010, %v2009
    %v2034 = vpack.c.b16 %v2012, %v2011
    %v2035 = vpack.c.b16 %v2014, %v2013
    %v2036 = vpack.c.b16 %v2016, %v2015
    %v2037 = vpack.c.b16 %v2018, %v2017
    %v2038 = vpack.c.b16 %v2020, %v2019
    %v2039 = vpack.c.b16 %v2022, %v2021
    %v2040 = vpack.c.b16 %v2024, %v2023
    %2057 = vmatprep.subr.bf16.mxu0 0
    %2058 = vmatpush1.bf16.msra.mxu0 %v2032
    %2059 = vmatprep.subr.bf16.mxu0 0
    %2060 = vmatpush1.bf16.msra.mxu0 %v2031
    %2061 = vmatprep.subr.bf16.mxu0 0
    %2062 = vmatpush1.bf16.msra.mxu0 %v2030
    %2063 = vmatprep.subr.bf16.mxu0 0
    %2064 = vmatpush1.bf16.msra.mxu0 %v2029
    %2065 = vmatprep.subr.bf16.mxu0 0
    %2066 = vmatpush1.bf16.msra.mxu0 %v2028
    %2067 = vmatprep.subr.bf16.mxu0 0
    %2068 = vmatpush1.bf16.msra.mxu0 %v2027
    %2069 = vmatprep.subr.bf16.mxu0 0
    %2070 = vmatpush1.bf16.msra.mxu0 %v2026
    %2071 = vmatprep.subr.bf16.mxu0 0
    %2072 = vmatpush1.bf16.msra.mxu0 %v2025
    %2073 = vmatprep.subr.bf16.mxu0 0
    %2074 = vmatpush2.bf16.msra.mxu0 %v2040
    %2075 = vmatprep.subr.bf16.mxu0 0
    %2076 = vmatpush2.bf16.msra.mxu0 %v2039
    %2077 = vmatprep.subr.bf16.mxu0 0
    %2078 = vmatpush2.bf16.msra.mxu0 %v2038
    %2079 = vmatprep.subr.bf16.mxu0 0
    %2080 = vmatpush2.bf16.msra.mxu0 %v2037
    %2081 = vmatprep.subr.bf16.mxu0 0
    %2082 = vmatpush2.bf16.msra.mxu0 %v2036
    %2083 = vmatprep.subr.bf16.mxu0 0
    %2084 = vmatpush2.bf16.msra.mxu0 %v2035
    %2085 = vmatprep.subr.bf16.mxu0 0
    %2086 = vmatpush2.bf16.msra.mxu0 %v2034
    %2087 = vmatprep.subr.bf16.mxu0 0
    %2088 = vmatpush2.bf16.msra.mxu0 %v2033
    %2089 = vmatprep.mubr.bf16.mxu0 %v1919
    %2090 = vmatmul.mubr.bf16.gmra.mxu0 %v1918
    %v2091 = vpop.f32.mrf.mxu0
    %v2092 = vadd.f32 %v1959, %v2091
    %v2093 = vpop.f32.mrf.mxu0
    %v2094 = vpop.f32.mrf.mxu0
    %v2095 = vpop.f32.mrf.mxu0
    %2096 = vdwg.mxu0
    %2097 = vmax.xlane.f32.xlu0 %v2092
    %v2098 = vpop.xlane.xlu0 %2097
    %v2099 = vsub.f32 %v2092, %v2098
    %v2100 = vmul.f32 %v2099, 1.442695
    %v2101 = vpow.pop %v2100
    %2102 = vadd.xlane.f32.xlu0 %v2101
    %v2103 = vpop.xlane.xlu0 %2102
    %v2104 = vlog2.pop %v2103
    %v2105 = vmul.f32 %v2104, 0.6931472
    %v2106 = vsub.f32 %v2099, %v2105
    %s2107 = scalar_lea.vmem %s7, 8
    %2108 = vst.msk [vmem:[%s2107] sm:$0xff] %vm1165, %v2106
    %s2109 = scalar_lea.vmem [#allocation6], 1536
    %v2110 = vld [vmem:[%s2109] sm:$0xff]
    %v2111 = vld [vmem:[%s2109 + $0x8] sm:$0xff]
    %v2112 = vld [vmem:[%s2109 + $0x10] sm:$0xff]
    %v2113 = vld [vmem:[%s2109 + $0x18] sm:$0xff]
    %v2114 = vld [vmem:[%s2109 + $0x20] sm:$0xff]
    %v2115 = vld [vmem:[%s2109 + $0x28] sm:$0xff]
    %v2116 = vld [vmem:[%s2109 + $0x30] sm:$0xff]
    %v2117 = vld [vmem:[%s2109 + $0x38] sm:$0xff]
    %v2118 = vld [vmem:[%s2109 + $0x40] sm:$0xff]
    %v2119 = vld [vmem:[%s2109 + $0x48] sm:$0xff]
    %v2120 = vld [vmem:[%s2109 + $0x50] sm:$0xff]
    %v2121 = vld [vmem:[%s2109 + $0x58] sm:$0xff]
    %v2122 = vld [vmem:[%s2109 + $0x60] sm:$0xff]
    %v2123 = vld [vmem:[%s2109 + $0x68] sm:$0xff]
    %v2124 = vld [vmem:[%s2109 + $0x70] sm:$0xff]
    %v2125 = vld [vmem:[%s2109 + $0x78] sm:$0xff]
    %v2126 = vld [vmem:[%s2109 + $0x80] sm:$0xff]
    %v2127 = vld [vmem:[%s2109 + $0x88] sm:$0xff]
    %v2128 = vld [vmem:[%s2109 + $0x90] sm:$0xff]
    %v2129 = vld [vmem:[%s2109 + $0x98] sm:$0xff]
    %v2130 = vld [vmem:[%s2109 + $0xa0] sm:$0xff]
    %v2131 = vld [vmem:[%s2109 + $0xa8] sm:$0xff]
    %v2132 = vld [vmem:[%s2109 + $0xb0] sm:$0xff]
    %v2133 = vld [vmem:[%s2109 + $0xb8] sm:$0xff]
    %v2134 = vld [vmem:[%s2109 + $0xc0] sm:$0xff]
    %v2135 = vld [vmem:[%s2109 + $0xc8] sm:$0xff]
    %v2136 = vld [vmem:[%s2109 + $0xd0] sm:$0xff]
    %v2137 = vld [vmem:[%s2109 + $0xd8] sm:$0xff]
    %v2138 = vld [vmem:[%s2109 + $0xe0] sm:$0xff]
    %v2139 = vld [vmem:[%s2109 + $0xe8] sm:$0xff]
    %v2140 = vld [vmem:[%s2109 + $0xf0] sm:$0xff]
    %v2141 = vld [vmem:[%s2109 + $0xf8] sm:$0xff]
    %s2142 = scalar_lea.vmem %s4, 16
    %v2143 = vld [vmem:[%s2142] ss:$4 sm:$0x3]
    %v2145 = vlaneseq
    %v2146 = vshrl.u32 %v2145, 7
    %v2147 = vsub.s32 0, %v2146
    %v2148 = vrot.slane %v2143, %v2147
    %v2149 = vlaneseq
    %v2150 = vshrl.u32 %v2149, 7
    %v2151 = vsub.s32 1, %v2150
    %v2152 = vrot.slane %v2143, %v2151
    %v2187 = vunpack.c.l.b16 %v2110
    %v2188 = vunpack.c.h.b16 %v2110
    %v2189 = vunpack.c.l.b16 %v2111
    %v2190 = vunpack.c.h.b16 %v2111
    %v2191 = vunpack.c.l.b16 %v2112
    %v2192 = vunpack.c.h.b16 %v2112
    %v2193 = vunpack.c.l.b16 %v2113
    %v2194 = vunpack.c.h.b16 %v2113
    %v2195 = vunpack.c.l.b16 %v2114
    %v2196 = vunpack.c.h.b16 %v2114
    %v2197 = vunpack.c.l.b16 %v2115
    %v2198 = vunpack.c.h.b16 %v2115
    %v2199 = vunpack.c.l.b16 %v2116
    %v2200 = vunpack.c.h.b16 %v2116
    %v2201 = vunpack.c.l.b16 %v2117
    %v2202 = vunpack.c.h.b16 %v2117
    %v2203 = vunpack.c.l.b16 %v2118
    %v2204 = vunpack.c.h.b16 %v2118
    %v2205 = vunpack.c.l.b16 %v2119
    %v2206 = vunpack.c.h.b16 %v2119
    %v2207 = vunpack.c.l.b16 %v2120
    %v2208 = vunpack.c.h.b16 %v2120
    %v2209 = vunpack.c.l.b16 %v2121
    %v2210 = vunpack.c.h.b16 %v2121
    %v2211 = vunpack.c.l.b16 %v2122
    %v2212 = vunpack.c.h.b16 %v2122
    %v2213 = vunpack.c.l.b16 %v2123
    %v2214 = vunpack.c.h.b16 %v2123
    %v2215 = vunpack.c.l.b16 %v2124
    %v2216 = vunpack.c.h.b16 %v2124
    %v2217 = vunpack.c.l.b16 %v2125
    %v2218 = vunpack.c.h.b16 %v2125
    %v2219 = vunpack.c.l.b16 %v2126
    %v2220 = vunpack.c.h.b16 %v2126
    %v2221 = vunpack.c.l.b16 %v2127
    %v2222 = vunpack.c.h.b16 %v2127
    %v2223 = vunpack.c.l.b16 %v2128
    %v2224 = vunpack.c.h.b16 %v2128
    %v2225 = vunpack.c.l.b16 %v2129
    %v2226 = vunpack.c.h.b16 %v2129
    %v2227 = vunpack.c.l.b16 %v2130
    %v2228 = vunpack.c.h.b16 %v2130
    %v2229 = vunpack.c.l.b16 %v2131
    %v2230 = vunpack.c.h.b16 %v2131
    %v2231 = vunpack.c.l.b16 %v2132
    %v2232 = vunpack.c.h.b16 %v2132
    %v2233 = vunpack.c.l.b16 %v2133
    %v2234 = vunpack.c.h.b16 %v2133
    %v2235 = vunpack.c.l.b16 %v2134
    %v2236 = vunpack.c.h.b16 %v2134
    %v2237 = vunpack.c.l.b16 %v2135
    %v2238 = vunpack.c.h.b16 %v2135
    %v2239 = vunpack.c.l.b16 %v2136
    %v2240 = vunpack.c.h.b16 %v2136
    %v2241 = vunpack.c.l.b16 %v2137
    %v2242 = vunpack.c.h.b16 %v2137
    %v2243 = vunpack.c.l.b16 %v2138
    %v2244 = vunpack.c.h.b16 %v2138
    %v2245 = vunpack.c.l.b16 %v2139
    %v2246 = vunpack.c.h.b16 %v2139
    %v2247 = vunpack.c.l.b16 %v2140
    %v2248 = vunpack.c.h.b16 %v2140
    %v2249 = vunpack.c.l.b16 %v2141
    %v2250 = vunpack.c.h.b16 %v2141
    %v2251 = vpack.c.b16 %v2189, %v2187
    %v2252 = vpack.c.b16 %v2190, %v2188
    %v2253 = vpack.c.b16 %v2193, %v2191
    %v2254 = vpack.c.b16 %v2194, %v2192
    %v2255 = vpack.c.b16 %v2197, %v2195
    %v2256 = vpack.c.b16 %v2198, %v2196
    %v2257 = vpack.c.b16 %v2201, %v2199
    %v2258 = vpack.c.b16 %v2202, %v2200
    %v2259 = vpack.c.b16 %v2205, %v2203
    %v2260 = vpack.c.b16 %v2206, %v2204
    %v2261 = vpack.c.b16 %v2209, %v2207
    %v2262 = vpack.c.b16 %v2210, %v2208
    %v2263 = vpack.c.b16 %v2213, %v2211
    %v2264 = vpack.c.b16 %v2214, %v2212
    %v2265 = vpack.c.b16 %v2217, %v2215
    %v2266 = vpack.c.b16 %v2218, %v2216
    %v2267 = vpack.c.b16 %v2221, %v2219
    %v2268 = vpack.c.b16 %v2222, %v2220
    %v2269 = vpack.c.b16 %v2225, %v2223
    %v2270 = vpack.c.b16 %v2226, %v2224
    %v2271 = vpack.c.b16 %v2229, %v2227
    %v2272 = vpack.c.b16 %v2230, %v2228
    %v2273 = vpack.c.b16 %v2233, %v2231
    %v2274 = vpack.c.b16 %v2234, %v2232
    %v2275 = vpack.c.b16 %v2237, %v2235
    %v2276 = vpack.c.b16 %v2238, %v2236
    %v2277 = vpack.c.b16 %v2241, %v2239
    %v2278 = vpack.c.b16 %v2242, %v2240
    %v2279 = vpack.c.b16 %v2245, %v2243
    %v2280 = vpack.c.b16 %v2246, %v2244
    %v2281 = vpack.c.b16 %v2249, %v2247
    %v2282 = vpack.c.b16 %v2250, %v2248
    %2315 = vmatprep.subr.bf16.mxu0 %v2266
    %2316 = vmatpush1.bf16.msra.mxu0 %v2265
    %2317 = vmatprep.subr.bf16.mxu0 %v2264
    %2318 = vmatpush1.bf16.msra.mxu0 %v2263
    %2319 = vmatprep.subr.bf16.mxu0 %v2262
    %2320 = vmatpush1.bf16.msra.mxu0 %v2261
    %2321 = vmatprep.subr.bf16.mxu0 %v2260
    %2322 = vmatpush1.bf16.msra.mxu0 %v2259
    %2323 = vmatprep.subr.bf16.mxu0 %v2258
    %2324 = vmatpush1.bf16.msra.mxu0 %v2257
    %2325 = vmatprep.subr.bf16.mxu0 %v2256
    %2326 = vmatpush1.bf16.msra.mxu0 %v2255
    %2327 = vmatprep.subr.bf16.mxu0 %v2254
    %2328 = vmatpush1.bf16.msra.mxu0 %v2253
    %2329 = vmatprep.subr.bf16.mxu0 %v2252
    %2330 = vmatpush1.bf16.msra.mxu0 %v2251
    %2331 = vmatprep.subr.bf16.mxu0 %v2282
    %2332 = vmatpush2.bf16.msra.mxu0 %v2281
    %2333 = vmatprep.subr.bf16.mxu0 %v2280
    %2334 = vmatpush2.bf16.msra.mxu0 %v2279
    %2335 = vmatprep.subr.bf16.mxu0 %v2278
    %2336 = vmatpush2.bf16.msra.mxu0 %v2277
    %2337 = vmatprep.subr.bf16.mxu0 %v2276
    %2338 = vmatpush2.bf16.msra.mxu0 %v2275
    %2339 = vmatprep.subr.bf16.mxu0 %v2274
    %2340 = vmatpush2.bf16.msra.mxu0 %v2273
    %2341 = vmatprep.subr.bf16.mxu0 %v2272
    %2342 = vmatpush2.bf16.msra.mxu0 %v2271
    %2343 = vmatprep.subr.bf16.mxu0 %v2270
    %2344 = vmatpush2.bf16.msra.mxu0 %v2269
    %2345 = vmatprep.subr.bf16.mxu0 %v2268
    %2346 = vmatpush2.bf16.msra.mxu0 %v2267
    %2347 = vmatprep.mubr.bf16.mxu0 %v228
    %2348 = vmatmul.mubr.bf16.gmra.mxu0 %v227
    %v2349 = vpop.f32.mrf.mxu0
    %v2350 = vadd.f32 %v2148, %v2349
    %v2351 = vpop.f32.mrf.mxu0
    %v2352 = vadd.f32 %v2152, %v2351
    %v2353 = vpop.f32.mrf.mxu0
    %v2354 = vpop.f32.mrf.mxu0
    %2355 = vdwg.mxu0
    %v2356 = vmax.f32 %v2350, 0.0
    %v2357 = vmax.f32 %v2352, 0.0
    %v2358 = vpack.c.bf16 %v2356, %v2356
    %v2359 = vpack.c.bf16 %v2357, %v2357
    %s2360 = scalar_lea.vmem [#allocation6], 1792
    %v2361 = vld [vmem:[%s2360] sm:$0xff]
    %v2362 = vld [vmem:[%s2360 + $0x8] sm:$0xff]
    %v2363 = vld [vmem:[%s2360 + $0x10] sm:$0xff]
    %v2364 = vld [vmem:[%s2360 + $0x18] sm:$0xff]
    %v2365 = vld [vmem:[%s2360 + $0x20] sm:$0xff]
    %v2366 = vld [vmem:[%s2360 + $0x28] sm:$0xff]
    %v2367 = vld [vmem:[%s2360 + $0x30] sm:$0xff]
    %v2368 = vld [vmem:[%s2360 + $0x38] sm:$0xff]
    %v2369 = vld [vmem:[%s2360 + $0x40] sm:$0xff]
    %v2370 = vld [vmem:[%s2360 + $0x48] sm:$0xff]
    %v2371 = vld [vmem:[%s2360 + $0x50] sm:$0xff]
    %v2372 = vld [vmem:[%s2360 + $0x58] sm:$0xff]
    %v2373 = vld [vmem:[%s2360 + $0x60] sm:$0xff]
    %v2374 = vld [vmem:[%s2360 + $0x68] sm:$0xff]
    %v2375 = vld [vmem:[%s2360 + $0x70] sm:$0xff]
    %v2376 = vld [vmem:[%s2360 + $0x78] sm:$0xff]
    %v2377 = vld [vmem:[%s2360 + $0x80] sm:$0xff]
    %v2378 = vld [vmem:[%s2360 + $0x88] sm:$0xff]
    %v2379 = vld [vmem:[%s2360 + $0x90] sm:$0xff]
    %v2380 = vld [vmem:[%s2360 + $0x98] sm:$0xff]
    %v2381 = vld [vmem:[%s2360 + $0xa0] sm:$0xff]
    %v2382 = vld [vmem:[%s2360 + $0xa8] sm:$0xff]
    %v2383 = vld [vmem:[%s2360 + $0xb0] sm:$0xff]
    %v2384 = vld [vmem:[%s2360 + $0xb8] sm:$0xff]
    %v2385 = vld [vmem:[%s2360 + $0xc0] sm:$0xff]
    %v2386 = vld [vmem:[%s2360 + $0xc8] sm:$0xff]
    %v2387 = vld [vmem:[%s2360 + $0xd0] sm:$0xff]
    %v2388 = vld [vmem:[%s2360 + $0xd8] sm:$0xff]
    %v2389 = vld [vmem:[%s2360 + $0xe0] sm:$0xff]
    %v2390 = vld [vmem:[%s2360 + $0xe8] sm:$0xff]
    %v2391 = vld [vmem:[%s2360 + $0xf0] sm:$0xff]
    %v2392 = vld [vmem:[%s2360 + $0xf8] sm:$0xff]
    %s2393 = scalar_lea.vmem %s2142, 1
    %v2394 = vld [vmem:[%s2393] ss:$4 sm:$0x3]
    %v2396 = vlaneseq
    %v2397 = vshrl.u32 %v2396, 7
    %v2398 = vsub.s32 0, %v2397
    %v2399 = vrot.slane %v2394, %v2398
    %v2400 = vlaneseq
    %v2401 = vshrl.u32 %v2400, 7
    %v2402 = vsub.s32 1, %v2401
    %v2403 = vrot.slane %v2394, %v2402
    %v2438 = vunpack.c.l.b16 %v2361
    %v2439 = vunpack.c.h.b16 %v2361
    %v2440 = vunpack.c.l.b16 %v2362
    %v2441 = vunpack.c.h.b16 %v2362
    %v2442 = vunpack.c.l.b16 %v2363
    %v2443 = vunpack.c.h.b16 %v2363
    %v2444 = vunpack.c.l.b16 %v2364
    %v2445 = vunpack.c.h.b16 %v2364
    %v2446 = vunpack.c.l.b16 %v2365
    %v2447 = vunpack.c.h.b16 %v2365
    %v2448 = vunpack.c.l.b16 %v2366
    %v2449 = vunpack.c.h.b16 %v2366
    %v2450 = vunpack.c.l.b16 %v2367
    %v2451 = vunpack.c.h.b16 %v2367
    %v2452 = vunpack.c.l.b16 %v2368
    %v2453 = vunpack.c.h.b16 %v2368
    %v2454 = vunpack.c.l.b16 %v2369
    %v2455 = vunpack.c.h.b16 %v2369
    %v2456 = vunpack.c.l.b16 %v2370
    %v2457 = vunpack.c.h.b16 %v2370
    %v2458 = vunpack.c.l.b16 %v2371
    %v2459 = vunpack.c.h.b16 %v2371
    %v2460 = vunpack.c.l.b16 %v2372
    %v2461 = vunpack.c.h.b16 %v2372
    %v2462 = vunpack.c.l.b16 %v2373
    %v2463 = vunpack.c.h.b16 %v2373
    %v2464 = vunpack.c.l.b16 %v2374
    %v2465 = vunpack.c.h.b16 %v2374
    %v2466 = vunpack.c.l.b16 %v2375
    %v2467 = vunpack.c.h.b16 %v2375
    %v2468 = vunpack.c.l.b16 %v2376
    %v2469 = vunpack.c.h.b16 %v2376
    %v2470 = vunpack.c.l.b16 %v2377
    %v2471 = vunpack.c.h.b16 %v2377
    %v2472 = vunpack.c.l.b16 %v2378
    %v2473 = vunpack.c.h.b16 %v2378
    %v2474 = vunpack.c.l.b16 %v2379
    %v2475 = vunpack.c.h.b16 %v2379
    %v2476 = vunpack.c.l.b16 %v2380
    %v2477 = vunpack.c.h.b16 %v2380
    %v2478 = vunpack.c.l.b16 %v2381
    %v2479 = vunpack.c.h.b16 %v2381
    %v2480 = vunpack.c.l.b16 %v2382
    %v2481 = vunpack.c.h.b16 %v2382
    %v2482 = vunpack.c.l.b16 %v2383
    %v2483 = vunpack.c.h.b16 %v2383
    %v2484 = vunpack.c.l.b16 %v2384
    %v2485 = vunpack.c.h.b16 %v2384
    %v2486 = vunpack.c.l.b16 %v2385
    %v2487 = vunpack.c.h.b16 %v2385
    %v2488 = vunpack.c.l.b16 %v2386
    %v2489 = vunpack.c.h.b16 %v2386
    %v2490 = vunpack.c.l.b16 %v2387
    %v2491 = vunpack.c.h.b16 %v2387
    %v2492 = vunpack.c.l.b16 %v2388
    %v2493 = vunpack.c.h.b16 %v2388
    %v2494 = vunpack.c.l.b16 %v2389
    %v2495 = vunpack.c.h.b16 %v2389
    %v2496 = vunpack.c.l.b16 %v2390
    %v2497 = vunpack.c.h.b16 %v2390
    %v2498 = vunpack.c.l.b16 %v2391
    %v2499 = vunpack.c.h.b16 %v2391
    %v2500 = vunpack.c.l.b16 %v2392
    %v2501 = vunpack.c.h.b16 %v2392
    %v2502 = vpack.c.b16 %v2440, %v2438
    %v2503 = vpack.c.b16 %v2441, %v2439
    %v2504 = vpack.c.b16 %v2444, %v2442
    %v2505 = vpack.c.b16 %v2445, %v2443
    %v2506 = vpack.c.b16 %v2448, %v2446
    %v2507 = vpack.c.b16 %v2449, %v2447
    %v2508 = vpack.c.b16 %v2452, %v2450
    %v2509 = vpack.c.b16 %v2453, %v2451
    %v2510 = vpack.c.b16 %v2456, %v2454
    %v2511 = vpack.c.b16 %v2457, %v2455
    %v2512 = vpack.c.b16 %v2460, %v2458
    %v2513 = vpack.c.b16 %v2461, %v2459
    %v2514 = vpack.c.b16 %v2464, %v2462
    %v2515 = vpack.c.b16 %v2465, %v2463
    %v2516 = vpack.c.b16 %v2468, %v2466
    %v2517 = vpack.c.b16 %v2469, %v2467
    %v2518 = vpack.c.b16 %v2472, %v2470
    %v2519 = vpack.c.b16 %v2473, %v2471
    %v2520 = vpack.c.b16 %v2476, %v2474
    %v2521 = vpack.c.b16 %v2477, %v2475
    %v2522 = vpack.c.b16 %v2480, %v2478
    %v2523 = vpack.c.b16 %v2481, %v2479
    %v2524 = vpack.c.b16 %v2484, %v2482
    %v2525 = vpack.c.b16 %v2485, %v2483
    %v2526 = vpack.c.b16 %v2488, %v2486
    %v2527 = vpack.c.b16 %v2489, %v2487
    %v2528 = vpack.c.b16 %v2492, %v2490
    %v2529 = vpack.c.b16 %v2493, %v2491
    %v2530 = vpack.c.b16 %v2496, %v2494
    %v2531 = vpack.c.b16 %v2497, %v2495
    %v2532 = vpack.c.b16 %v2500, %v2498
    %v2533 = vpack.c.b16 %v2501, %v2499
    %2566 = vmatprep.subr.bf16.mxu0 %v2517
    %2567 = vmatpush1.bf16.msra.mxu0 %v2516
    %2568 = vmatprep.subr.bf16.mxu0 %v2515
    %2569 = vmatpush1.bf16.msra.mxu0 %v2514
    %2570 = vmatprep.subr.bf16.mxu0 %v2513
    %2571 = vmatpush1.bf16.msra.mxu0 %v2512
    %2572 = vmatprep.subr.bf16.mxu0 %v2511
    %2573 = vmatpush1.bf16.msra.mxu0 %v2510
    %2574 = vmatprep.subr.bf16.mxu0 %v2509
    %2575 = vmatpush1.bf16.msra.mxu0 %v2508
    %2576 = vmatprep.subr.bf16.mxu0 %v2507
    %2577 = vmatpush1.bf16.msra.mxu0 %v2506
    %2578 = vmatprep.subr.bf16.mxu0 %v2505
    %2579 = vmatpush1.bf16.msra.mxu0 %v2504
    %2580 = vmatprep.subr.bf16.mxu0 %v2503
    %2581 = vmatpush1.bf16.msra.mxu0 %v2502
    %2582 = vmatprep.subr.bf16.mxu0 %v2533
    %2583 = vmatpush2.bf16.msra.mxu0 %v2532
    %2584 = vmatprep.subr.bf16.mxu0 %v2531
    %2585 = vmatpush2.bf16.msra.mxu0 %v2530
    %2586 = vmatprep.subr.bf16.mxu0 %v2529
    %2587 = vmatpush2.bf16.msra.mxu0 %v2528
    %2588 = vmatprep.subr.bf16.mxu0 %v2527
    %2589 = vmatpush2.bf16.msra.mxu0 %v2526
    %2590 = vmatprep.subr.bf16.mxu0 %v2525
    %2591 = vmatpush2.bf16.msra.mxu0 %v2524
    %2592 = vmatprep.subr.bf16.mxu0 %v2523
    %2593 = vmatpush2.bf16.msra.mxu0 %v2522
    %2594 = vmatprep.subr.bf16.mxu0 %v2521
    %2595 = vmatpush2.bf16.msra.mxu0 %v2520
    %2596 = vmatprep.subr.bf16.mxu0 %v2519
    %2597 = vmatpush2.bf16.msra.mxu0 %v2518
    %2598 = vmatprep.mubr.bf16.mxu0 %v2359
    %2599 = vmatmul.mubr.bf16.gmra.mxu0 %v2358
    %v2600 = vpop.f32.mrf.mxu0
    %v2601 = vadd.f32 %v2399, %v2600
    %v2602 = vpop.f32.mrf.mxu0
    %v2603 = vadd.f32 %v2403, %v2602
    %v2604 = vpop.f32.mrf.mxu0
    %v2605 = vpop.f32.mrf.mxu0
    %2606 = vdwg.mxu0
    %v2607 = vmax.f32 %v2601, 0.0
    %v2608 = vmax.f32 %v2603, 0.0
    %v2609 = vpack.c.bf16 %v2607, %v2607
    %v2610 = vpack.c.bf16 %v2608, %v2608
    %s2611 = scalar_lea.vmem [#allocation6], 2048
    %v2612 = vld [vmem:[%s2611] sm:$0xff]
    %v2613 = vld [vmem:[%s2611 + $0x8] sm:$0xff]
    %v2614 = vld [vmem:[%s2611 + $0x10] sm:$0xff]
    %v2615 = vld [vmem:[%s2611 + $0x18] sm:$0xff]
    %v2616 = vld [vmem:[%s2611 + $0x20] sm:$0xff]
    %v2617 = vld [vmem:[%s2611 + $0x28] sm:$0xff]
    %v2618 = vld [vmem:[%s2611 + $0x30] sm:$0xff]
    %v2619 = vld [vmem:[%s2611 + $0x38] sm:$0xff]
    %v2620 = vld [vmem:[%s2611 + $0x40] sm:$0xff]
    %v2621 = vld [vmem:[%s2611 + $0x48] sm:$0xff]
    %v2622 = vld [vmem:[%s2611 + $0x50] sm:$0xff]
    %v2623 = vld [vmem:[%s2611 + $0x58] sm:$0xff]
    %v2624 = vld [vmem:[%s2611 + $0x60] sm:$0xff]
    %v2625 = vld [vmem:[%s2611 + $0x68] sm:$0xff]
    %v2626 = vld [vmem:[%s2611 + $0x70] sm:$0xff]
    %v2627 = vld [vmem:[%s2611 + $0x78] sm:$0xff]
    %v2628 = vld [vmem:[%s2611 + $0x80] sm:$0xff]
    %v2629 = vld [vmem:[%s2611 + $0x88] sm:$0xff]
    %v2630 = vld [vmem:[%s2611 + $0x90] sm:$0xff]
    %v2631 = vld [vmem:[%s2611 + $0x98] sm:$0xff]
    %v2632 = vld [vmem:[%s2611 + $0xa0] sm:$0xff]
    %v2633 = vld [vmem:[%s2611 + $0xa8] sm:$0xff]
    %v2634 = vld [vmem:[%s2611 + $0xb0] sm:$0xff]
    %v2635 = vld [vmem:[%s2611 + $0xb8] sm:$0xff]
    %v2636 = vld [vmem:[%s2611 + $0xc0] sm:$0xff]
    %v2637 = vld [vmem:[%s2611 + $0xc8] sm:$0xff]
    %v2638 = vld [vmem:[%s2611 + $0xd0] sm:$0xff]
    %v2639 = vld [vmem:[%s2611 + $0xd8] sm:$0xff]
    %v2640 = vld [vmem:[%s2611 + $0xe0] sm:$0xff]
    %v2641 = vld [vmem:[%s2611 + $0xe8] sm:$0xff]
    %v2642 = vld [vmem:[%s2611 + $0xf0] sm:$0xff]
    %v2643 = vld [vmem:[%s2611 + $0xf8] sm:$0xff]
    %s2644 = scalar_lea.vmem %s2142, 2
    %v2645 = vld [vmem:[%s2644] ss:$4 sm:$0x3]
    %v2647 = vlaneseq
    %v2648 = vshrl.u32 %v2647, 7
    %v2649 = vsub.s32 0, %v2648
    %v2650 = vrot.slane %v2645, %v2649
    %v2651 = vlaneseq
    %v2652 = vshrl.u32 %v2651, 7
    %v2653 = vsub.s32 1, %v2652
    %v2654 = vrot.slane %v2645, %v2653
    %v2689 = vunpack.c.l.b16 %v2612
    %v2690 = vunpack.c.h.b16 %v2612
    %v2691 = vunpack.c.l.b16 %v2613
    %v2692 = vunpack.c.h.b16 %v2613
    %v2693 = vunpack.c.l.b16 %v2614
    %v2694 = vunpack.c.h.b16 %v2614
    %v2695 = vunpack.c.l.b16 %v2615
    %v2696 = vunpack.c.h.b16 %v2615
    %v2697 = vunpack.c.l.b16 %v2616
    %v2698 = vunpack.c.h.b16 %v2616
    %v2699 = vunpack.c.l.b16 %v2617
    %v2700 = vunpack.c.h.b16 %v2617
    %v2701 = vunpack.c.l.b16 %v2618
    %v2702 = vunpack.c.h.b16 %v2618
    %v2703 = vunpack.c.l.b16 %v2619
    %v2704 = vunpack.c.h.b16 %v2619
    %v2705 = vunpack.c.l.b16 %v2620
    %v2706 = vunpack.c.h.b16 %v2620
    %v2707 = vunpack.c.l.b16 %v2621
    %v2708 = vunpack.c.h.b16 %v2621
    %v2709 = vunpack.c.l.b16 %v2622
    %v2710 = vunpack.c.h.b16 %v2622
    %v2711 = vunpack.c.l.b16 %v2623
    %v2712 = vunpack.c.h.b16 %v2623
    %v2713 = vunpack.c.l.b16 %v2624
    %v2714 = vunpack.c.h.b16 %v2624
    %v2715 = vunpack.c.l.b16 %v2625
    %v2716 = vunpack.c.h.b16 %v2625
    %v2717 = vunpack.c.l.b16 %v2626
    %v2718 = vunpack.c.h.b16 %v2626
    %v2719 = vunpack.c.l.b16 %v2627
    %v2720 = vunpack.c.h.b16 %v2627
    %v2721 = vunpack.c.l.b16 %v2628
    %v2722 = vunpack.c.h.b16 %v2628
    %v2723 = vunpack.c.l.b16 %v2629
    %v2724 = vunpack.c.h.b16 %v2629
    %v2725 = vunpack.c.l.b16 %v2630
    %v2726 = vunpack.c.h.b16 %v2630
    %v2727 = vunpack.c.l.b16 %v2631
    %v2728 = vunpack.c.h.b16 %v2631
    %v2729 = vunpack.c.l.b16 %v2632
    %v2730 = vunpack.c.h.b16 %v2632
    %v2731 = vunpack.c.l.b16 %v2633
    %v2732 = vunpack.c.h.b16 %v2633
    %v2733 = vunpack.c.l.b16 %v2634
    %v2734 = vunpack.c.h.b16 %v2634
    %v2735 = vunpack.c.l.b16 %v2635
    %v2736 = vunpack.c.h.b16 %v2635
    %v2737 = vunpack.c.l.b16 %v2636
    %v2738 = vunpack.c.h.b16 %v2636
    %v2739 = vunpack.c.l.b16 %v2637
    %v2740 = vunpack.c.h.b16 %v2637
    %v2741 = vunpack.c.l.b16 %v2638
    %v2742 = vunpack.c.h.b16 %v2638
    %v2743 = vunpack.c.l.b16 %v2639
    %v2744 = vunpack.c.h.b16 %v2639
    %v2745 = vunpack.c.l.b16 %v2640
    %v2746 = vunpack.c.h.b16 %v2640
    %v2747 = vunpack.c.l.b16 %v2641
    %v2748 = vunpack.c.h.b16 %v2641
    %v2749 = vunpack.c.l.b16 %v2642
    %v2750 = vunpack.c.h.b16 %v2642
    %v2751 = vunpack.c.l.b16 %v2643
    %v2752 = vunpack.c.h.b16 %v2643
    %v2753 = vpack.c.b16 %v2691, %v2689
    %v2754 = vpack.c.b16 %v2692, %v2690
    %v2755 = vpack.c.b16 %v2695, %v2693
    %v2756 = vpack.c.b16 %v2696, %v2694
    %v2757 = vpack.c.b16 %v2699, %v2697
    %v2758 = vpack.c.b16 %v2700, %v2698
    %v2759 = vpack.c.b16 %v2703, %v2701
    %v2760 = vpack.c.b16 %v2704, %v2702
    %v2761 = vpack.c.b16 %v2707, %v2705
    %v2762 = vpack.c.b16 %v2708, %v2706
    %v2763 = vpack.c.b16 %v2711, %v2709
    %v2764 = vpack.c.b16 %v2712, %v2710
    %v2765 = vpack.c.b16 %v2715, %v2713
    %v2766 = vpack.c.b16 %v2716, %v2714
    %v2767 = vpack.c.b16 %v2719, %v2717
    %v2768 = vpack.c.b16 %v2720, %v2718
    %v2769 = vpack.c.b16 %v2723, %v2721
    %v2770 = vpack.c.b16 %v2724, %v2722
    %v2771 = vpack.c.b16 %v2727, %v2725
    %v2772 = vpack.c.b16 %v2728, %v2726
    %v2773 = vpack.c.b16 %v2731, %v2729
    %v2774 = vpack.c.b16 %v2732, %v2730
    %v2775 = vpack.c.b16 %v2735, %v2733
    %v2776 = vpack.c.b16 %v2736, %v2734
    %v2777 = vpack.c.b16 %v2739, %v2737
    %v2778 = vpack.c.b16 %v2740, %v2738
    %v2779 = vpack.c.b16 %v2743, %v2741
    %v2780 = vpack.c.b16 %v2744, %v2742
    %v2781 = vpack.c.b16 %v2747, %v2745
    %v2782 = vpack.c.b16 %v2748, %v2746
    %v2783 = vpack.c.b16 %v2751, %v2749
    %v2784 = vpack.c.b16 %v2752, %v2750
    %2817 = vmatprep.subr.bf16.mxu0 %v2768
    %2818 = vmatpush1.bf16.msra.mxu0 %v2767
    %2819 = vmatprep.subr.bf16.mxu0 %v2766
    %2820 = vmatpush1.bf16.msra.mxu0 %v2765
    %2821 = vmatprep.subr.bf16.mxu0 %v2764
    %2822 = vmatpush1.bf16.msra.mxu0 %v2763
    %2823 = vmatprep.subr.bf16.mxu0 %v2762
    %2824 = vmatpush1.bf16.msra.mxu0 %v2761
    %2825 = vmatprep.subr.bf16.mxu0 %v2760
    %2826 = vmatpush1.bf16.msra.mxu0 %v2759
    %2827 = vmatprep.subr.bf16.mxu0 %v2758
    %2828 = vmatpush1.bf16.msra.mxu0 %v2757
    %2829 = vmatprep.subr.bf16.mxu0 %v2756
    %2830 = vmatpush1.bf16.msra.mxu0 %v2755
    %2831 = vmatprep.subr.bf16.mxu0 %v2754
    %2832 = vmatpush1.bf16.msra.mxu0 %v2753
    %2833 = vmatprep.subr.bf16.mxu0 %v2784
    %2834 = vmatpush2.bf16.msra.mxu0 %v2783
    %2835 = vmatprep.subr.bf16.mxu0 %v2782
    %2836 = vmatpush2.bf16.msra.mxu0 %v2781
    %2837 = vmatprep.subr.bf16.mxu0 %v2780
    %2838 = vmatpush2.bf16.msra.mxu0 %v2779
    %2839 = vmatprep.subr.bf16.mxu0 %v2778
    %2840 = vmatpush2.bf16.msra.mxu0 %v2777
    %2841 = vmatprep.subr.bf16.mxu0 %v2776
    %2842 = vmatpush2.bf16.msra.mxu0 %v2775
    %2843 = vmatprep.subr.bf16.mxu0 %v2774
    %2844 = vmatpush2.bf16.msra.mxu0 %v2773
    %2845 = vmatprep.subr.bf16.mxu0 %v2772
    %2846 = vmatpush2.bf16.msra.mxu0 %v2771
    %2847 = vmatprep.subr.bf16.mxu0 %v2770
    %2848 = vmatpush2.bf16.msra.mxu0 %v2769
    %2849 = vmatprep.mubr.bf16.mxu0 %v2610
    %2850 = vmatmul.mubr.bf16.gmra.mxu0 %v2609
    %v2851 = vpop.f32.mrf.mxu0
    %v2852 = vadd.f32 %v2650, %v2851
    %v2853 = vpop.f32.mrf.mxu0
    %v2854 = vadd.f32 %v2654, %v2853
    %v2855 = vpop.f32.mrf.mxu0
    %v2856 = vpop.f32.mrf.mxu0
    %2857 = vdwg.mxu0
    %v2858 = vmax.f32 %v2852, 0.0
    %v2859 = vmax.f32 %v2854, 0.0
    %v2860 = vpack.c.bf16 %v2858, %v2858
    %v2861 = vpack.c.bf16 %v2859, %v2859
    %s2862 = scalar_lea.vmem [#allocation7], 256
    %v2863 = vld [vmem:[%s2862] sm:$0xf]
    %v2864 = vld [vmem:[%s2862 + $0x4] sm:$0xf]
    %v2865 = vld [vmem:[%s2862 + $0x8] sm:$0xf]
    %v2866 = vld [vmem:[%s2862 + $0xc] sm:$0xf]
    %v2867 = vld [vmem:[%s2862 + $0x10] sm:$0xf]
    %v2868 = vld [vmem:[%s2862 + $0x14] sm:$0xf]
    %v2869 = vld [vmem:[%s2862 + $0x18] sm:$0xf]
    %v2870 = vld [vmem:[%s2862 + $0x1c] sm:$0xf]
    %v2871 = vld [vmem:[%s2862 + $0x20] sm:$0xf]
    %v2872 = vld [vmem:[%s2862 + $0x24] sm:$0xf]
    %v2873 = vld [vmem:[%s2862 + $0x28] sm:$0xf]
    %v2874 = vld [vmem:[%s2862 + $0x2c] sm:$0xf]
    %v2875 = vld [vmem:[%s2862 + $0x30] sm:$0xf]
    %v2876 = vld [vmem:[%s2862 + $0x34] sm:$0xf]
    %v2877 = vld [vmem:[%s2862 + $0x38] sm:$0xf]
    %v2878 = vld [vmem:[%s2862 + $0x3c] sm:$0xf]
    %v2879 = vld [vmem:[%s2862 + $0x40] sm:$0xf]
    %v2880 = vld [vmem:[%s2862 + $0x44] sm:$0xf]
    %v2881 = vld [vmem:[%s2862 + $0x48] sm:$0xf]
    %v2882 = vld [vmem:[%s2862 + $0x4c] sm:$0xf]
    %v2883 = vld [vmem:[%s2862 + $0x50] sm:$0xf]
    %v2884 = vld [vmem:[%s2862 + $0x54] sm:$0xf]
    %v2885 = vld [vmem:[%s2862 + $0x58] sm:$0xf]
    %v2886 = vld [vmem:[%s2862 + $0x5c] sm:$0xf]
    %v2887 = vld [vmem:[%s2862 + $0x60] sm:$0xf]
    %v2888 = vld [vmem:[%s2862 + $0x64] sm:$0xf]
    %v2889 = vld [vmem:[%s2862 + $0x68] sm:$0xf]
    %v2890 = vld [vmem:[%s2862 + $0x6c] sm:$0xf]
    %v2891 = vld [vmem:[%s2862 + $0x70] sm:$0xf]
    %v2892 = vld [vmem:[%s2862 + $0x74] sm:$0xf]
    %v2893 = vld [vmem:[%s2862 + $0x78] sm:$0xf]
    %v2894 = vld [vmem:[%s2862 + $0x7c] sm:$0xf]
    %s2895 = scalar_lea.vmem [#allocation9], 2
    %v2896 = vld [vmem:[%s2895] sm:$0x1]
    %v2898 = vlaneseq
    %v2899 = vshrl.u32 %v2898, 7
    %v2900 = vsub.s32 0, %v2899
    %v2901 = vrot.slane %v2896, %v2900
    %v2935 = vunpack.c.l.b16 %v2863
    %v2936 = vunpack.c.l.b16 %v2864
    %v2937 = vunpack.c.l.b16 %v2865
    %v2938 = vunpack.c.l.b16 %v2866
    %v2939 = vunpack.c.l.b16 %v2867
    %v2940 = vunpack.c.l.b16 %v2868
    %v2941 = vunpack.c.l.b16 %v2869
    %v2942 = vunpack.c.l.b16 %v2870
    %v2943 = vunpack.c.l.b16 %v2871
    %v2944 = vunpack.c.l.b16 %v2872
    %v2945 = vunpack.c.l.b16 %v2873
    %v2946 = vunpack.c.l.b16 %v2874
    %v2947 = vunpack.c.l.b16 %v2875
    %v2948 = vunpack.c.l.b16 %v2876
    %v2949 = vunpack.c.l.b16 %v2877
    %v2950 = vunpack.c.l.b16 %v2878
    %v2951 = vunpack.c.l.b16 %v2879
    %v2952 = vunpack.c.l.b16 %v2880
    %v2953 = vunpack.c.l.b16 %v2881
    %v2954 = vunpack.c.l.b16 %v2882
    %v2955 = vunpack.c.l.b16 %v2883
    %v2956 = vunpack.c.l.b16 %v2884
    %v2957 = vunpack.c.l.b16 %v2885
    %v2958 = vunpack.c.l.b16 %v2886
    %v2959 = vunpack.c.l.b16 %v2887
    %v2960 = vunpack.c.l.b16 %v2888
    %v2961 = vunpack.c.l.b16 %v2889
    %v2962 = vunpack.c.l.b16 %v2890
    %v2963 = vunpack.c.l.b16 %v2891
    %v2964 = vunpack.c.l.b16 %v2892
    %v2965 = vunpack.c.l.b16 %v2893
    %v2966 = vunpack.c.l.b16 %v2894
    %v2967 = vpack.c.b16 %v2936, %v2935
    %v2968 = vpack.c.b16 %v2938, %v2937
    %v2969 = vpack.c.b16 %v2940, %v2939
    %v2970 = vpack.c.b16 %v2942, %v2941
    %v2971 = vpack.c.b16 %v2944, %v2943
    %v2972 = vpack.c.b16 %v2946, %v2945
    %v2973 = vpack.c.b16 %v2948, %v2947
    %v2974 = vpack.c.b16 %v2950, %v2949
    %v2975 = vpack.c.b16 %v2952, %v2951
    %v2976 = vpack.c.b16 %v2954, %v2953
    %v2977 = vpack.c.b16 %v2956, %v2955
    %v2978 = vpack.c.b16 %v2958, %v2957
    %v2979 = vpack.c.b16 %v2960, %v2959
    %v2980 = vpack.c.b16 %v2962, %v2961
    %v2981 = vpack.c.b16 %v2964, %v2963
    %v2982 = vpack.c.b16 %v2966, %v2965
    %2999 = vmatprep.subr.bf16.mxu0 0
    %3000 = vmatpush1.bf16.msra.mxu0 %v2974
    %3001 = vmatprep.subr.bf16.mxu0 0
    %3002 = vmatpush1.bf16.msra.mxu0 %v2973
    %3003 = vmatprep.subr.bf16.mxu0 0
    %3004 = vmatpush1.bf16.msra.mxu0 %v2972
    %3005 = vmatprep.subr.bf16.mxu0 0
    %3006 = vmatpush1.bf16.msra.mxu0 %v2971
    %3007 = vmatprep.subr.bf16.mxu0 0
    %3008 = vmatpush1.bf16.msra.mxu0 %v2970
    %3009 = vmatprep.subr.bf16.mxu0 0
    %3010 = vmatpush1.bf16.msra.mxu0 %v2969
    %3011 = vmatprep.subr.bf16.mxu0 0
    %3012 = vmatpush1.bf16.msra.mxu0 %v2968
    %3013 = vmatprep.subr.bf16.mxu0 0
    %3014 = vmatpush1.bf16.msra.mxu0 %v2967
    %3015 = vmatprep.subr.bf16.mxu0 0
    %3016 = vmatpush2.bf16.msra.mxu0 %v2982
    %3017 = vmatprep.subr.bf16.mxu0 0
    %3018 = vmatpush2.bf16.msra.mxu0 %v2981
    %3019 = vmatprep.subr.bf16.mxu0 0
    %3020 = vmatpush2.bf16.msra.mxu0 %v2980
    %3021 = vmatprep.subr.bf16.mxu0 0
    %3022 = vmatpush2.bf16.msra.mxu0 %v2979
    %3023 = vmatprep.subr.bf16.mxu0 0
    %3024 = vmatpush2.bf16.msra.mxu0 %v2978
    %3025 = vmatprep.subr.bf16.mxu0 0
    %3026 = vmatpush2.bf16.msra.mxu0 %v2977
    %3027 = vmatprep.subr.bf16.mxu0 0
    %3028 = vmatpush2.bf16.msra.mxu0 %v2976
    %3029 = vmatprep.subr.bf16.mxu0 0
    %3030 = vmatpush2.bf16.msra.mxu0 %v2975
    %3031 = vmatprep.mubr.bf16.mxu0 %v2861
    %3032 = vmatmul.mubr.bf16.gmra.mxu0 %v2860
    %v3033 = vpop.f32.mrf.mxu0
    %v3034 = vadd.f32 %v2901, %v3033
    %v3035 = vpop.f32.mrf.mxu0
    %v3036 = vpop.f32.mrf.mxu0
    %v3037 = vpop.f32.mrf.mxu0
    %3038 = vdwg.mxu0
    %3039 = vmax.xlane.f32.xlu0 %v3034
    %v3040 = vpop.xlane.xlu0 %3039
    %v3041 = vsub.f32 %v3034, %v3040
    %v3042 = vmul.f32 %v3041, 1.442695
    %v3043 = vpow.pop %v3042
    %3044 = vadd.xlane.f32.xlu0 %v3043
    %v3045 = vpop.xlane.xlu0 %3044
    %v3046 = vlog2.pop %v3045
    %v3047 = vmul.f32 %v3046, 0.6931472
    %v3048 = vsub.f32 %v3041, %v3047
    %s3049 = scalar_lea.vmem %s7, 16
    %3050 = vst.msk [vmem:[%s3049] sm:$0xff] %vm1165, %v3048
    %s3051 = scalar_lea.vmem [#allocation6], 2304
    %v3052 = vld [vmem:[%s3051] sm:$0xff]
    %v3053 = vld [vmem:[%s3051 + $0x8] sm:$0xff]
    %v3054 = vld [vmem:[%s3051 + $0x10] sm:$0xff]
    %v3055 = vld [vmem:[%s3051 + $0x18] sm:$0xff]
    %v3056 = vld [vmem:[%s3051 + $0x20] sm:$0xff]
    %v3057 = vld [vmem:[%s3051 + $0x28] sm:$0xff]
    %v3058 = vld [vmem:[%s3051 + $0x30] sm:$0xff]
    %v3059 = vld [vmem:[%s3051 + $0x38] sm:$0xff]
    %v3060 = vld [vmem:[%s3051 + $0x40] sm:$0xff]
    %v3061 = vld [vmem:[%s3051 + $0x48] sm:$0xff]
    %v3062 = vld [vmem:[%s3051 + $0x50] sm:$0xff]
    %v3063 = vld [vmem:[%s3051 + $0x58] sm:$0xff]
    %v3064 = vld [vmem:[%s3051 + $0x60] sm:$0xff]
    %v3065 = vld [vmem:[%s3051 + $0x68] sm:$0xff]
    %v3066 = vld [vmem:[%s3051 + $0x70] sm:$0xff]
    %v3067 = vld [vmem:[%s3051 + $0x78] sm:$0xff]
    %v3068 = vld [vmem:[%s3051 + $0x80] sm:$0xff]
    %v3069 = vld [vmem:[%s3051 + $0x88] sm:$0xff]
    %v3070 = vld [vmem:[%s3051 + $0x90] sm:$0xff]
    %v3071 = vld [vmem:[%s3051 + $0x98] sm:$0xff]
    %v3072 = vld [vmem:[%s3051 + $0xa0] sm:$0xff]
    %v3073 = vld [vmem:[%s3051 + $0xa8] sm:$0xff]
    %v3074 = vld [vmem:[%s3051 + $0xb0] sm:$0xff]
    %v3075 = vld [vmem:[%s3051 + $0xb8] sm:$0xff]
    %v3076 = vld [vmem:[%s3051 + $0xc0] sm:$0xff]
    %v3077 = vld [vmem:[%s3051 + $0xc8] sm:$0xff]
    %v3078 = vld [vmem:[%s3051 + $0xd0] sm:$0xff]
    %v3079 = vld [vmem:[%s3051 + $0xd8] sm:$0xff]
    %v3080 = vld [vmem:[%s3051 + $0xe0] sm:$0xff]
    %v3081 = vld [vmem:[%s3051 + $0xe8] sm:$0xff]
    %v3082 = vld [vmem:[%s3051 + $0xf0] sm:$0xff]
    %v3083 = vld [vmem:[%s3051 + $0xf8] sm:$0xff]
    %s3084 = scalar_lea.vmem %s4, 24
    %v3085 = vld [vmem:[%s3084] ss:$4 sm:$0x3]
    %v3087 = vlaneseq
    %v3088 = vshrl.u32 %v3087, 7
    %v3089 = vsub.s32 0, %v3088
    %v3090 = vrot.slane %v3085, %v3089
    %v3091 = vlaneseq
    %v3092 = vshrl.u32 %v3091, 7
    %v3093 = vsub.s32 1, %v3092
    %v3094 = vrot.slane %v3085, %v3093
    %v3129 = vunpack.c.l.b16 %v3052
    %v3130 = vunpack.c.h.b16 %v3052
    %v3131 = vunpack.c.l.b16 %v3053
    %v3132 = vunpack.c.h.b16 %v3053
    %v3133 = vunpack.c.l.b16 %v3054
    %v3134 = vunpack.c.h.b16 %v3054
    %v3135 = vunpack.c.l.b16 %v3055
    %v3136 = vunpack.c.h.b16 %v3055
    %v3137 = vunpack.c.l.b16 %v3056
    %v3138 = vunpack.c.h.b16 %v3056
    %v3139 = vunpack.c.l.b16 %v3057
    %v3140 = vunpack.c.h.b16 %v3057
    %v3141 = vunpack.c.l.b16 %v3058
    %v3142 = vunpack.c.h.b16 %v3058
    %v3143 = vunpack.c.l.b16 %v3059
    %v3144 = vunpack.c.h.b16 %v3059
    %v3145 = vunpack.c.l.b16 %v3060
    %v3146 = vunpack.c.h.b16 %v3060
    %v3147 = vunpack.c.l.b16 %v3061
    %v3148 = vunpack.c.h.b16 %v3061
    %v3149 = vunpack.c.l.b16 %v3062
    %v3150 = vunpack.c.h.b16 %v3062
    %v3151 = vunpack.c.l.b16 %v3063
    %v3152 = vunpack.c.h.b16 %v3063
    %v3153 = vunpack.c.l.b16 %v3064
    %v3154 = vunpack.c.h.b16 %v3064
    %v3155 = vunpack.c.l.b16 %v3065
    %v3156 = vunpack.c.h.b16 %v3065
    %v3157 = vunpack.c.l.b16 %v3066
    %v3158 = vunpack.c.h.b16 %v3066
    %v3159 = vunpack.c.l.b16 %v3067
    %v3160 = vunpack.c.h.b16 %v3067
    %v3161 = vunpack.c.l.b16 %v3068
    %v3162 = vunpack.c.h.b16 %v3068
    %v3163 = vunpack.c.l.b16 %v3069
    %v3164 = vunpack.c.h.b16 %v3069
    %v3165 = vunpack.c.l.b16 %v3070
    %v3166 = vunpack.c.h.b16 %v3070
    %v3167 = vunpack.c.l.b16 %v3071
    %v3168 = vunpack.c.h.b16 %v3071
    %v3169 = vunpack.c.l.b16 %v3072
    %v3170 = vunpack.c.h.b16 %v3072
    %v3171 = vunpack.c.l.b16 %v3073
    %v3172 = vunpack.c.h.b16 %v3073
    %v3173 = vunpack.c.l.b16 %v3074
    %v3174 = vunpack.c.h.b16 %v3074
    %v3175 = vunpack.c.l.b16 %v3075
    %v3176 = vunpack.c.h.b16 %v3075
    %v3177 = vunpack.c.l.b16 %v3076
    %v3178 = vunpack.c.h.b16 %v3076
    %v3179 = vunpack.c.l.b16 %v3077
    %v3180 = vunpack.c.h.b16 %v3077
    %v3181 = vunpack.c.l.b16 %v3078
    %v3182 = vunpack.c.h.b16 %v3078
    %v3183 = vunpack.c.l.b16 %v3079
    %v3184 = vunpack.c.h.b16 %v3079
    %v3185 = vunpack.c.l.b16 %v3080
    %v3186 = vunpack.c.h.b16 %v3080
    %v3187 = vunpack.c.l.b16 %v3081
    %v3188 = vunpack.c.h.b16 %v3081
    %v3189 = vunpack.c.l.b16 %v3082
    %v3190 = vunpack.c.h.b16 %v3082
    %v3191 = vunpack.c.l.b16 %v3083
    %v3192 = vunpack.c.h.b16 %v3083
    %v3193 = vpack.c.b16 %v3131, %v3129
    %v3194 = vpack.c.b16 %v3132, %v3130
    %v3195 = vpack.c.b16 %v3135, %v3133
    %v3196 = vpack.c.b16 %v3136, %v3134
    %v3197 = vpack.c.b16 %v3139, %v3137
    %v3198 = vpack.c.b16 %v3140, %v3138
    %v3199 = vpack.c.b16 %v3143, %v3141
    %v3200 = vpack.c.b16 %v3144, %v3142
    %v3201 = vpack.c.b16 %v3147, %v3145
    %v3202 = vpack.c.b16 %v3148, %v3146
    %v3203 = vpack.c.b16 %v3151, %v3149
    %v3204 = vpack.c.b16 %v3152, %v3150
    %v3205 = vpack.c.b16 %v3155, %v3153
    %v3206 = vpack.c.b16 %v3156, %v3154
    %v3207 = vpack.c.b16 %v3159, %v3157
    %v3208 = vpack.c.b16 %v3160, %v3158
    %v3209 = vpack.c.b16 %v3163, %v3161
    %v3210 = vpack.c.b16 %v3164, %v3162
    %v3211 = vpack.c.b16 %v3167, %v3165
    %v3212 = vpack.c.b16 %v3168, %v3166
    %v3213 = vpack.c.b16 %v3171, %v3169
    %v3214 = vpack.c.b16 %v3172, %v3170
    %v3215 = vpack.c.b16 %v3175, %v3173
    %v3216 = vpack.c.b16 %v3176, %v3174
    %v3217 = vpack.c.b16 %v3179, %v3177
    %v3218 = vpack.c.b16 %v3180, %v3178
    %v3219 = vpack.c.b16 %v3183, %v3181
    %v3220 = vpack.c.b16 %v3184, %v3182
    %v3221 = vpack.c.b16 %v3187, %v3185
    %v3222 = vpack.c.b16 %v3188, %v3186
    %v3223 = vpack.c.b16 %v3191, %v3189
    %v3224 = vpack.c.b16 %v3192, %v3190
    %3257 = vmatprep.subr.bf16.mxu0 %v3208
    %3258 = vmatpush1.bf16.msra.mxu0 %v3207
    %3259 = vmatprep.subr.bf16.mxu0 %v3206
    %3260 = vmatpush1.bf16.msra.mxu0 %v3205
    %3261 = vmatprep.subr.bf16.mxu0 %v3204
    %3262 = vmatpush1.bf16.msra.mxu0 %v3203
    %3263 = vmatprep.subr.bf16.mxu0 %v3202
    %3264 = vmatpush1.bf16.msra.mxu0 %v3201
    %3265 = vmatprep.subr.bf16.mxu0 %v3200
    %3266 = vmatpush1.bf16.msra.mxu0 %v3199
    %3267 = vmatprep.subr.bf16.mxu0 %v3198
    %3268 = vmatpush1.bf16.msra.mxu0 %v3197
    %3269 = vmatprep.subr.bf16.mxu0 %v3196
    %3270 = vmatpush1.bf16.msra.mxu0 %v3195
    %3271 = vmatprep.subr.bf16.mxu0 %v3194
    %3272 = vmatpush1.bf16.msra.mxu0 %v3193
    %3273 = vmatprep.subr.bf16.mxu0 %v3224
    %3274 = vmatpush2.bf16.msra.mxu0 %v3223
    %3275 = vmatprep.subr.bf16.mxu0 %v3222
    %3276 = vmatpush2.bf16.msra.mxu0 %v3221
    %3277 = vmatprep.subr.bf16.mxu0 %v3220
    %3278 = vmatpush2.bf16.msra.mxu0 %v3219
    %3279 = vmatprep.subr.bf16.mxu0 %v3218
    %3280 = vmatpush2.bf16.msra.mxu0 %v3217
    %3281 = vmatprep.subr.bf16.mxu0 %v3216
    %3282 = vmatpush2.bf16.msra.mxu0 %v3215
    %3283 = vmatprep.subr.bf16.mxu0 %v3214
    %3284 = vmatpush2.bf16.msra.mxu0 %v3213
    %3285 = vmatprep.subr.bf16.mxu0 %v3212
    %3286 = vmatpush2.bf16.msra.mxu0 %v3211
    %3287 = vmatprep.subr.bf16.mxu0 %v3210
    %3288 = vmatpush2.bf16.msra.mxu0 %v3209
    %3289 = vmatprep.mubr.bf16.mxu0 %v228
    %3290 = vmatmul.mubr.bf16.gmra.mxu0 %v227
    %v3291 = vpop.f32.mrf.mxu0
    %v3292 = vadd.f32 %v3090, %v3291
    %v3293 = vpop.f32.mrf.mxu0
    %v3294 = vadd.f32 %v3094, %v3293
    %v3295 = vpop.f32.mrf.mxu0
    %v3296 = vpop.f32.mrf.mxu0
    %3297 = vdwg.mxu0
    %v3298 = vmax.f32 %v3292, 0.0
    %v3299 = vmax.f32 %v3294, 0.0
    %v3300 = vpack.c.bf16 %v3298, %v3298
    %v3301 = vpack.c.bf16 %v3299, %v3299
    %s3302 = scalar_lea.vmem [#allocation6], 2560
    %v3303 = vld [vmem:[%s3302] sm:$0xff]
    %v3304 = vld [vmem:[%s3302 + $0x8] sm:$0xff]
    %v3305 = vld [vmem:[%s3302 + $0x10] sm:$0xff]
    %v3306 = vld [vmem:[%s3302 + $0x18] sm:$0xff]
    %v3307 = vld [vmem:[%s3302 + $0x20] sm:$0xff]
    %v3308 = vld [vmem:[%s3302 + $0x28] sm:$0xff]
    %v3309 = vld [vmem:[%s3302 + $0x30] sm:$0xff]
    %v3310 = vld [vmem:[%s3302 + $0x38] sm:$0xff]
    %v3311 = vld [vmem:[%s3302 + $0x40] sm:$0xff]
    %v3312 = vld [vmem:[%s3302 + $0x48] sm:$0xff]
    %v3313 = vld [vmem:[%s3302 + $0x50] sm:$0xff]
    %v3314 = vld [vmem:[%s3302 + $0x58] sm:$0xff]
    %v3315 = vld [vmem:[%s3302 + $0x60] sm:$0xff]
    %v3316 = vld [vmem:[%s3302 + $0x68] sm:$0xff]
    %v3317 = vld [vmem:[%s3302 + $0x70] sm:$0xff]
    %v3318 = vld [vmem:[%s3302 + $0x78] sm:$0xff]
    %v3319 = vld [vmem:[%s3302 + $0x80] sm:$0xff]
    %v3320 = vld [vmem:[%s3302 + $0x88] sm:$0xff]
    %v3321 = vld [vmem:[%s3302 + $0x90] sm:$0xff]
    %v3322 = vld [vmem:[%s3302 + $0x98] sm:$0xff]
    %v3323 = vld [vmem:[%s3302 + $0xa0] sm:$0xff]
    %v3324 = vld [vmem:[%s3302 + $0xa8] sm:$0xff]
    %v3325 = vld [vmem:[%s3302 + $0xb0] sm:$0xff]
    %v3326 = vld [vmem:[%s3302 + $0xb8] sm:$0xff]
    %v3327 = vld [vmem:[%s3302 + $0xc0] sm:$0xff]
    %v3328 = vld [vmem:[%s3302 + $0xc8] sm:$0xff]
    %v3329 = vld [vmem:[%s3302 + $0xd0] sm:$0xff]
    %v3330 = vld [vmem:[%s3302 + $0xd8] sm:$0xff]
    %v3331 = vld [vmem:[%s3302 + $0xe0] sm:$0xff]
    %v3332 = vld [vmem:[%s3302 + $0xe8] sm:$0xff]
    %v3333 = vld [vmem:[%s3302 + $0xf0] sm:$0xff]
    %v3334 = vld [vmem:[%s3302 + $0xf8] sm:$0xff]
    %s3335 = scalar_lea.vmem %s3084, 1
    %v3336 = vld [vmem:[%s3335] ss:$4 sm:$0x3]
    %v3338 = vlaneseq
    %v3339 = vshrl.u32 %v3338, 7
    %v3340 = vsub.s32 0, %v3339
    %v3341 = vrot.slane %v3336, %v3340
    %v3342 = vlaneseq
    %v3343 = vshrl.u32 %v3342, 7
    %v3344 = vsub.s32 1, %v3343
    %v3345 = vrot.slane %v3336, %v3344
    %v3380 = vunpack.c.l.b16 %v3303
    %v3381 = vunpack.c.h.b16 %v3303
    %v3382 = vunpack.c.l.b16 %v3304
    %v3383 = vunpack.c.h.b16 %v3304
    %v3384 = vunpack.c.l.b16 %v3305
    %v3385 = vunpack.c.h.b16 %v3305
    %v3386 = vunpack.c.l.b16 %v3306
    %v3387 = vunpack.c.h.b16 %v3306
    %v3388 = vunpack.c.l.b16 %v3307
    %v3389 = vunpack.c.h.b16 %v3307
    %v3390 = vunpack.c.l.b16 %v3308
    %v3391 = vunpack.c.h.b16 %v3308
    %v3392 = vunpack.c.l.b16 %v3309
    %v3393 = vunpack.c.h.b16 %v3309
    %v3394 = vunpack.c.l.b16 %v3310
    %v3395 = vunpack.c.h.b16 %v3310
    %v3396 = vunpack.c.l.b16 %v3311
    %v3397 = vunpack.c.h.b16 %v3311
    %v3398 = vunpack.c.l.b16 %v3312
    %v3399 = vunpack.c.h.b16 %v3312
    %v3400 = vunpack.c.l.b16 %v3313
    %v3401 = vunpack.c.h.b16 %v3313
    %v3402 = vunpack.c.l.b16 %v3314
    %v3403 = vunpack.c.h.b16 %v3314
    %v3404 = vunpack.c.l.b16 %v3315
    %v3405 = vunpack.c.h.b16 %v3315
    %v3406 = vunpack.c.l.b16 %v3316
    %v3407 = vunpack.c.h.b16 %v3316
    %v3408 = vunpack.c.l.b16 %v3317
    %v3409 = vunpack.c.h.b16 %v3317
    %v3410 = vunpack.c.l.b16 %v3318
    %v3411 = vunpack.c.h.b16 %v3318
    %v3412 = vunpack.c.l.b16 %v3319
    %v3413 = vunpack.c.h.b16 %v3319
    %v3414 = vunpack.c.l.b16 %v3320
    %v3415 = vunpack.c.h.b16 %v3320
    %v3416 = vunpack.c.l.b16 %v3321
    %v3417 = vunpack.c.h.b16 %v3321
    %v3418 = vunpack.c.l.b16 %v3322
    %v3419 = vunpack.c.h.b16 %v3322
    %v3420 = vunpack.c.l.b16 %v3323
    %v3421 = vunpack.c.h.b16 %v3323
    %v3422 = vunpack.c.l.b16 %v3324
    %v3423 = vunpack.c.h.b16 %v3324
    %v3424 = vunpack.c.l.b16 %v3325
    %v3425 = vunpack.c.h.b16 %v3325
    %v3426 = vunpack.c.l.b16 %v3326
    %v3427 = vunpack.c.h.b16 %v3326
    %v3428 = vunpack.c.l.b16 %v3327
    %v3429 = vunpack.c.h.b16 %v3327
    %v3430 = vunpack.c.l.b16 %v3328
    %v3431 = vunpack.c.h.b16 %v3328
    %v3432 = vunpack.c.l.b16 %v3329
    %v3433 = vunpack.c.h.b16 %v3329
    %v3434 = vunpack.c.l.b16 %v3330
    %v3435 = vunpack.c.h.b16 %v3330
    %v3436 = vunpack.c.l.b16 %v3331
    %v3437 = vunpack.c.h.b16 %v3331
    %v3438 = vunpack.c.l.b16 %v3332
    %v3439 = vunpack.c.h.b16 %v3332
    %v3440 = vunpack.c.l.b16 %v3333
    %v3441 = vunpack.c.h.b16 %v3333
    %v3442 = vunpack.c.l.b16 %v3334
    %v3443 = vunpack.c.h.b16 %v3334
    %v3444 = vpack.c.b16 %v3382, %v3380
    %v3445 = vpack.c.b16 %v3383, %v3381
    %v3446 = vpack.c.b16 %v3386, %v3384
    %v3447 = vpack.c.b16 %v3387, %v3385
    %v3448 = vpack.c.b16 %v3390, %v3388
    %v3449 = vpack.c.b16 %v3391, %v3389
    %v3450 = vpack.c.b16 %v3394, %v3392
    %v3451 = vpack.c.b16 %v3395, %v3393
    %v3452 = vpack.c.b16 %v3398, %v3396
    %v3453 = vpack.c.b16 %v3399, %v3397
    %v3454 = vpack.c.b16 %v3402, %v3400
    %v3455 = vpack.c.b16 %v3403, %v3401
    %v3456 = vpack.c.b16 %v3406, %v3404
    %v3457 = vpack.c.b16 %v3407, %v3405
    %v3458 = vpack.c.b16 %v3410, %v3408
    %v3459 = vpack.c.b16 %v3411, %v3409
    %v3460 = vpack.c.b16 %v3414, %v3412
    %v3461 = vpack.c.b16 %v3415, %v3413
    %v3462 = vpack.c.b16 %v3418, %v3416
    %v3463 = vpack.c.b16 %v3419, %v3417
    %v3464 = vpack.c.b16 %v3422, %v3420
    %v3465 = vpack.c.b16 %v3423, %v3421
    %v3466 = vpack.c.b16 %v3426, %v3424
    %v3467 = vpack.c.b16 %v3427, %v3425
    %v3468 = vpack.c.b16 %v3430, %v3428
    %v3469 = vpack.c.b16 %v3431, %v3429
    %v3470 = vpack.c.b16 %v3434, %v3432
    %v3471 = vpack.c.b16 %v3435, %v3433
    %v3472 = vpack.c.b16 %v3438, %v3436
    %v3473 = vpack.c.b16 %v3439, %v3437
    %v3474 = vpack.c.b16 %v3442, %v3440
    %v3475 = vpack.c.b16 %v3443, %v3441
    %3508 = vmatprep.subr.bf16.mxu0 %v3459
    %3509 = vmatpush1.bf16.msra.mxu0 %v3458
    %3510 = vmatprep.subr.bf16.mxu0 %v3457
    %3511 = vmatpush1.bf16.msra.mxu0 %v3456
    %3512 = vmatprep.subr.bf16.mxu0 %v3455
    %3513 = vmatpush1.bf16.msra.mxu0 %v3454
    %3514 = vmatprep.subr.bf16.mxu0 %v3453
    %3515 = vmatpush1.bf16.msra.mxu0 %v3452
    %3516 = vmatprep.subr.bf16.mxu0 %v3451
    %3517 = vmatpush1.bf16.msra.mxu0 %v3450
    %3518 = vmatprep.subr.bf16.mxu0 %v3449
    %3519 = vmatpush1.bf16.msra.mxu0 %v3448
    %3520 = vmatprep.subr.bf16.mxu0 %v3447
    %3521 = vmatpush1.bf16.msra.mxu0 %v3446
    %3522 = vmatprep.subr.bf16.mxu0 %v3445
    %3523 = vmatpush1.bf16.msra.mxu0 %v3444
    %3524 = vmatprep.subr.bf16.mxu0 %v3475
    %3525 = vmatpush2.bf16.msra.mxu0 %v3474
    %3526 = vmatprep.subr.bf16.mxu0 %v3473
    %3527 = vmatpush2.bf16.msra.mxu0 %v3472
    %3528 = vmatprep.subr.bf16.mxu0 %v3471
    %3529 = vmatpush2.bf16.msra.mxu0 %v3470
    %3530 = vmatprep.subr.bf16.mxu0 %v3469
    %3531 = vmatpush2.bf16.msra.mxu0 %v3468
    %3532 = vmatprep.subr.bf16.mxu0 %v3467
    %3533 = vmatpush2.bf16.msra.mxu0 %v3466
    %3534 = vmatprep.subr.bf16.mxu0 %v3465
    %3535 = vmatpush2.bf16.msra.mxu0 %v3464
    %3536 = vmatprep.subr.bf16.mxu0 %v3463
    %3537 = vmatpush2.bf16.msra.mxu0 %v3462
    %3538 = vmatprep.subr.bf16.mxu0 %v3461
    %3539 = vmatpush2.bf16.msra.mxu0 %v3460
    %3540 = vmatprep.mubr.bf16.mxu0 %v3301
    %3541 = vmatmul.mubr.bf16.gmra.mxu0 %v3300
    %v3542 = vpop.f32.mrf.mxu0
    %v3543 = vadd.f32 %v3341, %v3542
    %v3544 = vpop.f32.mrf.mxu0
    %v3545 = vadd.f32 %v3345, %v3544
    %v3546 = vpop.f32.mrf.mxu0
    %v3547 = vpop.f32.mrf.mxu0
    %3548 = vdwg.mxu0
    %v3549 = vmax.f32 %v3543, 0.0
    %v3550 = vmax.f32 %v3545, 0.0
    %v3551 = vpack.c.bf16 %v3549, %v3549
    %v3552 = vpack.c.bf16 %v3550, %v3550
    %s3553 = scalar_lea.vmem [#allocation6], 2816
    %v3554 = vld [vmem:[%s3553] sm:$0xff]
    %v3555 = vld [vmem:[%s3553 + $0x8] sm:$0xff]
    %v3556 = vld [vmem:[%s3553 + $0x10] sm:$0xff]
    %v3557 = vld [vmem:[%s3553 + $0x18] sm:$0xff]
    %v3558 = vld [vmem:[%s3553 + $0x20] sm:$0xff]
    %v3559 = vld [vmem:[%s3553 + $0x28] sm:$0xff]
    %v3560 = vld [vmem:[%s3553 + $0x30] sm:$0xff]
    %v3561 = vld [vmem:[%s3553 + $0x38] sm:$0xff]
    %v3562 = vld [vmem:[%s3553 + $0x40] sm:$0xff]
    %v3563 = vld [vmem:[%s3553 + $0x48] sm:$0xff]
    %v3564 = vld [vmem:[%s3553 + $0x50] sm:$0xff]
    %v3565 = vld [vmem:[%s3553 + $0x58] sm:$0xff]
    %v3566 = vld [vmem:[%s3553 + $0x60] sm:$0xff]
    %v3567 = vld [vmem:[%s3553 + $0x68] sm:$0xff]
    %v3568 = vld [vmem:[%s3553 + $0x70] sm:$0xff]
    %v3569 = vld [vmem:[%s3553 + $0x78] sm:$0xff]
    %v3570 = vld [vmem:[%s3553 + $0x80] sm:$0xff]
    %v3571 = vld [vmem:[%s3553 + $0x88] sm:$0xff]
    %v3572 = vld [vmem:[%s3553 + $0x90] sm:$0xff]
    %v3573 = vld [vmem:[%s3553 + $0x98] sm:$0xff]
    %v3574 = vld [vmem:[%s3553 + $0xa0] sm:$0xff]
    %v3575 = vld [vmem:[%s3553 + $0xa8] sm:$0xff]
    %v3576 = vld [vmem:[%s3553 + $0xb0] sm:$0xff]
    %v3577 = vld [vmem:[%s3553 + $0xb8] sm:$0xff]
    %v3578 = vld [vmem:[%s3553 + $0xc0] sm:$0xff]
    %v3579 = vld [vmem:[%s3553 + $0xc8] sm:$0xff]
    %v3580 = vld [vmem:[%s3553 + $0xd0] sm:$0xff]
    %v3581 = vld [vmem:[%s3553 + $0xd8] sm:$0xff]
    %v3582 = vld [vmem:[%s3553 + $0xe0] sm:$0xff]
    %v3583 = vld [vmem:[%s3553 + $0xe8] sm:$0xff]
    %v3584 = vld [vmem:[%s3553 + $0xf0] sm:$0xff]
    %v3585 = vld [vmem:[%s3553 + $0xf8] sm:$0xff]
    %s3586 = scalar_lea.vmem %s3084, 2
    %v3587 = vld [vmem:[%s3586] ss:$4 sm:$0x3]
    %v3589 = vlaneseq
    %v3590 = vshrl.u32 %v3589, 7
    %v3591 = vsub.s32 0, %v3590
    %v3592 = vrot.slane %v3587, %v3591
    %v3593 = vlaneseq
    %v3594 = vshrl.u32 %v3593, 7
    %v3595 = vsub.s32 1, %v3594
    %v3596 = vrot.slane %v3587, %v3595
    %v3631 = vunpack.c.l.b16 %v3554
    %v3632 = vunpack.c.h.b16 %v3554
    %v3633 = vunpack.c.l.b16 %v3555
    %v3634 = vunpack.c.h.b16 %v3555
    %v3635 = vunpack.c.l.b16 %v3556
    %v3636 = vunpack.c.h.b16 %v3556
    %v3637 = vunpack.c.l.b16 %v3557
    %v3638 = vunpack.c.h.b16 %v3557
    %v3639 = vunpack.c.l.b16 %v3558
    %v3640 = vunpack.c.h.b16 %v3558
    %v3641 = vunpack.c.l.b16 %v3559
    %v3642 = vunpack.c.h.b16 %v3559
    %v3643 = vunpack.c.l.b16 %v3560
    %v3644 = vunpack.c.h.b16 %v3560
    %v3645 = vunpack.c.l.b16 %v3561
    %v3646 = vunpack.c.h.b16 %v3561
    %v3647 = vunpack.c.l.b16 %v3562
    %v3648 = vunpack.c.h.b16 %v3562
    %v3649 = vunpack.c.l.b16 %v3563
    %v3650 = vunpack.c.h.b16 %v3563
    %v3651 = vunpack.c.l.b16 %v3564
    %v3652 = vunpack.c.h.b16 %v3564
    %v3653 = vunpack.c.l.b16 %v3565
    %v3654 = vunpack.c.h.b16 %v3565
    %v3655 = vunpack.c.l.b16 %v3566
    %v3656 = vunpack.c.h.b16 %v3566
    %v3657 = vunpack.c.l.b16 %v3567
    %v3658 = vunpack.c.h.b16 %v3567
    %v3659 = vunpack.c.l.b16 %v3568
    %v3660 = vunpack.c.h.b16 %v3568
    %v3661 = vunpack.c.l.b16 %v3569
    %v3662 = vunpack.c.h.b16 %v3569
    %v3663 = vunpack.c.l.b16 %v3570
    %v3664 = vunpack.c.h.b16 %v3570
    %v3665 = vunpack.c.l.b16 %v3571
    %v3666 = vunpack.c.h.b16 %v3571
    %v3667 = vunpack.c.l.b16 %v3572
    %v3668 = vunpack.c.h.b16 %v3572
    %v3669 = vunpack.c.l.b16 %v3573
    %v3670 = vunpack.c.h.b16 %v3573
    %v3671 = vunpack.c.l.b16 %v3574
    %v3672 = vunpack.c.h.b16 %v3574
    %v3673 = vunpack.c.l.b16 %v3575
    %v3674 = vunpack.c.h.b16 %v3575
    %v3675 = vunpack.c.l.b16 %v3576
    %v3676 = vunpack.c.h.b16 %v3576
    %v3677 = vunpack.c.l.b16 %v3577
    %v3678 = vunpack.c.h.b16 %v3577
    %v3679 = vunpack.c.l.b16 %v3578
    %v3680 = vunpack.c.h.b16 %v3578
    %v3681 = vunpack.c.l.b16 %v3579
    %v3682 = vunpack.c.h.b16 %v3579
    %v3683 = vunpack.c.l.b16 %v3580
    %v3684 = vunpack.c.h.b16 %v3580
    %v3685 = vunpack.c.l.b16 %v3581
    %v3686 = vunpack.c.h.b16 %v3581
    %v3687 = vunpack.c.l.b16 %v3582
    %v3688 = vunpack.c.h.b16 %v3582
    %v3689 = vunpack.c.l.b16 %v3583
    %v3690 = vunpack.c.h.b16 %v3583
    %v3691 = vunpack.c.l.b16 %v3584
    %v3692 = vunpack.c.h.b16 %v3584
    %v3693 = vunpack.c.l.b16 %v3585
    %v3694 = vunpack.c.h.b16 %v3585
    %v3695 = vpack.c.b16 %v3633, %v3631
    %v3696 = vpack.c.b16 %v3634, %v3632
    %v3697 = vpack.c.b16 %v3637, %v3635
    %v3698 = vpack.c.b16 %v3638, %v3636
    %v3699 = vpack.c.b16 %v3641, %v3639
    %v3700 = vpack.c.b16 %v3642, %v3640
    %v3701 = vpack.c.b16 %v3645, %v3643
    %v3702 = vpack.c.b16 %v3646, %v3644
    %v3703 = vpack.c.b16 %v3649, %v3647
    %v3704 = vpack.c.b16 %v3650, %v3648
    %v3705 = vpack.c.b16 %v3653, %v3651
    %v3706 = vpack.c.b16 %v3654, %v3652
    %v3707 = vpack.c.b16 %v3657, %v3655
    %v3708 = vpack.c.b16 %v3658, %v3656
    %v3709 = vpack.c.b16 %v3661, %v3659
    %v3710 = vpack.c.b16 %v3662, %v3660
    %v3711 = vpack.c.b16 %v3665, %v3663
    %v3712 = vpack.c.b16 %v3666, %v3664
    %v3713 = vpack.c.b16 %v3669, %v3667
    %v3714 = vpack.c.b16 %v3670, %v3668
    %v3715 = vpack.c.b16 %v3673, %v3671
    %v3716 = vpack.c.b16 %v3674, %v3672
    %v3717 = vpack.c.b16 %v3677, %v3675
    %v3718 = vpack.c.b16 %v3678, %v3676
    %v3719 = vpack.c.b16 %v3681, %v3679
    %v3720 = vpack.c.b16 %v3682, %v3680
    %v3721 = vpack.c.b16 %v3685, %v3683
    %v3722 = vpack.c.b16 %v3686, %v3684
    %v3723 = vpack.c.b16 %v3689, %v3687
    %v3724 = vpack.c.b16 %v3690, %v3688
    %v3725 = vpack.c.b16 %v3693, %v3691
    %v3726 = vpack.c.b16 %v3694, %v3692
    %3759 = vmatprep.subr.bf16.mxu0 %v3710
    %3760 = vmatpush1.bf16.msra.mxu0 %v3709
    %3761 = vmatprep.subr.bf16.mxu0 %v3708
    %3762 = vmatpush1.bf16.msra.mxu0 %v3707
    %3763 = vmatprep.subr.bf16.mxu0 %v3706
    %3764 = vmatpush1.bf16.msra.mxu0 %v3705
    %3765 = vmatprep.subr.bf16.mxu0 %v3704
    %3766 = vmatpush1.bf16.msra.mxu0 %v3703
    %3767 = vmatprep.subr.bf16.mxu0 %v3702
    %3768 = vmatpush1.bf16.msra.mxu0 %v3701
    %3769 = vmatprep.subr.bf16.mxu0 %v3700
    %3770 = vmatpush1.bf16.msra.mxu0 %v3699
    %3771 = vmatprep.subr.bf16.mxu0 %v3698
    %3772 = vmatpush1.bf16.msra.mxu0 %v3697
    %3773 = vmatprep.subr.bf16.mxu0 %v3696
    %3774 = vmatpush1.bf16.msra.mxu0 %v3695
    %3775 = vmatprep.subr.bf16.mxu0 %v3726
    %3776 = vmatpush2.bf16.msra.mxu0 %v3725
    %3777 = vmatprep.subr.bf16.mxu0 %v3724
    %3778 = vmatpush2.bf16.msra.mxu0 %v3723
    %3779 = vmatprep.subr.bf16.mxu0 %v3722
    %3780 = vmatpush2.bf16.msra.mxu0 %v3721
    %3781 = vmatprep.subr.bf16.mxu0 %v3720
    %3782 = vmatpush2.bf16.msra.mxu0 %v3719
    %3783 = vmatprep.subr.bf16.mxu0 %v3718
    %3784 = vmatpush2.bf16.msra.mxu0 %v3717
    %3785 = vmatprep.subr.bf16.mxu0 %v3716
    %3786 = vmatpush2.bf16.msra.mxu0 %v3715
    %3787 = vmatprep.subr.bf16.mxu0 %v3714
    %3788 = vmatpush2.bf16.msra.mxu0 %v3713
    %3789 = vmatprep.subr.bf16.mxu0 %v3712
    %3790 = vmatpush2.bf16.msra.mxu0 %v3711
    %3791 = vmatprep.mubr.bf16.mxu0 %v3552
    %3792 = vmatmul.mubr.bf16.gmra.mxu0 %v3551
    %v3793 = vpop.f32.mrf.mxu0
    %v3794 = vadd.f32 %v3592, %v3793
    %v3795 = vpop.f32.mrf.mxu0
    %v3796 = vadd.f32 %v3596, %v3795
    %v3797 = vpop.f32.mrf.mxu0
    %v3798 = vpop.f32.mrf.mxu0
    %3799 = vdwg.mxu0
    %v3800 = vmax.f32 %v3794, 0.0
    %v3801 = vmax.f32 %v3796, 0.0
    %v3802 = vpack.c.bf16 %v3800, %v3800
    %v3803 = vpack.c.bf16 %v3801, %v3801
    %s3804 = scalar_lea.vmem [#allocation7], 384
    %v3805 = vld [vmem:[%s3804] sm:$0xf]
    %v3806 = vld [vmem:[%s3804 + $0x4] sm:$0xf]
    %v3807 = vld [vmem:[%s3804 + $0x8] sm:$0xf]
    %v3808 = vld [vmem:[%s3804 + $0xc] sm:$0xf]
    %v3809 = vld [vmem:[%s3804 + $0x10] sm:$0xf]
    %v3810 = vld [vmem:[%s3804 + $0x14] sm:$0xf]
    %v3811 = vld [vmem:[%s3804 + $0x18] sm:$0xf]
    %v3812 = vld [vmem:[%s3804 + $0x1c] sm:$0xf]
    %v3813 = vld [vmem:[%s3804 + $0x20] sm:$0xf]
    %v3814 = vld [vmem:[%s3804 + $0x24] sm:$0xf]
    %v3815 = vld [vmem:[%s3804 + $0x28] sm:$0xf]
    %v3816 = vld [vmem:[%s3804 + $0x2c] sm:$0xf]
    %v3817 = vld [vmem:[%s3804 + $0x30] sm:$0xf]
    %v3818 = vld [vmem:[%s3804 + $0x34] sm:$0xf]
    %v3819 = vld [vmem:[%s3804 + $0x38] sm:$0xf]
    %v3820 = vld [vmem:[%s3804 + $0x3c] sm:$0xf]
    %v3821 = vld [vmem:[%s3804 + $0x40] sm:$0xf]
    %v3822 = vld [vmem:[%s3804 + $0x44] sm:$0xf]
    %v3823 = vld [vmem:[%s3804 + $0x48] sm:$0xf]
    %v3824 = vld [vmem:[%s3804 + $0x4c] sm:$0xf]
    %v3825 = vld [vmem:[%s3804 + $0x50] sm:$0xf]
    %v3826 = vld [vmem:[%s3804 + $0x54] sm:$0xf]
    %v3827 = vld [vmem:[%s3804 + $0x58] sm:$0xf]
    %v3828 = vld [vmem:[%s3804 + $0x5c] sm:$0xf]
    %v3829 = vld [vmem:[%s3804 + $0x60] sm:$0xf]
    %v3830 = vld [vmem:[%s3804 + $0x64] sm:$0xf]
    %v3831 = vld [vmem:[%s3804 + $0x68] sm:$0xf]
    %v3832 = vld [vmem:[%s3804 + $0x6c] sm:$0xf]
    %v3833 = vld [vmem:[%s3804 + $0x70] sm:$0xf]
    %v3834 = vld [vmem:[%s3804 + $0x74] sm:$0xf]
    %v3835 = vld [vmem:[%s3804 + $0x78] sm:$0xf]
    %v3836 = vld [vmem:[%s3804 + $0x7c] sm:$0xf]
    %s3837 = scalar_lea.vmem [#allocation9], 3
    %v3838 = vld [vmem:[%s3837] sm:$0x1]
    %v3840 = vlaneseq
    %v3841 = vshrl.u32 %v3840, 7
    %v3842 = vsub.s32 0, %v3841
    %v3843 = vrot.slane %v3838, %v3842
    %v3877 = vunpack.c.l.b16 %v3805
    %v3878 = vunpack.c.l.b16 %v3806
    %v3879 = vunpack.c.l.b16 %v3807
    %v3880 = vunpack.c.l.b16 %v3808
    %v3881 = vunpack.c.l.b16 %v3809
    %v3882 = vunpack.c.l.b16 %v3810
    %v3883 = vunpack.c.l.b16 %v3811
    %v3884 = vunpack.c.l.b16 %v3812
    %v3885 = vunpack.c.l.b16 %v3813
    %v3886 = vunpack.c.l.b16 %v3814
    %v3887 = vunpack.c.l.b16 %v3815
    %v3888 = vunpack.c.l.b16 %v3816
    %v3889 = vunpack.c.l.b16 %v3817
    %v3890 = vunpack.c.l.b16 %v3818
    %v3891 = vunpack.c.l.b16 %v3819
    %v3892 = vunpack.c.l.b16 %v3820
    %v3893 = vunpack.c.l.b16 %v3821
    %v3894 = vunpack.c.l.b16 %v3822
    %v3895 = vunpack.c.l.b16 %v3823
    %v3896 = vunpack.c.l.b16 %v3824
    %v3897 = vunpack.c.l.b16 %v3825
    %v3898 = vunpack.c.l.b16 %v3826
    %v3899 = vunpack.c.l.b16 %v3827
    %v3900 = vunpack.c.l.b16 %v3828
    %v3901 = vunpack.c.l.b16 %v3829
    %v3902 = vunpack.c.l.b16 %v3830
    %v3903 = vunpack.c.l.b16 %v3831
    %v3904 = vunpack.c.l.b16 %v3832
    %v3905 = vunpack.c.l.b16 %v3833
    %v3906 = vunpack.c.l.b16 %v3834
    %v3907 = vunpack.c.l.b16 %v3835
    %v3908 = vunpack.c.l.b16 %v3836
    %v3909 = vpack.c.b16 %v3878, %v3877
    %v3910 = vpack.c.b16 %v3880, %v3879
    %v3911 = vpack.c.b16 %v3882, %v3881
    %v3912 = vpack.c.b16 %v3884, %v3883
    %v3913 = vpack.c.b16 %v3886, %v3885
    %v3914 = vpack.c.b16 %v3888, %v3887
    %v3915 = vpack.c.b16 %v3890, %v3889
    %v3916 = vpack.c.b16 %v3892, %v3891
    %v3917 = vpack.c.b16 %v3894, %v3893
    %v3918 = vpack.c.b16 %v3896, %v3895
    %v3919 = vpack.c.b16 %v3898, %v3897
    %v3920 = vpack.c.b16 %v3900, %v3899
    %v3921 = vpack.c.b16 %v3902, %v3901
    %v3922 = vpack.c.b16 %v3904, %v3903
    %v3923 = vpack.c.b16 %v3906, %v3905
    %v3924 = vpack.c.b16 %v3908, %v3907
    %3941 = vmatprep.subr.bf16.mxu0 0
    %3942 = vmatpush1.bf16.msra.mxu0 %v3916
    %3943 = vmatprep.subr.bf16.mxu0 0
    %3944 = vmatpush1.bf16.msra.mxu0 %v3915
    %3945 = vmatprep.subr.bf16.mxu0 0
    %3946 = vmatpush1.bf16.msra.mxu0 %v3914
    %3947 = vmatprep.subr.bf16.mxu0 0
    %3948 = vmatpush1.bf16.msra.mxu0 %v3913
    %3949 = vmatprep.subr.bf16.mxu0 0
    %3950 = vmatpush1.bf16.msra.mxu0 %v3912
    %3951 = vmatprep.subr.bf16.mxu0 0
    %3952 = vmatpush1.bf16.msra.mxu0 %v3911
    %3953 = vmatprep.subr.bf16.mxu0 0
    %3954 = vmatpush1.bf16.msra.mxu0 %v3910
    %3955 = vmatprep.subr.bf16.mxu0 0
    %3956 = vmatpush1.bf16.msra.mxu0 %v3909
    %3957 = vmatprep.subr.bf16.mxu0 0
    %3958 = vmatpush2.bf16.msra.mxu0 %v3924
    %3959 = vmatprep.subr.bf16.mxu0 0
    %3960 = vmatpush2.bf16.msra.mxu0 %v3923
    %3961 = vmatprep.subr.bf16.mxu0 0
    %3962 = vmatpush2.bf16.msra.mxu0 %v3922
    %3963 = vmatprep.subr.bf16.mxu0 0
    %3964 = vmatpush2.bf16.msra.mxu0 %v3921
    %3965 = vmatprep.subr.bf16.mxu0 0
    %3966 = vmatpush2.bf16.msra.mxu0 %v3920
    %3967 = vmatprep.subr.bf16.mxu0 0
    %3968 = vmatpush2.bf16.msra.mxu0 %v3919
    %3969 = vmatprep.subr.bf16.mxu0 0
    %3970 = vmatpush2.bf16.msra.mxu0 %v3918
    %3971 = vmatprep.subr.bf16.mxu0 0
    %3972 = vmatpush2.bf16.msra.mxu0 %v3917
    %3973 = vmatprep.mubr.bf16.mxu0 %v3803
    %3974 = vmatmul.mubr.bf16.gmra.mxu0 %v3802
    %v3975 = vpop.f32.mrf.mxu0
    %v3976 = vadd.f32 %v3843, %v3975
    %v3977 = vpop.f32.mrf.mxu0
    %v3978 = vpop.f32.mrf.mxu0
    %v3979 = vpop.f32.mrf.mxu0
    %3980 = vdwg.mxu0
    %3981 = vmax.xlane.f32.xlu0 %v3976
    %v3982 = vpop.xlane.xlu0 %3981
    %v3983 = vsub.f32 %v3976, %v3982
    %v3984 = vmul.f32 %v3983, 1.442695
    %v3985 = vpow.pop %v3984
    %3986 = vadd.xlane.f32.xlu0 %v3985
    %v3987 = vpop.xlane.xlu0 %3986
    %v3988 = vlog2.pop %v3987
    %v3989 = vmul.f32 %v3988, 0.6931472
    %v3990 = vsub.f32 %v3983, %v3989
    %s3991 = scalar_lea.vmem %s7, 24
    %3992 = vst.msk [vmem:[%s3991] sm:$0xff] %vm1165, %v3990
    %s3993 = scalar_lea.vmem [#allocation6], 3072
    %v3994 = vld [vmem:[%s3993] sm:$0xff]
    %v3995 = vld [vmem:[%s3993 + $0x8] sm:$0xff]
    %v3996 = vld [vmem:[%s3993 + $0x10] sm:$0xff]
    %v3997 = vld [vmem:[%s3993 + $0x18] sm:$0xff]
    %v3998 = vld [vmem:[%s3993 + $0x20] sm:$0xff]
    %v3999 = vld [vmem:[%s3993 + $0x28] sm:$0xff]
    %v4000 = vld [vmem:[%s3993 + $0x30] sm:$0xff]
    %v4001 = vld [vmem:[%s3993 + $0x38] sm:$0xff]
    %v4002 = vld [vmem:[%s3993 + $0x40] sm:$0xff]
    %v4003 = vld [vmem:[%s3993 + $0x48] sm:$0xff]
    %v4004 = vld [vmem:[%s3993 + $0x50] sm:$0xff]
    %v4005 = vld [vmem:[%s3993 + $0x58] sm:$0xff]
    %v4006 = vld [vmem:[%s3993 + $0x60] sm:$0xff]
    %v4007 = vld [vmem:[%s3993 + $0x68] sm:$0xff]
    %v4008 = vld [vmem:[%s3993 + $0x70] sm:$0xff]
    %v4009 = vld [vmem:[%s3993 + $0x78] sm:$0xff]
    %v4010 = vld [vmem:[%s3993 + $0x80] sm:$0xff]
    %v4011 = vld [vmem:[%s3993 + $0x88] sm:$0xff]
    %v4012 = vld [vmem:[%s3993 + $0x90] sm:$0xff]
    %v4013 = vld [vmem:[%s3993 + $0x98] sm:$0xff]
    %v4014 = vld [vmem:[%s3993 + $0xa0] sm:$0xff]
    %v4015 = vld [vmem:[%s3993 + $0xa8] sm:$0xff]
    %v4016 = vld [vmem:[%s3993 + $0xb0] sm:$0xff]
    %v4017 = vld [vmem:[%s3993 + $0xb8] sm:$0xff]
    %v4018 = vld [vmem:[%s3993 + $0xc0] sm:$0xff]
    %v4019 = vld [vmem:[%s3993 + $0xc8] sm:$0xff]
    %v4020 = vld [vmem:[%s3993 + $0xd0] sm:$0xff]
    %v4021 = vld [vmem:[%s3993 + $0xd8] sm:$0xff]
    %v4022 = vld [vmem:[%s3993 + $0xe0] sm:$0xff]
    %v4023 = vld [vmem:[%s3993 + $0xe8] sm:$0xff]
    %v4024 = vld [vmem:[%s3993 + $0xf0] sm:$0xff]
    %v4025 = vld [vmem:[%s3993 + $0xf8] sm:$0xff]
    %s4026 = scalar_lea.vmem %s4, 32
    %v4027 = vld [vmem:[%s4026] ss:$4 sm:$0x3]
    %v4029 = vlaneseq
    %v4030 = vshrl.u32 %v4029, 7
    %v4031 = vsub.s32 0, %v4030
    %v4032 = vrot.slane %v4027, %v4031
    %v4033 = vlaneseq
    %v4034 = vshrl.u32 %v4033, 7
    %v4035 = vsub.s32 1, %v4034
    %v4036 = vrot.slane %v4027, %v4035
    %v4071 = vunpack.c.l.b16 %v3994
    %v4072 = vunpack.c.h.b16 %v3994
    %v4073 = vunpack.c.l.b16 %v3995
    %v4074 = vunpack.c.h.b16 %v3995
    %v4075 = vunpack.c.l.b16 %v3996
    %v4076 = vunpack.c.h.b16 %v3996
    %v4077 = vunpack.c.l.b16 %v3997
    %v4078 = vunpack.c.h.b16 %v3997
    %v4079 = vunpack.c.l.b16 %v3998
    %v4080 = vunpack.c.h.b16 %v3998
    %v4081 = vunpack.c.l.b16 %v3999
    %v4082 = vunpack.c.h.b16 %v3999
    %v4083 = vunpack.c.l.b16 %v4000
    %v4084 = vunpack.c.h.b16 %v4000
    %v4085 = vunpack.c.l.b16 %v4001
    %v4086 = vunpack.c.h.b16 %v4001
    %v4087 = vunpack.c.l.b16 %v4002
    %v4088 = vunpack.c.h.b16 %v4002
    %v4089 = vunpack.c.l.b16 %v4003
    %v4090 = vunpack.c.h.b16 %v4003
    %v4091 = vunpack.c.l.b16 %v4004
    %v4092 = vunpack.c.h.b16 %v4004
    %v4093 = vunpack.c.l.b16 %v4005
    %v4094 = vunpack.c.h.b16 %v4005
    %v4095 = vunpack.c.l.b16 %v4006
    %v4096 = vunpack.c.h.b16 %v4006
    %v4097 = vunpack.c.l.b16 %v4007
    %v4098 = vunpack.c.h.b16 %v4007
    %v4099 = vunpack.c.l.b16 %v4008
    %v4100 = vunpack.c.h.b16 %v4008
    %v4101 = vunpack.c.l.b16 %v4009
    %v4102 = vunpack.c.h.b16 %v4009
    %v4103 = vunpack.c.l.b16 %v4010
    %v4104 = vunpack.c.h.b16 %v4010
    %v4105 = vunpack.c.l.b16 %v4011
    %v4106 = vunpack.c.h.b16 %v4011
    %v4107 = vunpack.c.l.b16 %v4012
    %v4108 = vunpack.c.h.b16 %v4012
    %v4109 = vunpack.c.l.b16 %v4013
    %v4110 = vunpack.c.h.b16 %v4013
    %v4111 = vunpack.c.l.b16 %v4014
    %v4112 = vunpack.c.h.b16 %v4014
    %v4113 = vunpack.c.l.b16 %v4015
    %v4114 = vunpack.c.h.b16 %v4015
    %v4115 = vunpack.c.l.b16 %v4016
    %v4116 = vunpack.c.h.b16 %v4016
    %v4117 = vunpack.c.l.b16 %v4017
    %v4118 = vunpack.c.h.b16 %v4017
    %v4119 = vunpack.c.l.b16 %v4018
    %v4120 = vunpack.c.h.b16 %v4018
    %v4121 = vunpack.c.l.b16 %v4019
    %v4122 = vunpack.c.h.b16 %v4019
    %v4123 = vunpack.c.l.b16 %v4020
    %v4124 = vunpack.c.h.b16 %v4020
    %v4125 = vunpack.c.l.b16 %v4021
    %v4126 = vunpack.c.h.b16 %v4021
    %v4127 = vunpack.c.l.b16 %v4022
    %v4128 = vunpack.c.h.b16 %v4022
    %v4129 = vunpack.c.l.b16 %v4023
    %v4130 = vunpack.c.h.b16 %v4023
    %v4131 = vunpack.c.l.b16 %v4024
    %v4132 = vunpack.c.h.b16 %v4024
    %v4133 = vunpack.c.l.b16 %v4025
    %v4134 = vunpack.c.h.b16 %v4025
    %v4135 = vpack.c.b16 %v4073, %v4071
    %v4136 = vpack.c.b16 %v4074, %v4072
    %v4137 = vpack.c.b16 %v4077, %v4075
    %v4138 = vpack.c.b16 %v4078, %v4076
    %v4139 = vpack.c.b16 %v4081, %v4079
    %v4140 = vpack.c.b16 %v4082, %v4080
    %v4141 = vpack.c.b16 %v4085, %v4083
    %v4142 = vpack.c.b16 %v4086, %v4084
    %v4143 = vpack.c.b16 %v4089, %v4087
    %v4144 = vpack.c.b16 %v4090, %v4088
    %v4145 = vpack.c.b16 %v4093, %v4091
    %v4146 = vpack.c.b16 %v4094, %v4092
    %v4147 = vpack.c.b16 %v4097, %v4095
    %v4148 = vpack.c.b16 %v4098, %v4096
    %v4149 = vpack.c.b16 %v4101, %v4099
    %v4150 = vpack.c.b16 %v4102, %v4100
    %v4151 = vpack.c.b16 %v4105, %v4103
    %v4152 = vpack.c.b16 %v4106, %v4104
    %v4153 = vpack.c.b16 %v4109, %v4107
    %v4154 = vpack.c.b16 %v4110, %v4108
    %v4155 = vpack.c.b16 %v4113, %v4111
    %v4156 = vpack.c.b16 %v4114, %v4112
    %v4157 = vpack.c.b16 %v4117, %v4115
    %v4158 = vpack.c.b16 %v4118, %v4116
    %v4159 = vpack.c.b16 %v4121, %v4119
    %v4160 = vpack.c.b16 %v4122, %v4120
    %v4161 = vpack.c.b16 %v4125, %v4123
    %v4162 = vpack.c.b16 %v4126, %v4124
    %v4163 = vpack.c.b16 %v4129, %v4127
    %v4164 = vpack.c.b16 %v4130, %v4128
    %v4165 = vpack.c.b16 %v4133, %v4131
    %v4166 = vpack.c.b16 %v4134, %v4132
    %4199 = vmatprep.subr.bf16.mxu0 %v4150
    %4200 = vmatpush1.bf16.msra.mxu0 %v4149
    %4201 = vmatprep.subr.bf16.mxu0 %v4148
    %4202 = vmatpush1.bf16.msra.mxu0 %v4147
    %4203 = vmatprep.subr.bf16.mxu0 %v4146
    %4204 = vmatpush1.bf16.msra.mxu0 %v4145
    %4205 = vmatprep.subr.bf16.mxu0 %v4144
    %4206 = vmatpush1.bf16.msra.mxu0 %v4143
    %4207 = vmatprep.subr.bf16.mxu0 %v4142
    %4208 = vmatpush1.bf16.msra.mxu0 %v4141
    %4209 = vmatprep.subr.bf16.mxu0 %v4140
    %4210 = vmatpush1.bf16.msra.mxu0 %v4139
    %4211 = vmatprep.subr.bf16.mxu0 %v4138
    %4212 = vmatpush1.bf16.msra.mxu0 %v4137
    %4213 = vmatprep.subr.bf16.mxu0 %v4136
    %4214 = vmatpush1.bf16.msra.mxu0 %v4135
    %4215 = vmatprep.subr.bf16.mxu0 %v4166
    %4216 = vmatpush2.bf16.msra.mxu0 %v4165
    %4217 = vmatprep.subr.bf16.mxu0 %v4164
    %4218 = vmatpush2.bf16.msra.mxu0 %v4163
    %4219 = vmatprep.subr.bf16.mxu0 %v4162
    %4220 = vmatpush2.bf16.msra.mxu0 %v4161
    %4221 = vmatprep.subr.bf16.mxu0 %v4160
    %4222 = vmatpush2.bf16.msra.mxu0 %v4159
    %4223 = vmatprep.subr.bf16.mxu0 %v4158
    %4224 = vmatpush2.bf16.msra.mxu0 %v4157
    %4225 = vmatprep.subr.bf16.mxu0 %v4156
    %4226 = vmatpush2.bf16.msra.mxu0 %v4155
    %4227 = vmatprep.subr.bf16.mxu0 %v4154
    %4228 = vmatpush2.bf16.msra.mxu0 %v4153
    %4229 = vmatprep.subr.bf16.mxu0 %v4152
    %4230 = vmatpush2.bf16.msra.mxu0 %v4151
    %4231 = vmatprep.mubr.bf16.mxu0 %v228
    %4232 = vmatmul.mubr.bf16.gmra.mxu0 %v227
    %v4233 = vpop.f32.mrf.mxu0
    %v4234 = vadd.f32 %v4032, %v4233
    %v4235 = vpop.f32.mrf.mxu0
    %v4236 = vadd.f32 %v4036, %v4235
    %v4237 = vpop.f32.mrf.mxu0
    %v4238 = vpop.f32.mrf.mxu0
    %4239 = vdwg.mxu0
    %v4240 = vmax.f32 %v4234, 0.0
    %v4241 = vmax.f32 %v4236, 0.0
    %v4242 = vpack.c.bf16 %v4240, %v4240
    %v4243 = vpack.c.bf16 %v4241, %v4241
    %s4244 = scalar_lea.vmem [#allocation6], 3328
    %v4245 = vld [vmem:[%s4244] sm:$0xff]
    %v4246 = vld [vmem:[%s4244 + $0x8] sm:$0xff]
    %v4247 = vld [vmem:[%s4244 + $0x10] sm:$0xff]
    %v4248 = vld [vmem:[%s4244 + $0x18] sm:$0xff]
    %v4249 = vld [vmem:[%s4244 + $0x20] sm:$0xff]
    %v4250 = vld [vmem:[%s4244 + $0x28] sm:$0xff]
    %v4251 = vld [vmem:[%s4244 + $0x30] sm:$0xff]
    %v4252 = vld [vmem:[%s4244 + $0x38] sm:$0xff]
    %v4253 = vld [vmem:[%s4244 + $0x40] sm:$0xff]
    %v4254 = vld [vmem:[%s4244 + $0x48] sm:$0xff]
    %v4255 = vld [vmem:[%s4244 + $0x50] sm:$0xff]
    %v4256 = vld [vmem:[%s4244 + $0x58] sm:$0xff]
    %v4257 = vld [vmem:[%s4244 + $0x60] sm:$0xff]
    %v4258 = vld [vmem:[%s4244 + $0x68] sm:$0xff]
    %v4259 = vld [vmem:[%s4244 + $0x70] sm:$0xff]
    %v4260 = vld [vmem:[%s4244 + $0x78] sm:$0xff]
    %v4261 = vld [vmem:[%s4244 + $0x80] sm:$0xff]
    %v4262 = vld [vmem:[%s4244 + $0x88] sm:$0xff]
    %v4263 = vld [vmem:[%s4244 + $0x90] sm:$0xff]
    %v4264 = vld [vmem:[%s4244 + $0x98] sm:$0xff]
    %v4265 = vld [vmem:[%s4244 + $0xa0] sm:$0xff]
    %v4266 = vld [vmem:[%s4244 + $0xa8] sm:$0xff]
    %v4267 = vld [vmem:[%s4244 + $0xb0] sm:$0xff]
    %v4268 = vld [vmem:[%s4244 + $0xb8] sm:$0xff]
    %v4269 = vld [vmem:[%s4244 + $0xc0] sm:$0xff]
    %v4270 = vld [vmem:[%s4244 + $0xc8] sm:$0xff]
    %v4271 = vld [vmem:[%s4244 + $0xd0] sm:$0xff]
    %v4272 = vld [vmem:[%s4244 + $0xd8] sm:$0xff]
    %v4273 = vld [vmem:[%s4244 + $0xe0] sm:$0xff]
    %v4274 = vld [vmem:[%s4244 + $0xe8] sm:$0xff]
    %v4275 = vld [vmem:[%s4244 + $0xf0] sm:$0xff]
    %v4276 = vld [vmem:[%s4244 + $0xf8] sm:$0xff]
    %s4277 = scalar_lea.vmem %s4026, 1
    %v4278 = vld [vmem:[%s4277] ss:$4 sm:$0x3]
    %v4280 = vlaneseq
    %v4281 = vshrl.u32 %v4280, 7
    %v4282 = vsub.s32 0, %v4281
    %v4283 = vrot.slane %v4278, %v4282
    %v4284 = vlaneseq
    %v4285 = vshrl.u32 %v4284, 7
    %v4286 = vsub.s32 1, %v4285
    %v4287 = vrot.slane %v4278, %v4286
    %v4322 = vunpack.c.l.b16 %v4245
    %v4323 = vunpack.c.h.b16 %v4245
    %v4324 = vunpack.c.l.b16 %v4246
    %v4325 = vunpack.c.h.b16 %v4246
    %v4326 = vunpack.c.l.b16 %v4247
    %v4327 = vunpack.c.h.b16 %v4247
    %v4328 = vunpack.c.l.b16 %v4248
    %v4329 = vunpack.c.h.b16 %v4248
    %v4330 = vunpack.c.l.b16 %v4249
    %v4331 = vunpack.c.h.b16 %v4249
    %v4332 = vunpack.c.l.b16 %v4250
    %v4333 = vunpack.c.h.b16 %v4250
    %v4334 = vunpack.c.l.b16 %v4251
    %v4335 = vunpack.c.h.b16 %v4251
    %v4336 = vunpack.c.l.b16 %v4252
    %v4337 = vunpack.c.h.b16 %v4252
    %v4338 = vunpack.c.l.b16 %v4253
    %v4339 = vunpack.c.h.b16 %v4253
    %v4340 = vunpack.c.l.b16 %v4254
    %v4341 = vunpack.c.h.b16 %v4254
    %v4342 = vunpack.c.l.b16 %v4255
    %v4343 = vunpack.c.h.b16 %v4255
    %v4344 = vunpack.c.l.b16 %v4256
    %v4345 = vunpack.c.h.b16 %v4256
    %v4346 = vunpack.c.l.b16 %v4257
    %v4347 = vunpack.c.h.b16 %v4257
    %v4348 = vunpack.c.l.b16 %v4258
    %v4349 = vunpack.c.h.b16 %v4258
    %v4350 = vunpack.c.l.b16 %v4259
    %v4351 = vunpack.c.h.b16 %v4259
    %v4352 = vunpack.c.l.b16 %v4260
    %v4353 = vunpack.c.h.b16 %v4260
    %v4354 = vunpack.c.l.b16 %v4261
    %v4355 = vunpack.c.h.b16 %v4261
    %v4356 = vunpack.c.l.b16 %v4262
    %v4357 = vunpack.c.h.b16 %v4262
    %v4358 = vunpack.c.l.b16 %v4263
    %v4359 = vunpack.c.h.b16 %v4263
    %v4360 = vunpack.c.l.b16 %v4264
    %v4361 = vunpack.c.h.b16 %v4264
    %v4362 = vunpack.c.l.b16 %v4265
    %v4363 = vunpack.c.h.b16 %v4265
    %v4364 = vunpack.c.l.b16 %v4266
    %v4365 = vunpack.c.h.b16 %v4266
    %v4366 = vunpack.c.l.b16 %v4267
    %v4367 = vunpack.c.h.b16 %v4267
    %v4368 = vunpack.c.l.b16 %v4268
    %v4369 = vunpack.c.h.b16 %v4268
    %v4370 = vunpack.c.l.b16 %v4269
    %v4371 = vunpack.c.h.b16 %v4269
    %v4372 = vunpack.c.l.b16 %v4270
    %v4373 = vunpack.c.h.b16 %v4270
    %v4374 = vunpack.c.l.b16 %v4271
    %v4375 = vunpack.c.h.b16 %v4271
    %v4376 = vunpack.c.l.b16 %v4272
    %v4377 = vunpack.c.h.b16 %v4272
    %v4378 = vunpack.c.l.b16 %v4273
    %v4379 = vunpack.c.h.b16 %v4273
    %v4380 = vunpack.c.l.b16 %v4274
    %v4381 = vunpack.c.h.b16 %v4274
    %v4382 = vunpack.c.l.b16 %v4275
    %v4383 = vunpack.c.h.b16 %v4275
    %v4384 = vunpack.c.l.b16 %v4276
    %v4385 = vunpack.c.h.b16 %v4276
    %v4386 = vpack.c.b16 %v4324, %v4322
    %v4387 = vpack.c.b16 %v4325, %v4323
    %v4388 = vpack.c.b16 %v4328, %v4326
    %v4389 = vpack.c.b16 %v4329, %v4327
    %v4390 = vpack.c.b16 %v4332, %v4330
    %v4391 = vpack.c.b16 %v4333, %v4331
    %v4392 = vpack.c.b16 %v4336, %v4334
    %v4393 = vpack.c.b16 %v4337, %v4335
    %v4394 = vpack.c.b16 %v4340, %v4338
    %v4395 = vpack.c.b16 %v4341, %v4339
    %v4396 = vpack.c.b16 %v4344, %v4342
    %v4397 = vpack.c.b16 %v4345, %v4343
    %v4398 = vpack.c.b16 %v4348, %v4346
    %v4399 = vpack.c.b16 %v4349, %v4347
    %v4400 = vpack.c.b16 %v4352, %v4350
    %v4401 = vpack.c.b16 %v4353, %v4351
    %v4402 = vpack.c.b16 %v4356, %v4354
    %v4403 = vpack.c.b16 %v4357, %v4355
    %v4404 = vpack.c.b16 %v4360, %v4358
    %v4405 = vpack.c.b16 %v4361, %v4359
    %v4406 = vpack.c.b16 %v4364, %v4362
    %v4407 = vpack.c.b16 %v4365, %v4363
    %v4408 = vpack.c.b16 %v4368, %v4366
    %v4409 = vpack.c.b16 %v4369, %v4367
    %v4410 = vpack.c.b16 %v4372, %v4370
    %v4411 = vpack.c.b16 %v4373, %v4371
    %v4412 = vpack.c.b16 %v4376, %v4374
    %v4413 = vpack.c.b16 %v4377, %v4375
    %v4414 = vpack.c.b16 %v4380, %v4378
    %v4415 = vpack.c.b16 %v4381, %v4379
    %v4416 = vpack.c.b16 %v4384, %v4382
    %v4417 = vpack.c.b16 %v4385, %v4383
    %4450 = vmatprep.subr.bf16.mxu0 %v4401
    %4451 = vmatpush1.bf16.msra.mxu0 %v4400
    %4452 = vmatprep.subr.bf16.mxu0 %v4399
    %4453 = vmatpush1.bf16.msra.mxu0 %v4398
    %4454 = vmatprep.subr.bf16.mxu0 %v4397
    %4455 = vmatpush1.bf16.msra.mxu0 %v4396
    %4456 = vmatprep.subr.bf16.mxu0 %v4395
    %4457 = vmatpush1.bf16.msra.mxu0 %v4394
    %4458 = vmatprep.subr.bf16.mxu0 %v4393
    %4459 = vmatpush1.bf16.msra.mxu0 %v4392
    %4460 = vmatprep.subr.bf16.mxu0 %v4391
    %4461 = vmatpush1.bf16.msra.mxu0 %v4390
    %4462 = vmatprep.subr.bf16.mxu0 %v4389
    %4463 = vmatpush1.bf16.msra.mxu0 %v4388
    %4464 = vmatprep.subr.bf16.mxu0 %v4387
    %4465 = vmatpush1.bf16.msra.mxu0 %v4386
    %4466 = vmatprep.subr.bf16.mxu0 %v4417
    %4467 = vmatpush2.bf16.msra.mxu0 %v4416
    %4468 = vmatprep.subr.bf16.mxu0 %v4415
    %4469 = vmatpush2.bf16.msra.mxu0 %v4414
    %4470 = vmatprep.subr.bf16.mxu0 %v4413
    %4471 = vmatpush2.bf16.msra.mxu0 %v4412
    %4472 = vmatprep.subr.bf16.mxu0 %v4411
    %4473 = vmatpush2.bf16.msra.mxu0 %v4410
    %4474 = vmatprep.subr.bf16.mxu0 %v4409
    %4475 = vmatpush2.bf16.msra.mxu0 %v4408
    %4476 = vmatprep.subr.bf16.mxu0 %v4407
    %4477 = vmatpush2.bf16.msra.mxu0 %v4406
    %4478 = vmatprep.subr.bf16.mxu0 %v4405
    %4479 = vmatpush2.bf16.msra.mxu0 %v4404
    %4480 = vmatprep.subr.bf16.mxu0 %v4403
    %4481 = vmatpush2.bf16.msra.mxu0 %v4402
    %4482 = vmatprep.mubr.bf16.mxu0 %v4243
    %4483 = vmatmul.mubr.bf16.gmra.mxu0 %v4242
    %v4484 = vpop.f32.mrf.mxu0
    %v4485 = vadd.f32 %v4283, %v4484
    %v4486 = vpop.f32.mrf.mxu0
    %v4487 = vadd.f32 %v4287, %v4486
    %v4488 = vpop.f32.mrf.mxu0
    %v4489 = vpop.f32.mrf.mxu0
    %4490 = vdwg.mxu0
    %v4491 = vmax.f32 %v4485, 0.0
    %v4492 = vmax.f32 %v4487, 0.0
    %v4493 = vpack.c.bf16 %v4491, %v4491
    %v4494 = vpack.c.bf16 %v4492, %v4492
    %s4495 = scalar_lea.vmem [#allocation6], 3584
    %v4496 = vld [vmem:[%s4495] sm:$0xff]
    %v4497 = vld [vmem:[%s4495 + $0x8] sm:$0xff]
    %v4498 = vld [vmem:[%s4495 + $0x10] sm:$0xff]
    %v4499 = vld [vmem:[%s4495 + $0x18] sm:$0xff]
    %v4500 = vld [vmem:[%s4495 + $0x20] sm:$0xff]
    %v4501 = vld [vmem:[%s4495 + $0x28] sm:$0xff]
    %v4502 = vld [vmem:[%s4495 + $0x30] sm:$0xff]
    %v4503 = vld [vmem:[%s4495 + $0x38] sm:$0xff]
    %v4504 = vld [vmem:[%s4495 + $0x40] sm:$0xff]
    %v4505 = vld [vmem:[%s4495 + $0x48] sm:$0xff]
    %v4506 = vld [vmem:[%s4495 + $0x50] sm:$0xff]
    %v4507 = vld [vmem:[%s4495 + $0x58] sm:$0xff]
    %v4508 = vld [vmem:[%s4495 + $0x60] sm:$0xff]
    %v4509 = vld [vmem:[%s4495 + $0x68] sm:$0xff]
    %v4510 = vld [vmem:[%s4495 + $0x70] sm:$0xff]
    %v4511 = vld [vmem:[%s4495 + $0x78] sm:$0xff]
    %v4512 = vld [vmem:[%s4495 + $0x80] sm:$0xff]
    %v4513 = vld [vmem:[%s4495 + $0x88] sm:$0xff]
    %v4514 = vld [vmem:[%s4495 + $0x90] sm:$0xff]
    %v4515 = vld [vmem:[%s4495 + $0x98] sm:$0xff]
    %v4516 = vld [vmem:[%s4495 + $0xa0] sm:$0xff]
    %v4517 = vld [vmem:[%s4495 + $0xa8] sm:$0xff]
    %v4518 = vld [vmem:[%s4495 + $0xb0] sm:$0xff]
    %v4519 = vld [vmem:[%s4495 + $0xb8] sm:$0xff]
    %v4520 = vld [vmem:[%s4495 + $0xc0] sm:$0xff]
    %v4521 = vld [vmem:[%s4495 + $0xc8] sm:$0xff]
    %v4522 = vld [vmem:[%s4495 + $0xd0] sm:$0xff]
    %v4523 = vld [vmem:[%s4495 + $0xd8] sm:$0xff]
    %v4524 = vld [vmem:[%s4495 + $0xe0] sm:$0xff]
    %v4525 = vld [vmem:[%s4495 + $0xe8] sm:$0xff]
    %v4526 = vld [vmem:[%s4495 + $0xf0] sm:$0xff]
    %v4527 = vld [vmem:[%s4495 + $0xf8] sm:$0xff]
    %s4528 = scalar_lea.vmem %s4026, 2
    %v4529 = vld [vmem:[%s4528] ss:$4 sm:$0x3]
    %v4531 = vlaneseq
    %v4532 = vshrl.u32 %v4531, 7
    %v4533 = vsub.s32 0, %v4532
    %v4534 = vrot.slane %v4529, %v4533
    %v4535 = vlaneseq
    %v4536 = vshrl.u32 %v4535, 7
    %v4537 = vsub.s32 1, %v4536
    %v4538 = vrot.slane %v4529, %v4537
    %v4573 = vunpack.c.l.b16 %v4496
    %v4574 = vunpack.c.h.b16 %v4496
    %v4575 = vunpack.c.l.b16 %v4497
    %v4576 = vunpack.c.h.b16 %v4497
    %v4577 = vunpack.c.l.b16 %v4498
    %v4578 = vunpack.c.h.b16 %v4498
    %v4579 = vunpack.c.l.b16 %v4499
    %v4580 = vunpack.c.h.b16 %v4499
    %v4581 = vunpack.c.l.b16 %v4500
    %v4582 = vunpack.c.h.b16 %v4500
    %v4583 = vunpack.c.l.b16 %v4501
    %v4584 = vunpack.c.h.b16 %v4501
    %v4585 = vunpack.c.l.b16 %v4502
    %v4586 = vunpack.c.h.b16 %v4502
    %v4587 = vunpack.c.l.b16 %v4503
    %v4588 = vunpack.c.h.b16 %v4503
    %v4589 = vunpack.c.l.b16 %v4504
    %v4590 = vunpack.c.h.b16 %v4504
    %v4591 = vunpack.c.l.b16 %v4505
    %v4592 = vunpack.c.h.b16 %v4505
    %v4593 = vunpack.c.l.b16 %v4506
    %v4594 = vunpack.c.h.b16 %v4506
    %v4595 = vunpack.c.l.b16 %v4507
    %v4596 = vunpack.c.h.b16 %v4507
    %v4597 = vunpack.c.l.b16 %v4508
    %v4598 = vunpack.c.h.b16 %v4508
    %v4599 = vunpack.c.l.b16 %v4509
    %v4600 = vunpack.c.h.b16 %v4509
    %v4601 = vunpack.c.l.b16 %v4510
    %v4602 = vunpack.c.h.b16 %v4510
    %v4603 = vunpack.c.l.b16 %v4511
    %v4604 = vunpack.c.h.b16 %v4511
    %v4605 = vunpack.c.l.b16 %v4512
    %v4606 = vunpack.c.h.b16 %v4512
    %v4607 = vunpack.c.l.b16 %v4513
    %v4608 = vunpack.c.h.b16 %v4513
    %v4609 = vunpack.c.l.b16 %v4514
    %v4610 = vunpack.c.h.b16 %v4514
    %v4611 = vunpack.c.l.b16 %v4515
    %v4612 = vunpack.c.h.b16 %v4515
    %v4613 = vunpack.c.l.b16 %v4516
    %v4614 = vunpack.c.h.b16 %v4516
    %v4615 = vunpack.c.l.b16 %v4517
    %v4616 = vunpack.c.h.b16 %v4517
    %v4617 = vunpack.c.l.b16 %v4518
    %v4618 = vunpack.c.h.b16 %v4518
    %v4619 = vunpack.c.l.b16 %v4519
    %v4620 = vunpack.c.h.b16 %v4519
    %v4621 = vunpack.c.l.b16 %v4520
    %v4622 = vunpack.c.h.b16 %v4520
    %v4623 = vunpack.c.l.b16 %v4521
    %v4624 = vunpack.c.h.b16 %v4521
    %v4625 = vunpack.c.l.b16 %v4522
    %v4626 = vunpack.c.h.b16 %v4522
    %v4627 = vunpack.c.l.b16 %v4523
    %v4628 = vunpack.c.h.b16 %v4523
    %v4629 = vunpack.c.l.b16 %v4524
    %v4630 = vunpack.c.h.b16 %v4524
    %v4631 = vunpack.c.l.b16 %v4525
    %v4632 = vunpack.c.h.b16 %v4525
    %v4633 = vunpack.c.l.b16 %v4526
    %v4634 = vunpack.c.h.b16 %v4526
    %v4635 = vunpack.c.l.b16 %v4527
    %v4636 = vunpack.c.h.b16 %v4527
    %v4637 = vpack.c.b16 %v4575, %v4573
    %v4638 = vpack.c.b16 %v4576, %v4574
    %v4639 = vpack.c.b16 %v4579, %v4577
    %v4640 = vpack.c.b16 %v4580, %v4578
    %v4641 = vpack.c.b16 %v4583, %v4581
    %v4642 = vpack.c.b16 %v4584, %v4582
    %v4643 = vpack.c.b16 %v4587, %v4585
    %v4644 = vpack.c.b16 %v4588, %v4586
    %v4645 = vpack.c.b16 %v4591, %v4589
    %v4646 = vpack.c.b16 %v4592, %v4590
    %v4647 = vpack.c.b16 %v4595, %v4593
    %v4648 = vpack.c.b16 %v4596, %v4594
    %v4649 = vpack.c.b16 %v4599, %v4597
    %v4650 = vpack.c.b16 %v4600, %v4598
    %v4651 = vpack.c.b16 %v4603, %v4601
    %v4652 = vpack.c.b16 %v4604, %v4602
    %v4653 = vpack.c.b16 %v4607, %v4605
    %v4654 = vpack.c.b16 %v4608, %v4606
    %v4655 = vpack.c.b16 %v4611, %v4609
    %v4656 = vpack.c.b16 %v4612, %v4610
    %v4657 = vpack.c.b16 %v4615, %v4613
    %v4658 = vpack.c.b16 %v4616, %v4614
    %v4659 = vpack.c.b16 %v4619, %v4617
    %v4660 = vpack.c.b16 %v4620, %v4618
    %v4661 = vpack.c.b16 %v4623, %v4621
    %v4662 = vpack.c.b16 %v4624, %v4622
    %v4663 = vpack.c.b16 %v4627, %v4625
    %v4664 = vpack.c.b16 %v4628, %v4626
    %v4665 = vpack.c.b16 %v4631, %v4629
    %v4666 = vpack.c.b16 %v4632, %v4630
    %v4667 = vpack.c.b16 %v4635, %v4633
    %v4668 = vpack.c.b16 %v4636, %v4634
    %4701 = vmatprep.subr.bf16.mxu0 %v4652
    %4702 = vmatpush1.bf16.msra.mxu0 %v4651
    %4703 = vmatprep.subr.bf16.mxu0 %v4650
    %4704 = vmatpush1.bf16.msra.mxu0 %v4649
    %4705 = vmatprep.subr.bf16.mxu0 %v4648
    %4706 = vmatpush1.bf16.msra.mxu0 %v4647
    %4707 = vmatprep.subr.bf16.mxu0 %v4646
    %4708 = vmatpush1.bf16.msra.mxu0 %v4645
    %4709 = vmatprep.subr.bf16.mxu0 %v4644
    %4710 = vmatpush1.bf16.msra.mxu0 %v4643
    %4711 = vmatprep.subr.bf16.mxu0 %v4642
    %4712 = vmatpush1.bf16.msra.mxu0 %v4641
    %4713 = vmatprep.subr.bf16.mxu0 %v4640
    %4714 = vmatpush1.bf16.msra.mxu0 %v4639
    %4715 = vmatprep.subr.bf16.mxu0 %v4638
    %4716 = vmatpush1.bf16.msra.mxu0 %v4637
    %4717 = vmatprep.subr.bf16.mxu0 %v4668
    %4718 = vmatpush2.bf16.msra.mxu0 %v4667
    %4719 = vmatprep.subr.bf16.mxu0 %v4666
    %4720 = vmatpush2.bf16.msra.mxu0 %v4665
    %4721 = vmatprep.subr.bf16.mxu0 %v4664
    %4722 = vmatpush2.bf16.msra.mxu0 %v4663
    %4723 = vmatprep.subr.bf16.mxu0 %v4662
    %4724 = vmatpush2.bf16.msra.mxu0 %v4661
    %4725 = vmatprep.subr.bf16.mxu0 %v4660
    %4726 = vmatpush2.bf16.msra.mxu0 %v4659
    %4727 = vmatprep.subr.bf16.mxu0 %v4658
    %4728 = vmatpush2.bf16.msra.mxu0 %v4657
    %4729 = vmatprep.subr.bf16.mxu0 %v4656
    %4730 = vmatpush2.bf16.msra.mxu0 %v4655
    %4731 = vmatprep.subr.bf16.mxu0 %v4654
    %4732 = vmatpush2.bf16.msra.mxu0 %v4653
    %4733 = vmatprep.mubr.bf16.mxu0 %v4494
    %4734 = vmatmul.mubr.bf16.gmra.mxu0 %v4493
    %v4735 = vpop.f32.mrf.mxu0
    %v4736 = vadd.f32 %v4534, %v4735
    %v4737 = vpop.f32.mrf.mxu0
    %v4738 = vadd.f32 %v4538, %v4737
    %v4739 = vpop.f32.mrf.mxu0
    %v4740 = vpop.f32.mrf.mxu0
    %4741 = vdwg.mxu0
    %v4742 = vmax.f32 %v4736, 0.0
    %v4743 = vmax.f32 %v4738, 0.0
    %v4744 = vpack.c.bf16 %v4742, %v4742
    %v4745 = vpack.c.bf16 %v4743, %v4743
    %s4746 = scalar_lea.vmem [#allocation7], 512
    %v4747 = vld [vmem:[%s4746] sm:$0xf]
    %v4748 = vld [vmem:[%s4746 + $0x4] sm:$0xf]
    %v4749 = vld [vmem:[%s4746 + $0x8] sm:$0xf]
    %v4750 = vld [vmem:[%s4746 + $0xc] sm:$0xf]
    %v4751 = vld [vmem:[%s4746 + $0x10] sm:$0xf]
    %v4752 = vld [vmem:[%s4746 + $0x14] sm:$0xf]
    %v4753 = vld [vmem:[%s4746 + $0x18] sm:$0xf]
    %v4754 = vld [vmem:[%s4746 + $0x1c] sm:$0xf]
    %v4755 = vld [vmem:[%s4746 + $0x20] sm:$0xf]
    %v4756 = vld [vmem:[%s4746 + $0x24] sm:$0xf]
    %v4757 = vld [vmem:[%s4746 + $0x28] sm:$0xf]
    %v4758 = vld [vmem:[%s4746 + $0x2c] sm:$0xf]
    %v4759 = vld [vmem:[%s4746 + $0x30] sm:$0xf]
    %v4760 = vld [vmem:[%s4746 + $0x34] sm:$0xf]
    %v4761 = vld [vmem:[%s4746 + $0x38] sm:$0xf]
    %v4762 = vld [vmem:[%s4746 + $0x3c] sm:$0xf]
    %v4763 = vld [vmem:[%s4746 + $0x40] sm:$0xf]
    %v4764 = vld [vmem:[%s4746 + $0x44] sm:$0xf]
    %v4765 = vld [vmem:[%s4746 + $0x48] sm:$0xf]
    %v4766 = vld [vmem:[%s4746 + $0x4c] sm:$0xf]
    %v4767 = vld [vmem:[%s4746 + $0x50] sm:$0xf]
    %v4768 = vld [vmem:[%s4746 + $0x54] sm:$0xf]
    %v4769 = vld [vmem:[%s4746 + $0x58] sm:$0xf]
    %v4770 = vld [vmem:[%s4746 + $0x5c] sm:$0xf]
    %v4771 = vld [vmem:[%s4746 + $0x60] sm:$0xf]
    %v4772 = vld [vmem:[%s4746 + $0x64] sm:$0xf]
    %v4773 = vld [vmem:[%s4746 + $0x68] sm:$0xf]
    %v4774 = vld [vmem:[%s4746 + $0x6c] sm:$0xf]
    %v4775 = vld [vmem:[%s4746 + $0x70] sm:$0xf]
    %v4776 = vld [vmem:[%s4746 + $0x74] sm:$0xf]
    %v4777 = vld [vmem:[%s4746 + $0x78] sm:$0xf]
    %v4778 = vld [vmem:[%s4746 + $0x7c] sm:$0xf]
    %s4779 = scalar_lea.vmem [#allocation9], 4
    %v4780 = vld [vmem:[%s4779] sm:$0x1]
    %v4782 = vlaneseq
    %v4783 = vshrl.u32 %v4782, 7
    %v4784 = vsub.s32 0, %v4783
    %v4785 = vrot.slane %v4780, %v4784
    %v4819 = vunpack.c.l.b16 %v4747
    %v4820 = vunpack.c.l.b16 %v4748
    %v4821 = vunpack.c.l.b16 %v4749
    %v4822 = vunpack.c.l.b16 %v4750
    %v4823 = vunpack.c.l.b16 %v4751
    %v4824 = vunpack.c.l.b16 %v4752
    %v4825 = vunpack.c.l.b16 %v4753
    %v4826 = vunpack.c.l.b16 %v4754
    %v4827 = vunpack.c.l.b16 %v4755
    %v4828 = vunpack.c.l.b16 %v4756
    %v4829 = vunpack.c.l.b16 %v4757
    %v4830 = vunpack.c.l.b16 %v4758
    %v4831 = vunpack.c.l.b16 %v4759
    %v4832 = vunpack.c.l.b16 %v4760
    %v4833 = vunpack.c.l.b16 %v4761
    %v4834 = vunpack.c.l.b16 %v4762
    %v4835 = vunpack.c.l.b16 %v4763
    %v4836 = vunpack.c.l.b16 %v4764
    %v4837 = vunpack.c.l.b16 %v4765
    %v4838 = vunpack.c.l.b16 %v4766
    %v4839 = vunpack.c.l.b16 %v4767
    %v4840 = vunpack.c.l.b16 %v4768
    %v4841 = vunpack.c.l.b16 %v4769
    %v4842 = vunpack.c.l.b16 %v4770
    %v4843 = vunpack.c.l.b16 %v4771
    %v4844 = vunpack.c.l.b16 %v4772
    %v4845 = vunpack.c.l.b16 %v4773
    %v4846 = vunpack.c.l.b16 %v4774
    %v4847 = vunpack.c.l.b16 %v4775
    %v4848 = vunpack.c.l.b16 %v4776
    %v4849 = vunpack.c.l.b16 %v4777
    %v4850 = vunpack.c.l.b16 %v4778
    %v4851 = vpack.c.b16 %v4820, %v4819
    %v4852 = vpack.c.b16 %v4822, %v4821
    %v4853 = vpack.c.b16 %v4824, %v4823
    %v4854 = vpack.c.b16 %v4826, %v4825
    %v4855 = vpack.c.b16 %v4828, %v4827
    %v4856 = vpack.c.b16 %v4830, %v4829
    %v4857 = vpack.c.b16 %v4832, %v4831
    %v4858 = vpack.c.b16 %v4834, %v4833
    %v4859 = vpack.c.b16 %v4836, %v4835
    %v4860 = vpack.c.b16 %v4838, %v4837
    %v4861 = vpack.c.b16 %v4840, %v4839
    %v4862 = vpack.c.b16 %v4842, %v4841
    %v4863 = vpack.c.b16 %v4844, %v4843
    %v4864 = vpack.c.b16 %v4846, %v4845
    %v4865 = vpack.c.b16 %v4848, %v4847
    %v4866 = vpack.c.b16 %v4850, %v4849
    %4883 = vmatprep.subr.bf16.mxu0 0
    %4884 = vmatpush1.bf16.msra.mxu0 %v4858
    %4885 = vmatprep.subr.bf16.mxu0 0
    %4886 = vmatpush1.bf16.msra.mxu0 %v4857
    %4887 = vmatprep.subr.bf16.mxu0 0
    %4888 = vmatpush1.bf16.msra.mxu0 %v4856
    %4889 = vmatprep.subr.bf16.mxu0 0
    %4890 = vmatpush1.bf16.msra.mxu0 %v4855
    %4891 = vmatprep.subr.bf16.mxu0 0
    %4892 = vmatpush1.bf16.msra.mxu0 %v4854
    %4893 = vmatprep.subr.bf16.mxu0 0
    %4894 = vmatpush1.bf16.msra.mxu0 %v4853
    %4895 = vmatprep.subr.bf16.mxu0 0
    %4896 = vmatpush1.bf16.msra.mxu0 %v4852
    %4897 = vmatprep.subr.bf16.mxu0 0
    %4898 = vmatpush1.bf16.msra.mxu0 %v4851
    %4899 = vmatprep.subr.bf16.mxu0 0
    %4900 = vmatpush2.bf16.msra.mxu0 %v4866
    %4901 = vmatprep.subr.bf16.mxu0 0
    %4902 = vmatpush2.bf16.msra.mxu0 %v4865
    %4903 = vmatprep.subr.bf16.mxu0 0
    %4904 = vmatpush2.bf16.msra.mxu0 %v4864
    %4905 = vmatprep.subr.bf16.mxu0 0
    %4906 = vmatpush2.bf16.msra.mxu0 %v4863
    %4907 = vmatprep.subr.bf16.mxu0 0
    %4908 = vmatpush2.bf16.msra.mxu0 %v4862
    %4909 = vmatprep.subr.bf16.mxu0 0
    %4910 = vmatpush2.bf16.msra.mxu0 %v4861
    %4911 = vmatprep.subr.bf16.mxu0 0
    %4912 = vmatpush2.bf16.msra.mxu0 %v4860
    %4913 = vmatprep.subr.bf16.mxu0 0
    %4914 = vmatpush2.bf16.msra.mxu0 %v4859
    %4915 = vmatprep.mubr.bf16.mxu0 %v4745
    %4916 = vmatmul.mubr.bf16.gmra.mxu0 %v4744
    %v4917 = vpop.f32.mrf.mxu0
    %v4918 = vadd.f32 %v4785, %v4917
    %v4919 = vpop.f32.mrf.mxu0
    %v4920 = vpop.f32.mrf.mxu0
    %v4921 = vpop.f32.mrf.mxu0
    %4922 = vdwg.mxu0
    %4923 = vmax.xlane.f32.xlu0 %v4918
    %v4924 = vpop.xlane.xlu0 %4923
    %v4925 = vsub.f32 %v4918, %v4924
    %v4926 = vmul.f32 %v4925, 1.442695
    %v4927 = vpow.pop %v4926
    %4928 = vadd.xlane.f32.xlu0 %v4927
    %v4929 = vpop.xlane.xlu0 %4928
    %v4930 = vlog2.pop %v4929
    %v4931 = vmul.f32 %v4930, 0.6931472
    %v4932 = vsub.f32 %v4925, %v4931
    %s4933 = scalar_lea.vmem %s7, 32
    %4934 = vst.msk [vmem:[%s4933] sm:$0xff] %vm1165, %v4932
    %s4935 = scalar_lea.vmem [#allocation6], 3840
    %v4936 = vld [vmem:[%s4935] sm:$0xff]
    %v4937 = vld [vmem:[%s4935 + $0x8] sm:$0xff]
    %v4938 = vld [vmem:[%s4935 + $0x10] sm:$0xff]
    %v4939 = vld [vmem:[%s4935 + $0x18] sm:$0xff]
    %v4940 = vld [vmem:[%s4935 + $0x20] sm:$0xff]
    %v4941 = vld [vmem:[%s4935 + $0x28] sm:$0xff]
    %v4942 = vld [vmem:[%s4935 + $0x30] sm:$0xff]
    %v4943 = vld [vmem:[%s4935 + $0x38] sm:$0xff]
    %v4944 = vld [vmem:[%s4935 + $0x40] sm:$0xff]
    %v4945 = vld [vmem:[%s4935 + $0x48] sm:$0xff]
    %v4946 = vld [vmem:[%s4935 + $0x50] sm:$0xff]
    %v4947 = vld [vmem:[%s4935 + $0x58] sm:$0xff]
    %v4948 = vld [vmem:[%s4935 + $0x60] sm:$0xff]
    %v4949 = vld [vmem:[%s4935 + $0x68] sm:$0xff]
    %v4950 = vld [vmem:[%s4935 + $0x70] sm:$0xff]
    %v4951 = vld [vmem:[%s4935 + $0x78] sm:$0xff]
    %v4952 = vld [vmem:[%s4935 + $0x80] sm:$0xff]
    %v4953 = vld [vmem:[%s4935 + $0x88] sm:$0xff]
    %v4954 = vld [vmem:[%s4935 + $0x90] sm:$0xff]
    %v4955 = vld [vmem:[%s4935 + $0x98] sm:$0xff]
    %v4956 = vld [vmem:[%s4935 + $0xa0] sm:$0xff]
    %v4957 = vld [vmem:[%s4935 + $0xa8] sm:$0xff]
    %v4958 = vld [vmem:[%s4935 + $0xb0] sm:$0xff]
    %v4959 = vld [vmem:[%s4935 + $0xb8] sm:$0xff]
    %v4960 = vld [vmem:[%s4935 + $0xc0] sm:$0xff]
    %v4961 = vld [vmem:[%s4935 + $0xc8] sm:$0xff]
    %v4962 = vld [vmem:[%s4935 + $0xd0] sm:$0xff]
    %v4963 = vld [vmem:[%s4935 + $0xd8] sm:$0xff]
    %v4964 = vld [vmem:[%s4935 + $0xe0] sm:$0xff]
    %v4965 = vld [vmem:[%s4935 + $0xe8] sm:$0xff]
    %v4966 = vld [vmem:[%s4935 + $0xf0] sm:$0xff]
    %v4967 = vld [vmem:[%s4935 + $0xf8] sm:$0xff]
    %s4968 = scalar_lea.vmem %s4, 40
    %v4969 = vld [vmem:[%s4968] ss:$4 sm:$0x3]
    %v4971 = vlaneseq
    %v4972 = vshrl.u32 %v4971, 7
    %v4973 = vsub.s32 0, %v4972
    %v4974 = vrot.slane %v4969, %v4973
    %v4975 = vlaneseq
    %v4976 = vshrl.u32 %v4975, 7
    %v4977 = vsub.s32 1, %v4976
    %v4978 = vrot.slane %v4969, %v4977
    %v5013 = vunpack.c.l.b16 %v4936
    %v5014 = vunpack.c.h.b16 %v4936
    %v5015 = vunpack.c.l.b16 %v4937
    %v5016 = vunpack.c.h.b16 %v4937
    %v5017 = vunpack.c.l.b16 %v4938
    %v5018 = vunpack.c.h.b16 %v4938
    %v5019 = vunpack.c.l.b16 %v4939
    %v5020 = vunpack.c.h.b16 %v4939
    %v5021 = vunpack.c.l.b16 %v4940
    %v5022 = vunpack.c.h.b16 %v4940
    %v5023 = vunpack.c.l.b16 %v4941
    %v5024 = vunpack.c.h.b16 %v4941
    %v5025 = vunpack.c.l.b16 %v4942
    %v5026 = vunpack.c.h.b16 %v4942
    %v5027 = vunpack.c.l.b16 %v4943
    %v5028 = vunpack.c.h.b16 %v4943
    %v5029 = vunpack.c.l.b16 %v4944
    %v5030 = vunpack.c.h.b16 %v4944
    %v5031 = vunpack.c.l.b16 %v4945
    %v5032 = vunpack.c.h.b16 %v4945
    %v5033 = vunpack.c.l.b16 %v4946
    %v5034 = vunpack.c.h.b16 %v4946
    %v5035 = vunpack.c.l.b16 %v4947
    %v5036 = vunpack.c.h.b16 %v4947
    %v5037 = vunpack.c.l.b16 %v4948
    %v5038 = vunpack.c.h.b16 %v4948
    %v5039 = vunpack.c.l.b16 %v4949
    %v5040 = vunpack.c.h.b16 %v4949
    %v5041 = vunpack.c.l.b16 %v4950
    %v5042 = vunpack.c.h.b16 %v4950
    %v5043 = vunpack.c.l.b16 %v4951
    %v5044 = vunpack.c.h.b16 %v4951
    %v5045 = vunpack.c.l.b16 %v4952
    %v5046 = vunpack.c.h.b16 %v4952
    %v5047 = vunpack.c.l.b16 %v4953
    %v5048 = vunpack.c.h.b16 %v4953
    %v5049 = vunpack.c.l.b16 %v4954
    %v5050 = vunpack.c.h.b16 %v4954
    %v5051 = vunpack.c.l.b16 %v4955
    %v5052 = vunpack.c.h.b16 %v4955
    %v5053 = vunpack.c.l.b16 %v4956
    %v5054 = vunpack.c.h.b16 %v4956
    %v5055 = vunpack.c.l.b16 %v4957
    %v5056 = vunpack.c.h.b16 %v4957
    %v5057 = vunpack.c.l.b16 %v4958
    %v5058 = vunpack.c.h.b16 %v4958
    %v5059 = vunpack.c.l.b16 %v4959
    %v5060 = vunpack.c.h.b16 %v4959
    %v5061 = vunpack.c.l.b16 %v4960
    %v5062 = vunpack.c.h.b16 %v4960
    %v5063 = vunpack.c.l.b16 %v4961
    %v5064 = vunpack.c.h.b16 %v4961
    %v5065 = vunpack.c.l.b16 %v4962
    %v5066 = vunpack.c.h.b16 %v4962
    %v5067 = vunpack.c.l.b16 %v4963
    %v5068 = vunpack.c.h.b16 %v4963
    %v5069 = vunpack.c.l.b16 %v4964
    %v5070 = vunpack.c.h.b16 %v4964
    %v5071 = vunpack.c.l.b16 %v4965
    %v5072 = vunpack.c.h.b16 %v4965
    %v5073 = vunpack.c.l.b16 %v4966
    %v5074 = vunpack.c.h.b16 %v4966
    %v5075 = vunpack.c.l.b16 %v4967
    %v5076 = vunpack.c.h.b16 %v4967
    %v5077 = vpack.c.b16 %v5015, %v5013
    %v5078 = vpack.c.b16 %v5016, %v5014
    %v5079 = vpack.c.b16 %v5019, %v5017
    %v5080 = vpack.c.b16 %v5020, %v5018
    %v5081 = vpack.c.b16 %v5023, %v5021
    %v5082 = vpack.c.b16 %v5024, %v5022
    %v5083 = vpack.c.b16 %v5027, %v5025
    %v5084 = vpack.c.b16 %v5028, %v5026
    %v5085 = vpack.c.b16 %v5031, %v5029
    %v5086 = vpack.c.b16 %v5032, %v5030
    %v5087 = vpack.c.b16 %v5035, %v5033
    %v5088 = vpack.c.b16 %v5036, %v5034
    %v5089 = vpack.c.b16 %v5039, %v5037
    %v5090 = vpack.c.b16 %v5040, %v5038
    %v5091 = vpack.c.b16 %v5043, %v5041
    %v5092 = vpack.c.b16 %v5044, %v5042
    %v5093 = vpack.c.b16 %v5047, %v5045
    %v5094 = vpack.c.b16 %v5048, %v5046
    %v5095 = vpack.c.b16 %v5051, %v5049
    %v5096 = vpack.c.b16 %v5052, %v5050
    %v5097 = vpack.c.b16 %v5055, %v5053
    %v5098 = vpack.c.b16 %v5056, %v5054
    %v5099 = vpack.c.b16 %v5059, %v5057
    %v5100 = vpack.c.b16 %v5060, %v5058
    %v5101 = vpack.c.b16 %v5063, %v5061
    %v5102 = vpack.c.b16 %v5064, %v5062
    %v5103 = vpack.c.b16 %v5067, %v5065
    %v5104 = vpack.c.b16 %v5068, %v5066
    %v5105 = vpack.c.b16 %v5071, %v5069
    %v5106 = vpack.c.b16 %v5072, %v5070
    %v5107 = vpack.c.b16 %v5075, %v5073
    %v5108 = vpack.c.b16 %v5076, %v5074
    %5141 = vmatprep.subr.bf16.mxu0 %v5092
    %5142 = vmatpush1.bf16.msra.mxu0 %v5091
    %5143 = vmatprep.subr.bf16.mxu0 %v5090
    %5144 = vmatpush1.bf16.msra.mxu0 %v5089
    %5145 = vmatprep.subr.bf16.mxu0 %v5088
    %5146 = vmatpush1.bf16.msra.mxu0 %v5087
    %5147 = vmatprep.subr.bf16.mxu0 %v5086
    %5148 = vmatpush1.bf16.msra.mxu0 %v5085
    %5149 = vmatprep.subr.bf16.mxu0 %v5084
    %5150 = vmatpush1.bf16.msra.mxu0 %v5083
    %5151 = vmatprep.subr.bf16.mxu0 %v5082
    %5152 = vmatpush1.bf16.msra.mxu0 %v5081
    %5153 = vmatprep.subr.bf16.mxu0 %v5080
    %5154 = vmatpush1.bf16.msra.mxu0 %v5079
    %5155 = vmatprep.subr.bf16.mxu0 %v5078
    %5156 = vmatpush1.bf16.msra.mxu0 %v5077
    %5157 = vmatprep.subr.bf16.mxu0 %v5108
    %5158 = vmatpush2.bf16.msra.mxu0 %v5107
    %5159 = vmatprep.subr.bf16.mxu0 %v5106
    %5160 = vmatpush2.bf16.msra.mxu0 %v5105
    %5161 = vmatprep.subr.bf16.mxu0 %v5104
    %5162 = vmatpush2.bf16.msra.mxu0 %v5103
    %5163 = vmatprep.subr.bf16.mxu0 %v5102
    %5164 = vmatpush2.bf16.msra.mxu0 %v5101
    %5165 = vmatprep.subr.bf16.mxu0 %v5100
    %5166 = vmatpush2.bf16.msra.mxu0 %v5099
    %5167 = vmatprep.subr.bf16.mxu0 %v5098
    %5168 = vmatpush2.bf16.msra.mxu0 %v5097
    %5169 = vmatprep.subr.bf16.mxu0 %v5096
    %5170 = vmatpush2.bf16.msra.mxu0 %v5095
    %5171 = vmatprep.subr.bf16.mxu0 %v5094
    %5172 = vmatpush2.bf16.msra.mxu0 %v5093
    %5173 = vmatprep.mubr.bf16.mxu0 %v228
    %5174 = vmatmul.mubr.bf16.gmra.mxu0 %v227
    %v5175 = vpop.f32.mrf.mxu0
    %v5176 = vadd.f32 %v4974, %v5175
    %v5177 = vpop.f32.mrf.mxu0
    %v5178 = vadd.f32 %v4978, %v5177
    %v5179 = vpop.f32.mrf.mxu0
    %v5180 = vpop.f32.mrf.mxu0
    %5181 = vdwg.mxu0
    %v5182 = vmax.f32 %v5176, 0.0
    %v5183 = vmax.f32 %v5178, 0.0
    %v5184 = vpack.c.bf16 %v5182, %v5182
    %v5185 = vpack.c.bf16 %v5183, %v5183
    %s5186 = scalar_lea.vmem [#allocation6], 4096
    %v5187 = vld [vmem:[%s5186] sm:$0xff]
    %v5188 = vld [vmem:[%s5186 + $0x8] sm:$0xff]
    %v5189 = vld [vmem:[%s5186 + $0x10] sm:$0xff]
    %v5190 = vld [vmem:[%s5186 + $0x18] sm:$0xff]
    %v5191 = vld [vmem:[%s5186 + $0x20] sm:$0xff]
    %v5192 = vld [vmem:[%s5186 + $0x28] sm:$0xff]
    %v5193 = vld [vmem:[%s5186 + $0x30] sm:$0xff]
    %v5194 = vld [vmem:[%s5186 + $0x38] sm:$0xff]
    %v5195 = vld [vmem:[%s5186 + $0x40] sm:$0xff]
    %v5196 = vld [vmem:[%s5186 + $0x48] sm:$0xff]
    %v5197 = vld [vmem:[%s5186 + $0x50] sm:$0xff]
    %v5198 = vld [vmem:[%s5186 + $0x58] sm:$0xff]
    %v5199 = vld [vmem:[%s5186 + $0x60] sm:$0xff]
    %v5200 = vld [vmem:[%s5186 + $0x68] sm:$0xff]
    %v5201 = vld [vmem:[%s5186 + $0x70] sm:$0xff]
    %v5202 = vld [vmem:[%s5186 + $0x78] sm:$0xff]
    %v5203 = vld [vmem:[%s5186 + $0x80] sm:$0xff]
    %v5204 = vld [vmem:[%s5186 + $0x88] sm:$0xff]
    %v5205 = vld [vmem:[%s5186 + $0x90] sm:$0xff]
    %v5206 = vld [vmem:[%s5186 + $0x98] sm:$0xff]
    %v5207 = vld [vmem:[%s5186 + $0xa0] sm:$0xff]
    %v5208 = vld [vmem:[%s5186 + $0xa8] sm:$0xff]
    %v5209 = vld [vmem:[%s5186 + $0xb0] sm:$0xff]
    %v5210 = vld [vmem:[%s5186 + $0xb8] sm:$0xff]
    %v5211 = vld [vmem:[%s5186 + $0xc0] sm:$0xff]
    %v5212 = vld [vmem:[%s5186 + $0xc8] sm:$0xff]
    %v5213 = vld [vmem:[%s5186 + $0xd0] sm:$0xff]
    %v5214 = vld [vmem:[%s5186 + $0xd8] sm:$0xff]
    %v5215 = vld [vmem:[%s5186 + $0xe0] sm:$0xff]
    %v5216 = vld [vmem:[%s5186 + $0xe8] sm:$0xff]
    %v5217 = vld [vmem:[%s5186 + $0xf0] sm:$0xff]
    %v5218 = vld [vmem:[%s5186 + $0xf8] sm:$0xff]
    %s5219 = scalar_lea.vmem %s4968, 1
    %v5220 = vld [vmem:[%s5219] ss:$4 sm:$0x3]
    %v5222 = vlaneseq
    %v5223 = vshrl.u32 %v5222, 7
    %v5224 = vsub.s32 0, %v5223
    %v5225 = vrot.slane %v5220, %v5224
    %v5226 = vlaneseq
    %v5227 = vshrl.u32 %v5226, 7
    %v5228 = vsub.s32 1, %v5227
    %v5229 = vrot.slane %v5220, %v5228
    %v5264 = vunpack.c.l.b16 %v5187
    %v5265 = vunpack.c.h.b16 %v5187
    %v5266 = vunpack.c.l.b16 %v5188
    %v5267 = vunpack.c.h.b16 %v5188
    %v5268 = vunpack.c.l.b16 %v5189
    %v5269 = vunpack.c.h.b16 %v5189
    %v5270 = vunpack.c.l.b16 %v5190
    %v5271 = vunpack.c.h.b16 %v5190
    %v5272 = vunpack.c.l.b16 %v5191
    %v5273 = vunpack.c.h.b16 %v5191
    %v5274 = vunpack.c.l.b16 %v5192
    %v5275 = vunpack.c.h.b16 %v5192
    %v5276 = vunpack.c.l.b16 %v5193
    %v5277 = vunpack.c.h.b16 %v5193
    %v5278 = vunpack.c.l.b16 %v5194
    %v5279 = vunpack.c.h.b16 %v5194
    %v5280 = vunpack.c.l.b16 %v5195
    %v5281 = vunpack.c.h.b16 %v5195
    %v5282 = vunpack.c.l.b16 %v5196
    %v5283 = vunpack.c.h.b16 %v5196
    %v5284 = vunpack.c.l.b16 %v5197
    %v5285 = vunpack.c.h.b16 %v5197
    %v5286 = vunpack.c.l.b16 %v5198
    %v5287 = vunpack.c.h.b16 %v5198
    %v5288 = vunpack.c.l.b16 %v5199
    %v5289 = vunpack.c.h.b16 %v5199
    %v5290 = vunpack.c.l.b16 %v5200
    %v5291 = vunpack.c.h.b16 %v5200
    %v5292 = vunpack.c.l.b16 %v5201
    %v5293 = vunpack.c.h.b16 %v5201
    %v5294 = vunpack.c.l.b16 %v5202
    %v5295 = vunpack.c.h.b16 %v5202
    %v5296 = vunpack.c.l.b16 %v5203
    %v5297 = vunpack.c.h.b16 %v5203
    %v5298 = vunpack.c.l.b16 %v5204
    %v5299 = vunpack.c.h.b16 %v5204
    %v5300 = vunpack.c.l.b16 %v5205
    %v5301 = vunpack.c.h.b16 %v5205
    %v5302 = vunpack.c.l.b16 %v5206
    %v5303 = vunpack.c.h.b16 %v5206
    %v5304 = vunpack.c.l.b16 %v5207
    %v5305 = vunpack.c.h.b16 %v5207
    %v5306 = vunpack.c.l.b16 %v5208
    %v5307 = vunpack.c.h.b16 %v5208
    %v5308 = vunpack.c.l.b16 %v5209
    %v5309 = vunpack.c.h.b16 %v5209
    %v5310 = vunpack.c.l.b16 %v5210
    %v5311 = vunpack.c.h.b16 %v5210
    %v5312 = vunpack.c.l.b16 %v5211
    %v5313 = vunpack.c.h.b16 %v5211
    %v5314 = vunpack.c.l.b16 %v5212
    %v5315 = vunpack.c.h.b16 %v5212
    %v5316 = vunpack.c.l.b16 %v5213
    %v5317 = vunpack.c.h.b16 %v5213
    %v5318 = vunpack.c.l.b16 %v5214
    %v5319 = vunpack.c.h.b16 %v5214
    %v5320 = vunpack.c.l.b16 %v5215
    %v5321 = vunpack.c.h.b16 %v5215
    %v5322 = vunpack.c.l.b16 %v5216
    %v5323 = vunpack.c.h.b16 %v5216
    %v5324 = vunpack.c.l.b16 %v5217
    %v5325 = vunpack.c.h.b16 %v5217
    %v5326 = vunpack.c.l.b16 %v5218
    %v5327 = vunpack.c.h.b16 %v5218
    %v5328 = vpack.c.b16 %v5266, %v5264
    %v5329 = vpack.c.b16 %v5267, %v5265
    %v5330 = vpack.c.b16 %v5270, %v5268
    %v5331 = vpack.c.b16 %v5271, %v5269
    %v5332 = vpack.c.b16 %v5274, %v5272
    %v5333 = vpack.c.b16 %v5275, %v5273
    %v5334 = vpack.c.b16 %v5278, %v5276
    %v5335 = vpack.c.b16 %v5279, %v5277
    %v5336 = vpack.c.b16 %v5282, %v5280
    %v5337 = vpack.c.b16 %v5283, %v5281
    %v5338 = vpack.c.b16 %v5286, %v5284
    %v5339 = vpack.c.b16 %v5287, %v5285
    %v5340 = vpack.c.b16 %v5290, %v5288
    %v5341 = vpack.c.b16 %v5291, %v5289
    %v5342 = vpack.c.b16 %v5294, %v5292
    %v5343 = vpack.c.b16 %v5295, %v5293
    %v5344 = vpack.c.b16 %v5298, %v5296
    %v5345 = vpack.c.b16 %v5299, %v5297
    %v5346 = vpack.c.b16 %v5302, %v5300
    %v5347 = vpack.c.b16 %v5303, %v5301
    %v5348 = vpack.c.b16 %v5306, %v5304
    %v5349 = vpack.c.b16 %v5307, %v5305
    %v5350 = vpack.c.b16 %v5310, %v5308
    %v5351 = vpack.c.b16 %v5311, %v5309
    %v5352 = vpack.c.b16 %v5314, %v5312
    %v5353 = vpack.c.b16 %v5315, %v5313
    %v5354 = vpack.c.b16 %v5318, %v5316
    %v5355 = vpack.c.b16 %v5319, %v5317
    %v5356 = vpack.c.b16 %v5322, %v5320
    %v5357 = vpack.c.b16 %v5323, %v5321
    %v5358 = vpack.c.b16 %v5326, %v5324
    %v5359 = vpack.c.b16 %v5327, %v5325
    %5392 = vmatprep.subr.bf16.mxu0 %v5343
    %5393 = vmatpush1.bf16.msra.mxu0 %v5342
    %5394 = vmatprep.subr.bf16.mxu0 %v5341
    %5395 = vmatpush1.bf16.msra.mxu0 %v5340
    %5396 = vmatprep.subr.bf16.mxu0 %v5339
    %5397 = vmatpush1.bf16.msra.mxu0 %v5338
    %5398 = vmatprep.subr.bf16.mxu0 %v5337
    %5399 = vmatpush1.bf16.msra.mxu0 %v5336
    %5400 = vmatprep.subr.bf16.mxu0 %v5335
    %5401 = vmatpush1.bf16.msra.mxu0 %v5334
    %5402 = vmatprep.subr.bf16.mxu0 %v5333
    %5403 = vmatpush1.bf16.msra.mxu0 %v5332
    %5404 = vmatprep.subr.bf16.mxu0 %v5331
    %5405 = vmatpush1.bf16.msra.mxu0 %v5330
    %5406 = vmatprep.subr.bf16.mxu0 %v5329
    %5407 = vmatpush1.bf16.msra.mxu0 %v5328
    %5408 = vmatprep.subr.bf16.mxu0 %v5359
    %5409 = vmatpush2.bf16.msra.mxu0 %v5358
    %5410 = vmatprep.subr.bf16.mxu0 %v5357
    %5411 = vmatpush2.bf16.msra.mxu0 %v5356
    %5412 = vmatprep.subr.bf16.mxu0 %v5355
    %5413 = vmatpush2.bf16.msra.mxu0 %v5354
    %5414 = vmatprep.subr.bf16.mxu0 %v5353
    %5415 = vmatpush2.bf16.msra.mxu0 %v5352
    %5416 = vmatprep.subr.bf16.mxu0 %v5351
    %5417 = vmatpush2.bf16.msra.mxu0 %v5350
    %5418 = vmatprep.subr.bf16.mxu0 %v5349
    %5419 = vmatpush2.bf16.msra.mxu0 %v5348
    %5420 = vmatprep.subr.bf16.mxu0 %v5347
    %5421 = vmatpush2.bf16.msra.mxu0 %v5346
    %5422 = vmatprep.subr.bf16.mxu0 %v5345
    %5423 = vmatpush2.bf16.msra.mxu0 %v5344
    %5424 = vmatprep.mubr.bf16.mxu0 %v5185
    %5425 = vmatmul.mubr.bf16.gmra.mxu0 %v5184
    %v5426 = vpop.f32.mrf.mxu0
    %v5427 = vadd.f32 %v5225, %v5426
    %v5428 = vpop.f32.mrf.mxu0
    %v5429 = vadd.f32 %v5229, %v5428
    %v5430 = vpop.f32.mrf.mxu0
    %v5431 = vpop.f32.mrf.mxu0
    %5432 = vdwg.mxu0
    %v5433 = vmax.f32 %v5427, 0.0
    %v5434 = vmax.f32 %v5429, 0.0
    %v5435 = vpack.c.bf16 %v5433, %v5433
    %v5436 = vpack.c.bf16 %v5434, %v5434
    %s5437 = scalar_lea.vmem [#allocation6], 4352
    %v5438 = vld [vmem:[%s5437] sm:$0xff]
    %v5439 = vld [vmem:[%s5437 + $0x8] sm:$0xff]
    %v5440 = vld [vmem:[%s5437 + $0x10] sm:$0xff]
    %v5441 = vld [vmem:[%s5437 + $0x18] sm:$0xff]
    %v5442 = vld [vmem:[%s5437 + $0x20] sm:$0xff]
    %v5443 = vld [vmem:[%s5437 + $0x28] sm:$0xff]
    %v5444 = vld [vmem:[%s5437 + $0x30] sm:$0xff]
    %v5445 = vld [vmem:[%s5437 + $0x38] sm:$0xff]
    %v5446 = vld [vmem:[%s5437 + $0x40] sm:$0xff]
    %v5447 = vld [vmem:[%s5437 + $0x48] sm:$0xff]
    %v5448 = vld [vmem:[%s5437 + $0x50] sm:$0xff]
    %v5449 = vld [vmem:[%s5437 + $0x58] sm:$0xff]
    %v5450 = vld [vmem:[%s5437 + $0x60] sm:$0xff]
    %v5451 = vld [vmem:[%s5437 + $0x68] sm:$0xff]
    %v5452 = vld [vmem:[%s5437 + $0x70] sm:$0xff]
    %v5453 = vld [vmem:[%s5437 + $0x78] sm:$0xff]
    %v5454 = vld [vmem:[%s5437 + $0x80] sm:$0xff]
    %v5455 = vld [vmem:[%s5437 + $0x88] sm:$0xff]
    %v5456 = vld [vmem:[%s5437 + $0x90] sm:$0xff]
    %v5457 = vld [vmem:[%s5437 + $0x98] sm:$0xff]
    %v5458 = vld [vmem:[%s5437 + $0xa0] sm:$0xff]
    %v5459 = vld [vmem:[%s5437 + $0xa8] sm:$0xff]
    %v5460 = vld [vmem:[%s5437 + $0xb0] sm:$0xff]
    %v5461 = vld [vmem:[%s5437 + $0xb8] sm:$0xff]
    %v5462 = vld [vmem:[%s5437 + $0xc0] sm:$0xff]
    %v5463 = vld [vmem:[%s5437 + $0xc8] sm:$0xff]
    %v5464 = vld [vmem:[%s5437 + $0xd0] sm:$0xff]
    %v5465 = vld [vmem:[%s5437 + $0xd8] sm:$0xff]
    %v5466 = vld [vmem:[%s5437 + $0xe0] sm:$0xff]
    %v5467 = vld [vmem:[%s5437 + $0xe8] sm:$0xff]
    %v5468 = vld [vmem:[%s5437 + $0xf0] sm:$0xff]
    %v5469 = vld [vmem:[%s5437 + $0xf8] sm:$0xff]
    %s5470 = scalar_lea.vmem %s4968, 2
    %v5471 = vld [vmem:[%s5470] ss:$4 sm:$0x3]
    %v5473 = vlaneseq
    %v5474 = vshrl.u32 %v5473, 7
    %v5475 = vsub.s32 0, %v5474
    %v5476 = vrot.slane %v5471, %v5475
    %v5477 = vlaneseq
    %v5478 = vshrl.u32 %v5477, 7
    %v5479 = vsub.s32 1, %v5478
    %v5480 = vrot.slane %v5471, %v5479
    %v5515 = vunpack.c.l.b16 %v5438
    %v5516 = vunpack.c.h.b16 %v5438
    %v5517 = vunpack.c.l.b16 %v5439
    %v5518 = vunpack.c.h.b16 %v5439
    %v5519 = vunpack.c.l.b16 %v5440
    %v5520 = vunpack.c.h.b16 %v5440
    %v5521 = vunpack.c.l.b16 %v5441
    %v5522 = vunpack.c.h.b16 %v5441
    %v5523 = vunpack.c.l.b16 %v5442
    %v5524 = vunpack.c.h.b16 %v5442
    %v5525 = vunpack.c.l.b16 %v5443
    %v5526 = vunpack.c.h.b16 %v5443
    %v5527 = vunpack.c.l.b16 %v5444
    %v5528 = vunpack.c.h.b16 %v5444
    %v5529 = vunpack.c.l.b16 %v5445
    %v5530 = vunpack.c.h.b16 %v5445
    %v5531 = vunpack.c.l.b16 %v5446
    %v5532 = vunpack.c.h.b16 %v5446
    %v5533 = vunpack.c.l.b16 %v5447
    %v5534 = vunpack.c.h.b16 %v5447
    %v5535 = vunpack.c.l.b16 %v5448
    %v5536 = vunpack.c.h.b16 %v5448
    %v5537 = vunpack.c.l.b16 %v5449
    %v5538 = vunpack.c.h.b16 %v5449
    %v5539 = vunpack.c.l.b16 %v5450
    %v5540 = vunpack.c.h.b16 %v5450
    %v5541 = vunpack.c.l.b16 %v5451
    %v5542 = vunpack.c.h.b16 %v5451
    %v5543 = vunpack.c.l.b16 %v5452
    %v5544 = vunpack.c.h.b16 %v5452
    %v5545 = vunpack.c.l.b16 %v5453
    %v5546 = vunpack.c.h.b16 %v5453
    %v5547 = vunpack.c.l.b16 %v5454
    %v5548 = vunpack.c.h.b16 %v5454
    %v5549 = vunpack.c.l.b16 %v5455
    %v5550 = vunpack.c.h.b16 %v5455
    %v5551 = vunpack.c.l.b16 %v5456
    %v5552 = vunpack.c.h.b16 %v5456
    %v5553 = vunpack.c.l.b16 %v5457
    %v5554 = vunpack.c.h.b16 %v5457
    %v5555 = vunpack.c.l.b16 %v5458
    %v5556 = vunpack.c.h.b16 %v5458
    %v5557 = vunpack.c.l.b16 %v5459
    %v5558 = vunpack.c.h.b16 %v5459
    %v5559 = vunpack.c.l.b16 %v5460
    %v5560 = vunpack.c.h.b16 %v5460
    %v5561 = vunpack.c.l.b16 %v5461
    %v5562 = vunpack.c.h.b16 %v5461
    %v5563 = vunpack.c.l.b16 %v5462
    %v5564 = vunpack.c.h.b16 %v5462
    %v5565 = vunpack.c.l.b16 %v5463
    %v5566 = vunpack.c.h.b16 %v5463
    %v5567 = vunpack.c.l.b16 %v5464
    %v5568 = vunpack.c.h.b16 %v5464
    %v5569 = vunpack.c.l.b16 %v5465
    %v5570 = vunpack.c.h.b16 %v5465
    %v5571 = vunpack.c.l.b16 %v5466
    %v5572 = vunpack.c.h.b16 %v5466
    %v5573 = vunpack.c.l.b16 %v5467
    %v5574 = vunpack.c.h.b16 %v5467
    %v5575 = vunpack.c.l.b16 %v5468
    %v5576 = vunpack.c.h.b16 %v5468
    %v5577 = vunpack.c.l.b16 %v5469
    %v5578 = vunpack.c.h.b16 %v5469
    %v5579 = vpack.c.b16 %v5517, %v5515
    %v5580 = vpack.c.b16 %v5518, %v5516
    %v5581 = vpack.c.b16 %v5521, %v5519
    %v5582 = vpack.c.b16 %v5522, %v5520
    %v5583 = vpack.c.b16 %v5525, %v5523
    %v5584 = vpack.c.b16 %v5526, %v5524
    %v5585 = vpack.c.b16 %v5529, %v5527
    %v5586 = vpack.c.b16 %v5530, %v5528
    %v5587 = vpack.c.b16 %v5533, %v5531
    %v5588 = vpack.c.b16 %v5534, %v5532
    %v5589 = vpack.c.b16 %v5537, %v5535
    %v5590 = vpack.c.b16 %v5538, %v5536
    %v5591 = vpack.c.b16 %v5541, %v5539
    %v5592 = vpack.c.b16 %v5542, %v5540
    %v5593 = vpack.c.b16 %v5545, %v5543
    %v5594 = vpack.c.b16 %v5546, %v5544
    %v5595 = vpack.c.b16 %v5549, %v5547
    %v5596 = vpack.c.b16 %v5550, %v5548
    %v5597 = vpack.c.b16 %v5553, %v5551
    %v5598 = vpack.c.b16 %v5554, %v5552
    %v5599 = vpack.c.b16 %v5557, %v5555
    %v5600 = vpack.c.b16 %v5558, %v5556
    %v5601 = vpack.c.b16 %v5561, %v5559
    %v5602 = vpack.c.b16 %v5562, %v5560
    %v5603 = vpack.c.b16 %v5565, %v5563
    %v5604 = vpack.c.b16 %v5566, %v5564
    %v5605 = vpack.c.b16 %v5569, %v5567
    %v5606 = vpack.c.b16 %v5570, %v5568
    %v5607 = vpack.c.b16 %v5573, %v5571
    %v5608 = vpack.c.b16 %v5574, %v5572
    %v5609 = vpack.c.b16 %v5577, %v5575
    %v5610 = vpack.c.b16 %v5578, %v5576
    %5643 = vmatprep.subr.bf16.mxu0 %v5594
    %5644 = vmatpush1.bf16.msra.mxu0 %v5593
    %5645 = vmatprep.subr.bf16.mxu0 %v5592
    %5646 = vmatpush1.bf16.msra.mxu0 %v5591
    %5647 = vmatprep.subr.bf16.mxu0 %v5590
    %5648 = vmatpush1.bf16.msra.mxu0 %v5589
    %5649 = vmatprep.subr.bf16.mxu0 %v5588
    %5650 = vmatpush1.bf16.msra.mxu0 %v5587
    %5651 = vmatprep.subr.bf16.mxu0 %v5586
    %5652 = vmatpush1.bf16.msra.mxu0 %v5585
    %5653 = vmatprep.subr.bf16.mxu0 %v5584
    %5654 = vmatpush1.bf16.msra.mxu0 %v5583
    %5655 = vmatprep.subr.bf16.mxu0 %v5582
    %5656 = vmatpush1.bf16.msra.mxu0 %v5581
    %5657 = vmatprep.subr.bf16.mxu0 %v5580
    %5658 = vmatpush1.bf16.msra.mxu0 %v5579
    %5659 = vmatprep.subr.bf16.mxu0 %v5610
    %5660 = vmatpush2.bf16.msra.mxu0 %v5609
    %5661 = vmatprep.subr.bf16.mxu0 %v5608
    %5662 = vmatpush2.bf16.msra.mxu0 %v5607
    %5663 = vmatprep.subr.bf16.mxu0 %v5606
    %5664 = vmatpush2.bf16.msra.mxu0 %v5605
    %5665 = vmatprep.subr.bf16.mxu0 %v5604
    %5666 = vmatpush2.bf16.msra.mxu0 %v5603
    %5667 = vmatprep.subr.bf16.mxu0 %v5602
    %5668 = vmatpush2.bf16.msra.mxu0 %v5601
    %5669 = vmatprep.subr.bf16.mxu0 %v5600
    %5670 = vmatpush2.bf16.msra.mxu0 %v5599
    %5671 = vmatprep.subr.bf16.mxu0 %v5598
    %5672 = vmatpush2.bf16.msra.mxu0 %v5597
    %5673 = vmatprep.subr.bf16.mxu0 %v5596
    %5674 = vmatpush2.bf16.msra.mxu0 %v5595
    %5675 = vmatprep.mubr.bf16.mxu0 %v5436
    %5676 = vmatmul.mubr.bf16.gmra.mxu0 %v5435
    %v5677 = vpop.f32.mrf.mxu0
    %v5678 = vadd.f32 %v5476, %v5677
    %v5679 = vpop.f32.mrf.mxu0
    %v5680 = vadd.f32 %v5480, %v5679
    %v5681 = vpop.f32.mrf.mxu0
    %v5682 = vpop.f32.mrf.mxu0
    %5683 = vdwg.mxu0
    %v5684 = vmax.f32 %v5678, 0.0
    %v5685 = vmax.f32 %v5680, 0.0
    %v5686 = vpack.c.bf16 %v5684, %v5684
    %v5687 = vpack.c.bf16 %v5685, %v5685
    %s5688 = scalar_lea.vmem [#allocation7], 640
    %v5689 = vld [vmem:[%s5688] sm:$0xf]
    %v5690 = vld [vmem:[%s5688 + $0x4] sm:$0xf]
    %v5691 = vld [vmem:[%s5688 + $0x8] sm:$0xf]
    %v5692 = vld [vmem:[%s5688 + $0xc] sm:$0xf]
    %v5693 = vld [vmem:[%s5688 + $0x10] sm:$0xf]
    %v5694 = vld [vmem:[%s5688 + $0x14] sm:$0xf]
    %v5695 = vld [vmem:[%s5688 + $0x18] sm:$0xf]
    %v5696 = vld [vmem:[%s5688 + $0x1c] sm:$0xf]
    %v5697 = vld [vmem:[%s5688 + $0x20] sm:$0xf]
    %v5698 = vld [vmem:[%s5688 + $0x24] sm:$0xf]
    %v5699 = vld [vmem:[%s5688 + $0x28] sm:$0xf]
    %v5700 = vld [vmem:[%s5688 + $0x2c] sm:$0xf]
    %v5701 = vld [vmem:[%s5688 + $0x30] sm:$0xf]
    %v5702 = vld [vmem:[%s5688 + $0x34] sm:$0xf]
    %v5703 = vld [vmem:[%s5688 + $0x38] sm:$0xf]
    %v5704 = vld [vmem:[%s5688 + $0x3c] sm:$0xf]
    %v5705 = vld [vmem:[%s5688 + $0x40] sm:$0xf]
    %v5706 = vld [vmem:[%s5688 + $0x44] sm:$0xf]
    %v5707 = vld [vmem:[%s5688 + $0x48] sm:$0xf]
    %v5708 = vld [vmem:[%s5688 + $0x4c] sm:$0xf]
    %v5709 = vld [vmem:[%s5688 + $0x50] sm:$0xf]
    %v5710 = vld [vmem:[%s5688 + $0x54] sm:$0xf]
    %v5711 = vld [vmem:[%s5688 + $0x58] sm:$0xf]
    %v5712 = vld [vmem:[%s5688 + $0x5c] sm:$0xf]
    %v5713 = vld [vmem:[%s5688 + $0x60] sm:$0xf]
    %v5714 = vld [vmem:[%s5688 + $0x64] sm:$0xf]
    %v5715 = vld [vmem:[%s5688 + $0x68] sm:$0xf]
    %v5716 = vld [vmem:[%s5688 + $0x6c] sm:$0xf]
    %v5717 = vld [vmem:[%s5688 + $0x70] sm:$0xf]
    %v5718 = vld [vmem:[%s5688 + $0x74] sm:$0xf]
    %v5719 = vld [vmem:[%s5688 + $0x78] sm:$0xf]
    %v5720 = vld [vmem:[%s5688 + $0x7c] sm:$0xf]
    %s5721 = scalar_lea.vmem [#allocation9], 5
    %v5722 = vld [vmem:[%s5721] sm:$0x1]
    %v5724 = vlaneseq
    %v5725 = vshrl.u32 %v5724, 7
    %v5726 = vsub.s32 0, %v5725
    %v5727 = vrot.slane %v5722, %v5726
    %v5761 = vunpack.c.l.b16 %v5689
    %v5762 = vunpack.c.l.b16 %v5690
    %v5763 = vunpack.c.l.b16 %v5691
    %v5764 = vunpack.c.l.b16 %v5692
    %v5765 = vunpack.c.l.b16 %v5693
    %v5766 = vunpack.c.l.b16 %v5694
    %v5767 = vunpack.c.l.b16 %v5695
    %v5768 = vunpack.c.l.b16 %v5696
    %v5769 = vunpack.c.l.b16 %v5697
    %v5770 = vunpack.c.l.b16 %v5698
    %v5771 = vunpack.c.l.b16 %v5699
    %v5772 = vunpack.c.l.b16 %v5700
    %v5773 = vunpack.c.l.b16 %v5701
    %v5774 = vunpack.c.l.b16 %v5702
    %v5775 = vunpack.c.l.b16 %v5703
    %v5776 = vunpack.c.l.b16 %v5704
    %v5777 = vunpack.c.l.b16 %v5705
    %v5778 = vunpack.c.l.b16 %v5706
    %v5779 = vunpack.c.l.b16 %v5707
    %v5780 = vunpack.c.l.b16 %v5708
    %v5781 = vunpack.c.l.b16 %v5709
    %v5782 = vunpack.c.l.b16 %v5710
    %v5783 = vunpack.c.l.b16 %v5711
    %v5784 = vunpack.c.l.b16 %v5712
    %v5785 = vunpack.c.l.b16 %v5713
    %v5786 = vunpack.c.l.b16 %v5714
    %v5787 = vunpack.c.l.b16 %v5715
    %v5788 = vunpack.c.l.b16 %v5716
    %v5789 = vunpack.c.l.b16 %v5717
    %v5790 = vunpack.c.l.b16 %v5718
    %v5791 = vunpack.c.l.b16 %v5719
    %v5792 = vunpack.c.l.b16 %v5720
    %v5793 = vpack.c.b16 %v5762, %v5761
    %v5794 = vpack.c.b16 %v5764, %v5763
    %v5795 = vpack.c.b16 %v5766, %v5765
    %v5796 = vpack.c.b16 %v5768, %v5767
    %v5797 = vpack.c.b16 %v5770, %v5769
    %v5798 = vpack.c.b16 %v5772, %v5771
    %v5799 = vpack.c.b16 %v5774, %v5773
    %v5800 = vpack.c.b16 %v5776, %v5775
    %v5801 = vpack.c.b16 %v5778, %v5777
    %v5802 = vpack.c.b16 %v5780, %v5779
    %v5803 = vpack.c.b16 %v5782, %v5781
    %v5804 = vpack.c.b16 %v5784, %v5783
    %v5805 = vpack.c.b16 %v5786, %v5785
    %v5806 = vpack.c.b16 %v5788, %v5787
    %v5807 = vpack.c.b16 %v5790, %v5789
    %v5808 = vpack.c.b16 %v5792, %v5791
    %5825 = vmatprep.subr.bf16.mxu0 0
    %5826 = vmatpush1.bf16.msra.mxu0 %v5800
    %5827 = vmatprep.subr.bf16.mxu0 0
    %5828 = vmatpush1.bf16.msra.mxu0 %v5799
    %5829 = vmatprep.subr.bf16.mxu0 0
    %5830 = vmatpush1.bf16.msra.mxu0 %v5798
    %5831 = vmatprep.subr.bf16.mxu0 0
    %5832 = vmatpush1.bf16.msra.mxu0 %v5797
    %5833 = vmatprep.subr.bf16.mxu0 0
    %5834 = vmatpush1.bf16.msra.mxu0 %v5796
    %5835 = vmatprep.subr.bf16.mxu0 0
    %5836 = vmatpush1.bf16.msra.mxu0 %v5795
    %5837 = vmatprep.subr.bf16.mxu0 0
    %5838 = vmatpush1.bf16.msra.mxu0 %v5794
    %5839 = vmatprep.subr.bf16.mxu0 0
    %5840 = vmatpush1.bf16.msra.mxu0 %v5793
    %5841 = vmatprep.subr.bf16.mxu0 0
    %5842 = vmatpush2.bf16.msra.mxu0 %v5808
    %5843 = vmatprep.subr.bf16.mxu0 0
    %5844 = vmatpush2.bf16.msra.mxu0 %v5807
    %5845 = vmatprep.subr.bf16.mxu0 0
    %5846 = vmatpush2.bf16.msra.mxu0 %v5806
    %5847 = vmatprep.subr.bf16.mxu0 0
    %5848 = vmatpush2.bf16.msra.mxu0 %v5805
    %5849 = vmatprep.subr.bf16.mxu0 0
    %5850 = vmatpush2.bf16.msra.mxu0 %v5804
    %5851 = vmatprep.subr.bf16.mxu0 0
    %5852 = vmatpush2.bf16.msra.mxu0 %v5803
    %5853 = vmatprep.subr.bf16.mxu0 0
    %5854 = vmatpush2.bf16.msra.mxu0 %v5802
    %5855 = vmatprep.subr.bf16.mxu0 0
    %5856 = vmatpush2.bf16.msra.mxu0 %v5801
    %5857 = vmatprep.mubr.bf16.mxu0 %v5687
    %5858 = vmatmul.mubr.bf16.gmra.mxu0 %v5686
    %v5859 = vpop.f32.mrf.mxu0
    %v5860 = vadd.f32 %v5727, %v5859
    %v5861 = vpop.f32.mrf.mxu0
    %v5862 = vpop.f32.mrf.mxu0
    %v5863 = vpop.f32.mrf.mxu0
    %5864 = vdwg.mxu0
    %5865 = vmax.xlane.f32.xlu0 %v5860
    %v5866 = vpop.xlane.xlu0 %5865
    %v5867 = vsub.f32 %v5860, %v5866
    %v5868 = vmul.f32 %v5867, 1.442695
    %v5869 = vpow.pop %v5868
    %5870 = vadd.xlane.f32.xlu0 %v5869
    %v5871 = vpop.xlane.xlu0 %5870
    %v5872 = vlog2.pop %v5871
    %v5873 = vmul.f32 %v5872, 0.6931472
    %v5874 = vsub.f32 %v5867, %v5873
    %s5875 = scalar_lea.vmem %s7, 40
    %5876 = vst.msk [vmem:[%s5875] sm:$0xff] %vm1165, %v5874
    %s5877 = scalar_lea.vmem [#allocation6], 4608
    %v5878 = vld [vmem:[%s5877] sm:$0xff]
    %v5879 = vld [vmem:[%s5877 + $0x8] sm:$0xff]
    %v5880 = vld [vmem:[%s5877 + $0x10] sm:$0xff]
    %v5881 = vld [vmem:[%s5877 + $0x18] sm:$0xff]
    %v5882 = vld [vmem:[%s5877 + $0x20] sm:$0xff]
    %v5883 = vld [vmem:[%s5877 + $0x28] sm:$0xff]
    %v5884 = vld [vmem:[%s5877 + $0x30] sm:$0xff]
    %v5885 = vld [vmem:[%s5877 + $0x38] sm:$0xff]
    %v5886 = vld [vmem:[%s5877 + $0x40] sm:$0xff]
    %v5887 = vld [vmem:[%s5877 + $0x48] sm:$0xff]
    %v5888 = vld [vmem:[%s5877 + $0x50] sm:$0xff]
    %v5889 = vld [vmem:[%s5877 + $0x58] sm:$0xff]
    %v5890 = vld [vmem:[%s5877 + $0x60] sm:$0xff]
    %v5891 = vld [vmem:[%s5877 + $0x68] sm:$0xff]
    %v5892 = vld [vmem:[%s5877 + $0x70] sm:$0xff]
    %v5893 = vld [vmem:[%s5877 + $0x78] sm:$0xff]
    %v5894 = vld [vmem:[%s5877 + $0x80] sm:$0xff]
    %v5895 = vld [vmem:[%s5877 + $0x88] sm:$0xff]
    %v5896 = vld [vmem:[%s5877 + $0x90] sm:$0xff]
    %v5897 = vld [vmem:[%s5877 + $0x98] sm:$0xff]
    %v5898 = vld [vmem:[%s5877 + $0xa0] sm:$0xff]
    %v5899 = vld [vmem:[%s5877 + $0xa8] sm:$0xff]
    %v5900 = vld [vmem:[%s5877 + $0xb0] sm:$0xff]
    %v5901 = vld [vmem:[%s5877 + $0xb8] sm:$0xff]
    %v5902 = vld [vmem:[%s5877 + $0xc0] sm:$0xff]
    %v5903 = vld [vmem:[%s5877 + $0xc8] sm:$0xff]
    %v5904 = vld [vmem:[%s5877 + $0xd0] sm:$0xff]
    %v5905 = vld [vmem:[%s5877 + $0xd8] sm:$0xff]
    %v5906 = vld [vmem:[%s5877 + $0xe0] sm:$0xff]
    %v5907 = vld [vmem:[%s5877 + $0xe8] sm:$0xff]
    %v5908 = vld [vmem:[%s5877 + $0xf0] sm:$0xff]
    %v5909 = vld [vmem:[%s5877 + $0xf8] sm:$0xff]
    %s5910 = scalar_lea.vmem %s4, 48
    %v5911 = vld [vmem:[%s5910] ss:$4 sm:$0x3]
    %v5913 = vlaneseq
    %v5914 = vshrl.u32 %v5913, 7
    %v5915 = vsub.s32 0, %v5914
    %v5916 = vrot.slane %v5911, %v5915
    %v5917 = vlaneseq
    %v5918 = vshrl.u32 %v5917, 7
    %v5919 = vsub.s32 1, %v5918
    %v5920 = vrot.slane %v5911, %v5919
    %v5955 = vunpack.c.l.b16 %v5878
    %v5956 = vunpack.c.h.b16 %v5878
    %v5957 = vunpack.c.l.b16 %v5879
    %v5958 = vunpack.c.h.b16 %v5879
    %v5959 = vunpack.c.l.b16 %v5880
    %v5960 = vunpack.c.h.b16 %v5880
    %v5961 = vunpack.c.l.b16 %v5881
    %v5962 = vunpack.c.h.b16 %v5881
    %v5963 = vunpack.c.l.b16 %v5882
    %v5964 = vunpack.c.h.b16 %v5882
    %v5965 = vunpack.c.l.b16 %v5883
    %v5966 = vunpack.c.h.b16 %v5883
    %v5967 = vunpack.c.l.b16 %v5884
    %v5968 = vunpack.c.h.b16 %v5884
    %v5969 = vunpack.c.l.b16 %v5885
    %v5970 = vunpack.c.h.b16 %v5885
    %v5971 = vunpack.c.l.b16 %v5886
    %v5972 = vunpack.c.h.b16 %v5886
    %v5973 = vunpack.c.l.b16 %v5887
    %v5974 = vunpack.c.h.b16 %v5887
    %v5975 = vunpack.c.l.b16 %v5888
    %v5976 = vunpack.c.h.b16 %v5888
    %v5977 = vunpack.c.l.b16 %v5889
    %v5978 = vunpack.c.h.b16 %v5889
    %v5979 = vunpack.c.l.b16 %v5890
    %v5980 = vunpack.c.h.b16 %v5890
    %v5981 = vunpack.c.l.b16 %v5891
    %v5982 = vunpack.c.h.b16 %v5891
    %v5983 = vunpack.c.l.b16 %v5892
    %v5984 = vunpack.c.h.b16 %v5892
    %v5985 = vunpack.c.l.b16 %v5893
    %v5986 = vunpack.c.h.b16 %v5893
    %v5987 = vunpack.c.l.b16 %v5894
    %v5988 = vunpack.c.h.b16 %v5894
    %v5989 = vunpack.c.l.b16 %v5895
    %v5990 = vunpack.c.h.b16 %v5895
    %v5991 = vunpack.c.l.b16 %v5896
    %v5992 = vunpack.c.h.b16 %v5896
    %v5993 = vunpack.c.l.b16 %v5897
    %v5994 = vunpack.c.h.b16 %v5897
    %v5995 = vunpack.c.l.b16 %v5898
    %v5996 = vunpack.c.h.b16 %v5898
    %v5997 = vunpack.c.l.b16 %v5899
    %v5998 = vunpack.c.h.b16 %v5899
    %v5999 = vunpack.c.l.b16 %v5900
    %v6000 = vunpack.c.h.b16 %v5900
    %v6001 = vunpack.c.l.b16 %v5901
    %v6002 = vunpack.c.h.b16 %v5901
    %v6003 = vunpack.c.l.b16 %v5902
    %v6004 = vunpack.c.h.b16 %v5902
    %v6005 = vunpack.c.l.b16 %v5903
    %v6006 = vunpack.c.h.b16 %v5903
    %v6007 = vunpack.c.l.b16 %v5904
    %v6008 = vunpack.c.h.b16 %v5904
    %v6009 = vunpack.c.l.b16 %v5905
    %v6010 = vunpack.c.h.b16 %v5905
    %v6011 = vunpack.c.l.b16 %v5906
    %v6012 = vunpack.c.h.b16 %v5906
    %v6013 = vunpack.c.l.b16 %v5907
    %v6014 = vunpack.c.h.b16 %v5907
    %v6015 = vunpack.c.l.b16 %v5908
    %v6016 = vunpack.c.h.b16 %v5908
    %v6017 = vunpack.c.l.b16 %v5909
    %v6018 = vunpack.c.h.b16 %v5909
    %v6019 = vpack.c.b16 %v5957, %v5955
    %v6020 = vpack.c.b16 %v5958, %v5956
    %v6021 = vpack.c.b16 %v5961, %v5959
    %v6022 = vpack.c.b16 %v5962, %v5960
    %v6023 = vpack.c.b16 %v5965, %v5963
    %v6024 = vpack.c.b16 %v5966, %v5964
    %v6025 = vpack.c.b16 %v5969, %v5967
    %v6026 = vpack.c.b16 %v5970, %v5968
    %v6027 = vpack.c.b16 %v5973, %v5971
    %v6028 = vpack.c.b16 %v5974, %v5972
    %v6029 = vpack.c.b16 %v5977, %v5975
    %v6030 = vpack.c.b16 %v5978, %v5976
    %v6031 = vpack.c.b16 %v5981, %v5979
    %v6032 = vpack.c.b16 %v5982, %v5980
    %v6033 = vpack.c.b16 %v5985, %v5983
    %v6034 = vpack.c.b16 %v5986, %v5984
    %v6035 = vpack.c.b16 %v5989, %v5987
    %v6036 = vpack.c.b16 %v5990, %v5988
    %v6037 = vpack.c.b16 %v5993, %v5991
    %v6038 = vpack.c.b16 %v5994, %v5992
    %v6039 = vpack.c.b16 %v5997, %v5995
    %v6040 = vpack.c.b16 %v5998, %v5996
    %v6041 = vpack.c.b16 %v6001, %v5999
    %v6042 = vpack.c.b16 %v6002, %v6000
    %v6043 = vpack.c.b16 %v6005, %v6003
    %v6044 = vpack.c.b16 %v6006, %v6004
    %v6045 = vpack.c.b16 %v6009, %v6007
    %v6046 = vpack.c.b16 %v6010, %v6008
    %v6047 = vpack.c.b16 %v6013, %v6011
    %v6048 = vpack.c.b16 %v6014, %v6012
    %v6049 = vpack.c.b16 %v6017, %v6015
    %v6050 = vpack.c.b16 %v6018, %v6016
    %6083 = vmatprep.subr.bf16.mxu0 %v6034
    %6084 = vmatpush1.bf16.msra.mxu0 %v6033
    %6085 = vmatprep.subr.bf16.mxu0 %v6032
    %6086 = vmatpush1.bf16.msra.mxu0 %v6031
    %6087 = vmatprep.subr.bf16.mxu0 %v6030
    %6088 = vmatpush1.bf16.msra.mxu0 %v6029
    %6089 = vmatprep.subr.bf16.mxu0 %v6028
    %6090 = vmatpush1.bf16.msra.mxu0 %v6027
    %6091 = vmatprep.subr.bf16.mxu0 %v6026
    %6092 = vmatpush1.bf16.msra.mxu0 %v6025
    %6093 = vmatprep.subr.bf16.mxu0 %v6024
    %6094 = vmatpush1.bf16.msra.mxu0 %v6023
    %6095 = vmatprep.subr.bf16.mxu0 %v6022
    %6096 = vmatpush1.bf16.msra.mxu0 %v6021
    %6097 = vmatprep.subr.bf16.mxu0 %v6020
    %6098 = vmatpush1.bf16.msra.mxu0 %v6019
    %6099 = vmatprep.subr.bf16.mxu0 %v6050
    %6100 = vmatpush2.bf16.msra.mxu0 %v6049
    %6101 = vmatprep.subr.bf16.mxu0 %v6048
    %6102 = vmatpush2.bf16.msra.mxu0 %v6047
    %6103 = vmatprep.subr.bf16.mxu0 %v6046
    %6104 = vmatpush2.bf16.msra.mxu0 %v6045
    %6105 = vmatprep.subr.bf16.mxu0 %v6044
    %6106 = vmatpush2.bf16.msra.mxu0 %v6043
    %6107 = vmatprep.subr.bf16.mxu0 %v6042
    %6108 = vmatpush2.bf16.msra.mxu0 %v6041
    %6109 = vmatprep.subr.bf16.mxu0 %v6040
    %6110 = vmatpush2.bf16.msra.mxu0 %v6039
    %6111 = vmatprep.subr.bf16.mxu0 %v6038
    %6112 = vmatpush2.bf16.msra.mxu0 %v6037
    %6113 = vmatprep.subr.bf16.mxu0 %v6036
    %6114 = vmatpush2.bf16.msra.mxu0 %v6035
    %6115 = vmatprep.mubr.bf16.mxu0 %v228
    %6116 = vmatmul.mubr.bf16.gmra.mxu0 %v227
    %v6117 = vpop.f32.mrf.mxu0
    %v6118 = vadd.f32 %v5916, %v6117
    %v6119 = vpop.f32.mrf.mxu0
    %v6120 = vadd.f32 %v5920, %v6119
    %v6121 = vpop.f32.mrf.mxu0
    %v6122 = vpop.f32.mrf.mxu0
    %6123 = vdwg.mxu0
    %v6124 = vmax.f32 %v6118, 0.0
    %v6125 = vmax.f32 %v6120, 0.0
    %v6126 = vpack.c.bf16 %v6124, %v6124
    %v6127 = vpack.c.bf16 %v6125, %v6125
    %s6128 = scalar_lea.vmem [#allocation6], 4864
    %v6129 = vld [vmem:[%s6128] sm:$0xff]
    %v6130 = vld [vmem:[%s6128 + $0x8] sm:$0xff]
    %v6131 = vld [vmem:[%s6128 + $0x10] sm:$0xff]
    %v6132 = vld [vmem:[%s6128 + $0x18] sm:$0xff]
    %v6133 = vld [vmem:[%s6128 + $0x20] sm:$0xff]
    %v6134 = vld [vmem:[%s6128 + $0x28] sm:$0xff]
    %v6135 = vld [vmem:[%s6128 + $0x30] sm:$0xff]
    %v6136 = vld [vmem:[%s6128 + $0x38] sm:$0xff]
    %v6137 = vld [vmem:[%s6128 + $0x40] sm:$0xff]
    %v6138 = vld [vmem:[%s6128 + $0x48] sm:$0xff]
    %v6139 = vld [vmem:[%s6128 + $0x50] sm:$0xff]
    %v6140 = vld [vmem:[%s6128 + $0x58] sm:$0xff]
    %v6141 = vld [vmem:[%s6128 + $0x60] sm:$0xff]
    %v6142 = vld [vmem:[%s6128 + $0x68] sm:$0xff]
    %v6143 = vld [vmem:[%s6128 + $0x70] sm:$0xff]
    %v6144 = vld [vmem:[%s6128 + $0x78] sm:$0xff]
    %v6145 = vld [vmem:[%s6128 + $0x80] sm:$0xff]
    %v6146 = vld [vmem:[%s6128 + $0x88] sm:$0xff]
    %v6147 = vld [vmem:[%s6128 + $0x90] sm:$0xff]
    %v6148 = vld [vmem:[%s6128 + $0x98] sm:$0xff]
    %v6149 = vld [vmem:[%s6128 + $0xa0] sm:$0xff]
    %v6150 = vld [vmem:[%s6128 + $0xa8] sm:$0xff]
    %v6151 = vld [vmem:[%s6128 + $0xb0] sm:$0xff]
    %v6152 = vld [vmem:[%s6128 + $0xb8] sm:$0xff]
    %v6153 = vld [vmem:[%s6128 + $0xc0] sm:$0xff]
    %v6154 = vld [vmem:[%s6128 + $0xc8] sm:$0xff]
    %v6155 = vld [vmem:[%s6128 + $0xd0] sm:$0xff]
    %v6156 = vld [vmem:[%s6128 + $0xd8] sm:$0xff]
    %v6157 = vld [vmem:[%s6128 + $0xe0] sm:$0xff]
    %v6158 = vld [vmem:[%s6128 + $0xe8] sm:$0xff]
    %v6159 = vld [vmem:[%s6128 + $0xf0] sm:$0xff]
    %v6160 = vld [vmem:[%s6128 + $0xf8] sm:$0xff]
    %s6161 = scalar_lea.vmem %s5910, 1
    %v6162 = vld [vmem:[%s6161] ss:$4 sm:$0x3]
    %v6164 = vlaneseq
    %v6165 = vshrl.u32 %v6164, 7
    %v6166 = vsub.s32 0, %v6165
    %v6167 = vrot.slane %v6162, %v6166
    %v6168 = vlaneseq
    %v6169 = vshrl.u32 %v6168, 7
    %v6170 = vsub.s32 1, %v6169
    %v6171 = vrot.slane %v6162, %v6170
    %v6206 = vunpack.c.l.b16 %v6129
    %v6207 = vunpack.c.h.b16 %v6129
    %v6208 = vunpack.c.l.b16 %v6130
    %v6209 = vunpack.c.h.b16 %v6130
    %v6210 = vunpack.c.l.b16 %v6131
    %v6211 = vunpack.c.h.b16 %v6131
    %v6212 = vunpack.c.l.b16 %v6132
    %v6213 = vunpack.c.h.b16 %v6132
    %v6214 = vunpack.c.l.b16 %v6133
    %v6215 = vunpack.c.h.b16 %v6133
    %v6216 = vunpack.c.l.b16 %v6134
    %v6217 = vunpack.c.h.b16 %v6134
    %v6218 = vunpack.c.l.b16 %v6135
    %v6219 = vunpack.c.h.b16 %v6135
    %v6220 = vunpack.c.l.b16 %v6136
    %v6221 = vunpack.c.h.b16 %v6136
    %v6222 = vunpack.c.l.b16 %v6137
    %v6223 = vunpack.c.h.b16 %v6137
    %v6224 = vunpack.c.l.b16 %v6138
    %v6225 = vunpack.c.h.b16 %v6138
    %v6226 = vunpack.c.l.b16 %v6139
    %v6227 = vunpack.c.h.b16 %v6139
    %v6228 = vunpack.c.l.b16 %v6140
    %v6229 = vunpack.c.h.b16 %v6140
    %v6230 = vunpack.c.l.b16 %v6141
    %v6231 = vunpack.c.h.b16 %v6141
    %v6232 = vunpack.c.l.b16 %v6142
    %v6233 = vunpack.c.h.b16 %v6142
    %v6234 = vunpack.c.l.b16 %v6143
    %v6235 = vunpack.c.h.b16 %v6143
    %v6236 = vunpack.c.l.b16 %v6144
    %v6237 = vunpack.c.h.b16 %v6144
    %v6238 = vunpack.c.l.b16 %v6145
    %v6239 = vunpack.c.h.b16 %v6145
    %v6240 = vunpack.c.l.b16 %v6146
    %v6241 = vunpack.c.h.b16 %v6146
    %v6242 = vunpack.c.l.b16 %v6147
    %v6243 = vunpack.c.h.b16 %v6147
    %v6244 = vunpack.c.l.b16 %v6148
    %v6245 = vunpack.c.h.b16 %v6148
    %v6246 = vunpack.c.l.b16 %v6149
    %v6247 = vunpack.c.h.b16 %v6149
    %v6248 = vunpack.c.l.b16 %v6150
    %v6249 = vunpack.c.h.b16 %v6150
    %v6250 = vunpack.c.l.b16 %v6151
    %v6251 = vunpack.c.h.b16 %v6151
    %v6252 = vunpack.c.l.b16 %v6152
    %v6253 = vunpack.c.h.b16 %v6152
    %v6254 = vunpack.c.l.b16 %v6153
    %v6255 = vunpack.c.h.b16 %v6153
    %v6256 = vunpack.c.l.b16 %v6154
    %v6257 = vunpack.c.h.b16 %v6154
    %v6258 = vunpack.c.l.b16 %v6155
    %v6259 = vunpack.c.h.b16 %v6155
    %v6260 = vunpack.c.l.b16 %v6156
    %v6261 = vunpack.c.h.b16 %v6156
    %v6262 = vunpack.c.l.b16 %v6157
    %v6263 = vunpack.c.h.b16 %v6157
    %v6264 = vunpack.c.l.b16 %v6158
    %v6265 = vunpack.c.h.b16 %v6158
    %v6266 = vunpack.c.l.b16 %v6159
    %v6267 = vunpack.c.h.b16 %v6159
    %v6268 = vunpack.c.l.b16 %v6160
    %v6269 = vunpack.c.h.b16 %v6160
    %v6270 = vpack.c.b16 %v6208, %v6206
    %v6271 = vpack.c.b16 %v6209, %v6207
    %v6272 = vpack.c.b16 %v6212, %v6210
    %v6273 = vpack.c.b16 %v6213, %v6211
    %v6274 = vpack.c.b16 %v6216, %v6214
    %v6275 = vpack.c.b16 %v6217, %v6215
    %v6276 = vpack.c.b16 %v6220, %v6218
    %v6277 = vpack.c.b16 %v6221, %v6219
    %v6278 = vpack.c.b16 %v6224, %v6222
    %v6279 = vpack.c.b16 %v6225, %v6223
    %v6280 = vpack.c.b16 %v6228, %v6226
    %v6281 = vpack.c.b16 %v6229, %v6227
    %v6282 = vpack.c.b16 %v6232, %v6230
    %v6283 = vpack.c.b16 %v6233, %v6231
    %v6284 = vpack.c.b16 %v6236, %v6234
    %v6285 = vpack.c.b16 %v6237, %v6235
    %v6286 = vpack.c.b16 %v6240, %v6238
    %v6287 = vpack.c.b16 %v6241, %v6239
    %v6288 = vpack.c.b16 %v6244, %v6242
    %v6289 = vpack.c.b16 %v6245, %v6243
    %v6290 = vpack.c.b16 %v6248, %v6246
    %v6291 = vpack.c.b16 %v6249, %v6247
    %v6292 = vpack.c.b16 %v6252, %v6250
    %v6293 = vpack.c.b16 %v6253, %v6251
    %v6294 = vpack.c.b16 %v6256, %v6254
    %v6295 = vpack.c.b16 %v6257, %v6255
    %v6296 = vpack.c.b16 %v6260, %v6258
    %v6297 = vpack.c.b16 %v6261, %v6259
    %v6298 = vpack.c.b16 %v6264, %v6262
    %v6299 = vpack.c.b16 %v6265, %v6263
    %v6300 = vpack.c.b16 %v6268, %v6266
    %v6301 = vpack.c.b16 %v6269, %v6267
    %6334 = vmatprep.subr.bf16.mxu0 %v6285
    %6335 = vmatpush1.bf16.msra.mxu0 %v6284
    %6336 = vmatprep.subr.bf16.mxu0 %v6283
    %6337 = vmatpush1.bf16.msra.mxu0 %v6282
    %6338 = vmatprep.subr.bf16.mxu0 %v6281
    %6339 = vmatpush1.bf16.msra.mxu0 %v6280
    %6340 = vmatprep.subr.bf16.mxu0 %v6279
    %6341 = vmatpush1.bf16.msra.mxu0 %v6278
    %6342 = vmatprep.subr.bf16.mxu0 %v6277
    %6343 = vmatpush1.bf16.msra.mxu0 %v6276
    %6344 = vmatprep.subr.bf16.mxu0 %v6275
    %6345 = vmatpush1.bf16.msra.mxu0 %v6274
    %6346 = vmatprep.subr.bf16.mxu0 %v6273
    %6347 = vmatpush1.bf16.msra.mxu0 %v6272
    %6348 = vmatprep.subr.bf16.mxu0 %v6271
    %6349 = vmatpush1.bf16.msra.mxu0 %v6270
    %6350 = vmatprep.subr.bf16.mxu0 %v6301
    %6351 = vmatpush2.bf16.msra.mxu0 %v6300
    %6352 = vmatprep.subr.bf16.mxu0 %v6299
    %6353 = vmatpush2.bf16.msra.mxu0 %v6298
    %6354 = vmatprep.subr.bf16.mxu0 %v6297
    %6355 = vmatpush2.bf16.msra.mxu0 %v6296
    %6356 = vmatprep.subr.bf16.mxu0 %v6295
    %6357 = vmatpush2.bf16.msra.mxu0 %v6294
    %6358 = vmatprep.subr.bf16.mxu0 %v6293
    %6359 = vmatpush2.bf16.msra.mxu0 %v6292
    %6360 = vmatprep.subr.bf16.mxu0 %v6291
    %6361 = vmatpush2.bf16.msra.mxu0 %v6290
    %6362 = vmatprep.subr.bf16.mxu0 %v6289
    %6363 = vmatpush2.bf16.msra.mxu0 %v6288
    %6364 = vmatprep.subr.bf16.mxu0 %v6287
    %6365 = vmatpush2.bf16.msra.mxu0 %v6286
    %6366 = vmatprep.mubr.bf16.mxu0 %v6127
    %6367 = vmatmul.mubr.bf16.gmra.mxu0 %v6126
    %v6368 = vpop.f32.mrf.mxu0
    %v6369 = vadd.f32 %v6167, %v6368
    %v6370 = vpop.f32.mrf.mxu0
    %v6371 = vadd.f32 %v6171, %v6370
    %v6372 = vpop.f32.mrf.mxu0
    %v6373 = vpop.f32.mrf.mxu0
    %6374 = vdwg.mxu0
    %v6375 = vmax.f32 %v6369, 0.0
    %v6376 = vmax.f32 %v6371, 0.0
    %v6377 = vpack.c.bf16 %v6375, %v6375
    %v6378 = vpack.c.bf16 %v6376, %v6376
    %s6379 = scalar_lea.vmem [#allocation6], 5120
    %v6380 = vld [vmem:[%s6379] sm:$0xff]
    %v6381 = vld [vmem:[%s6379 + $0x8] sm:$0xff]
    %v6382 = vld [vmem:[%s6379 + $0x10] sm:$0xff]
    %v6383 = vld [vmem:[%s6379 + $0x18] sm:$0xff]
    %v6384 = vld [vmem:[%s6379 + $0x20] sm:$0xff]
    %v6385 = vld [vmem:[%s6379 + $0x28] sm:$0xff]
    %v6386 = vld [vmem:[%s6379 + $0x30] sm:$0xff]
    %v6387 = vld [vmem:[%s6379 + $0x38] sm:$0xff]
    %v6388 = vld [vmem:[%s6379 + $0x40] sm:$0xff]
    %v6389 = vld [vmem:[%s6379 + $0x48] sm:$0xff]
    %v6390 = vld [vmem:[%s6379 + $0x50] sm:$0xff]
    %v6391 = vld [vmem:[%s6379 + $0x58] sm:$0xff]
    %v6392 = vld [vmem:[%s6379 + $0x60] sm:$0xff]
    %v6393 = vld [vmem:[%s6379 + $0x68] sm:$0xff]
    %v6394 = vld [vmem:[%s6379 + $0x70] sm:$0xff]
    %v6395 = vld [vmem:[%s6379 + $0x78] sm:$0xff]
    %v6396 = vld [vmem:[%s6379 + $0x80] sm:$0xff]
    %v6397 = vld [vmem:[%s6379 + $0x88] sm:$0xff]
    %v6398 = vld [vmem:[%s6379 + $0x90] sm:$0xff]
    %v6399 = vld [vmem:[%s6379 + $0x98] sm:$0xff]
    %v6400 = vld [vmem:[%s6379 + $0xa0] sm:$0xff]
    %v6401 = vld [vmem:[%s6379 + $0xa8] sm:$0xff]
    %v6402 = vld [vmem:[%s6379 + $0xb0] sm:$0xff]
    %v6403 = vld [vmem:[%s6379 + $0xb8] sm:$0xff]
    %v6404 = vld [vmem:[%s6379 + $0xc0] sm:$0xff]
    %v6405 = vld [vmem:[%s6379 + $0xc8] sm:$0xff]
    %v6406 = vld [vmem:[%s6379 + $0xd0] sm:$0xff]
    %v6407 = vld [vmem:[%s6379 + $0xd8] sm:$0xff]
    %v6408 = vld [vmem:[%s6379 + $0xe0] sm:$0xff]
    %v6409 = vld [vmem:[%s6379 + $0xe8] sm:$0xff]
    %v6410 = vld [vmem:[%s6379 + $0xf0] sm:$0xff]
    %v6411 = vld [vmem:[%s6379 + $0xf8] sm:$0xff]
    %s6412 = scalar_lea.vmem %s5910, 2
    %v6413 = vld [vmem:[%s6412] ss:$4 sm:$0x3]
    %v6415 = vlaneseq
    %v6416 = vshrl.u32 %v6415, 7
    %v6417 = vsub.s32 0, %v6416
    %v6418 = vrot.slane %v6413, %v6417
    %v6419 = vlaneseq
    %v6420 = vshrl.u32 %v6419, 7
    %v6421 = vsub.s32 1, %v6420
    %v6422 = vrot.slane %v6413, %v6421
    %v6457 = vunpack.c.l.b16 %v6380
    %v6458 = vunpack.c.h.b16 %v6380
    %v6459 = vunpack.c.l.b16 %v6381
    %v6460 = vunpack.c.h.b16 %v6381
    %v6461 = vunpack.c.l.b16 %v6382
    %v6462 = vunpack.c.h.b16 %v6382
    %v6463 = vunpack.c.l.b16 %v6383
    %v6464 = vunpack.c.h.b16 %v6383
    %v6465 = vunpack.c.l.b16 %v6384
    %v6466 = vunpack.c.h.b16 %v6384
    %v6467 = vunpack.c.l.b16 %v6385
    %v6468 = vunpack.c.h.b16 %v6385
    %v6469 = vunpack.c.l.b16 %v6386
    %v6470 = vunpack.c.h.b16 %v6386
    %v6471 = vunpack.c.l.b16 %v6387
    %v6472 = vunpack.c.h.b16 %v6387
    %v6473 = vunpack.c.l.b16 %v6388
    %v6474 = vunpack.c.h.b16 %v6388
    %v6475 = vunpack.c.l.b16 %v6389
    %v6476 = vunpack.c.h.b16 %v6389
    %v6477 = vunpack.c.l.b16 %v6390
    %v6478 = vunpack.c.h.b16 %v6390
    %v6479 = vunpack.c.l.b16 %v6391
    %v6480 = vunpack.c.h.b16 %v6391
    %v6481 = vunpack.c.l.b16 %v6392
    %v6482 = vunpack.c.h.b16 %v6392
    %v6483 = vunpack.c.l.b16 %v6393
    %v6484 = vunpack.c.h.b16 %v6393
    %v6485 = vunpack.c.l.b16 %v6394
    %v6486 = vunpack.c.h.b16 %v6394
    %v6487 = vunpack.c.l.b16 %v6395
    %v6488 = vunpack.c.h.b16 %v6395
    %v6489 = vunpack.c.l.b16 %v6396
    %v6490 = vunpack.c.h.b16 %v6396
    %v6491 = vunpack.c.l.b16 %v6397
    %v6492 = vunpack.c.h.b16 %v6397
    %v6493 = vunpack.c.l.b16 %v6398
    %v6494 = vunpack.c.h.b16 %v6398
    %v6495 = vunpack.c.l.b16 %v6399
    %v6496 = vunpack.c.h.b16 %v6399
    %v6497 = vunpack.c.l.b16 %v6400
    %v6498 = vunpack.c.h.b16 %v6400
    %v6499 = vunpack.c.l.b16 %v6401
    %v6500 = vunpack.c.h.b16 %v6401
    %v6501 = vunpack.c.l.b16 %v6402
    %v6502 = vunpack.c.h.b16 %v6402
    %v6503 = vunpack.c.l.b16 %v6403
    %v6504 = vunpack.c.h.b16 %v6403
    %v6505 = vunpack.c.l.b16 %v6404
    %v6506 = vunpack.c.h.b16 %v6404
    %v6507 = vunpack.c.l.b16 %v6405
    %v6508 = vunpack.c.h.b16 %v6405
    %v6509 = vunpack.c.l.b16 %v6406
    %v6510 = vunpack.c.h.b16 %v6406
    %v6511 = vunpack.c.l.b16 %v6407
    %v6512 = vunpack.c.h.b16 %v6407
    %v6513 = vunpack.c.l.b16 %v6408
    %v6514 = vunpack.c.h.b16 %v6408
    %v6515 = vunpack.c.l.b16 %v6409
    %v6516 = vunpack.c.h.b16 %v6409
    %v6517 = vunpack.c.l.b16 %v6410
    %v6518 = vunpack.c.h.b16 %v6410
    %v6519 = vunpack.c.l.b16 %v6411
    %v6520 = vunpack.c.h.b16 %v6411
    %v6521 = vpack.c.b16 %v6459, %v6457
    %v6522 = vpack.c.b16 %v6460, %v6458
    %v6523 = vpack.c.b16 %v6463, %v6461
    %v6524 = vpack.c.b16 %v6464, %v6462
    %v6525 = vpack.c.b16 %v6467, %v6465
    %v6526 = vpack.c.b16 %v6468, %v6466
    %v6527 = vpack.c.b16 %v6471, %v6469
    %v6528 = vpack.c.b16 %v6472, %v6470
    %v6529 = vpack.c.b16 %v6475, %v6473
    %v6530 = vpack.c.b16 %v6476, %v6474
    %v6531 = vpack.c.b16 %v6479, %v6477
    %v6532 = vpack.c.b16 %v6480, %v6478
    %v6533 = vpack.c.b16 %v6483, %v6481
    %v6534 = vpack.c.b16 %v6484, %v6482
    %v6535 = vpack.c.b16 %v6487, %v6485
    %v6536 = vpack.c.b16 %v6488, %v6486
    %v6537 = vpack.c.b16 %v6491, %v6489
    %v6538 = vpack.c.b16 %v6492, %v6490
    %v6539 = vpack.c.b16 %v6495, %v6493
    %v6540 = vpack.c.b16 %v6496, %v6494
    %v6541 = vpack.c.b16 %v6499, %v6497
    %v6542 = vpack.c.b16 %v6500, %v6498
    %v6543 = vpack.c.b16 %v6503, %v6501
    %v6544 = vpack.c.b16 %v6504, %v6502
    %v6545 = vpack.c.b16 %v6507, %v6505
    %v6546 = vpack.c.b16 %v6508, %v6506
    %v6547 = vpack.c.b16 %v6511, %v6509
    %v6548 = vpack.c.b16 %v6512, %v6510
    %v6549 = vpack.c.b16 %v6515, %v6513
    %v6550 = vpack.c.b16 %v6516, %v6514
    %v6551 = vpack.c.b16 %v6519, %v6517
    %v6552 = vpack.c.b16 %v6520, %v6518
    %6585 = vmatprep.subr.bf16.mxu0 %v6536
    %6586 = vmatpush1.bf16.msra.mxu0 %v6535
    %6587 = vmatprep.subr.bf16.mxu0 %v6534
    %6588 = vmatpush1.bf16.msra.mxu0 %v6533
    %6589 = vmatprep.subr.bf16.mxu0 %v6532
    %6590 = vmatpush1.bf16.msra.mxu0 %v6531
    %6591 = vmatprep.subr.bf16.mxu0 %v6530
    %6592 = vmatpush1.bf16.msra.mxu0 %v6529
    %6593 = vmatprep.subr.bf16.mxu0 %v6528
    %6594 = vmatpush1.bf16.msra.mxu0 %v6527
    %6595 = vmatprep.subr.bf16.mxu0 %v6526
    %6596 = vmatpush1.bf16.msra.mxu0 %v6525
    %6597 = vmatprep.subr.bf16.mxu0 %v6524
    %6598 = vmatpush1.bf16.msra.mxu0 %v6523
    %6599 = vmatprep.subr.bf16.mxu0 %v6522
    %6600 = vmatpush1.bf16.msra.mxu0 %v6521
    %6601 = vmatprep.subr.bf16.mxu0 %v6552
    %6602 = vmatpush2.bf16.msra.mxu0 %v6551
    %6603 = vmatprep.subr.bf16.mxu0 %v6550
    %6604 = vmatpush2.bf16.msra.mxu0 %v6549
    %6605 = vmatprep.subr.bf16.mxu0 %v6548
    %6606 = vmatpush2.bf16.msra.mxu0 %v6547
    %6607 = vmatprep.subr.bf16.mxu0 %v6546
    %6608 = vmatpush2.bf16.msra.mxu0 %v6545
    %6609 = vmatprep.subr.bf16.mxu0 %v6544
    %6610 = vmatpush2.bf16.msra.mxu0 %v6543
    %6611 = vmatprep.subr.bf16.mxu0 %v6542
    %6612 = vmatpush2.bf16.msra.mxu0 %v6541
    %6613 = vmatprep.subr.bf16.mxu0 %v6540
    %6614 = vmatpush2.bf16.msra.mxu0 %v6539
    %6615 = vmatprep.subr.bf16.mxu0 %v6538
    %6616 = vmatpush2.bf16.msra.mxu0 %v6537
    %6617 = vmatprep.mubr.bf16.mxu0 %v6378
    %6618 = vmatmul.mubr.bf16.gmra.mxu0 %v6377
    %v6619 = vpop.f32.mrf.mxu0
    %v6620 = vadd.f32 %v6418, %v6619
    %v6621 = vpop.f32.mrf.mxu0
    %v6622 = vadd.f32 %v6422, %v6621
    %v6623 = vpop.f32.mrf.mxu0
    %v6624 = vpop.f32.mrf.mxu0
    %6625 = vdwg.mxu0
    %v6626 = vmax.f32 %v6620, 0.0
    %v6627 = vmax.f32 %v6622, 0.0
    %v6628 = vpack.c.bf16 %v6626, %v6626
    %v6629 = vpack.c.bf16 %v6627, %v6627
    %s6630 = scalar_lea.vmem [#allocation7], 768
    %v6631 = vld [vmem:[%s6630] sm:$0xf]
    %v6632 = vld [vmem:[%s6630 + $0x4] sm:$0xf]
    %v6633 = vld [vmem:[%s6630 + $0x8] sm:$0xf]
    %v6634 = vld [vmem:[%s6630 + $0xc] sm:$0xf]
    %v6635 = vld [vmem:[%s6630 + $0x10] sm:$0xf]
    %v6636 = vld [vmem:[%s6630 + $0x14] sm:$0xf]
    %v6637 = vld [vmem:[%s6630 + $0x18] sm:$0xf]
    %v6638 = vld [vmem:[%s6630 + $0x1c] sm:$0xf]
    %v6639 = vld [vmem:[%s6630 + $0x20] sm:$0xf]
    %v6640 = vld [vmem:[%s6630 + $0x24] sm:$0xf]
    %v6641 = vld [vmem:[%s6630 + $0x28] sm:$0xf]
    %v6642 = vld [vmem:[%s6630 + $0x2c] sm:$0xf]
    %v6643 = vld [vmem:[%s6630 + $0x30] sm:$0xf]
    %v6644 = vld [vmem:[%s6630 + $0x34] sm:$0xf]
    %v6645 = vld [vmem:[%s6630 + $0x38] sm:$0xf]
    %v6646 = vld [vmem:[%s6630 + $0x3c] sm:$0xf]
    %v6647 = vld [vmem:[%s6630 + $0x40] sm:$0xf]
    %v6648 = vld [vmem:[%s6630 + $0x44] sm:$0xf]
    %v6649 = vld [vmem:[%s6630 + $0x48] sm:$0xf]
    %v6650 = vld [vmem:[%s6630 + $0x4c] sm:$0xf]
    %v6651 = vld [vmem:[%s6630 + $0x50] sm:$0xf]
    %v6652 = vld [vmem:[%s6630 + $0x54] sm:$0xf]
    %v6653 = vld [vmem:[%s6630 + $0x58] sm:$0xf]
    %v6654 = vld [vmem:[%s6630 + $0x5c] sm:$0xf]
    %v6655 = vld [vmem:[%s6630 + $0x60] sm:$0xf]
    %v6656 = vld [vmem:[%s6630 + $0x64] sm:$0xf]
    %v6657 = vld [vmem:[%s6630 + $0x68] sm:$0xf]
    %v6658 = vld [vmem:[%s6630 + $0x6c] sm:$0xf]
    %v6659 = vld [vmem:[%s6630 + $0x70] sm:$0xf]
    %v6660 = vld [vmem:[%s6630 + $0x74] sm:$0xf]
    %v6661 = vld [vmem:[%s6630 + $0x78] sm:$0xf]
    %v6662 = vld [vmem:[%s6630 + $0x7c] sm:$0xf]
    %s6663 = scalar_lea.vmem [#allocation9], 6
    %v6664 = vld [vmem:[%s6663] sm:$0x1]
    %v6666 = vlaneseq
    %v6667 = vshrl.u32 %v6666, 7
    %v6668 = vsub.s32 0, %v6667
    %v6669 = vrot.slane %v6664, %v6668
    %v6703 = vunpack.c.l.b16 %v6631
    %v6704 = vunpack.c.l.b16 %v6632
    %v6705 = vunpack.c.l.b16 %v6633
    %v6706 = vunpack.c.l.b16 %v6634
    %v6707 = vunpack.c.l.b16 %v6635
    %v6708 = vunpack.c.l.b16 %v6636
    %v6709 = vunpack.c.l.b16 %v6637
    %v6710 = vunpack.c.l.b16 %v6638
    %v6711 = vunpack.c.l.b16 %v6639
    %v6712 = vunpack.c.l.b16 %v6640
    %v6713 = vunpack.c.l.b16 %v6641
    %v6714 = vunpack.c.l.b16 %v6642
    %v6715 = vunpack.c.l.b16 %v6643
    %v6716 = vunpack.c.l.b16 %v6644
    %v6717 = vunpack.c.l.b16 %v6645
    %v6718 = vunpack.c.l.b16 %v6646
    %v6719 = vunpack.c.l.b16 %v6647
    %v6720 = vunpack.c.l.b16 %v6648
    %v6721 = vunpack.c.l.b16 %v6649
    %v6722 = vunpack.c.l.b16 %v6650
    %v6723 = vunpack.c.l.b16 %v6651
    %v6724 = vunpack.c.l.b16 %v6652
    %v6725 = vunpack.c.l.b16 %v6653
    %v6726 = vunpack.c.l.b16 %v6654
    %v6727 = vunpack.c.l.b16 %v6655
    %v6728 = vunpack.c.l.b16 %v6656
    %v6729 = vunpack.c.l.b16 %v6657
    %v6730 = vunpack.c.l.b16 %v6658
    %v6731 = vunpack.c.l.b16 %v6659
    %v6732 = vunpack.c.l.b16 %v6660
    %v6733 = vunpack.c.l.b16 %v6661
    %v6734 = vunpack.c.l.b16 %v6662
    %v6735 = vpack.c.b16 %v6704, %v6703
    %v6736 = vpack.c.b16 %v6706, %v6705
    %v6737 = vpack.c.b16 %v6708, %v6707
    %v6738 = vpack.c.b16 %v6710, %v6709
    %v6739 = vpack.c.b16 %v6712, %v6711
    %v6740 = vpack.c.b16 %v6714, %v6713
    %v6741 = vpack.c.b16 %v6716, %v6715
    %v6742 = vpack.c.b16 %v6718, %v6717
    %v6743 = vpack.c.b16 %v6720, %v6719
    %v6744 = vpack.c.b16 %v6722, %v6721
    %v6745 = vpack.c.b16 %v6724, %v6723
    %v6746 = vpack.c.b16 %v6726, %v6725
    %v6747 = vpack.c.b16 %v6728, %v6727
    %v6748 = vpack.c.b16 %v6730, %v6729
    %v6749 = vpack.c.b16 %v6732, %v6731
    %v6750 = vpack.c.b16 %v6734, %v6733
    %6767 = vmatprep.subr.bf16.mxu0 0
    %6768 = vmatpush1.bf16.msra.mxu0 %v6742
    %6769 = vmatprep.subr.bf16.mxu0 0
    %6770 = vmatpush1.bf16.msra.mxu0 %v6741
    %6771 = vmatprep.subr.bf16.mxu0 0
    %6772 = vmatpush1.bf16.msra.mxu0 %v6740
    %6773 = vmatprep.subr.bf16.mxu0 0
    %6774 = vmatpush1.bf16.msra.mxu0 %v6739
    %6775 = vmatprep.subr.bf16.mxu0 0
    %6776 = vmatpush1.bf16.msra.mxu0 %v6738
    %6777 = vmatprep.subr.bf16.mxu0 0
    %6778 = vmatpush1.bf16.msra.mxu0 %v6737
    %6779 = vmatprep.subr.bf16.mxu0 0
    %6780 = vmatpush1.bf16.msra.mxu0 %v6736
    %6781 = vmatprep.subr.bf16.mxu0 0
    %6782 = vmatpush1.bf16.msra.mxu0 %v6735
    %6783 = vmatprep.subr.bf16.mxu0 0
    %6784 = vmatpush2.bf16.msra.mxu0 %v6750
    %6785 = vmatprep.subr.bf16.mxu0 0
    %6786 = vmatpush2.bf16.msra.mxu0 %v6749
    %6787 = vmatprep.subr.bf16.mxu0 0
    %6788 = vmatpush2.bf16.msra.mxu0 %v6748
    %6789 = vmatprep.subr.bf16.mxu0 0
    %6790 = vmatpush2.bf16.msra.mxu0 %v6747
    %6791 = vmatprep.subr.bf16.mxu0 0
    %6792 = vmatpush2.bf16.msra.mxu0 %v6746
    %6793 = vmatprep.subr.bf16.mxu0 0
    %6794 = vmatpush2.bf16.msra.mxu0 %v6745
    %6795 = vmatprep.subr.bf16.mxu0 0
    %6796 = vmatpush2.bf16.msra.mxu0 %v6744
    %6797 = vmatprep.subr.bf16.mxu0 0
    %6798 = vmatpush2.bf16.msra.mxu0 %v6743
    %6799 = vmatprep.mubr.bf16.mxu0 %v6629
    %6800 = vmatmul.mubr.bf16.gmra.mxu0 %v6628
    %v6801 = vpop.f32.mrf.mxu0
    %v6802 = vadd.f32 %v6669, %v6801
    %v6803 = vpop.f32.mrf.mxu0
    %v6804 = vpop.f32.mrf.mxu0
    %v6805 = vpop.f32.mrf.mxu0
    %6806 = vdwg.mxu0
    %6807 = vmax.xlane.f32.xlu0 %v6802
    %v6808 = vpop.xlane.xlu0 %6807
    %v6809 = vsub.f32 %v6802, %v6808
    %v6810 = vmul.f32 %v6809, 1.442695
    %v6811 = vpow.pop %v6810
    %6812 = vadd.xlane.f32.xlu0 %v6811
    %v6813 = vpop.xlane.xlu0 %6812
    %v6814 = vlog2.pop %v6813
    %v6815 = vmul.f32 %v6814, 0.6931472
    %v6816 = vsub.f32 %v6809, %v6815
    %s6817 = scalar_lea.vmem %s7, 48
    %6818 = vst.msk [vmem:[%s6817] sm:$0xff] %vm1165, %v6816
    %s6819 = scalar_lea.vmem [#allocation6], 5376
    %v6820 = vld [vmem:[%s6819] sm:$0xff]
    %v6821 = vld [vmem:[%s6819 + $0x8] sm:$0xff]
    %v6822 = vld [vmem:[%s6819 + $0x10] sm:$0xff]
    %v6823 = vld [vmem:[%s6819 + $0x18] sm:$0xff]
    %v6824 = vld [vmem:[%s6819 + $0x20] sm:$0xff]
    %v6825 = vld [vmem:[%s6819 + $0x28] sm:$0xff]
    %v6826 = vld [vmem:[%s6819 + $0x30] sm:$0xff]
    %v6827 = vld [vmem:[%s6819 + $0x38] sm:$0xff]
    %v6828 = vld [vmem:[%s6819 + $0x40] sm:$0xff]
    %v6829 = vld [vmem:[%s6819 + $0x48] sm:$0xff]
    %v6830 = vld [vmem:[%s6819 + $0x50] sm:$0xff]
    %v6831 = vld [vmem:[%s6819 + $0x58] sm:$0xff]
    %v6832 = vld [vmem:[%s6819 + $0x60] sm:$0xff]
    %v6833 = vld [vmem:[%s6819 + $0x68] sm:$0xff]
    %v6834 = vld [vmem:[%s6819 + $0x70] sm:$0xff]
    %v6835 = vld [vmem:[%s6819 + $0x78] sm:$0xff]
    %v6836 = vld [vmem:[%s6819 + $0x80] sm:$0xff]
    %v6837 = vld [vmem:[%s6819 + $0x88] sm:$0xff]
    %v6838 = vld [vmem:[%s6819 + $0x90] sm:$0xff]
    %v6839 = vld [vmem:[%s6819 + $0x98] sm:$0xff]
    %v6840 = vld [vmem:[%s6819 + $0xa0] sm:$0xff]
    %v6841 = vld [vmem:[%s6819 + $0xa8] sm:$0xff]
    %v6842 = vld [vmem:[%s6819 + $0xb0] sm:$0xff]
    %v6843 = vld [vmem:[%s6819 + $0xb8] sm:$0xff]
    %v6844 = vld [vmem:[%s6819 + $0xc0] sm:$0xff]
    %v6845 = vld [vmem:[%s6819 + $0xc8] sm:$0xff]
    %v6846 = vld [vmem:[%s6819 + $0xd0] sm:$0xff]
    %v6847 = vld [vmem:[%s6819 + $0xd8] sm:$0xff]
    %v6848 = vld [vmem:[%s6819 + $0xe0] sm:$0xff]
    %v6849 = vld [vmem:[%s6819 + $0xe8] sm:$0xff]
    %v6850 = vld [vmem:[%s6819 + $0xf0] sm:$0xff]
    %v6851 = vld [vmem:[%s6819 + $0xf8] sm:$0xff]
    %s6852 = scalar_lea.vmem %s4, 56
    %v6853 = vld [vmem:[%s6852] ss:$4 sm:$0x3]
    %v6855 = vlaneseq
    %v6856 = vshrl.u32 %v6855, 7
    %v6857 = vsub.s32 0, %v6856
    %v6858 = vrot.slane %v6853, %v6857
    %v6859 = vlaneseq
    %v6860 = vshrl.u32 %v6859, 7
    %v6861 = vsub.s32 1, %v6860
    %v6862 = vrot.slane %v6853, %v6861
    %v6897 = vunpack.c.l.b16 %v6820
    %v6898 = vunpack.c.h.b16 %v6820
    %v6899 = vunpack.c.l.b16 %v6821
    %v6900 = vunpack.c.h.b16 %v6821
    %v6901 = vunpack.c.l.b16 %v6822
    %v6902 = vunpack.c.h.b16 %v6822
    %v6903 = vunpack.c.l.b16 %v6823
    %v6904 = vunpack.c.h.b16 %v6823
    %v6905 = vunpack.c.l.b16 %v6824
    %v6906 = vunpack.c.h.b16 %v6824
    %v6907 = vunpack.c.l.b16 %v6825
    %v6908 = vunpack.c.h.b16 %v6825
    %v6909 = vunpack.c.l.b16 %v6826
    %v6910 = vunpack.c.h.b16 %v6826
    %v6911 = vunpack.c.l.b16 %v6827
    %v6912 = vunpack.c.h.b16 %v6827
    %v6913 = vunpack.c.l.b16 %v6828
    %v6914 = vunpack.c.h.b16 %v6828
    %v6915 = vunpack.c.l.b16 %v6829
    %v6916 = vunpack.c.h.b16 %v6829
    %v6917 = vunpack.c.l.b16 %v6830
    %v6918 = vunpack.c.h.b16 %v6830
    %v6919 = vunpack.c.l.b16 %v6831
    %v6920 = vunpack.c.h.b16 %v6831
    %v6921 = vunpack.c.l.b16 %v6832
    %v6922 = vunpack.c.h.b16 %v6832
    %v6923 = vunpack.c.l.b16 %v6833
    %v6924 = vunpack.c.h.b16 %v6833
    %v6925 = vunpack.c.l.b16 %v6834
    %v6926 = vunpack.c.h.b16 %v6834
    %v6927 = vunpack.c.l.b16 %v6835
    %v6928 = vunpack.c.h.b16 %v6835
    %v6929 = vunpack.c.l.b16 %v6836
    %v6930 = vunpack.c.h.b16 %v6836
    %v6931 = vunpack.c.l.b16 %v6837
    %v6932 = vunpack.c.h.b16 %v6837
    %v6933 = vunpack.c.l.b16 %v6838
    %v6934 = vunpack.c.h.b16 %v6838
    %v6935 = vunpack.c.l.b16 %v6839
    %v6936 = vunpack.c.h.b16 %v6839
    %v6937 = vunpack.c.l.b16 %v6840
    %v6938 = vunpack.c.h.b16 %v6840
    %v6939 = vunpack.c.l.b16 %v6841
    %v6940 = vunpack.c.h.b16 %v6841
    %v6941 = vunpack.c.l.b16 %v6842
    %v6942 = vunpack.c.h.b16 %v6842
    %v6943 = vunpack.c.l.b16 %v6843
    %v6944 = vunpack.c.h.b16 %v6843
    %v6945 = vunpack.c.l.b16 %v6844
    %v6946 = vunpack.c.h.b16 %v6844
    %v6947 = vunpack.c.l.b16 %v6845
    %v6948 = vunpack.c.h.b16 %v6845
    %v6949 = vunpack.c.l.b16 %v6846
    %v6950 = vunpack.c.h.b16 %v6846
    %v6951 = vunpack.c.l.b16 %v6847
    %v6952 = vunpack.c.h.b16 %v6847
    %v6953 = vunpack.c.l.b16 %v6848
    %v6954 = vunpack.c.h.b16 %v6848
    %v6955 = vunpack.c.l.b16 %v6849
    %v6956 = vunpack.c.h.b16 %v6849
    %v6957 = vunpack.c.l.b16 %v6850
    %v6958 = vunpack.c.h.b16 %v6850
    %v6959 = vunpack.c.l.b16 %v6851
    %v6960 = vunpack.c.h.b16 %v6851
    %v6961 = vpack.c.b16 %v6899, %v6897
    %v6962 = vpack.c.b16 %v6900, %v6898
    %v6963 = vpack.c.b16 %v6903, %v6901
    %v6964 = vpack.c.b16 %v6904, %v6902
    %v6965 = vpack.c.b16 %v6907, %v6905
    %v6966 = vpack.c.b16 %v6908, %v6906
    %v6967 = vpack.c.b16 %v6911, %v6909
    %v6968 = vpack.c.b16 %v6912, %v6910
    %v6969 = vpack.c.b16 %v6915, %v6913
    %v6970 = vpack.c.b16 %v6916, %v6914
    %v6971 = vpack.c.b16 %v6919, %v6917
    %v6972 = vpack.c.b16 %v6920, %v6918
    %v6973 = vpack.c.b16 %v6923, %v6921
    %v6974 = vpack.c.b16 %v6924, %v6922
    %v6975 = vpack.c.b16 %v6927, %v6925
    %v6976 = vpack.c.b16 %v6928, %v6926
    %v6977 = vpack.c.b16 %v6931, %v6929
    %v6978 = vpack.c.b16 %v6932, %v6930
    %v6979 = vpack.c.b16 %v6935, %v6933
    %v6980 = vpack.c.b16 %v6936, %v6934
    %v6981 = vpack.c.b16 %v6939, %v6937
    %v6982 = vpack.c.b16 %v6940, %v6938
    %v6983 = vpack.c.b16 %v6943, %v6941
    %v6984 = vpack.c.b16 %v6944, %v6942
    %v6985 = vpack.c.b16 %v6947, %v6945
    %v6986 = vpack.c.b16 %v6948, %v6946
    %v6987 = vpack.c.b16 %v6951, %v6949
    %v6988 = vpack.c.b16 %v6952, %v6950
    %v6989 = vpack.c.b16 %v6955, %v6953
    %v6990 = vpack.c.b16 %v6956, %v6954
    %v6991 = vpack.c.b16 %v6959, %v6957
    %v6992 = vpack.c.b16 %v6960, %v6958
    %7025 = vmatprep.subr.bf16.mxu0 %v6976
    %7026 = vmatpush1.bf16.msra.mxu0 %v6975
    %7027 = vmatprep.subr.bf16.mxu0 %v6974
    %7028 = vmatpush1.bf16.msra.mxu0 %v6973
    %7029 = vmatprep.subr.bf16.mxu0 %v6972
    %7030 = vmatpush1.bf16.msra.mxu0 %v6971
    %7031 = vmatprep.subr.bf16.mxu0 %v6970
    %7032 = vmatpush1.bf16.msra.mxu0 %v6969
    %7033 = vmatprep.subr.bf16.mxu0 %v6968
    %7034 = vmatpush1.bf16.msra.mxu0 %v6967
    %7035 = vmatprep.subr.bf16.mxu0 %v6966
    %7036 = vmatpush1.bf16.msra.mxu0 %v6965
    %7037 = vmatprep.subr.bf16.mxu0 %v6964
    %7038 = vmatpush1.bf16.msra.mxu0 %v6963
    %7039 = vmatprep.subr.bf16.mxu0 %v6962
    %7040 = vmatpush1.bf16.msra.mxu0 %v6961
    %7041 = vmatprep.subr.bf16.mxu0 %v6992
    %7042 = vmatpush2.bf16.msra.mxu0 %v6991
    %7043 = vmatprep.subr.bf16.mxu0 %v6990
    %7044 = vmatpush2.bf16.msra.mxu0 %v6989
    %7045 = vmatprep.subr.bf16.mxu0 %v6988
    %7046 = vmatpush2.bf16.msra.mxu0 %v6987
    %7047 = vmatprep.subr.bf16.mxu0 %v6986
    %7048 = vmatpush2.bf16.msra.mxu0 %v6985
    %7049 = vmatprep.subr.bf16.mxu0 %v6984
    %7050 = vmatpush2.bf16.msra.mxu0 %v6983
    %7051 = vmatprep.subr.bf16.mxu0 %v6982
    %7052 = vmatpush2.bf16.msra.mxu0 %v6981
    %7053 = vmatprep.subr.bf16.mxu0 %v6980
    %7054 = vmatpush2.bf16.msra.mxu0 %v6979
    %7055 = vmatprep.subr.bf16.mxu0 %v6978
    %7056 = vmatpush2.bf16.msra.mxu0 %v6977
    %7057 = vmatprep.mubr.bf16.mxu0 %v228
    %7058 = vmatmul.mubr.bf16.gmra.mxu0 %v227
    %v7059 = vpop.f32.mrf.mxu0
    %v7060 = vadd.f32 %v6858, %v7059
    %v7061 = vpop.f32.mrf.mxu0
    %v7062 = vadd.f32 %v6862, %v7061
    %v7063 = vpop.f32.mrf.mxu0
    %v7064 = vpop.f32.mrf.mxu0
    %7065 = vdwg.mxu0
    %v7066 = vmax.f32 %v7060, 0.0
    %v7067 = vmax.f32 %v7062, 0.0
    %v7068 = vpack.c.bf16 %v7066, %v7066
    %v7069 = vpack.c.bf16 %v7067, %v7067
    %s7070 = scalar_lea.vmem [#allocation6], 5632
    %v7071 = vld [vmem:[%s7070] sm:$0xff]
    %v7072 = vld [vmem:[%s7070 + $0x8] sm:$0xff]
    %v7073 = vld [vmem:[%s7070 + $0x10] sm:$0xff]
    %v7074 = vld [vmem:[%s7070 + $0x18] sm:$0xff]
    %v7075 = vld [vmem:[%s7070 + $0x20] sm:$0xff]
    %v7076 = vld [vmem:[%s7070 + $0x28] sm:$0xff]
    %v7077 = vld [vmem:[%s7070 + $0x30] sm:$0xff]
    %v7078 = vld [vmem:[%s7070 + $0x38] sm:$0xff]
    %v7079 = vld [vmem:[%s7070 + $0x40] sm:$0xff]
    %v7080 = vld [vmem:[%s7070 + $0x48] sm:$0xff]
    %v7081 = vld [vmem:[%s7070 + $0x50] sm:$0xff]
    %v7082 = vld [vmem:[%s7070 + $0x58] sm:$0xff]
    %v7083 = vld [vmem:[%s7070 + $0x60] sm:$0xff]
    %v7084 = vld [vmem:[%s7070 + $0x68] sm:$0xff]
    %v7085 = vld [vmem:[%s7070 + $0x70] sm:$0xff]
    %v7086 = vld [vmem:[%s7070 + $0x78] sm:$0xff]
    %v7087 = vld [vmem:[%s7070 + $0x80] sm:$0xff]
    %v7088 = vld [vmem:[%s7070 + $0x88] sm:$0xff]
    %v7089 = vld [vmem:[%s7070 + $0x90] sm:$0xff]
    %v7090 = vld [vmem:[%s7070 + $0x98] sm:$0xff]
    %v7091 = vld [vmem:[%s7070 + $0xa0] sm:$0xff]
    %v7092 = vld [vmem:[%s7070 + $0xa8] sm:$0xff]
    %v7093 = vld [vmem:[%s7070 + $0xb0] sm:$0xff]
    %v7094 = vld [vmem:[%s7070 + $0xb8] sm:$0xff]
    %v7095 = vld [vmem:[%s7070 + $0xc0] sm:$0xff]
    %v7096 = vld [vmem:[%s7070 + $0xc8] sm:$0xff]
    %v7097 = vld [vmem:[%s7070 + $0xd0] sm:$0xff]
    %v7098 = vld [vmem:[%s7070 + $0xd8] sm:$0xff]
    %v7099 = vld [vmem:[%s7070 + $0xe0] sm:$0xff]
    %v7100 = vld [vmem:[%s7070 + $0xe8] sm:$0xff]
    %v7101 = vld [vmem:[%s7070 + $0xf0] sm:$0xff]
    %v7102 = vld [vmem:[%s7070 + $0xf8] sm:$0xff]
    %s7103 = scalar_lea.vmem %s6852, 1
    %v7104 = vld [vmem:[%s7103] ss:$4 sm:$0x3]
    %v7106 = vlaneseq
    %v7107 = vshrl.u32 %v7106, 7
    %v7108 = vsub.s32 0, %v7107
    %v7109 = vrot.slane %v7104, %v7108
    %v7110 = vlaneseq
    %v7111 = vshrl.u32 %v7110, 7
    %v7112 = vsub.s32 1, %v7111
    %v7113 = vrot.slane %v7104, %v7112
    %v7148 = vunpack.c.l.b16 %v7071
    %v7149 = vunpack.c.h.b16 %v7071
    %v7150 = vunpack.c.l.b16 %v7072
    %v7151 = vunpack.c.h.b16 %v7072
    %v7152 = vunpack.c.l.b16 %v7073
    %v7153 = vunpack.c.h.b16 %v7073
    %v7154 = vunpack.c.l.b16 %v7074
    %v7155 = vunpack.c.h.b16 %v7074
    %v7156 = vunpack.c.l.b16 %v7075
    %v7157 = vunpack.c.h.b16 %v7075
    %v7158 = vunpack.c.l.b16 %v7076
    %v7159 = vunpack.c.h.b16 %v7076
    %v7160 = vunpack.c.l.b16 %v7077
    %v7161 = vunpack.c.h.b16 %v7077
    %v7162 = vunpack.c.l.b16 %v7078
    %v7163 = vunpack.c.h.b16 %v7078
    %v7164 = vunpack.c.l.b16 %v7079
    %v7165 = vunpack.c.h.b16 %v7079
    %v7166 = vunpack.c.l.b16 %v7080
    %v7167 = vunpack.c.h.b16 %v7080
    %v7168 = vunpack.c.l.b16 %v7081
    %v7169 = vunpack.c.h.b16 %v7081
    %v7170 = vunpack.c.l.b16 %v7082
    %v7171 = vunpack.c.h.b16 %v7082
    %v7172 = vunpack.c.l.b16 %v7083
    %v7173 = vunpack.c.h.b16 %v7083
    %v7174 = vunpack.c.l.b16 %v7084
    %v7175 = vunpack.c.h.b16 %v7084
    %v7176 = vunpack.c.l.b16 %v7085
    %v7177 = vunpack.c.h.b16 %v7085
    %v7178 = vunpack.c.l.b16 %v7086
    %v7179 = vunpack.c.h.b16 %v7086
    %v7180 = vunpack.c.l.b16 %v7087
    %v7181 = vunpack.c.h.b16 %v7087
    %v7182 = vunpack.c.l.b16 %v7088
    %v7183 = vunpack.c.h.b16 %v7088
    %v7184 = vunpack.c.l.b16 %v7089
    %v7185 = vunpack.c.h.b16 %v7089
    %v7186 = vunpack.c.l.b16 %v7090
    %v7187 = vunpack.c.h.b16 %v7090
    %v7188 = vunpack.c.l.b16 %v7091
    %v7189 = vunpack.c.h.b16 %v7091
    %v7190 = vunpack.c.l.b16 %v7092
    %v7191 = vunpack.c.h.b16 %v7092
    %v7192 = vunpack.c.l.b16 %v7093
    %v7193 = vunpack.c.h.b16 %v7093
    %v7194 = vunpack.c.l.b16 %v7094
    %v7195 = vunpack.c.h.b16 %v7094
    %v7196 = vunpack.c.l.b16 %v7095
    %v7197 = vunpack.c.h.b16 %v7095
    %v7198 = vunpack.c.l.b16 %v7096
    %v7199 = vunpack.c.h.b16 %v7096
    %v7200 = vunpack.c.l.b16 %v7097
    %v7201 = vunpack.c.h.b16 %v7097
    %v7202 = vunpack.c.l.b16 %v7098
    %v7203 = vunpack.c.h.b16 %v7098
    %v7204 = vunpack.c.l.b16 %v7099
    %v7205 = vunpack.c.h.b16 %v7099
    %v7206 = vunpack.c.l.b16 %v7100
    %v7207 = vunpack.c.h.b16 %v7100
    %v7208 = vunpack.c.l.b16 %v7101
    %v7209 = vunpack.c.h.b16 %v7101
    %v7210 = vunpack.c.l.b16 %v7102
    %v7211 = vunpack.c.h.b16 %v7102
    %v7212 = vpack.c.b16 %v7150, %v7148
    %v7213 = vpack.c.b16 %v7151, %v7149
    %v7214 = vpack.c.b16 %v7154, %v7152
    %v7215 = vpack.c.b16 %v7155, %v7153
    %v7216 = vpack.c.b16 %v7158, %v7156
    %v7217 = vpack.c.b16 %v7159, %v7157
    %v7218 = vpack.c.b16 %v7162, %v7160
    %v7219 = vpack.c.b16 %v7163, %v7161
    %v7220 = vpack.c.b16 %v7166, %v7164
    %v7221 = vpack.c.b16 %v7167, %v7165
    %v7222 = vpack.c.b16 %v7170, %v7168
    %v7223 = vpack.c.b16 %v7171, %v7169
    %v7224 = vpack.c.b16 %v7174, %v7172
    %v7225 = vpack.c.b16 %v7175, %v7173
    %v7226 = vpack.c.b16 %v7178, %v7176
    %v7227 = vpack.c.b16 %v7179, %v7177
    %v7228 = vpack.c.b16 %v7182, %v7180
    %v7229 = vpack.c.b16 %v7183, %v7181
    %v7230 = vpack.c.b16 %v7186, %v7184
    %v7231 = vpack.c.b16 %v7187, %v7185
    %v7232 = vpack.c.b16 %v7190, %v7188
    %v7233 = vpack.c.b16 %v7191, %v7189
    %v7234 = vpack.c.b16 %v7194, %v7192
    %v7235 = vpack.c.b16 %v7195, %v7193
    %v7236 = vpack.c.b16 %v7198, %v7196
    %v7237 = vpack.c.b16 %v7199, %v7197
    %v7238 = vpack.c.b16 %v7202, %v7200
    %v7239 = vpack.c.b16 %v7203, %v7201
    %v7240 = vpack.c.b16 %v7206, %v7204
    %v7241 = vpack.c.b16 %v7207, %v7205
    %v7242 = vpack.c.b16 %v7210, %v7208
    %v7243 = vpack.c.b16 %v7211, %v7209
    %7276 = vmatprep.subr.bf16.mxu0 %v7227
    %7277 = vmatpush1.bf16.msra.mxu0 %v7226
    %7278 = vmatprep.subr.bf16.mxu0 %v7225
    %7279 = vmatpush1.bf16.msra.mxu0 %v7224
    %7280 = vmatprep.subr.bf16.mxu0 %v7223
    %7281 = vmatpush1.bf16.msra.mxu0 %v7222
    %7282 = vmatprep.subr.bf16.mxu0 %v7221
    %7283 = vmatpush1.bf16.msra.mxu0 %v7220
    %7284 = vmatprep.subr.bf16.mxu0 %v7219
    %7285 = vmatpush1.bf16.msra.mxu0 %v7218
    %7286 = vmatprep.subr.bf16.mxu0 %v7217
    %7287 = vmatpush1.bf16.msra.mxu0 %v7216
    %7288 = vmatprep.subr.bf16.mxu0 %v7215
    %7289 = vmatpush1.bf16.msra.mxu0 %v7214
    %7290 = vmatprep.subr.bf16.mxu0 %v7213
    %7291 = vmatpush1.bf16.msra.mxu0 %v7212
    %7292 = vmatprep.subr.bf16.mxu0 %v7243
    %7293 = vmatpush2.bf16.msra.mxu0 %v7242
    %7294 = vmatprep.subr.bf16.mxu0 %v7241
    %7295 = vmatpush2.bf16.msra.mxu0 %v7240
    %7296 = vmatprep.subr.bf16.mxu0 %v7239
    %7297 = vmatpush2.bf16.msra.mxu0 %v7238
    %7298 = vmatprep.subr.bf16.mxu0 %v7237
    %7299 = vmatpush2.bf16.msra.mxu0 %v7236
    %7300 = vmatprep.subr.bf16.mxu0 %v7235
    %7301 = vmatpush2.bf16.msra.mxu0 %v7234
    %7302 = vmatprep.subr.bf16.mxu0 %v7233
    %7303 = vmatpush2.bf16.msra.mxu0 %v7232
    %7304 = vmatprep.subr.bf16.mxu0 %v7231
    %7305 = vmatpush2.bf16.msra.mxu0 %v7230
    %7306 = vmatprep.subr.bf16.mxu0 %v7229
    %7307 = vmatpush2.bf16.msra.mxu0 %v7228
    %7308 = vmatprep.mubr.bf16.mxu0 %v7069
    %7309 = vmatmul.mubr.bf16.gmra.mxu0 %v7068
    %v7310 = vpop.f32.mrf.mxu0
    %v7311 = vadd.f32 %v7109, %v7310
    %v7312 = vpop.f32.mrf.mxu0
    %v7313 = vadd.f32 %v7113, %v7312
    %v7314 = vpop.f32.mrf.mxu0
    %v7315 = vpop.f32.mrf.mxu0
    %7316 = vdwg.mxu0
    %v7317 = vmax.f32 %v7311, 0.0
    %v7318 = vmax.f32 %v7313, 0.0
    %v7319 = vpack.c.bf16 %v7317, %v7317
    %v7320 = vpack.c.bf16 %v7318, %v7318
    %s7321 = scalar_lea.vmem [#allocation6], 5888
    %v7322 = vld [vmem:[%s7321] sm:$0xff]
    %v7323 = vld [vmem:[%s7321 + $0x8] sm:$0xff]
    %v7324 = vld [vmem:[%s7321 + $0x10] sm:$0xff]
    %v7325 = vld [vmem:[%s7321 + $0x18] sm:$0xff]
    %v7326 = vld [vmem:[%s7321 + $0x20] sm:$0xff]
    %v7327 = vld [vmem:[%s7321 + $0x28] sm:$0xff]
    %v7328 = vld [vmem:[%s7321 + $0x30] sm:$0xff]
    %v7329 = vld [vmem:[%s7321 + $0x38] sm:$0xff]
    %v7330 = vld [vmem:[%s7321 + $0x40] sm:$0xff]
    %v7331 = vld [vmem:[%s7321 + $0x48] sm:$0xff]
    %v7332 = vld [vmem:[%s7321 + $0x50] sm:$0xff]
    %v7333 = vld [vmem:[%s7321 + $0x58] sm:$0xff]
    %v7334 = vld [vmem:[%s7321 + $0x60] sm:$0xff]
    %v7335 = vld [vmem:[%s7321 + $0x68] sm:$0xff]
    %v7336 = vld [vmem:[%s7321 + $0x70] sm:$0xff]
    %v7337 = vld [vmem:[%s7321 + $0x78] sm:$0xff]
    %v7338 = vld [vmem:[%s7321 + $0x80] sm:$0xff]
    %v7339 = vld [vmem:[%s7321 + $0x88] sm:$0xff]
    %v7340 = vld [vmem:[%s7321 + $0x90] sm:$0xff]
    %v7341 = vld [vmem:[%s7321 + $0x98] sm:$0xff]
    %v7342 = vld [vmem:[%s7321 + $0xa0] sm:$0xff]
    %v7343 = vld [vmem:[%s7321 + $0xa8] sm:$0xff]
    %v7344 = vld [vmem:[%s7321 + $0xb0] sm:$0xff]
    %v7345 = vld [vmem:[%s7321 + $0xb8] sm:$0xff]
    %v7346 = vld [vmem:[%s7321 + $0xc0] sm:$0xff]
    %v7347 = vld [vmem:[%s7321 + $0xc8] sm:$0xff]
    %v7348 = vld [vmem:[%s7321 + $0xd0] sm:$0xff]
    %v7349 = vld [vmem:[%s7321 + $0xd8] sm:$0xff]
    %v7350 = vld [vmem:[%s7321 + $0xe0] sm:$0xff]
    %v7351 = vld [vmem:[%s7321 + $0xe8] sm:$0xff]
    %v7352 = vld [vmem:[%s7321 + $0xf0] sm:$0xff]
    %v7353 = vld [vmem:[%s7321 + $0xf8] sm:$0xff]
    %s7354 = scalar_lea.vmem %s6852, 2
    %v7355 = vld [vmem:[%s7354] ss:$4 sm:$0x3]
    %v7357 = vlaneseq
    %v7358 = vshrl.u32 %v7357, 7
    %v7359 = vsub.s32 0, %v7358
    %v7360 = vrot.slane %v7355, %v7359
    %v7361 = vlaneseq
    %v7362 = vshrl.u32 %v7361, 7
    %v7363 = vsub.s32 1, %v7362
    %v7364 = vrot.slane %v7355, %v7363
    %v7399 = vunpack.c.l.b16 %v7322
    %v7400 = vunpack.c.h.b16 %v7322
    %v7401 = vunpack.c.l.b16 %v7323
    %v7402 = vunpack.c.h.b16 %v7323
    %v7403 = vunpack.c.l.b16 %v7324
    %v7404 = vunpack.c.h.b16 %v7324
    %v7405 = vunpack.c.l.b16 %v7325
    %v7406 = vunpack.c.h.b16 %v7325
    %v7407 = vunpack.c.l.b16 %v7326
    %v7408 = vunpack.c.h.b16 %v7326
    %v7409 = vunpack.c.l.b16 %v7327
    %v7410 = vunpack.c.h.b16 %v7327
    %v7411 = vunpack.c.l.b16 %v7328
    %v7412 = vunpack.c.h.b16 %v7328
    %v7413 = vunpack.c.l.b16 %v7329
    %v7414 = vunpack.c.h.b16 %v7329
    %v7415 = vunpack.c.l.b16 %v7330
    %v7416 = vunpack.c.h.b16 %v7330
    %v7417 = vunpack.c.l.b16 %v7331
    %v7418 = vunpack.c.h.b16 %v7331
    %v7419 = vunpack.c.l.b16 %v7332
    %v7420 = vunpack.c.h.b16 %v7332
    %v7421 = vunpack.c.l.b16 %v7333
    %v7422 = vunpack.c.h.b16 %v7333
    %v7423 = vunpack.c.l.b16 %v7334
    %v7424 = vunpack.c.h.b16 %v7334
    %v7425 = vunpack.c.l.b16 %v7335
    %v7426 = vunpack.c.h.b16 %v7335
    %v7427 = vunpack.c.l.b16 %v7336
    %v7428 = vunpack.c.h.b16 %v7336
    %v7429 = vunpack.c.l.b16 %v7337
    %v7430 = vunpack.c.h.b16 %v7337
    %v7431 = vunpack.c.l.b16 %v7338
    %v7432 = vunpack.c.h.b16 %v7338
    %v7433 = vunpack.c.l.b16 %v7339
    %v7434 = vunpack.c.h.b16 %v7339
    %v7435 = vunpack.c.l.b16 %v7340
    %v7436 = vunpack.c.h.b16 %v7340
    %v7437 = vunpack.c.l.b16 %v7341
    %v7438 = vunpack.c.h.b16 %v7341
    %v7439 = vunpack.c.l.b16 %v7342
    %v7440 = vunpack.c.h.b16 %v7342
    %v7441 = vunpack.c.l.b16 %v7343
    %v7442 = vunpack.c.h.b16 %v7343
    %v7443 = vunpack.c.l.b16 %v7344
    %v7444 = vunpack.c.h.b16 %v7344
    %v7445 = vunpack.c.l.b16 %v7345
    %v7446 = vunpack.c.h.b16 %v7345
    %v7447 = vunpack.c.l.b16 %v7346
    %v7448 = vunpack.c.h.b16 %v7346
    %v7449 = vunpack.c.l.b16 %v7347
    %v7450 = vunpack.c.h.b16 %v7347
    %v7451 = vunpack.c.l.b16 %v7348
    %v7452 = vunpack.c.h.b16 %v7348
    %v7453 = vunpack.c.l.b16 %v7349
    %v7454 = vunpack.c.h.b16 %v7349
    %v7455 = vunpack.c.l.b16 %v7350
    %v7456 = vunpack.c.h.b16 %v7350
    %v7457 = vunpack.c.l.b16 %v7351
    %v7458 = vunpack.c.h.b16 %v7351
    %v7459 = vunpack.c.l.b16 %v7352
    %v7460 = vunpack.c.h.b16 %v7352
    %v7461 = vunpack.c.l.b16 %v7353
    %v7462 = vunpack.c.h.b16 %v7353
    %v7463 = vpack.c.b16 %v7401, %v7399
    %v7464 = vpack.c.b16 %v7402, %v7400
    %v7465 = vpack.c.b16 %v7405, %v7403
    %v7466 = vpack.c.b16 %v7406, %v7404
    %v7467 = vpack.c.b16 %v7409, %v7407
    %v7468 = vpack.c.b16 %v7410, %v7408
    %v7469 = vpack.c.b16 %v7413, %v7411
    %v7470 = vpack.c.b16 %v7414, %v7412
    %v7471 = vpack.c.b16 %v7417, %v7415
    %v7472 = vpack.c.b16 %v7418, %v7416
    %v7473 = vpack.c.b16 %v7421, %v7419
    %v7474 = vpack.c.b16 %v7422, %v7420
    %v7475 = vpack.c.b16 %v7425, %v7423
    %v7476 = vpack.c.b16 %v7426, %v7424
    %v7477 = vpack.c.b16 %v7429, %v7427
    %v7478 = vpack.c.b16 %v7430, %v7428
    %v7479 = vpack.c.b16 %v7433, %v7431
    %v7480 = vpack.c.b16 %v7434, %v7432
    %v7481 = vpack.c.b16 %v7437, %v7435
    %v7482 = vpack.c.b16 %v7438, %v7436
    %v7483 = vpack.c.b16 %v7441, %v7439
    %v7484 = vpack.c.b16 %v7442, %v7440
    %v7485 = vpack.c.b16 %v7445, %v7443
    %v7486 = vpack.c.b16 %v7446, %v7444
    %v7487 = vpack.c.b16 %v7449, %v7447
    %v7488 = vpack.c.b16 %v7450, %v7448
    %v7489 = vpack.c.b16 %v7453, %v7451
    %v7490 = vpack.c.b16 %v7454, %v7452
    %v7491 = vpack.c.b16 %v7457, %v7455
    %v7492 = vpack.c.b16 %v7458, %v7456
    %v7493 = vpack.c.b16 %v7461, %v7459
    %v7494 = vpack.c.b16 %v7462, %v7460
    %7527 = vmatprep.subr.bf16.mxu0 %v7478
    %7528 = vmatpush1.bf16.msra.mxu0 %v7477
    %7529 = vmatprep.subr.bf16.mxu0 %v7476
    %7530 = vmatpush1.bf16.msra.mxu0 %v7475
    %7531 = vmatprep.subr.bf16.mxu0 %v7474
    %7532 = vmatpush1.bf16.msra.mxu0 %v7473
    %7533 = vmatprep.subr.bf16.mxu0 %v7472
    %7534 = vmatpush1.bf16.msra.mxu0 %v7471
    %7535 = vmatprep.subr.bf16.mxu0 %v7470
    %7536 = vmatpush1.bf16.msra.mxu0 %v7469
    %7537 = vmatprep.subr.bf16.mxu0 %v7468
    %7538 = vmatpush1.bf16.msra.mxu0 %v7467
    %7539 = vmatprep.subr.bf16.mxu0 %v7466
    %7540 = vmatpush1.bf16.msra.mxu0 %v7465
    %7541 = vmatprep.subr.bf16.mxu0 %v7464
    %7542 = vmatpush1.bf16.msra.mxu0 %v7463
    %7543 = vmatprep.subr.bf16.mxu0 %v7494
    %7544 = vmatpush2.bf16.msra.mxu0 %v7493
    %7545 = vmatprep.subr.bf16.mxu0 %v7492
    %7546 = vmatpush2.bf16.msra.mxu0 %v7491
    %7547 = vmatprep.subr.bf16.mxu0 %v7490
    %7548 = vmatpush2.bf16.msra.mxu0 %v7489
    %7549 = vmatprep.subr.bf16.mxu0 %v7488
    %7550 = vmatpush2.bf16.msra.mxu0 %v7487
    %7551 = vmatprep.subr.bf16.mxu0 %v7486
    %7552 = vmatpush2.bf16.msra.mxu0 %v7485
    %7553 = vmatprep.subr.bf16.mxu0 %v7484
    %7554 = vmatpush2.bf16.msra.mxu0 %v7483
    %7555 = vmatprep.subr.bf16.mxu0 %v7482
    %7556 = vmatpush2.bf16.msra.mxu0 %v7481
    %7557 = vmatprep.subr.bf16.mxu0 %v7480
    %7558 = vmatpush2.bf16.msra.mxu0 %v7479
    %7559 = vmatprep.mubr.bf16.mxu0 %v7320
    %7560 = vmatmul.mubr.bf16.gmra.mxu0 %v7319
    %v7561 = vpop.f32.mrf.mxu0
    %v7562 = vadd.f32 %v7360, %v7561
    %v7563 = vpop.f32.mrf.mxu0
    %v7564 = vadd.f32 %v7364, %v7563
    %v7565 = vpop.f32.mrf.mxu0
    %v7566 = vpop.f32.mrf.mxu0
    %7567 = vdwg.mxu0
    %v7568 = vmax.f32 %v7562, 0.0
    %v7569 = vmax.f32 %v7564, 0.0
    %v7570 = vpack.c.bf16 %v7568, %v7568
    %v7571 = vpack.c.bf16 %v7569, %v7569
    %s7572 = scalar_lea.vmem [#allocation7], 896
    %v7573 = vld [vmem:[%s7572] sm:$0xf]
    %v7574 = vld [vmem:[%s7572 + $0x4] sm:$0xf]
    %v7575 = vld [vmem:[%s7572 + $0x8] sm:$0xf]
    %v7576 = vld [vmem:[%s7572 + $0xc] sm:$0xf]
    %v7577 = vld [vmem:[%s7572 + $0x10] sm:$0xf]
    %v7578 = vld [vmem:[%s7572 + $0x14] sm:$0xf]
    %v7579 = vld [vmem:[%s7572 + $0x18] sm:$0xf]
    %v7580 = vld [vmem:[%s7572 + $0x1c] sm:$0xf]
    %v7581 = vld [vmem:[%s7572 + $0x20] sm:$0xf]
    %v7582 = vld [vmem:[%s7572 + $0x24] sm:$0xf]
    %v7583 = vld [vmem:[%s7572 + $0x28] sm:$0xf]
    %v7584 = vld [vmem:[%s7572 + $0x2c] sm:$0xf]
    %v7585 = vld [vmem:[%s7572 + $0x30] sm:$0xf]
    %v7586 = vld [vmem:[%s7572 + $0x34] sm:$0xf]
    %v7587 = vld [vmem:[%s7572 + $0x38] sm:$0xf]
    %v7588 = vld [vmem:[%s7572 + $0x3c] sm:$0xf]
    %v7589 = vld [vmem:[%s7572 + $0x40] sm:$0xf]
    %v7590 = vld [vmem:[%s7572 + $0x44] sm:$0xf]
    %v7591 = vld [vmem:[%s7572 + $0x48] sm:$0xf]
    %v7592 = vld [vmem:[%s7572 + $0x4c] sm:$0xf]
    %v7593 = vld [vmem:[%s7572 + $0x50] sm:$0xf]
    %v7594 = vld [vmem:[%s7572 + $0x54] sm:$0xf]
    %v7595 = vld [vmem:[%s7572 + $0x58] sm:$0xf]
    %v7596 = vld [vmem:[%s7572 + $0x5c] sm:$0xf]
    %v7597 = vld [vmem:[%s7572 + $0x60] sm:$0xf]
    %v7598 = vld [vmem:[%s7572 + $0x64] sm:$0xf]
    %v7599 = vld [vmem:[%s7572 + $0x68] sm:$0xf]
    %v7600 = vld [vmem:[%s7572 + $0x6c] sm:$0xf]
    %v7601 = vld [vmem:[%s7572 + $0x70] sm:$0xf]
    %v7602 = vld [vmem:[%s7572 + $0x74] sm:$0xf]
    %v7603 = vld [vmem:[%s7572 + $0x78] sm:$0xf]
    %v7604 = vld [vmem:[%s7572 + $0x7c] sm:$0xf]
    %s7605 = scalar_lea.vmem [#allocation9], 7
    %v7606 = vld [vmem:[%s7605] sm:$0x1]
    %v7608 = vlaneseq
    %v7609 = vshrl.u32 %v7608, 7
    %v7610 = vsub.s32 0, %v7609
    %v7611 = vrot.slane %v7606, %v7610
    %v7645 = vunpack.c.l.b16 %v7573
    %v7646 = vunpack.c.l.b16 %v7574
    %v7647 = vunpack.c.l.b16 %v7575
    %v7648 = vunpack.c.l.b16 %v7576
    %v7649 = vunpack.c.l.b16 %v7577
    %v7650 = vunpack.c.l.b16 %v7578
    %v7651 = vunpack.c.l.b16 %v7579
    %v7652 = vunpack.c.l.b16 %v7580
    %v7653 = vunpack.c.l.b16 %v7581
    %v7654 = vunpack.c.l.b16 %v7582
    %v7655 = vunpack.c.l.b16 %v7583
    %v7656 = vunpack.c.l.b16 %v7584
    %v7657 = vunpack.c.l.b16 %v7585
    %v7658 = vunpack.c.l.b16 %v7586
    %v7659 = vunpack.c.l.b16 %v7587
    %v7660 = vunpack.c.l.b16 %v7588
    %v7661 = vunpack.c.l.b16 %v7589
    %v7662 = vunpack.c.l.b16 %v7590
    %v7663 = vunpack.c.l.b16 %v7591
    %v7664 = vunpack.c.l.b16 %v7592
    %v7665 = vunpack.c.l.b16 %v7593
    %v7666 = vunpack.c.l.b16 %v7594
    %v7667 = vunpack.c.l.b16 %v7595
    %v7668 = vunpack.c.l.b16 %v7596
    %v7669 = vunpack.c.l.b16 %v7597
    %v7670 = vunpack.c.l.b16 %v7598
    %v7671 = vunpack.c.l.b16 %v7599
    %v7672 = vunpack.c.l.b16 %v7600
    %v7673 = vunpack.c.l.b16 %v7601
    %v7674 = vunpack.c.l.b16 %v7602
    %v7675 = vunpack.c.l.b16 %v7603
    %v7676 = vunpack.c.l.b16 %v7604
    %v7677 = vpack.c.b16 %v7646, %v7645
    %v7678 = vpack.c.b16 %v7648, %v7647
    %v7679 = vpack.c.b16 %v7650, %v7649
    %v7680 = vpack.c.b16 %v7652, %v7651
    %v7681 = vpack.c.b16 %v7654, %v7653
    %v7682 = vpack.c.b16 %v7656, %v7655
    %v7683 = vpack.c.b16 %v7658, %v7657
    %v7684 = vpack.c.b16 %v7660, %v7659
    %v7685 = vpack.c.b16 %v7662, %v7661
    %v7686 = vpack.c.b16 %v7664, %v7663
    %v7687 = vpack.c.b16 %v7666, %v7665
    %v7688 = vpack.c.b16 %v7668, %v7667
    %v7689 = vpack.c.b16 %v7670, %v7669
    %v7690 = vpack.c.b16 %v7672, %v7671
    %v7691 = vpack.c.b16 %v7674, %v7673
    %v7692 = vpack.c.b16 %v7676, %v7675
    %7709 = vmatprep.subr.bf16.mxu0 0
    %7710 = vmatpush1.bf16.msra.mxu0 %v7684
    %7711 = vmatprep.subr.bf16.mxu0 0
    %7712 = vmatpush1.bf16.msra.mxu0 %v7683
    %7713 = vmatprep.subr.bf16.mxu0 0
    %7714 = vmatpush1.bf16.msra.mxu0 %v7682
    %7715 = vmatprep.subr.bf16.mxu0 0
    %7716 = vmatpush1.bf16.msra.mxu0 %v7681
    %7717 = vmatprep.subr.bf16.mxu0 0
    %7718 = vmatpush1.bf16.msra.mxu0 %v7680
    %7719 = vmatprep.subr.bf16.mxu0 0
    %7720 = vmatpush1.bf16.msra.mxu0 %v7679
    %7721 = vmatprep.subr.bf16.mxu0 0
    %7722 = vmatpush1.bf16.msra.mxu0 %v7678
    %7723 = vmatprep.subr.bf16.mxu0 0
    %7724 = vmatpush1.bf16.msra.mxu0 %v7677
    %7725 = vmatprep.subr.bf16.mxu0 0
    %7726 = vmatpush2.bf16.msra.mxu0 %v7692
    %7727 = vmatprep.subr.bf16.mxu0 0
    %7728 = vmatpush2.bf16.msra.mxu0 %v7691
    %7729 = vmatprep.subr.bf16.mxu0 0
    %7730 = vmatpush2.bf16.msra.mxu0 %v7690
    %7731 = vmatprep.subr.bf16.mxu0 0
    %7732 = vmatpush2.bf16.msra.mxu0 %v7689
    %7733 = vmatprep.subr.bf16.mxu0 0
    %7734 = vmatpush2.bf16.msra.mxu0 %v7688
    %7735 = vmatprep.subr.bf16.mxu0 0
    %7736 = vmatpush2.bf16.msra.mxu0 %v7687
    %7737 = vmatprep.subr.bf16.mxu0 0
    %7738 = vmatpush2.bf16.msra.mxu0 %v7686
    %7739 = vmatprep.subr.bf16.mxu0 0
    %7740 = vmatpush2.bf16.msra.mxu0 %v7685
    %7741 = vmatprep.mubr.bf16.mxu0 %v7571
    %7742 = vmatmul.mubr.bf16.gmra.mxu0 %v7570
    %v7743 = vpop.f32.mrf.mxu0
    %v7744 = vadd.f32 %v7611, %v7743
    %v7745 = vpop.f32.mrf.mxu0
    %v7746 = vpop.f32.mrf.mxu0
    %v7747 = vpop.f32.mrf.mxu0
    %7748 = vdwg.mxu0
    %7749 = vmax.xlane.f32.xlu0 %v7744
    %v7750 = vpop.xlane.xlu0 %7749
    %v7751 = vsub.f32 %v7744, %v7750
    %v7752 = vmul.f32 %v7751, 1.442695
    %v7753 = vpow.pop %v7752
    %7754 = vadd.xlane.f32.xlu0 %v7753
    %v7755 = vpop.xlane.xlu0 %7754
    %v7756 = vlog2.pop %v7755
    %v7757 = vmul.f32 %v7756, 0.6931472
    %v7758 = vsub.f32 %v7751, %v7757
    %s7759 = scalar_lea.vmem %s7, 56
    %7760 = vst.msk [vmem:[%s7759] sm:$0xff] %vm1165, %v7758
    // Predicated region
    $region50: #{fully_connected2_forward.1} parent=1 // pred_check
      _
    $region51: #{fully_connected2_forward.1} parent=1 // pred_check_branch
      %7762 = sbr.rel (0) target = $region53
    $region52: #{fully_connected2_forward.1} parent=1 // pred_region
      _
    $region53: #{fully_connected2_forward.1} parent=1 // pred_fallthru
      _
    // Predicated region
    $region54: #{fully_connected2_forward.1} parent=1 // pred_check
      _
    $region55: #{fully_connected2_forward.1} parent=1 // pred_check_branch
      %7764 = sbr.rel (0) target = $region57
    $region56: #{fully_connected2_forward.1} parent=1 // pred_region
      _
    $region57: #{fully_connected2_forward.1} parent=1 // pred_fallthru
      _
    %7765 = vsyncpa [#allocation3], 1
    %7766 = vsyncpa [#allocation5], 1
    %7767 = vsyncpa [#allocation8], 1

</llo_original>
